<compile_context>
chip_gen: v6e
topology: v6e:2x2x1
jax: 0.10.0
libtpu: 0.0.40
codegen_flags: <defaults>
</compile_context>

<pallas_src>
import functools

import jax
import jax.numpy as jnp
from jax import lax
from jax.experimental import pallas as pl
from jax.experimental.pallas import tpu as pltpu

BN_EPS = 1e-3
K_CAP = 2304      # max single-tile K (full-K GEMM, no k-loop / accumulator)
N_CAP = 512       # max N tile width
ACT_DTYPE = jnp.bfloat16
RED_A_KLMN = (256, 256, 384, 384)


def _round_up(x, m):
    return (x + m - 1) // m * m


def _pad_and_tile(dim, cap):
    """Pad `dim` to a lane-friendly size and pick the tile width.

    Returns (padded_dim, tile): padded_dim % tile == 0, tile a multiple of 128.
    Uses one full tile when the 128-rounded dim fits under `cap`; otherwise the
    largest tile <= cap that adds at most one extra 128-wide block of padding.
    """
    p = _round_up(dim, 128)
    if p <= cap:
        return p, p
    for t in range(cap, 127, -128):
        if _round_up(p, t) <= p + 128:
            return _round_up(p, t), t
    return p, 128


def _pick_tm(m):
    if m <= 256:
        return _round_up(m, 8)
    return 128 if m <= 1024 else 256


# ----------------------------------------------------------------------------
# Pallas kernels: fused matmul + shift (+ residual) (+ ReLU)
# ----------------------------------------------------------------------------


def _mm_single_kernel(relu, res_scale, *refs):
    # refs = (x, w, shift, [res], out); whole K in one tile, no scratch.
    if res_scale is None:
        x_ref, w_ref, sh_ref, o_ref = refs
        r_ref = None
    else:
        x_ref, w_ref, sh_ref, r_ref, o_ref = refs
    y = jnp.dot(x_ref[...], w_ref[...], preferred_element_type=jnp.float32)
    y = y + sh_ref[...]
    if res_scale is not None:
        y = r_ref[...].astype(jnp.float32) + res_scale * y
    if relu:
        y = jnp.maximum(y, 0.0)
    o_ref[...] = y.astype(o_ref.dtype)


def _mm_multi_kernel(relu, res_scale, *refs):
    # refs = (x, w, shift, [res], out, acc); K consumed over grid axis 2.
    if res_scale is None:
        x_ref, w_ref, sh_ref, o_ref, acc_ref = refs
        r_ref = None
    else:
        x_ref, w_ref, sh_ref, r_ref, o_ref, acc_ref = refs
    k = pl.program_id(2)

    @pl.when(k == 0)
    def _():
        acc_ref[...] = jnp.zeros_like(acc_ref)

    acc_ref[...] += jnp.dot(x_ref[...], w_ref[...],
                            preferred_element_type=jnp.float32)

    @pl.when(k == pl.num_programs(2) - 1)
    def _():
        y = acc_ref[...] + sh_ref[...]
        if res_scale is not None:
            y = r_ref[...].astype(jnp.float32) + res_scale * y
        if relu:
            y = jnp.maximum(y, 0.0)
        o_ref[...] = y.astype(o_ref.dtype)


@functools.lru_cache(maxsize=None)
def _get_mm(Mp, Kp, Np, TM, TK, TN, relu, res_scale, out_dtype_name):
    out_dtype = jnp.dtype(out_dtype_name)
    gm, gn, gk = Mp // TM, Np // TN, Kp // TK
    has_res = res_scale is not None
    if gk == 1:
        grid = (gm, gn)
        in_specs = [
            pl.BlockSpec((TM, Kp), lambda i, j: (i, 0)),
            pl.BlockSpec((Kp, TN), lambda i, j: (0, j)),
            pl.BlockSpec((1, TN), lambda i, j: (0, j)),
        ]
        if has_res:
            in_specs.append(pl.BlockSpec((TM, TN), lambda i, j: (i, j)))
        out_spec = pl.BlockSpec((TM, TN), lambda i, j: (i, j))
        kernel = functools.partial(_mm_single_kernel, relu, res_scale)
        scratch = []
        dims = ("parallel", "parallel")
    else:
        grid = (gm, gn, gk)
        in_specs = [
            pl.BlockSpec((TM, TK), lambda i, j, k: (i, k)),
            pl.BlockSpec((TK, TN), lambda i, j, k: (k, j)),
            pl.BlockSpec((1, TN), lambda i, j, k: (0, j)),
        ]
        if has_res:
            in_specs.append(pl.BlockSpec((TM, TN), lambda i, j, k: (i, j)))
        out_spec = pl.BlockSpec((TM, TN), lambda i, j, k: (i, j))
        kernel = functools.partial(_mm_multi_kernel, relu, res_scale)
        scratch = [pltpu.VMEM((TM, TN), jnp.float32)]
        dims = ("parallel", "parallel", "arbitrary")
    return pl.pallas_call(
        kernel,
        out_shape=jax.ShapeDtypeStruct((Mp, Np), out_dtype),
        grid_spec=pltpu.PrefetchScalarGridSpec(
            num_scalar_prefetch=0,
            grid=grid,
            in_specs=in_specs,
            out_specs=out_spec,
            scratch_shapes=scratch),
        compiler_params=pltpu.CompilerParams(dimension_semantics=dims),
    )


def matmul_fused(x, wm, shift, n_out, relu, res=None, res_scale=None,
                 out_dtype=ACT_DTYPE):
    """out[:M, :n_out] = act(x @ wm + shift [+ res + res_scale * (...)]).

    `wm` / `shift` are already padded & bf16 (built at init); only the
    activation (and residual) are padded here, fused by XLA inside the
    surrounding block-level jit.
    """
    M, K = x.shape
    Kp, TK = _pad_and_tile(K, K_CAP)
    Np, TN = _pad_and_tile(n_out, N_CAP)
    assert wm.shape == (Kp, Np), (wm.shape, (Kp, Np))
    assert shift.shape == (1, Np), (shift.shape, Np)
    TM = _pick_tm(M)
    Mp = _round_up(M, TM)
    xp = x.astype(jnp.bfloat16)
    if (Mp, Kp) != (M, K):
        xp = jnp.pad(xp, ((0, Mp - M), (0, Kp - K)))
    args = [xp, wm, shift]
    if res is not None:
        rp = res.astype(jnp.bfloat16)
        if (Mp, Np) != (M, n_out):
            rp = jnp.pad(rp, ((0, Mp - M), (0, Np - n_out)))
        args.append(rp)
        res_scale = float(res_scale)
    else:
        res_scale = None
    fn = _get_mm(Mp, Kp, Np, TM, TK, TN, bool(relu), res_scale,
                 jnp.dtype(out_dtype).name)
    out = fn(*args)
    return out[:M, :n_out]


# ----------------------------------------------------------------------------
# Conv / pooling glue (runs inside the per-block jit -> fused by XLA)
# ----------------------------------------------------------------------------


def _pair(v):
    return (v, v) if isinstance(v, int) else tuple(v)


def conv_apply(p, x, cout, ksize=1, stride=1, padding=0, relu=True,
               res=None, res_scale=None):
    """x: NHWC bf16; p: pre-padded matmul-form conv params."""
    kh, kw = _pair(ksize)
    st_h, st_w = _pair(stride)
    pd_h, pd_w = _pair(padding)
    n, h, w, c = x.shape
    ho = (h + 2 * pd_h - kh) // st_h + 1
    wo = (w + 2 * pd_w - kw) // st_w + 1
    if (kh, kw, st_h, st_w, pd_h, pd_w) == (1, 1, 1, 1, 0, 0):
        patches = x.reshape(n * h * w, c)
    else:
        xp = jnp.pad(x, ((0, 0), (pd_h, pd_h), (pd_w, pd_w), (0, 0)))
        cols = []
        for i in range(kh):
            for j in range(kw):
                cols.append(xp[:, i:i + st_h * (ho - 1) + 1:st_h,
                               j:j + st_w * (wo - 1) + 1:st_w, :])
        patches = jnp.concatenate(cols, axis=-1).reshape(
            n * ho * wo, kh * kw * c)
    res_m = None if res is None else res.reshape(n * ho * wo, cout)
    y = matmul_fused(patches, p["wm"], p["shift"], cout, relu, res_m, res_scale)
    return y.reshape(n, ho, wo, cout)


def max_pool(x, k, s):
    return lax.reduce_window(x, jnp.array(-jnp.inf, x.dtype), lax.max,
                             (1, k, k, 1), (1, s, s, 1), "VALID")


def avg_pool_3x3_s1_p1(x):  # count_include_pad=False
    pads = ((0, 0), (1, 1), (1, 1), (0, 0))
    xf = x.astype(jnp.float32)
    num = lax.reduce_window(xf, 0.0, lax.add, (1, 3, 3, 1), (1, 1, 1, 1), pads)
    cnt = lax.reduce_window(jnp.ones(x.shape[:3] + (1,), jnp.float32), 0.0,
                            lax.add, (1, 3, 3, 1), (1, 1, 1, 1), pads)
    return (num / cnt).astype(x.dtype)


# ----------------------------------------------------------------------------
# Deterministic parameter init (weights pre-folded / pre-padded / bf16)
# ----------------------------------------------------------------------------

_KEY = jax.random.PRNGKey(0)
_COUNTER = [0]


def _next_key():
    _COUNTER[0] += 1
    return jax.random.fold_in(_KEY, _COUNTER[0])


def _prep_conv(w_oihw, scale, shift):
    """Fold BN scale into W, convert to padded (kh*kw*Cin, Cout) bf16 form."""
    cout, cin, kh, kw = w_oihw.shape
    k = kh * kw * cin
    kp, _ = _pad_and_tile(k, K_CAP)
    np_, _ = _pad_and_tile(cout, N_CAP)
    wm = jnp.transpose(w_oihw, (2, 3, 1, 0)).reshape(k, cout) * scale[None, :]
    wm = jnp.pad(wm, ((0, kp - k), (0, np_ - cout))).astype(jnp.bfloat16)
    sh = jnp.pad(shift, (0, np_ - cout)).reshape(1, np_).astype(jnp.float32)
    return {"wm": wm, "shift": sh}


def init_conv_bn(cin, cout, kh, kw):
    fan_in = cin * kh * kw
    w = jax.random.normal(_next_key(), (cout, cin, kh, kw),
                          jnp.float32) * (2.0 / fan_in) ** 0.5
    gamma = jnp.ones((cout,), jnp.float32)
    beta = jnp.zeros((cout,), jnp.float32)
    mean = jnp.zeros((cout,), jnp.float32)
    var = jnp.ones((cout,), jnp.float32)
    scale = gamma / jnp.sqrt(var + BN_EPS)
    shift = beta - mean * scale
    return _prep_conv(w, scale, shift)


def init_conv_bias(cin, cout):
    w = jax.random.normal(_next_key(), (cout, cin, 1, 1),
                          jnp.float32) * (1.0 / cin) ** 0.5
    b = jax.random.normal(_next_key(), (cout,), jnp.float32) * 0.01
    return _prep_conv(w, jnp.ones((cout,), jnp.float32), b)


def init_linear(cin, classes):
    w = jax.random.normal(_next_key(), (classes, cin),
                          jnp.float32) * (1.0 / cin) ** 0.5
    b = jnp.zeros((classes,), jnp.float32)
    kp, _ = _pad_and_tile(cin, K_CAP)
    np_, _ = _pad_and_tile(classes, N_CAP)
    wm = jnp.pad(w.T, ((0, kp - cin), (0, np_ - classes))).astype(jnp.bfloat16)
    sh = jnp.pad(b, (0, np_ - classes)).reshape(1, np_).astype(jnp.float32)
    return {"wm": wm, "shift": sh}


# ----------------------------------------------------------------------------
# Inception-ResNet-v2 blocks
# ----------------------------------------------------------------------------


def init_stem(in_ch):
    return {
        "f0": init_conv_bn(in_ch, 32, 3, 3),
        "f1": init_conv_bn(32, 32, 3, 3),
        "f2": init_conv_bn(32, 64, 3, 3),
        "f3": init_conv_bn(64, 80, 1, 1),
        "f4": init_conv_bn(80, 192, 3, 3),
        "b0": init_conv_bn(192, 96, 1, 1),
        "b1_0": init_conv_bn(192, 48, 1, 1),
        "b1_1": init_conv_bn(48, 64, 5, 5),
        "b2_0": init_conv_bn(192, 64, 1, 1),
        "b2_1": init_conv_bn(64, 96, 3, 3),
        "b2_2": init_conv_bn(96, 96, 3, 3),
        "b3": init_conv_bn(192, 64, 1, 1),
    }


def stem_fwd(p, x_nchw):
    x = jnp.transpose(x_nchw, (0, 2, 3, 1)).astype(ACT_DTYPE)
    x = conv_apply(p["f0"], x, 32, 3, stride=2)
    x = conv_apply(p["f1"], x, 32, 3)
    x = conv_apply(p["f2"], x, 64, 3, padding=1)
    x = max_pool(x, 3, 2)
    x = conv_apply(p["f3"], x, 80, 1)
    x = conv_apply(p["f4"], x, 192, 3)
    x = max_pool(x, 3, 2)
    x0 = conv_apply(p["b0"], x, 96, 1)
    x1 = conv_apply(p["b1_1"], conv_apply(p["b1_0"], x, 48, 1),
                    64, 5, padding=2)
    x2 = conv_apply(p["b2_0"], x, 64, 1)
    x2 = conv_apply(p["b2_1"], x2, 96, 3, padding=1)
    x2 = conv_apply(p["b2_2"], x2, 96, 3, padding=1)
    x3 = conv_apply(p["b3"], avg_pool_3x3_s1_p1(x), 64, 1)
    return jnp.concatenate([x0, x1, x2, x3], axis=-1)      # 320 channels


def init_irA(cin):
    return {
        "b0": init_conv_bn(cin, 32, 1, 1),
        "b1_0": init_conv_bn(cin, 32, 1, 1),
        "b1_1": init_conv_bn(32, 32, 3, 3),
        "b2_0": init_conv_bn(cin, 32, 1, 1),
        "b2_1": init_conv_bn(32, 48, 3, 3),
        "b2_2": init_conv_bn(48, 64, 3, 3),
        "conv": init_conv_bias(128, 320),
    }


def irA_fwd(p, x, scale):
    x0 = conv_apply(p["b0"], x, 32, 1)
    x1 = conv_apply(p["b1_1"], conv_apply(p["b1_0"], x, 32, 1),
                    32, 3, padding=1)
    x2 = conv_apply(p["b2_0"], x, 32, 1)
    x2 = conv_apply(p["b2_1"], x2, 48, 3, padding=1)
    x2 = conv_apply(p["b2_2"], x2, 64, 3, padding=1)
    xr = jnp.concatenate([x0, x1, x2], axis=-1)             # 128 channels
    return conv_apply(p["conv"], xr, 320, 1, relu=True, res=x, res_scale=scale)


def init_irB(cin):
    return {
        "b0": init_conv_bn(cin, 192, 1, 1),
        "b1_0": init_conv_bn(cin, 128, 1, 1),
        "b1_1": init_conv_bn(128, 160, 1, 7),
        "b1_2": init_conv_bn(160, 192, 7, 1),
        "conv": init_conv_bias(384, 1088),
    }


def irB_fwd(p, x, scale):
    x0 = conv_apply(p["b0"], x, 192, 1)
    x1 = conv_apply(p["b1_0"], x, 128, 1)
    x1 = conv_apply(p["b1_1"], x1, 160, (1, 7), padding=(0, 3))
    x1 = conv_apply(p["b1_2"], x1, 192, (7, 1), padding=(3, 0))
    xr = jnp.concatenate([x0, x1], axis=-1)                 # 384 channels
    return conv_apply(p["conv"], xr, 1088, 1, relu=True, res=x, res_scale=scale)


def init_irC(cin):
    return {
        "b0": init_conv_bn(cin, 192, 1, 1),
        "b1_0": init_conv_bn(cin, 192, 1, 1),
        "b1_1": init_conv_bn(192, 224, 1, 3),
        "b1_2": init_conv_bn(224, 256, 3, 1),
        "conv": init_conv_bias(448, 2080),
    }


def irC_fwd(p, x, scale, activation):
    x0 = conv_apply(p["b0"], x, 192, 1)
    x1 = conv_apply(p["b1_0"], x, 192, 1)
    x1 = conv_apply(p["b1_1"], x1, 224, (1, 3), padding=(0, 1))
    x1 = conv_apply(p["b1_2"], x1, 256, (3, 1), padding=(1, 0))
    xr = jnp.concatenate([x0, x1], axis=-1)                 # 448 channels
    return conv_apply(p["conv"], xr, 2080, 1, relu=activation,
                      res=x, res_scale=scale)


def init_redA(cin, k, l, m, n):
    return {
        "b0": init_conv_bn(cin, n, 3, 3),
        "b1_0": init_conv_bn(cin, k, 1, 1),
        "b1_1": init_conv_bn(k, l, 3, 3),
        "b1_2": init_conv_bn(l, m, 3, 3),
    }


def redA_fwd(p, x):
    k, l, m, n = RED_A_KLMN
    x0 = conv_apply(p["b0"], x, n, 3, stride=2)
    x1 = conv_apply(p["b1_0"], x, k, 1)
    x1 = conv_apply(p["b1_1"], x1, l, 3, padding=1)
    x1 = conv_apply(p["b1_2"], x1, m, 3, stride=2)
    x2 = max_pool(x, 3, 2)
    return jnp.concatenate([x0, x1, x2], axis=-1)           # 1088 channels


def init_redB(cin):
    return {
        "b0_0": init_conv_bn(cin, 256, 1, 1),
        "b0_1": init_conv_bn(256, 384, 3, 3),
        "b1_0": init_conv_bn(cin, 256, 1, 1),
        "b1_1": init_conv_bn(256, 288, 3, 3),
        "b2_0": init_conv_bn(cin, 256, 1, 1),
        "b2_1": init_conv_bn(256, 288, 3, 3),
        "b2_2": init_conv_bn(288, 320, 3, 3),
    }


def redB_fwd(p, x):
    x0 = conv_apply(p["b0_1"], conv_apply(p["b0_0"], x, 256, 1),
                    384, 3, stride=2)
    x1 = conv_apply(p["b1_1"], conv_apply(p["b1_0"], x, 256, 1),
                    288, 3, stride=2)
    x2 = conv_apply(p["b2_0"], x, 256, 1)
    x2 = conv_apply(p["b2_1"], x2, 288, 3, padding=1)
    x2 = conv_apply(p["b2_2"], x2, 320, 3, stride=2)
    x3 = max_pool(x, 3, 2)
    return jnp.concatenate([x0, x1, x2, x3], axis=-1)       # 2080 channels


def head_fwd(p_conv, p_lin, x, classes):
    x = conv_apply(p_conv, x, 1536, 1)
    x = jnp.mean(x.astype(jnp.float32), axis=(1, 2))        # global avg pool
    logits = matmul_fused(x, p_lin["wm"], p_lin["shift"], classes,
                          relu=False, out_dtype=jnp.float32)
    return logits


# Per-block jit: removes per-op dispatch; repeated blocks reuse one executable.
_stem_jit = jax.jit(stem_fwd)
_irA_jit = jax.jit(irA_fwd, static_argnums=(2,))
_redA_jit = jax.jit(redA_fwd)
_irB_jit = jax.jit(irB_fwd, static_argnums=(2,))
_redB_jit = jax.jit(redB_fwd)
_irC_jit = jax.jit(irC_fwd, static_argnums=(2, 3))
_head_jit = jax.jit(head_fwd, static_argnums=(3,))


# ----------------------------------------------------------------------------
# Full model
# ----------------------------------------------------------------------------


def init_model(in_channels=3, classes=1000):
    k, l, m, n = RED_A_KLMN
    params = {"stem": init_stem(in_channels)}
    params["A"] = [init_irA(320) for _ in range(10)]
    params["redA"] = init_redA(320, k, l, m, n)
    params["B"] = [init_irB(1088) for _ in range(20)]
    params["redB"] = init_redB(1088)
    params["C"] = [init_irC(2080) for _ in range(10)]
    params["final_conv"] = init_conv_bn(2080, 1536, 1, 1)
    params["linear"] = init_linear(1536, classes)
    return params


def model_fwd(params, x_nchw, classes=1000):
    # layout: input NCHW (PyTorch); internal NHWC bf16.
    x = _stem_jit(params["stem"], x_nchw)                   # (N, h, w, 320)
    for p in params["A"]:
        x = _irA_jit(p, x, 0.17)
    x = _redA_jit(params["redA"], x)                        # (N, h, w, 1088)
    for p in params["B"]:
        x = _irB_jit(p, x, 0.1)
    x = _redB_jit(params["redB"], x)                        # (N, h, w, 2080)
    for p in params["C"][:9]:
        x = _irC_jit(p, x, 0.2, True)
    x = _irC_jit(params["C"][9], x, 1.0, False)             # no activation
    return _head_jit(params["final_conv"], params["linear"], x, classes)


if __name__ == "__main__":
    # Smallest spatial size that survives all stride-2 reductions is 75.
    x = jax.random.normal(jax.random.PRNGKey(0), (1, 3, 75, 75), jnp.float32)
    params = init_model(in_channels=3, classes=1000)
    out = model_fwd(params, x)
    out = jax.block_until_ready(out)
    assert out.shape == (1, 1000), out.shape
    print("KERNEL_OK")
</pallas_src>

<mosaic_0001>
module attributes {stable_mosaic.version = 11 : i64} {
  func.func @_mm_single_kernel(%arg0: i32, %arg1: i32, %arg2: memref<256x128xbf16, #tpu.memory_space<vmem>>, %arg3: memref<128x128xbf16, #tpu.memory_space<vmem>>, %arg4: memref<1x128xf32, #tpu.memory_space<vmem>>, %arg5: memref<256x128xbf16, #tpu.memory_space<vmem>>) attributes {dimension_semantics = [#tpu.dimension_semantics<parallel>, #tpu.dimension_semantics<parallel>], iteration_bounds = array<i64: 6, 1>, scalar_prefetch = 0 : i64, scratch_operands = 0 : i64, tpu.core_type = #tpu.core_type<tc>, window_params = [{transform_indices = @transform_0, window_bounds = array<i64: 256, 128>}, {transform_indices = @transform_1, window_bounds = array<i64: 128, 128>}, {transform_indices = @transform_2, window_bounds = array<i64: 1, 128>}, {transform_indices = @transform_3, window_bounds = array<i64: 256, 128>}]} {
    %c0 = arith.constant 0 : index
    %c0_0 = arith.constant 0 : index
    %0 = vector.load %arg2[%c0, %c0_0] : memref<256x128xbf16, #tpu.memory_space<vmem>>, vector<256x128xbf16>
    %c0_1 = arith.constant 0 : index
    %c0_2 = arith.constant 0 : index
    %1 = vector.load %arg3[%c0_1, %c0_2] : memref<128x128xbf16, #tpu.memory_space<vmem>>, vector<128x128xbf16>
    %cst = arith.constant dense<0.000000e+00> : vector<256x128xf32>
    %2 = tpu.matmul %0, %1, %cst {dimension_numbers = #tpu.dot_dimension_numbers<[1], [0], [0], [1], [0, 0, 1, 1], [], []>} : vector<256x128xbf16>, vector<128x128xbf16>, vector<256x128xf32> -> vector<256x128xf32>
    %c0_3 = arith.constant 0 : index
    %c0_4 = arith.constant 0 : index
    %3 = vector.load %arg4[%c0_3, %c0_4] : memref<1x128xf32, #tpu.memory_space<vmem>>, vector<1x128xf32>
    %4 = vector.broadcast %3 : vector<1x128xf32> to vector<256x128xf32>
    %5 = arith.addf %2, %4 : vector<256x128xf32>
    %cst_5 = arith.constant 0.000000e+00 : f32
    %6 = vector.broadcast %cst_5 : f32 to vector<256x128xf32>
    %7 = arith.maximumf %5, %6 : vector<256x128xf32>
    %8 = arith.truncf %7 : vector<256x128xf32> to vector<256x128xbf16>
    %c0_6 = arith.constant 0 : index
    %c0_7 = arith.constant 0 : index
    %9 = vector.load %arg5[%c0_6, %c0_7] : memref<256x128xbf16, #tpu.memory_space<vmem>>, vector<256x128xbf16>
    tpu.vector_store %arg5[%c0_6, %c0_7], %8 {strides = array<i32>} : memref<256x128xbf16, #tpu.memory_space<vmem>>, vector<256x128xbf16>,
    return
  }
  func.func @transform_0(%arg0: i32, %arg1: i32) -> (i32, i32) {
    %c0_i32 = arith.constant 0 : i32
    %c0_i32_0 = arith.constant 0 : i32
    return %arg0, %c0_i32 : i32, i32
  }
  func.func @transform_1(%arg0: i32, %arg1: i32) -> (i32, i32) {
    %c0_i32 = arith.constant 0 : i32
    %c0_i32_0 = arith.constant 0 : i32
    return %c0_i32, %arg1 : i32, i32
  }
  func.func @transform_2(%arg0: i32, %arg1: i32) -> (i32, i32) {
    %c0_i32 = arith.constant 0 : i32
    %c0_i32_0 = arith.constant 0 : i32
    return %c0_i32, %arg1 : i32, i32
  }
  func.func @transform_3(%arg0: i32, %arg1: i32) -> (i32, i32) {
    %c0_i32 = arith.constant 0 : i32
    return %arg0, %arg1 : i32, i32
  }
}

module attributes {stable_mosaic.version = 11 : i64} {
  func.func @_mm_single_kernel(%arg0: i32, %arg1: i32, %arg2: memref<256x384xbf16, #tpu.memory_space<vmem>>, %arg3: memref<384x128xbf16, #tpu.memory_space<vmem>>, %arg4: memref<1x128xf32, #tpu.memory_space<vmem>>, %arg5: memref<256x128xbf16, #tpu.memory_space<vmem>>) attributes {dimension_semantics = [#tpu.dimension_semantics<parallel>, #tpu.dimension_semantics<parallel>], iteration_bounds = array<i64: 5, 1>, scalar_prefetch = 0 : i64, scratch_operands = 0 : i64, tpu.core_type = #tpu.core_type<tc>, window_params = [{transform_indices = @transform_0, window_bounds = array<i64: 256, 384>}, {transform_indices = @transform_1, window_bounds = array<i64: 384, 128>}, {transform_indices = @transform_2, window_bounds = array<i64: 1, 128>}, {transform_indices = @transform_3, window_bounds = array<i64: 256, 128>}]} {
    %c0 = arith.constant 0 : index
    %c0_0 = arith.constant 0 : index
    %0 = vector.load %arg2[%c0, %c0_0] : memref<256x384xbf16, #tpu.memory_space<vmem>>, vector<256x384xbf16>
    %c0_1 = arith.constant 0 : index
    %c0_2 = arith.constant 0 : index
    %1 = vector.load %arg3[%c0_1, %c0_2] : memref<384x128xbf16, #tpu.memory_space<vmem>>, vector<384x128xbf16>
    %cst = arith.constant dense<0.000000e+00> : vector<256x128xf32>
    %2 = tpu.matmul %0, %1, %cst {dimension_numbers = #tpu.dot_dimension_numbers<[1], [0], [0], [1], [0, 0, 1, 1], [], []>} : vector<256x384xbf16>, vector<384x128xbf16>, vector<256x128xf32> -> vector<256x128xf32>
    %c0_3 = arith.constant 0 : index
    %c0_4 = arith.constant 0 : index
    %3 = vector.load %arg4[%c0_3, %c0_4] : memref<1x128xf32, #tpu.memory_space<vmem>>, vector<1x128xf32>
    %4 = vector.broadcast %3 : vector<1x128xf32> to vector<256x128xf32>
    %5 = arith.addf %2, %4 : vector<256x128xf32>
    %cst_5 = arith.constant 0.000000e+00 : f32
    %6 = vector.broadcast %cst_5 : f32 to vector<256x128xf32>
    %7 = arith.maximumf %5, %6 : vector<256x128xf32>
    %8 = arith.truncf %7 : vector<256x128xf32> to vector<256x128xbf16>
    %c0_6 = arith.constant 0 : index
    %c0_7 = arith.constant 0 : index
    %9 = vector.load %arg5[%c0_6, %c0_7] : memref<256x128xbf16, #tpu.memory_space<vmem>>, vector<256x128xbf16>
    tpu.vector_store %arg5[%c0_6, %c0_7], %8 {strides = array<i32>} : memref<256x128xbf16, #tpu.memory_space<vmem>>, vector<256x128xbf16>,
    return
  }
  func.func @transform_0(%arg0: i32, %arg1: i32) -> (i32, i32) {
    %c0_i32 = arith.constant 0 : i32
    %c0_i32_0 = arith.constant 0 : i32
    return %arg0, %c0_i32 : i32, i32
  }
  func.func @transform_1(%arg0: i32, %arg1: i32) -> (i32, i32) {
    %c0_i32 = arith.constant 0 : i32
    %c0_i32_0 = arith.constant 0 : i32
    return %c0_i32, %arg1 : i32, i32
  }
  func.func @transform_2(%arg0: i32, %arg1: i32) -> (i32, i32) {
    %c0_i32 = arith.constant 0 : i32
    %c0_i32_0 = arith.constant 0 : i32
    return %c0_i32, %arg1 : i32, i32
  }
  func.func @transform_3(%arg0: i32, %arg1: i32) -> (i32, i32) {
    %c0_i32 = arith.constant 0 : i32
    return %arg0, %arg1 : i32, i32
  }
}

module attributes {stable_mosaic.version = 11 : i64} {
  func.func @_mm_single_kernel(%arg0: i32, %arg1: i32, %arg2: memref<128x128xbf16, #tpu.memory_space<vmem>>, %arg3: memref<128x128xbf16, #tpu.memory_space<vmem>>, %arg4: memref<1x128xf32, #tpu.memory_space<vmem>>, %arg5: memref<128x128xbf16, #tpu.memory_space<vmem>>) attributes {dimension_semantics = [#tpu.dimension_semantics<parallel>, #tpu.dimension_semantics<parallel>], iteration_bounds = array<i64: 3, 1>, scalar_prefetch = 0 : i64, scratch_operands = 0 : i64, tpu.core_type = #tpu.core_type<tc>, window_params = [{transform_indices = @transform_0, window_bounds = array<i64: 128, 128>}, {transform_indices = @transform_1, window_bounds = array<i64: 128, 128>}, {transform_indices = @transform_2, window_bounds = array<i64: 1, 128>}, {transform_indices = @transform_3, window_bounds = array<i64: 128, 128>}]} {
    %c0 = arith.constant 0 : index
    %c0_0 = arith.constant 0 : index
    %0 = vector.load %arg2[%c0, %c0_0] : memref<128x128xbf16, #tpu.memory_space<vmem>>, vector<128x128xbf16>
    %c0_1 = arith.constant 0 : index
    %c0_2 = arith.constant 0 : index
    %1 = vector.load %arg3[%c0_1, %c0_2] : memref<128x128xbf16, #tpu.memory_space<vmem>>, vector<128x128xbf16>
    %cst = arith.constant dense<0.000000e+00> : vector<128x128xf32>
    %2 = tpu.matmul %0, %1, %cst {dimension_numbers = #tpu.dot_dimension_numbers<[1], [0], [0], [1], [0, 0, 1, 1], [], []>} : vector<128x128xbf16>, vector<128x128xbf16>, vector<128x128xf32> -> vector<128x128xf32>
    %c0_3 = arith.constant 0 : index
    %c0_4 = arith.constant 0 : index
    %3 = vector.load %arg4[%c0_3, %c0_4] : memref<1x128xf32, #tpu.memory_space<vmem>>, vector<1x128xf32>
    %4 = vector.broadcast %3 : vector<1x128xf32> to vector<128x128xf32>
    %5 = arith.addf %2, %4 : vector<128x128xf32>
    %cst_5 = arith.constant 0.000000e+00 : f32
    %6 = vector.broadcast %cst_5 : f32 to vector<128x128xf32>
    %7 = arith.maximumf %5, %6 : vector<128x128xf32>
    %8 = arith.truncf %7 : vector<128x128xf32> to vector<128x128xbf16>
    %c0_6 = arith.constant 0 : index
    %c0_7 = arith.constant 0 : index
    %9 = vector.load %arg5[%c0_6, %c0_7] : memref<128x128xbf16, #tpu.memory_space<vmem>>, vector<128x128xbf16>
    tpu.vector_store %arg5[%c0_6, %c0_7], %8 {strides = array<i32>} : memref<128x128xbf16, #tpu.memory_space<vmem>>, vector<128x128xbf16>,
    return
  }
  func.func @transform_0(%arg0: i32, %arg1: i32) -> (i32, i32) {
    %c0_i32 = arith.constant 0 : i32
    %c0_i32_0 = arith.constant 0 : i32
    return %arg0, %c0_i32 : i32, i32
  }
  func.func @transform_1(%arg0: i32, %arg1: i32) -> (i32, i32) {
    %c0_i32 = arith.constant 0 : i32
    %c0_i32_0 = arith.constant 0 : i32
    return %c0_i32, %arg1 : i32, i32
  }
  func.func @transform_2(%arg0: i32, %arg1: i32) -> (i32, i32) {
    %c0_i32 = arith.constant 0 : i32
    %c0_i32_0 = arith.constant 0 : i32
    return %c0_i32, %arg1 : i32, i32
  }
  func.func @transform_3(%arg0: i32, %arg1: i32) -> (i32, i32) {
    %c0_i32 = arith.constant 0 : i32
    return %arg0, %arg1 : i32, i32
  }
}

module attributes {stable_mosaic.version = 11 : i64} {
  func.func @_mm_single_kernel(%arg0: i32, %arg1: i32, %arg2: memref<232x768xbf16, #tpu.memory_space<vmem>>, %arg3: memref<768x256xbf16, #tpu.memory_space<vmem>>, %arg4: memref<1x256xf32, #tpu.memory_space<vmem>>, %arg5: memref<232x256xbf16, #tpu.memory_space<vmem>>) attributes {dimension_semantics = [#tpu.dimension_semantics<parallel>, #tpu.dimension_semantics<parallel>], iteration_bounds = array<i64: 1, 1>, scalar_prefetch = 0 : i64, scratch_operands = 0 : i64, tpu.core_type = #tpu.core_type<tc>, window_params = [{transform_indices = @transform_0, window_bounds = array<i64: 232, 768>}, {transform_indices = @transform_1, window_bounds = array<i64: 768, 256>}, {transform_indices = @transform_2, window_bounds = array<i64: 1, 256>}, {transform_indices = @transform_3, window_bounds = array<i64: 232, 256>}]} {
    %c0 = arith.constant 0 : index
    %c0_0 = arith.constant 0 : index
    %0 = vector.load %arg2[%c0, %c0_0] : memref<232x768xbf16, #tpu.memory_space<vmem>>, vector<232x768xbf16>
    %c0_1 = arith.constant 0 : index
    %c0_2 = arith.constant 0 : index
    %1 = vector.load %arg3[%c0_1, %c0_2] : memref<768x256xbf16, #tpu.memory_space<vmem>>, vector<768x256xbf16>
    %cst = arith.constant dense<0.000000e+00> : vector<232x256xf32>
    %2 = tpu.matmul %0, %1, %cst {dimension_numbers = #tpu.dot_dimension_numbers<[1], [0], [0], [1], [0, 0, 1, 1], [], []>} : vector<232x768xbf16>, vector<768x256xbf16>, vector<232x256xf32> -> vector<232x256xf32>
    %c0_3 = arith.constant 0 : index
    %c0_4 = arith.constant 0 : index
    %3 = vector.load %arg4[%c0_3, %c0_4] : memref<1x256xf32, #tpu.memory_space<vmem>>, vector<1x256xf32>
    %4 = vector.broadcast %3 : vector<1x256xf32> to vector<232x256xf32>
    %5 = arith.addf %2, %4 : vector<232x256xf32>
    %cst_5 = arith.constant 0.000000e+00 : f32
    %6 = vector.broadcast %cst_5 : f32 to vector<232x256xf32>
    %7 = arith.maximumf %5, %6 : vector<232x256xf32>
    %8 = arith.truncf %7 : vector<232x256xf32> to vector<232x256xbf16>
    %c0_6 = arith.constant 0 : index
    %c0_7 = arith.constant 0 : index
    %9 = vector.load %arg5[%c0_6, %c0_7] : memref<232x256xbf16, #tpu.memory_space<vmem>>, vector<232x256xbf16>
    tpu.vector_store %arg5[%c0_6, %c0_7], %8 {strides = array<i32>} : memref<232x256xbf16, #tpu.memory_space<vmem>>, vector<232x256xbf16>,
    return
  }
  func.func @transform_0(%arg0: i32, %arg1: i32) -> (i32, i32) {
    %c0_i32 = arith.constant 0 : i32
    %c0_i32_0 = arith.constant 0 : i32
    return %arg0, %c0_i32 : i32, i32
  }
  func.func @transform_1(%arg0: i32, %arg1: i32) -> (i32, i32) {
    %c0_i32 = arith.constant 0 : i32
    %c0_i32_0 = arith.constant 0 : i32
    return %c0_i32, %arg1 : i32, i32
  }
  func.func @transform_2(%arg0: i32, %arg1: i32) -> (i32, i32) {
    %c0_i32 = arith.constant 0 : i32
    %c0_i32_0 = arith.constant 0 : i32
    return %c0_i32, %arg1 : i32, i32
  }
  func.func @transform_3(%arg0: i32, %arg1: i32) -> (i32, i32) {
    %c0_i32 = arith.constant 0 : i32
    return %arg0, %arg1 : i32, i32
  }
}

module attributes {stable_mosaic.version = 11 : i64} {
  func.func @_mm_single_kernel(%arg0: i32, %arg1: i32, %arg2: memref<56x256xbf16, #tpu.memory_space<vmem>>, %arg3: memref<256x128xbf16, #tpu.memory_space<vmem>>, %arg4: memref<1x128xf32, #tpu.memory_space<vmem>>, %arg5: memref<56x128xbf16, #tpu.memory_space<vmem>>) attributes {dimension_semantics = [#tpu.dimension_semantics<parallel>, #tpu.dimension_semantics<parallel>], iteration_bounds = array<i64: 1, 1>, scalar_prefetch = 0 : i64, scratch_operands = 0 : i64, tpu.core_type = #tpu.core_type<tc>, window_params = [{transform_indices = @transform_0, window_bounds = array<i64: 56, 256>}, {transform_indices = @transform_1, window_bounds = array<i64: 256, 128>}, {transform_indices = @transform_2, window_bounds = array<i64: 1, 128>}, {transform_indices = @transform_3, window_bounds = array<i64: 56, 128>}]} {
    %c0 = arith.constant 0 : index
    %c0_0 = arith.constant 0 : index
    %0 = vector.load %arg2[%c0, %c0_0] : memref<56x256xbf16, #tpu.memory_space<vmem>>, vector<56x256xbf16>
    %c0_1 = arith.constant 0 : index
    %c0_2 = arith.constant 0 : index
    %1 = vector.load %arg3[%c0_1, %c0_2] : memref<256x128xbf16, #tpu.memory_space<vmem>>, vector<256x128xbf16>
    %cst = arith.constant dense<0.000000e+00> : vector<56x128xf32>
    %2 = tpu.matmul %0, %1, %cst {dimension_numbers = #tpu.dot_dimension_numbers<[1], [0], [0], [1], [0, 0, 1, 1], [], []>} : vector<56x256xbf16>, vector<256x128xbf16>, vector<56x128xf32> -> vector<56x128xf32>
    %c0_3 = arith.constant 0 : index
    %c0_4 = arith.constant 0 : index
    %3 = vector.load %arg4[%c0_3, %c0_4] : memref<1x128xf32, #tpu.memory_space<vmem>>, vector<1x128xf32>
    %4 = vector.broadcast %3 : vector<1x128xf32> to vector<56x128xf32>
    %5 = arith.addf %2, %4 : vector<56x128xf32>
    %cst_5 = arith.constant 0.000000e+00 : f32
    %6 = vector.broadcast %cst_5 : f32 to vector<56x128xf32>
    %7 = arith.maximumf %5, %6 : vector<56x128xf32>
    %8 = arith.truncf %7 : vector<56x128xf32> to vector<56x128xbf16>
    %c0_6 = arith.constant 0 : index
    %c0_7 = arith.constant 0 : index
    %9 = vector.load %arg5[%c0_6, %c0_7] : memref<56x128xbf16, #tpu.memory_space<vmem>>, vector<56x128xbf16>
    tpu.vector_store %arg5[%c0_6, %c0_7], %8 {strides = array<i32>} : memref<56x128xbf16, #tpu.memory_space<vmem>>, vector<56x128xbf16>,
    return
  }
  func.func @transform_0(%arg0: i32, %arg1: i32) -> (i32, i32) {
    %c0_i32 = arith.constant 0 : i32
    %c0_i32_0 = arith.constant 0 : i32
    return %arg0, %c0_i32 : i32, i32
  }
  func.func @transform_1(%arg0: i32, %arg1: i32) -> (i32, i32) {
    %c0_i32 = arith.constant 0 : i32
    %c0_i32_0 = arith.constant 0 : i32
    return %c0_i32, %arg1 : i32, i32
  }
  func.func @transform_2(%arg0: i32, %arg1: i32) -> (i32, i32) {
    %c0_i32 = arith.constant 0 : i32
    %c0_i32_0 = arith.constant 0 : i32
    return %c0_i32, %arg1 : i32, i32
  }
  func.func @transform_3(%arg0: i32, %arg1: i32) -> (i32, i32) {
    %c0_i32 = arith.constant 0 : i32
    return %arg0, %arg1 : i32, i32
  }
}

module attributes {stable_mosaic.version = 11 : i64} {
  func.func @_mm_single_kernel(%arg0: i32, %arg1: i32, %arg2: memref<56x640xbf16, #tpu.memory_space<vmem>>, %arg3: memref<640x128xbf16, #tpu.memory_space<vmem>>, %arg4: memref<1x128xf32, #tpu.memory_space<vmem>>, %arg5: memref<56x128xbf16, #tpu.memory_space<vmem>>) attributes {dimension_semantics = [#tpu.dimension_semantics<parallel>, #tpu.dimension_semantics<parallel>], iteration_bounds = array<i64: 1, 1>, scalar_prefetch = 0 : i64, scratch_operands = 0 : i64, tpu.core_type = #tpu.core_type<tc>, window_params = [{transform_indices = @transform_0, window_bounds = array<i64: 56, 640>}, {transform_indices = @transform_1, window_bounds = array<i64: 640, 128>}, {transform_indices = @transform_2, window_bounds = array<i64: 1, 128>}, {transform_indices = @transform_3, window_bounds = array<i64: 56, 128>}]} {
    %c0 = arith.constant 0 : index
    %c0_0 = arith.constant 0 : index
    %0 = vector.load %arg2[%c0, %c0_0] : memref<56x640xbf16, #tpu.memory_space<vmem>>, vector<56x640xbf16>
    %c0_1 = arith.constant 0 : index
    %c0_2 = arith.constant 0 : index
    %1 = vector.load %arg3[%c0_1, %c0_2] : memref<640x128xbf16, #tpu.memory_space<vmem>>, vector<640x128xbf16>
    %cst = arith.constant dense<0.000000e+00> : vector<56x128xf32>
    %2 = tpu.matmul %0, %1, %cst {dimension_numbers = #tpu.dot_dimension_numbers<[1], [0], [0], [1], [0, 0, 1, 1], [], []>} : vector<56x640xbf16>, vector<640x128xbf16>, vector<56x128xf32> -> vector<56x128xf32>
    %c0_3 = arith.constant 0 : index
    %c0_4 = arith.constant 0 : index
    %3 = vector.load %arg4[%c0_3, %c0_4] : memref<1x128xf32, #tpu.memory_space<vmem>>, vector<1x128xf32>
    %4 = vector.broadcast %3 : vector<1x128xf32> to vector<56x128xf32>
    %5 = arith.addf %2, %4 : vector<56x128xf32>
    %cst_5 = arith.constant 0.000000e+00 : f32
    %6 = vector.broadcast %cst_5 : f32 to vector<56x128xf32>
    %7 = arith.maximumf %5, %6 : vector<56x128xf32>
    %8 = arith.truncf %7 : vector<56x128xf32> to vector<56x128xbf16>
    %c0_6 = arith.constant 0 : index
    %c0_7 = arith.constant 0 : index
    %9 = vector.load %arg5[%c0_6, %c0_7] : memref<56x128xbf16, #tpu.memory_space<vmem>>, vector<56x128xbf16>
    tpu.vector_store %arg5[%c0_6, %c0_7], %8 {strides = array<i32>} : memref<56x128xbf16, #tpu.memory_space<vmem>>, vector<56x128xbf16>,
    return
  }
  func.func @transform_0(%arg0: i32, %arg1: i32) -> (i32, i32) {
    %c0_i32 = arith.constant 0 : i32
    %c0_i32_0 = arith.constant 0 : i32
    return %arg0, %c0_i32 : i32, i32
  }
  func.func @transform_1(%arg0: i32, %arg1: i32) -> (i32, i32) {
    %c0_i32 = arith.constant 0 : i32
    %c0_i32_0 = arith.constant 0 : i32
    return %c0_i32, %arg1 : i32, i32
  }
  func.func @transform_2(%arg0: i32, %arg1: i32) -> (i32, i32) {
    %c0_i32 = arith.constant 0 : i32
    %c0_i32_0 = arith.constant 0 : i32
    return %c0_i32, %arg1 : i32, i32
  }
  func.func @transform_3(%arg0: i32, %arg1: i32) -> (i32, i32) {
    %c0_i32 = arith.constant 0 : i32
    return %arg0, %arg1 : i32, i32
  }
}

module attributes {stable_mosaic.version = 11 : i64} {
  func.func @_mm_single_kernel(%arg0: i32, %arg1: i32, %arg2: memref<56x896xbf16, #tpu.memory_space<vmem>>, %arg3: memref<896x128xbf16, #tpu.memory_space<vmem>>, %arg4: memref<1x128xf32, #tpu.memory_space<vmem>>, %arg5: memref<56x128xbf16, #tpu.memory_space<vmem>>) attributes {dimension_semantics = [#tpu.dimension_semantics<parallel>, #tpu.dimension_semantics<parallel>], iteration_bounds = array<i64: 1, 1>, scalar_prefetch = 0 : i64, scratch_operands = 0 : i64, tpu.core_type = #tpu.core_type<tc>, window_params = [{transform_indices = @transform_0, window_bounds = array<i64: 56, 896>}, {transform_indices = @transform_1, window_bounds = array<i64: 896, 128>}, {transform_indices = @transform_2, window_bounds = array<i64: 1, 128>}, {transform_indices = @transform_3, window_bounds = array<i64: 56, 128>}]} {
    %c0 = arith.constant 0 : index
    %c0_0 = arith.constant 0 : index
    %0 = vector.load %arg2[%c0, %c0_0] : memref<56x896xbf16, #tpu.memory_space<vmem>>, vector<56x896xbf16>
    %c0_1 = arith.constant 0 : index
    %c0_2 = arith.constant 0 : index
    %1 = vector.load %arg3[%c0_1, %c0_2] : memref<896x128xbf16, #tpu.memory_space<vmem>>, vector<896x128xbf16>
    %cst = arith.constant dense<0.000000e+00> : vector<56x128xf32>
    %2 = tpu.matmul %0, %1, %cst {dimension_numbers = #tpu.dot_dimension_numbers<[1], [0], [0], [1], [0, 0, 1, 1], [], []>} : vector<56x896xbf16>, vector<896x128xbf16>, vector<56x128xf32> -> vector<56x128xf32>
    %c0_3 = arith.constant 0 : index
    %c0_4 = arith.constant 0 : index
    %3 = vector.load %arg4[%c0_3, %c0_4] : memref<1x128xf32, #tpu.memory_space<vmem>>, vector<1x128xf32>
    %4 = vector.broadcast %3 : vector<1x128xf32> to vector<56x128xf32>
    %5 = arith.addf %2, %4 : vector<56x128xf32>
    %cst_5 = arith.constant 0.000000e+00 : f32
    %6 = vector.broadcast %cst_5 : f32 to vector<56x128xf32>
    %7 = arith.maximumf %5, %6 : vector<56x128xf32>
    %8 = arith.truncf %7 : vector<56x128xf32> to vector<56x128xbf16>
    %c0_6 = arith.constant 0 : index
    %c0_7 = arith.constant 0 : index
    %9 = vector.load %arg5[%c0_6, %c0_7] : memref<56x128xbf16, #tpu.memory_space<vmem>>, vector<56x128xbf16>
    tpu.vector_store %arg5[%c0_6, %c0_7], %8 {strides = array<i32>} : memref<56x128xbf16, #tpu.memory_space<vmem>>, vector<56x128xbf16>,
    return
  }
  func.func @transform_0(%arg0: i32, %arg1: i32) -> (i32, i32) {
    %c0_i32 = arith.constant 0 : i32
    %c0_i32_0 = arith.constant 0 : i32
    return %arg0, %c0_i32 : i32, i32
  }
  func.func @transform_1(%arg0: i32, %arg1: i32) -> (i32, i32) {
    %c0_i32 = arith.constant 0 : i32
    %c0_i32_0 = arith.constant 0 : i32
    return %c0_i32, %arg1 : i32, i32
  }
  func.func @transform_2(%arg0: i32, %arg1: i32) -> (i32, i32) {
    %c0_i32 = arith.constant 0 : i32
    %c0_i32_0 = arith.constant 0 : i32
    return %c0_i32, %arg1 : i32, i32
  }
  func.func @transform_3(%arg0: i32, %arg1: i32) -> (i32, i32) {
    %c0_i32 = arith.constant 0 : i32
    return %arg0, %arg1 : i32, i32
  }
}

module attributes {stable_mosaic.version = 11 : i64} {
  func.func @_mm_single_kernel(%arg0: i32, %arg1: i32, %arg2: memref<56x1280xbf16, #tpu.memory_space<vmem>>, %arg3: memref<1280x128xbf16, #tpu.memory_space<vmem>>, %arg4: memref<1x128xf32, #tpu.memory_space<vmem>>, %arg5: memref<56x128xbf16, #tpu.memory_space<vmem>>) attributes {dimension_semantics = [#tpu.dimension_semantics<parallel>, #tpu.dimension_semantics<parallel>], iteration_bounds = array<i64: 1, 1>, scalar_prefetch = 0 : i64, scratch_operands = 0 : i64, tpu.core_type = #tpu.core_type<tc>, window_params = [{transform_indices = @transform_0, window_bounds = array<i64: 56, 1280>}, {transform_indices = @transform_1, window_bounds = array<i64: 1280, 128>}, {transform_indices = @transform_2, window_bounds = array<i64: 1, 128>}, {transform_indices = @transform_3, window_bounds = array<i64: 56, 128>}]} {
    %c0 = arith.constant 0 : index
    %c0_0 = arith.constant 0 : index
    %0 = vector.load %arg2[%c0, %c0_0] : memref<56x1280xbf16, #tpu.memory_space<vmem>>, vector<56x1280xbf16>
    %c0_1 = arith.constant 0 : index
    %c0_2 = arith.constant 0 : index
    %1 = vector.load %arg3[%c0_1, %c0_2] : memref<1280x128xbf16, #tpu.memory_space<vmem>>, vector<1280x128xbf16>
    %cst = arith.constant dense<0.000000e+00> : vector<56x128xf32>
    %2 = tpu.matmul %0, %1, %cst {dimension_numbers = #tpu.dot_dimension_numbers<[1], [0], [0], [1], [0, 0, 1, 1], [], []>} : vector<56x1280xbf16>, vector<1280x128xbf16>, vector<56x128xf32> -> vector<56x128xf32>
    %c0_3 = arith.constant 0 : index
    %c0_4 = arith.constant 0 : index
    %3 = vector.load %arg4[%c0_3, %c0_4] : memref<1x128xf32, #tpu.memory_space<vmem>>, vector<1x128xf32>
    %4 = vector.broadcast %3 : vector<1x128xf32> to vector<56x128xf32>
    %5 = arith.addf %2, %4 : vector<56x128xf32>
    %cst_5 = arith.constant 0.000000e+00 : f32
    %6 = vector.broadcast %cst_5 : f32 to vector<56x128xf32>
    %7 = arith.maximumf %5, %6 : vector<56x128xf32>
    %8 = arith.truncf %7 : vector<56x128xf32> to vector<56x128xbf16>
    %c0_6 = arith.constant 0 : index
    %c0_7 = arith.constant 0 : index
    %9 = vector.load %arg5[%c0_6, %c0_7] : memref<56x128xbf16, #tpu.memory_space<vmem>>, vector<56x128xbf16>
    tpu.vector_store %arg5[%c0_6, %c0_7], %8 {strides = array<i32>} : memref<56x128xbf16, #tpu.memory_space<vmem>>, vector<56x128xbf16>,
    return
  }
  func.func @transform_0(%arg0: i32, %arg1: i32) -> (i32, i32) {
    %c0_i32 = arith.constant 0 : i32
    %c0_i32_0 = arith.constant 0 : i32
    return %arg0, %c0_i32 : i32, i32
  }
  func.func @transform_1(%arg0: i32, %arg1: i32) -> (i32, i32) {
    %c0_i32 = arith.constant 0 : i32
    %c0_i32_0 = arith.constant 0 : i32
    return %c0_i32, %arg1 : i32, i32
  }
  func.func @transform_2(%arg0: i32, %arg1: i32) -> (i32, i32) {
    %c0_i32 = arith.constant 0 : i32
    %c0_i32_0 = arith.constant 0 : i32
    return %c0_i32, %arg1 : i32, i32
  }
  func.func @transform_3(%arg0: i32, %arg1: i32) -> (i32, i32) {
    %c0_i32 = arith.constant 0 : i32
    return %arg0, %arg1 : i32, i32
  }
}

</mosaic_0001>

<llo_original>
// kernel: stem_fwd.12
$region0: #{stem_fwd.12}
  #allocation0 [shape = 'u32[]', space=smem, size = 0x4, offset = 0x4, fixed_abs, tag = 'smem constant byte address 0x4 - core index']
  #allocation1 [shape = 'u32[144,128]{1,0:T(1,128)}', space=vmem, size = 0x12000, scoped, tag = 'internal scratch']
  %s0 = inlined_call_operand.vmem [shape: bf16[1536,128], index: 0, kind: input, shape index: {}]
  %s1 = inlined_call_operand.vmem [shape: bf16[128,128], index: 1, kind: input, shape index: {}]
  %s2 = inlined_call_operand.vmem [shape: f32[1,128], index: 2, kind: input, shape index: {}]
  %s3 = inlined_call_operand.vmem [shape: bf16[1536,128], index: 3, kind: output, shape index: {}]
  %s4 = sld [smem:[#allocation0]]
  $region45: #{stem_fwd.12} parent=0
    _
  %s6 = ssub.s32 1, %s4
  %s7 = scalar_select 0, %s6, %s4
  loop: start=0, step=1, limit=8
  $region2: #{stem_fwd.12} parent=0 // loop_pre_header
    _
  $region3: #{stem_fwd.12} parent=0 // loop_header
    %s9 = sphi 0, %s13
    %p10 = scmp.ge.s32.totalorder %s9, 8
    %s16 = sphi 0, %s28
    %s17 = sphi 0, %s24
    %s18 = sphi 0, %s16
    %s19 = sphi 0, %s17
    %s20 = sphi 0, %s18
    %s21 = sphi 0, %s19
    %s31 = sphi 0, %s33
    %s34 = sphi 0, %s31
    %s35 = sphi 0, %s34
    %s51 = sphi 0, %s35
    %s57 = sphi 0, %s59
    %s60 = sphi 0, %s57
    %s61 = sphi 0, %s60
    %s77 = sphi 0, %s61
    %s83 = sphi 0, %s85
    %s86 = sphi 0, %s83
    %s87 = sphi 0, %s86
    %s103 = sphi 0, %s87
    %s111 = sphi 0, %s113
    %s114 = sphi 0, %s111
    %s115 = sphi 0, %s114
    %s131 = sphi 0, %s115
  $region4: #{stem_fwd.12} parent=0 // loop_header_branch
    %12 = sbr.rel (%p10) target = $region8
  $region5: #{stem_fwd.12} parent=0 // loop_body
    %s14 = ssub.s32 %s9, 1
    %s15 = ssub.s32 %s9, 2
    %s22 = sadd.s32 1, %s17
    %p23 = scmp.ge.s32.totalorder %s22, 1
    %s24 = scalar_select %p23, 0, %s22
    %s25 = sadd.s32 1, %s16
    %s26 = scalar_select %p23, %s25, %s16
    %p27 = scmp.ge.s32.totalorder %s26, 6
    %s28 = scalar_select %p27, 0, %s26
    %s29 = ssub.s32 %s16, %s28
    %p30 = scmp.eq.s32.totalorder %s29, 0
    %s32 = sadd.s32 %s31, 1
    %s33 = scalar_select %p30, %s31, %s32
    %p36 = pneg %p30
    %p37 = scmp.eq.s32.totalorder %s9, 5
    %p38 = por %p36, %p37
    %p39 = scmp.ne.s32.totalorder %s31, %s34
    %p40 = scmp.eq.s32.totalorder %s9, 0
    %p41 = por %p39, %p40
    %p42 = scmp.ne.s32.totalorder %s31, %s34
    %p43 = scmp.eq.s32.totalorder %s14, 5
    %p44 = por %p42, %p43
    %p45 = scmp.ne.s32.totalorder %s34, %s35
    %p46 = scmp.eq.s32.totalorder %s14, 0
    %p47 = por %p45, %p46
    %p48 = scmp.ne.s32.totalorder %s34, %s35
    %p49 = scmp.eq.s32.totalorder %s15, 5
    %p50 = por %p48, %p49
    %p52 = scmp.ne.s32.totalorder %s35, %s51
    %p53 = scmp.eq.s32.totalorder %s15, 0
    %p54 = por %p52, %p53
    %s55 = ssub.s32 %s17, %s24
    %p56 = scmp.eq.s32.totalorder %s55, 0
    %s58 = sadd.s32 %s57, 1
    %s59 = scalar_select %p56, %s57, %s58
    %p62 = pneg %p56
    %p63 = scmp.eq.s32.totalorder %s9, 5
    %p64 = por %p62, %p63
    %p65 = scmp.ne.s32.totalorder %s57, %s60
    %p66 = scmp.eq.s32.totalorder %s9, 0
    %p67 = por %p65, %p66
    %p68 = scmp.ne.s32.totalorder %s57, %s60
    %p69 = scmp.eq.s32.totalorder %s14, 5
    %p70 = por %p68, %p69
    %p71 = scmp.ne.s32.totalorder %s60, %s61
    %p72 = scmp.eq.s32.totalorder %s14, 0
    %p73 = por %p71, %p72
    %p74 = scmp.ne.s32.totalorder %s60, %s61
    %p75 = scmp.eq.s32.totalorder %s15, 5
    %p76 = por %p74, %p75
    %p78 = scmp.ne.s32.totalorder %s61, %s77
    %p79 = scmp.eq.s32.totalorder %s15, 0
    %p80 = por %p78, %p79
    %s81 = ssub.s32 %s17, %s24
    %p82 = scmp.eq.s32.totalorder %s81, 0
    %s84 = sadd.s32 %s83, 1
    %s85 = scalar_select %p82, %s83, %s84
    %p88 = pneg %p82
    %p89 = scmp.eq.s32.totalorder %s9, 5
    %p90 = por %p88, %p89
    %p91 = scmp.ne.s32.totalorder %s83, %s86
    %p92 = scmp.eq.s32.totalorder %s9, 0
    %p93 = por %p91, %p92
    %p94 = scmp.ne.s32.totalorder %s83, %s86
    %p95 = scmp.eq.s32.totalorder %s14, 5
    %p96 = por %p94, %p95
    %p97 = scmp.ne.s32.totalorder %s86, %s87
    %p98 = scmp.eq.s32.totalorder %s14, 0
    %p99 = por %p97, %p98
    %p100 = scmp.ne.s32.totalorder %s86, %s87
    %p101 = scmp.eq.s32.totalorder %s15, 5
    %p102 = por %p100, %p101
    %p104 = scmp.ne.s32.totalorder %s87, %s103
    %p105 = scmp.eq.s32.totalorder %s15, 0
    %p106 = por %p104, %p105
    %s107 = ssub.s32 %s16, %s28
    %s108 = ssub.s32 %s17, %s24
    %s109 = sor.u32 %s107, %s108
    %p110 = scmp.eq.s32.totalorder %s109, 0
    %s112 = sadd.s32 %s111, 1
    %s113 = scalar_select %p110, %s111, %s112
    %p116 = pneg %p110
    %p117 = scmp.eq.s32.totalorder %s9, 5
    %p118 = por %p116, %p117
    %p119 = scmp.ne.s32.totalorder %s111, %s114
    %p120 = scmp.eq.s32.totalorder %s9, 0
    %p121 = por %p119, %p120
    %p122 = scmp.ne.s32.totalorder %s111, %s114
    %p123 = scmp.eq.s32.totalorder %s14, 5
    %p124 = por %p122, %p123
    %p125 = scmp.ne.s32.totalorder %s114, %s115
    %p126 = scmp.eq.s32.totalorder %s14, 0
    %p127 = por %p125, %p126
    %p128 = scmp.ne.s32.totalorder %s114, %s115
    %p129 = scmp.eq.s32.totalorder %s15, 5
    %p130 = por %p128, %p129
    %p132 = scmp.ne.s32.totalorder %s115, %s131
    %p133 = scmp.eq.s32.totalorder %s15, 0
    %p134 = por %p132, %p133
    %p135 = scmp.le.s32.totalorder 1, %s9
    %p136 = scmp.lt.s32.totalorder %s9, 7
    %p137 = pnand %p135, %p136
    %p138 = pneg %p137
    // Predicated region
    $region9: #{stem_fwd.12} parent=5 // pred_check
      _
    $region10: #{stem_fwd.12} parent=5 // pred_check_branch
      %140 = sbr.rel (%p137) target = $region12
    $region11: #{stem_fwd.12} parent=5 // pred_region
      %s141 = ssub.s32 %s9, 1
      // Predicated region
      $region13: #{stem_fwd.12} parent=11 // pred_check
        %p142 = pneg %p73
      $region14: #{stem_fwd.12} parent=11 // pred_check_branch
        %144 = sbr.rel (%p142) target = $region16
      $region15: #{stem_fwd.12} parent=11 // pred_region
        %p145 = scmp.lt.s32.totalorder %s19, 0
        %s146 = scalar_select %p145, %s19, 0
        %s147 = smul.addr %s146, 4
        %s148 = scalar_lea.vmem %s1, %s147
      $region16: #{stem_fwd.12} parent=11 // pred_fallthru
        _
      // Predicated region
      $region17: #{stem_fwd.12} parent=11 // pred_check
        %p149 = pneg %p99
      $region18: #{stem_fwd.12} parent=11 // pred_check_branch
        %151 = sbr.rel (%p149) target = $region20
      $region19: #{stem_fwd.12} parent=11 // pred_region
        %p152 = scmp.lt.s32.totalorder %s19, 0
        %s153 = scalar_select %p152, %s19, 0
        %s154 = scalar_lea.vmem %s2, %s153
      $region20: #{stem_fwd.12} parent=11 // pred_fallthru
        _
    $region12: #{stem_fwd.12} parent=5 // pred_fallthru
      _
    %p155 = scmp.lt.s32.totalorder %s9, 6
    // Predicated region
    $region21: #{stem_fwd.12} parent=5 // pred_check
      %p156 = pneg %p155
    $region22: #{stem_fwd.12} parent=5 // pred_check_branch
      %158 = sbr.rel (%p156) target = $region24
    $region23: #{stem_fwd.12} parent=5 // pred_region
      // Predicated region
      $region25: #{stem_fwd.12} parent=23 // pred_check
        %p159 = pneg %p41
      $region26: #{stem_fwd.12} parent=23 // pred_check_branch
        %161 = sbr.rel (%p159) target = $region28
      $region27: #{stem_fwd.12} parent=23 // pred_region
        %s162 = smul.u32 32, %s16
        %p163 = scmp.lt.s32.totalorder %s162, 191
        %s164 = scalar_select %p163, %s162, 191
        %s165 = smul.addr %s164, 4
        %s166 = scalar_lea.vmem %s0, %s165
        %s167 = smul.u32 32, %s16
      $region28: #{stem_fwd.12} parent=23 // pred_fallthru
        _
    $region24: #{stem_fwd.12} parent=5 // pred_fallthru
      _
    %p168 = scmp.le.s32.totalorder 1, %s9
    %p169 = scmp.lt.s32.totalorder %s9, 7
    %p170 = pnand %p168, %p169
    %p171 = pneg %p170
    // Predicated region
    $region29: #{stem_fwd.12} parent=5 // pred_check
      _
    $region30: #{stem_fwd.12} parent=5 // pred_check_branch
      %173 = sbr.rel (%p170) target = $region32
    $region31: #{stem_fwd.12} parent=5 // pred_region
      %s174 = ssub.s32 %s9, 1
      %s175 = smul.u32 32, %s18
      %p176 = scmp.lt.s32.totalorder %s175, 191
      %s177 = scalar_select %p176, %s175, 191
      %s178 = smul.addr %s177, 4
      %s179 = scalar_lea.vmem %s0, %s178
      %p180 = pneg %p47
      %p181 = pneg %p44
      %p182 = scmp.lt.s32.totalorder %s19, 0
      %s183 = scalar_select %p182, %s19, 0
      %s184 = smul.addr %s183, 4
      %s185 = scalar_lea.vmem %s1, %s184
      %p186 = pneg %p73
      %p187 = pneg %p70
      %p188 = scmp.lt.s32.totalorder %s19, 0
      %s189 = scalar_select %p188, %s19, 0
      %s190 = scalar_lea.vmem %s2, %s189
      %p191 = pneg %p99
      %p192 = pneg %p96
      %p193 = pneg %p127
      %p194 = pneg %p124
      %s195 = smul.u32 32, %s18
      %p196 = scmp.lt.s32.totalorder %s195, 191
      %s197 = scalar_select %p196, %s195, 191
      %p198 = scmp.lt.s32.totalorder %s19, 0
      %s199 = scalar_select %p198, %s19, 0
      %s200 = sadd.s32 %s199, %s197
      %s201 = smul.addr %s200, 4
      %s202 = scalar_lea.vmem %s3, %s201
      %s203 = smul.u32 32, %s18
      %p204 = scmp.lt.s32.totalorder %s203, 191
      %s205 = scalar_select %p204, %s203, 191
      %s206 = smul.addr %s205, 4
      %s207 = scalar_lea.vmem %s0, %s206
      %s208 = smul.u32 32, %s18
      %p209 = scmp.lt.s32.totalorder %s19, 0
      %s210 = scalar_select %p209, %s19, 0
      %s211 = smul.addr %s210, 4
      %s212 = scalar_lea.vmem %s1, %s211
      %p213 = scmp.lt.s32.totalorder %s19, 0
      %s214 = scalar_select %p213, %s19, 0
      %s215 = scalar_lea.vmem %s2, %s214
      %s216 = smul.u32 32, %s18
      %p217 = scmp.lt.s32.totalorder %s216, 191
      %s218 = scalar_select %p217, %s216, 191
      %p219 = scmp.lt.s32.totalorder %s19, 0
      %s220 = scalar_select %p219, %s19, 0
      %s221 = sadd.s32 %s220, %s218
      %s222 = smul.addr %s221, 4
      %s223 = scalar_lea.vmem %s3, %s222
      %s224 = smul.u32 32, %s18
      %v226 = vld [vmem:[%s207] sm:$0xf]
      %v227 = vld [vmem:[%s207 + $0x4] sm:$0xf]
      %v228 = vld [vmem:[%s207 + $0x8] sm:$0xf]
      %v229 = vld [vmem:[%s207 + $0xc] sm:$0xf]
      %v230 = vld [vmem:[%s207 + $0x10] sm:$0xf]
      %v231 = vld [vmem:[%s207 + $0x14] sm:$0xf]
      %v232 = vld [vmem:[%s207 + $0x18] sm:$0xf]
      %v233 = vld [vmem:[%s207 + $0x1c] sm:$0xf]
      %v234 = vld [vmem:[%s207 + $0x20] sm:$0xf]
      %v235 = vld [vmem:[%s207 + $0x24] sm:$0xf]
      %v236 = vld [vmem:[%s207 + $0x28] sm:$0xf]
      %v237 = vld [vmem:[%s207 + $0x2c] sm:$0xf]
      %v238 = vld [vmem:[%s207 + $0x30] sm:$0xf]
      %v239 = vld [vmem:[%s207 + $0x34] sm:$0xf]
      %v240 = vld [vmem:[%s207 + $0x38] sm:$0xf]
      %v241 = vld [vmem:[%s207 + $0x3c] sm:$0xf]
      %v242 = vld [vmem:[%s207 + $0x40] sm:$0xf]
      %v243 = vld [vmem:[%s207 + $0x44] sm:$0xf]
      %v244 = vld [vmem:[%s207 + $0x48] sm:$0xf]
      %v245 = vld [vmem:[%s207 + $0x4c] sm:$0xf]
      %v246 = vld [vmem:[%s207 + $0x50] sm:$0xf]
      %v247 = vld [vmem:[%s207 + $0x54] sm:$0xf]
      %v248 = vld [vmem:[%s207 + $0x58] sm:$0xf]
      %v249 = vld [vmem:[%s207 + $0x5c] sm:$0xf]
      %v250 = vld [vmem:[%s207 + $0x60] sm:$0xf]
      %v251 = vld [vmem:[%s207 + $0x64] sm:$0xf]
      %v252 = vld [vmem:[%s207 + $0x68] sm:$0xf]
      %v253 = vld [vmem:[%s207 + $0x6c] sm:$0xf]
      %v254 = vld [vmem:[%s207 + $0x70] sm:$0xf]
      %v255 = vld [vmem:[%s207 + $0x74] sm:$0xf]
      %v256 = vld [vmem:[%s207 + $0x78] sm:$0xf]
      %v257 = vld [vmem:[%s207 + $0x7c] sm:$0xf]
      %v258 = vld [vmem:[%s212] sm:$0xf]
      %v259 = vld [vmem:[%s212 + $0x4] sm:$0xf]
      %v260 = vld [vmem:[%s212 + $0x8] sm:$0xf]
      %v261 = vld [vmem:[%s212 + $0xc] sm:$0xf]
      %v262 = vld [vmem:[%s212 + $0x10] sm:$0xf]
      %v263 = vld [vmem:[%s212 + $0x14] sm:$0xf]
      %v264 = vld [vmem:[%s212 + $0x18] sm:$0xf]
      %v265 = vld [vmem:[%s212 + $0x1c] sm:$0xf]
      %v266 = vld [vmem:[%s212 + $0x20] sm:$0xf]
      %v267 = vld [vmem:[%s212 + $0x24] sm:$0xf]
      %v268 = vld [vmem:[%s212 + $0x28] sm:$0xf]
      %v269 = vld [vmem:[%s212 + $0x2c] sm:$0xf]
      %v270 = vld [vmem:[%s212 + $0x30] sm:$0xf]
      %v271 = vld [vmem:[%s212 + $0x34] sm:$0xf]
      %v272 = vld [vmem:[%s212 + $0x38] sm:$0xf]
      %v273 = vld [vmem:[%s212 + $0x3c] sm:$0xf]
      %v274 = vld [vmem:[%s215] sm:$0x1]
      %v276 = vlaneseq
      %v277 = vshrl.u32 %v276, 7
      %v278 = vsub.s32 0, %v277
      %v279 = vrot.slane %v274, %v278
      %v313 = vunpack.c.l.b16 %v226
      %v314 = vunpack.c.l.b16 %v227
      %v315 = vunpack.c.l.b16 %v228
      %v316 = vunpack.c.l.b16 %v229
      %v317 = vunpack.c.l.b16 %v230
      %v318 = vunpack.c.l.b16 %v231
      %v319 = vunpack.c.l.b16 %v232
      %v320 = vunpack.c.l.b16 %v233
      %v321 = vunpack.c.l.b16 %v234
      %v322 = vunpack.c.l.b16 %v235
      %v323 = vunpack.c.l.b16 %v236
      %v324 = vunpack.c.l.b16 %v237
      %v325 = vunpack.c.l.b16 %v238
      %v326 = vunpack.c.l.b16 %v239
      %v327 = vunpack.c.l.b16 %v240
      %v328 = vunpack.c.l.b16 %v241
      %v329 = vunpack.c.l.b16 %v242
      %v330 = vunpack.c.l.b16 %v243
      %v331 = vunpack.c.l.b16 %v244
      %v332 = vunpack.c.l.b16 %v245
      %v333 = vunpack.c.l.b16 %v246
      %v334 = vunpack.c.l.b16 %v247
      %v335 = vunpack.c.l.b16 %v248
      %v336 = vunpack.c.l.b16 %v249
      %v337 = vunpack.c.l.b16 %v250
      %v338 = vunpack.c.l.b16 %v251
      %v339 = vunpack.c.l.b16 %v252
      %v340 = vunpack.c.l.b16 %v253
      %v341 = vunpack.c.l.b16 %v254
      %v342 = vunpack.c.l.b16 %v255
      %v343 = vunpack.c.l.b16 %v256
      %v344 = vunpack.c.l.b16 %v257
      %v345 = vpack.c.b16 %v314, %v313
      %v346 = vpack.c.b16 %v316, %v315
      %v347 = vpack.c.b16 %v318, %v317
      %v348 = vpack.c.b16 %v320, %v319
      %v349 = vpack.c.b16 %v322, %v321
      %v350 = vpack.c.b16 %v324, %v323
      %v351 = vpack.c.b16 %v326, %v325
      %v352 = vpack.c.b16 %v328, %v327
      %v353 = vpack.c.b16 %v330, %v329
      %v354 = vpack.c.b16 %v332, %v331
      %v355 = vpack.c.b16 %v334, %v333
      %v356 = vpack.c.b16 %v336, %v335
      %v357 = vpack.c.b16 %v338, %v337
      %v358 = vpack.c.b16 %v340, %v339
      %v359 = vpack.c.b16 %v342, %v341
      %v360 = vpack.c.b16 %v344, %v343
      %v393 = vunpack.c.l.b16 %v258
      %v394 = vunpack.c.l.b16 %v259
      %v395 = vunpack.c.l.b16 %v260
      %v396 = vunpack.c.l.b16 %v261
      %v397 = vunpack.c.l.b16 %v262
      %v398 = vunpack.c.l.b16 %v263
      %v399 = vunpack.c.l.b16 %v264
      %v400 = vunpack.c.l.b16 %v265
      %v401 = vunpack.c.l.b16 %v266
      %v402 = vunpack.c.l.b16 %v267
      %v403 = vunpack.c.l.b16 %v268
      %v404 = vunpack.c.l.b16 %v269
      %v405 = vunpack.c.l.b16 %v270
      %v406 = vunpack.c.l.b16 %v271
      %v407 = vunpack.c.l.b16 %v272
      %v408 = vunpack.c.l.b16 %v273
      %v409 = vpack.c.b16 %v394, %v393
      %v410 = vpack.c.b16 %v396, %v395
      %v411 = vpack.c.b16 %v398, %v397
      %v412 = vpack.c.b16 %v400, %v399
      %v413 = vpack.c.b16 %v402, %v401
      %v414 = vpack.c.b16 %v404, %v403
      %v415 = vpack.c.b16 %v406, %v405
      %v416 = vpack.c.b16 %v408, %v407
      %425 = vmatprep.subr.bf16.mxu0 0
      %426 = vmatpush1.bf16.msra.mxu0 %v416
      %427 = vmatprep.subr.bf16.mxu0 0
      %428 = vmatpush1.bf16.msra.mxu0 %v415
      %429 = vmatprep.subr.bf16.mxu0 0
      %430 = vmatpush1.bf16.msra.mxu0 %v414
      %431 = vmatprep.subr.bf16.mxu0 0
      %432 = vmatpush1.bf16.msra.mxu0 %v413
      %433 = vmatprep.subr.bf16.mxu0 0
      %434 = vmatpush1.bf16.msra.mxu0 %v412
      %435 = vmatprep.subr.bf16.mxu0 0
      %436 = vmatpush1.bf16.msra.mxu0 %v411
      %437 = vmatprep.subr.bf16.mxu0 0
      %438 = vmatpush1.bf16.msra.mxu0 %v410
      %439 = vmatprep.subr.bf16.mxu0 0
      %440 = vmatpush1.bf16.msra.mxu0 %v409
      %441 = vmatprep.subr.bf16.mxu0 0
      %442 = vmatpush2.bf16.msra.mxu0 0
      %443 = vmatprep.subr.bf16.mxu0 0
      %444 = vmatpush2.bf16.msra.mxu0 0
      %445 = vmatprep.subr.bf16.mxu0 0
      %446 = vmatpush2.bf16.msra.mxu0 0
      %447 = vmatprep.subr.bf16.mxu0 0
      %448 = vmatpush2.bf16.msra.mxu0 0
      %449 = vmatprep.subr.bf16.mxu0 0
      %450 = vmatpush2.bf16.msra.mxu0 0
      %451 = vmatprep.subr.bf16.mxu0 0
      %452 = vmatpush2.bf16.msra.mxu0 0
      %453 = vmatprep.subr.bf16.mxu0 0
      %454 = vmatpush2.bf16.msra.mxu0 0
      %455 = vmatprep.subr.bf16.mxu0 0
      %456 = vmatpush2.bf16.msra.mxu0 0
      %457 = vmatprep.mubr.bf16.mxu0 0
      %458 = vmatmul.mubr.bf16.gmra.mxu0 %v345
      %v459 = vpop.f32.mrf.mxu0
      %v460 = vadd.f32 %v279, %v459
      %v461 = vpop.f32.mrf.mxu0
      %v462 = vpop.f32.mrf.mxu0
      %v463 = vadd.f32 %v279, %v462
      %v464 = vpop.f32.mrf.mxu0
      %465 = vmatprep.mubr.bf16.mxu0 0
      %466 = vmatmul.mubr.bf16.gmra.mxu0 %v346
      %v467 = vpop.f32.mrf.mxu0
      %v468 = vadd.f32 %v279, %v467
      %v469 = vpop.f32.mrf.mxu0
      %v470 = vpop.f32.mrf.mxu0
      %v471 = vadd.f32 %v279, %v470
      %v472 = vpop.f32.mrf.mxu0
      %473 = vmatprep.mubr.bf16.mxu0 0
      %474 = vmatmul.mubr.bf16.gmra.mxu0 %v347
      %v475 = vpop.f32.mrf.mxu0
      %v476 = vadd.f32 %v279, %v475
      %v477 = vpop.f32.mrf.mxu0
      %v478 = vpop.f32.mrf.mxu0
      %v479 = vadd.f32 %v279, %v478
      %v480 = vpop.f32.mrf.mxu0
      %481 = vmatprep.mubr.bf16.mxu0 0
      %482 = vmatmul.mubr.bf16.gmra.mxu0 %v348
      %v483 = vpop.f32.mrf.mxu0
      %v484 = vadd.f32 %v279, %v483
      %v485 = vpop.f32.mrf.mxu0
      %v486 = vpop.f32.mrf.mxu0
      %v487 = vadd.f32 %v279, %v486
      %v488 = vpop.f32.mrf.mxu0
      %489 = vmatprep.mubr.bf16.mxu0 0
      %490 = vmatmul.mubr.bf16.gmra.mxu0 %v349
      %v491 = vpop.f32.mrf.mxu0
      %v492 = vadd.f32 %v279, %v491
      %v493 = vpop.f32.mrf.mxu0
      %v494 = vpop.f32.mrf.mxu0
      %v495 = vadd.f32 %v279, %v494
      %v496 = vpop.f32.mrf.mxu0
      %497 = vmatprep.mubr.bf16.mxu0 0
      %498 = vmatmul.mubr.bf16.gmra.mxu0 %v350
      %v499 = vpop.f32.mrf.mxu0
      %v500 = vadd.f32 %v279, %v499
      %v501 = vpop.f32.mrf.mxu0
      %v502 = vpop.f32.mrf.mxu0
      %v503 = vadd.f32 %v279, %v502
      %v504 = vpop.f32.mrf.mxu0
      %505 = vmatprep.mubr.bf16.mxu0 0
      %506 = vmatmul.mubr.bf16.gmra.mxu0 %v351
      %v507 = vpop.f32.mrf.mxu0
      %v508 = vadd.f32 %v279, %v507
      %v509 = vpop.f32.mrf.mxu0
      %v510 = vpop.f32.mrf.mxu0
      %v511 = vadd.f32 %v279, %v510
      %v512 = vpop.f32.mrf.mxu0
      %513 = vmatprep.mubr.bf16.mxu0 0
      %514 = vmatmul.mubr.bf16.gmra.mxu0 %v352
      %v515 = vpop.f32.mrf.mxu0
      %v516 = vadd.f32 %v279, %v515
      %v517 = vpop.f32.mrf.mxu0
      %v518 = vpop.f32.mrf.mxu0
      %v519 = vadd.f32 %v279, %v518
      %v520 = vpop.f32.mrf.mxu0
      %521 = vmatprep.mubr.bf16.mxu0 0
      %522 = vmatmul.mubr.bf16.gmra.mxu0 %v353
      %v523 = vpop.f32.mrf.mxu0
      %v524 = vadd.f32 %v279, %v523
      %v525 = vpop.f32.mrf.mxu0
      %v526 = vpop.f32.mrf.mxu0
      %v527 = vadd.f32 %v279, %v526
      %v528 = vpop.f32.mrf.mxu0
      %529 = vmatprep.mubr.bf16.mxu0 0
      %530 = vmatmul.mubr.bf16.gmra.mxu0 %v354
      %v531 = vpop.f32.mrf.mxu0
      %v532 = vadd.f32 %v279, %v531
      %v533 = vpop.f32.mrf.mxu0
      %v534 = vpop.f32.mrf.mxu0
      %v535 = vadd.f32 %v279, %v534
      %v536 = vpop.f32.mrf.mxu0
      %537 = vmatprep.mubr.bf16.mxu0 0
      %538 = vmatmul.mubr.bf16.gmra.mxu0 %v355
      %v539 = vpop.f32.mrf.mxu0
      %v540 = vadd.f32 %v279, %v539
      %v541 = vpop.f32.mrf.mxu0
      %v542 = vpop.f32.mrf.mxu0
      %v543 = vadd.f32 %v279, %v542
      %v544 = vpop.f32.mrf.mxu0
      %545 = vmatprep.mubr.bf16.mxu0 0
      %546 = vmatmul.mubr.bf16.gmra.mxu0 %v356
      %v547 = vpop.f32.mrf.mxu0
      %v548 = vadd.f32 %v279, %v547
      %v549 = vpop.f32.mrf.mxu0
      %v550 = vpop.f32.mrf.mxu0
      %v551 = vadd.f32 %v279, %v550
      %v552 = vpop.f32.mrf.mxu0
      %553 = vmatprep.mubr.bf16.mxu0 0
      %554 = vmatmul.mubr.bf16.gmra.mxu0 %v357
      %v555 = vpop.f32.mrf.mxu0
      %v556 = vadd.f32 %v279, %v555
      %v557 = vpop.f32.mrf.mxu0
      %v558 = vpop.f32.mrf.mxu0
      %v559 = vadd.f32 %v279, %v558
      %v560 = vpop.f32.mrf.mxu0
      %561 = vmatprep.mubr.bf16.mxu0 0
      %562 = vmatmul.mubr.bf16.gmra.mxu0 %v358
      %v563 = vpop.f32.mrf.mxu0
      %v564 = vadd.f32 %v279, %v563
      %v565 = vpop.f32.mrf.mxu0
      %v566 = vpop.f32.mrf.mxu0
      %v567 = vadd.f32 %v279, %v566
      %v568 = vpop.f32.mrf.mxu0
      %569 = vmatprep.mubr.bf16.mxu0 0
      %570 = vmatmul.mubr.bf16.gmra.mxu0 %v359
      %v571 = vpop.f32.mrf.mxu0
      %v572 = vadd.f32 %v279, %v571
      %v573 = vpop.f32.mrf.mxu0
      %v574 = vpop.f32.mrf.mxu0
      %v575 = vadd.f32 %v279, %v574
      %v576 = vpop.f32.mrf.mxu0
      %577 = vmatprep.mubr.bf16.mxu0 0
      %578 = vmatmul.mubr.bf16.gmra.mxu0 %v360
      %v579 = vpop.f32.mrf.mxu0
      %v580 = vadd.f32 %v279, %v579
      %v581 = vpop.f32.mrf.mxu0
      %v582 = vpop.f32.mrf.mxu0
      %v583 = vadd.f32 %v279, %v582
      %v584 = vpop.f32.mrf.mxu0
      %585 = vdwg.mxu0
      %v586 = vmax.f32 %v460, 0.0
      %v587 = vmax.f32 %v463, 0.0
      %v588 = vmax.f32 %v468, 0.0
      %v589 = vmax.f32 %v471, 0.0
      %v590 = vmax.f32 %v476, 0.0
      %v591 = vmax.f32 %v479, 0.0
      %v592 = vmax.f32 %v484, 0.0
      %v593 = vmax.f32 %v487, 0.0
      %v594 = vmax.f32 %v492, 0.0
      %v595 = vmax.f32 %v495, 0.0
      %v596 = vmax.f32 %v500, 0.0
      %v597 = vmax.f32 %v503, 0.0
      %v598 = vmax.f32 %v508, 0.0
      %v599 = vmax.f32 %v511, 0.0
      %v600 = vmax.f32 %v516, 0.0
      %v601 = vmax.f32 %v519, 0.0
      %v602 = vmax.f32 %v524, 0.0
      %v603 = vmax.f32 %v527, 0.0
      %v604 = vmax.f32 %v532, 0.0
      %v605 = vmax.f32 %v535, 0.0
      %v606 = vmax.f32 %v540, 0.0
      %v607 = vmax.f32 %v543, 0.0
      %v608 = vmax.f32 %v548, 0.0
      %v609 = vmax.f32 %v551, 0.0
      %v610 = vmax.f32 %v556, 0.0
      %v611 = vmax.f32 %v559, 0.0
      %v612 = vmax.f32 %v564, 0.0
      %v613 = vmax.f32 %v567, 0.0
      %v614 = vmax.f32 %v572, 0.0
      %v615 = vmax.f32 %v575, 0.0
      %v616 = vmax.f32 %v580, 0.0
      %v617 = vmax.f32 %v583, 0.0
      %v618 = vpack.c.bf16 %v587, %v586
      %v619 = vpack.c.bf16 %v589, %v588
      %v620 = vpack.c.bf16 %v591, %v590
      %v621 = vpack.c.bf16 %v593, %v592
      %v622 = vpack.c.bf16 %v595, %v594
      %v623 = vpack.c.bf16 %v597, %v596
      %v624 = vpack.c.bf16 %v599, %v598
      %v625 = vpack.c.bf16 %v601, %v600
      %v626 = vpack.c.bf16 %v603, %v602
      %v627 = vpack.c.bf16 %v605, %v604
      %v628 = vpack.c.bf16 %v607, %v606
      %v629 = vpack.c.bf16 %v609, %v608
      %v630 = vpack.c.bf16 %v611, %v610
      %v631 = vpack.c.bf16 %v613, %v612
      %v632 = vpack.c.bf16 %v615, %v614
      %v633 = vpack.c.bf16 %v617, %v616
      %v650 = vunpack.c.l.b16 %v618
      %v651 = vunpack.c.h.b16 %v618
      %v652 = vunpack.c.l.b16 %v619
      %v653 = vunpack.c.h.b16 %v619
      %v654 = vunpack.c.l.b16 %v620
      %v655 = vunpack.c.h.b16 %v620
      %v656 = vunpack.c.l.b16 %v621
      %v657 = vunpack.c.h.b16 %v621
      %v658 = vunpack.c.l.b16 %v622
      %v659 = vunpack.c.h.b16 %v622
      %v660 = vunpack.c.l.b16 %v623
      %v661 = vunpack.c.h.b16 %v623
      %v662 = vunpack.c.l.b16 %v624
      %v663 = vunpack.c.h.b16 %v624
      %v664 = vunpack.c.l.b16 %v625
      %v665 = vunpack.c.h.b16 %v625
      %v666 = vunpack.c.l.b16 %v626
      %v667 = vunpack.c.h.b16 %v626
      %v668 = vunpack.c.l.b16 %v627
      %v669 = vunpack.c.h.b16 %v627
      %v670 = vunpack.c.l.b16 %v628
      %v671 = vunpack.c.h.b16 %v628
      %v672 = vunpack.c.l.b16 %v629
      %v673 = vunpack.c.h.b16 %v629
      %v674 = vunpack.c.l.b16 %v630
      %v675 = vunpack.c.h.b16 %v630
      %v676 = vunpack.c.l.b16 %v631
      %v677 = vunpack.c.h.b16 %v631
      %v678 = vunpack.c.l.b16 %v632
      %v679 = vunpack.c.h.b16 %v632
      %v680 = vunpack.c.l.b16 %v633
      %v681 = vunpack.c.h.b16 %v633
      %v682 = vpack.c.b16 %v650, %v650
      %v683 = vpack.c.b16 %v651, %v651
      %v684 = vpack.c.b16 %v652, %v652
      %v685 = vpack.c.b16 %v653, %v653
      %v686 = vpack.c.b16 %v654, %v654
      %v687 = vpack.c.b16 %v655, %v655
      %v688 = vpack.c.b16 %v656, %v656
      %v689 = vpack.c.b16 %v657, %v657
      %v690 = vpack.c.b16 %v658, %v658
      %v691 = vpack.c.b16 %v659, %v659
      %v692 = vpack.c.b16 %v660, %v660
      %v693 = vpack.c.b16 %v661, %v661
      %v694 = vpack.c.b16 %v662, %v662
      %v695 = vpack.c.b16 %v663, %v663
      %v696 = vpack.c.b16 %v664, %v664
      %v697 = vpack.c.b16 %v665, %v665
      %v698 = vpack.c.b16 %v666, %v666
      %v699 = vpack.c.b16 %v667, %v667
      %v700 = vpack.c.b16 %v668, %v668
      %v701 = vpack.c.b16 %v669, %v669
      %v702 = vpack.c.b16 %v670, %v670
      %v703 = vpack.c.b16 %v671, %v671
      %v704 = vpack.c.b16 %v672, %v672
      %v705 = vpack.c.b16 %v673, %v673
      %v706 = vpack.c.b16 %v674, %v674
      %v707 = vpack.c.b16 %v675, %v675
      %v708 = vpack.c.b16 %v676, %v676
      %v709 = vpack.c.b16 %v677, %v677
      %v710 = vpack.c.b16 %v678, %v678
      %v711 = vpack.c.b16 %v679, %v679
      %v712 = vpack.c.b16 %v680, %v680
      %v713 = vpack.c.b16 %v681, %v681
      %746 = vst [vmem:[%s223] sm:$0xf] %v682
      %747 = vst [vmem:[%s223 + $0x4] sm:$0xf] %v683
      %748 = vst [vmem:[%s223 + $0x8] sm:$0xf] %v684
      %749 = vst [vmem:[%s223 + $0xc] sm:$0xf] %v685
      %750 = vst [vmem:[%s223 + $0x10] sm:$0xf] %v686
      %751 = vst [vmem:[%s223 + $0x14] sm:$0xf] %v687
      %752 = vst [vmem:[%s223 + $0x18] sm:$0xf] %v688
      %753 = vst [vmem:[%s223 + $0x1c] sm:$0xf] %v689
      %754 = vst [vmem:[%s223 + $0x20] sm:$0xf] %v690
      %755 = vst [vmem:[%s223 + $0x24] sm:$0xf] %v691
      %756 = vst [vmem:[%s223 + $0x28] sm:$0xf] %v692
      %757 = vst [vmem:[%s223 + $0x2c] sm:$0xf] %v693
      %758 = vst [vmem:[%s223 + $0x30] sm:$0xf] %v694
      %759 = vst [vmem:[%s223 + $0x34] sm:$0xf] %v695
      %760 = vst [vmem:[%s223 + $0x38] sm:$0xf] %v696
      %761 = vst [vmem:[%s223 + $0x3c] sm:$0xf] %v697
      %762 = vst [vmem:[%s223 + $0x40] sm:$0xf] %v698
      %763 = vst [vmem:[%s223 + $0x44] sm:$0xf] %v699
      %764 = vst [vmem:[%s223 + $0x48] sm:$0xf] %v700
      %765 = vst [vmem:[%s223 + $0x4c] sm:$0xf] %v701
      %766 = vst [vmem:[%s223 + $0x50] sm:$0xf] %v702
      %767 = vst [vmem:[%s223 + $0x54] sm:$0xf] %v703
      %768 = vst [vmem:[%s223 + $0x58] sm:$0xf] %v704
      %769 = vst [vmem:[%s223 + $0x5c] sm:$0xf] %v705
      %770 = vst [vmem:[%s223 + $0x60] sm:$0xf] %v706
      %771 = vst [vmem:[%s223 + $0x64] sm:$0xf] %v707
      %772 = vst [vmem:[%s223 + $0x68] sm:$0xf] %v708
      %773 = vst [vmem:[%s223 + $0x6c] sm:$0xf] %v709
      %774 = vst [vmem:[%s223 + $0x70] sm:$0xf] %v710
      %775 = vst [vmem:[%s223 + $0x74] sm:$0xf] %v711
      %776 = vst [vmem:[%s223 + $0x78] sm:$0xf] %v712
      %777 = vst [vmem:[%s223 + $0x7c] sm:$0xf] %v713
      %s778 = smul.u32 32, %s18
      %p779 = scmp.lt.s32.totalorder %s778, 191
      %s780 = scalar_select %p779, %s778, 191
      %p781 = scmp.lt.s32.totalorder %s19, 0
      %s782 = scalar_select %p781, %s19, 0
      %s783 = sadd.s32 %s782, %s780
      %s784 = smul.addr %s783, 4
      %s785 = scalar_lea.vmem %s3, %s784
      // Predicated region
      $region33: #{stem_fwd.12} parent=31 // pred_check
        %p786 = pneg %p124
      $region34: #{stem_fwd.12} parent=31 // pred_check_branch
        %788 = sbr.rel (%p786) target = $region36
      $region35: #{stem_fwd.12} parent=31 // pred_region
        %s789 = smul.u32 32, %s18
      $region36: #{stem_fwd.12} parent=31 // pred_fallthru
        _
    $region32: #{stem_fwd.12} parent=5 // pred_fallthru
      _
    %p790 = scmp.le.s32.totalorder 2, %s9
    // Predicated region
    $region37: #{stem_fwd.12} parent=5 // pred_check
      %p791 = pneg %p790
    $region38: #{stem_fwd.12} parent=5 // pred_check_branch
      %793 = sbr.rel (%p791) target = $region40
    $region39: #{stem_fwd.12} parent=5 // pred_region
      %s794 = ssub.s32 %s9, 2
      // Predicated region
      $region41: #{stem_fwd.12} parent=39 // pred_check
        %p795 = pneg %p130
      $region42: #{stem_fwd.12} parent=39 // pred_check_branch
        %797 = sbr.rel (%p795) target = $region44
      $region43: #{stem_fwd.12} parent=39 // pred_region
        %s798 = smul.u32 32, %s20
        %p799 = scmp.lt.s32.totalorder %s798, 191
        %s800 = scalar_select %p799, %s798, 191
        %p801 = scmp.lt.s32.totalorder %s21, 0
        %s802 = scalar_select %p801, %s21, 0
        %s803 = sadd.s32 %s802, %s800
        %s804 = smul.addr %s803, 4
        %s805 = scalar_lea.vmem %s3, %s804
      $region44: #{stem_fwd.12} parent=39 // pred_fallthru
        _
    $region40: #{stem_fwd.12} parent=5 // pred_fallthru
      _
  $region6: #{stem_fwd.12} parent=0 // loop_footer
    %s13 = sadd.s32 1, %s9
  $region7: #{stem_fwd.12} parent=0 // loop_footer_branch
    %8 = sbr.rel target = $region3
  $region8: #{stem_fwd.12} parent=0 // loop_exit
    _

// kernel: stem_fwd.13
$region0: #{stem_fwd.13}
  #allocation0 [shape = 'u32[]', space=smem, size = 0x4, offset = 0x4, fixed_abs, tag = 'smem constant byte address 0x4 - core index']
  #allocation1 [shape = 'u32[144,128]{1,0:T(1,128)}', space=vmem, size = 0x12000, scoped, tag = 'internal scratch']
  %s0 = inlined_call_operand.vmem [shape: bf16[1280,384], index: 0, kind: input, shape index: {}]
  %s1 = inlined_call_operand.vmem [shape: bf16[384,128], index: 1, kind: input, shape index: {}]
  %s2 = inlined_call_operand.vmem [shape: f32[1,128], index: 2, kind: input, shape index: {}]
  %s3 = inlined_call_operand.vmem [shape: bf16[1280,128], index: 3, kind: output, shape index: {}]
  %s4 = sld [smem:[#allocation0]]
  $region45: #{stem_fwd.13} parent=0
    _
  %s6 = ssub.s32 1, %s4
  %s7 = scalar_select 0, %s6, %s4
  loop: start=0, step=1, limit=7
  $region2: #{stem_fwd.13} parent=0 // loop_pre_header
    _
  $region3: #{stem_fwd.13} parent=0 // loop_header
    %s9 = sphi 0, %s13
    %p10 = scmp.ge.s32.totalorder %s9, 7
    %s16 = sphi 0, %s28
    %s17 = sphi 0, %s24
    %s18 = sphi 0, %s16
    %s19 = sphi 0, %s17
    %s20 = sphi 0, %s18
    %s21 = sphi 0, %s19
    %s31 = sphi 0, %s33
    %s34 = sphi 0, %s31
    %s35 = sphi 0, %s34
    %s51 = sphi 0, %s35
    %s57 = sphi 0, %s59
    %s60 = sphi 0, %s57
    %s61 = sphi 0, %s60
    %s77 = sphi 0, %s61
    %s83 = sphi 0, %s85
    %s86 = sphi 0, %s83
    %s87 = sphi 0, %s86
    %s103 = sphi 0, %s87
    %s111 = sphi 0, %s113
    %s114 = sphi 0, %s111
    %s115 = sphi 0, %s114
    %s131 = sphi 0, %s115
  $region4: #{stem_fwd.13} parent=0 // loop_header_branch
    %12 = sbr.rel (%p10) target = $region8
  $region5: #{stem_fwd.13} parent=0 // loop_body
    %s14 = ssub.s32 %s9, 1
    %s15 = ssub.s32 %s9, 2
    %s22 = sadd.s32 1, %s17
    %p23 = scmp.ge.s32.totalorder %s22, 1
    %s24 = scalar_select %p23, 0, %s22
    %s25 = sadd.s32 1, %s16
    %s26 = scalar_select %p23, %s25, %s16
    %p27 = scmp.ge.s32.totalorder %s26, 5
    %s28 = scalar_select %p27, 0, %s26
    %s29 = ssub.s32 %s16, %s28
    %p30 = scmp.eq.s32.totalorder %s29, 0
    %s32 = sadd.s32 %s31, 1
    %s33 = scalar_select %p30, %s31, %s32
    %p36 = pneg %p30
    %p37 = scmp.eq.s32.totalorder %s9, 4
    %p38 = por %p36, %p37
    %p39 = scmp.ne.s32.totalorder %s31, %s34
    %p40 = scmp.eq.s32.totalorder %s9, 0
    %p41 = por %p39, %p40
    %p42 = scmp.ne.s32.totalorder %s31, %s34
    %p43 = scmp.eq.s32.totalorder %s14, 4
    %p44 = por %p42, %p43
    %p45 = scmp.ne.s32.totalorder %s34, %s35
    %p46 = scmp.eq.s32.totalorder %s14, 0
    %p47 = por %p45, %p46
    %p48 = scmp.ne.s32.totalorder %s34, %s35
    %p49 = scmp.eq.s32.totalorder %s15, 4
    %p50 = por %p48, %p49
    %p52 = scmp.ne.s32.totalorder %s35, %s51
    %p53 = scmp.eq.s32.totalorder %s15, 0
    %p54 = por %p52, %p53
    %s55 = ssub.s32 %s17, %s24
    %p56 = scmp.eq.s32.totalorder %s55, 0
    %s58 = sadd.s32 %s57, 1
    %s59 = scalar_select %p56, %s57, %s58
    %p62 = pneg %p56
    %p63 = scmp.eq.s32.totalorder %s9, 4
    %p64 = por %p62, %p63
    %p65 = scmp.ne.s32.totalorder %s57, %s60
    %p66 = scmp.eq.s32.totalorder %s9, 0
    %p67 = por %p65, %p66
    %p68 = scmp.ne.s32.totalorder %s57, %s60
    %p69 = scmp.eq.s32.totalorder %s14, 4
    %p70 = por %p68, %p69
    %p71 = scmp.ne.s32.totalorder %s60, %s61
    %p72 = scmp.eq.s32.totalorder %s14, 0
    %p73 = por %p71, %p72
    %p74 = scmp.ne.s32.totalorder %s60, %s61
    %p75 = scmp.eq.s32.totalorder %s15, 4
    %p76 = por %p74, %p75
    %p78 = scmp.ne.s32.totalorder %s61, %s77
    %p79 = scmp.eq.s32.totalorder %s15, 0
    %p80 = por %p78, %p79
    %s81 = ssub.s32 %s17, %s24
    %p82 = scmp.eq.s32.totalorder %s81, 0
    %s84 = sadd.s32 %s83, 1
    %s85 = scalar_select %p82, %s83, %s84
    %p88 = pneg %p82
    %p89 = scmp.eq.s32.totalorder %s9, 4
    %p90 = por %p88, %p89
    %p91 = scmp.ne.s32.totalorder %s83, %s86
    %p92 = scmp.eq.s32.totalorder %s9, 0
    %p93 = por %p91, %p92
    %p94 = scmp.ne.s32.totalorder %s83, %s86
    %p95 = scmp.eq.s32.totalorder %s14, 4
    %p96 = por %p94, %p95
    %p97 = scmp.ne.s32.totalorder %s86, %s87
    %p98 = scmp.eq.s32.totalorder %s14, 0
    %p99 = por %p97, %p98
    %p100 = scmp.ne.s32.totalorder %s86, %s87
    %p101 = scmp.eq.s32.totalorder %s15, 4
    %p102 = por %p100, %p101
    %p104 = scmp.ne.s32.totalorder %s87, %s103
    %p105 = scmp.eq.s32.totalorder %s15, 0
    %p106 = por %p104, %p105
    %s107 = ssub.s32 %s16, %s28
    %s108 = ssub.s32 %s17, %s24
    %s109 = sor.u32 %s107, %s108
    %p110 = scmp.eq.s32.totalorder %s109, 0
    %s112 = sadd.s32 %s111, 1
    %s113 = scalar_select %p110, %s111, %s112
    %p116 = pneg %p110
    %p117 = scmp.eq.s32.totalorder %s9, 4
    %p118 = por %p116, %p117
    %p119 = scmp.ne.s32.totalorder %s111, %s114
    %p120 = scmp.eq.s32.totalorder %s9, 0
    %p121 = por %p119, %p120
    %p122 = scmp.ne.s32.totalorder %s111, %s114
    %p123 = scmp.eq.s32.totalorder %s14, 4
    %p124 = por %p122, %p123
    %p125 = scmp.ne.s32.totalorder %s114, %s115
    %p126 = scmp.eq.s32.totalorder %s14, 0
    %p127 = por %p125, %p126
    %p128 = scmp.ne.s32.totalorder %s114, %s115
    %p129 = scmp.eq.s32.totalorder %s15, 4
    %p130 = por %p128, %p129
    %p132 = scmp.ne.s32.totalorder %s115, %s131
    %p133 = scmp.eq.s32.totalorder %s15, 0
    %p134 = por %p132, %p133
    %p135 = scmp.le.s32.totalorder 1, %s9
    %p136 = scmp.lt.s32.totalorder %s9, 6
    %p137 = pnand %p135, %p136
    %p138 = pneg %p137
    // Predicated region
    $region9: #{stem_fwd.13} parent=5 // pred_check
      _
    $region10: #{stem_fwd.13} parent=5 // pred_check_branch
      %140 = sbr.rel (%p137) target = $region12
    $region11: #{stem_fwd.13} parent=5 // pred_region
      %s141 = ssub.s32 %s9, 1
      // Predicated region
      $region13: #{stem_fwd.13} parent=11 // pred_check
        %p142 = pneg %p73
      $region14: #{stem_fwd.13} parent=11 // pred_check_branch
        %144 = sbr.rel (%p142) target = $region16
      $region15: #{stem_fwd.13} parent=11 // pred_region
        %p145 = scmp.lt.s32.totalorder %s19, 0
        %s146 = scalar_select %p145, %s19, 0
        %s147 = smul.addr %s146, 4
        %s148 = scalar_lea.vmem %s1, %s147
      $region16: #{stem_fwd.13} parent=11 // pred_fallthru
        _
      // Predicated region
      $region17: #{stem_fwd.13} parent=11 // pred_check
        %p149 = pneg %p99
      $region18: #{stem_fwd.13} parent=11 // pred_check_branch
        %151 = sbr.rel (%p149) target = $region20
      $region19: #{stem_fwd.13} parent=11 // pred_region
        %p152 = scmp.lt.s32.totalorder %s19, 0
        %s153 = scalar_select %p152, %s19, 0
        %s154 = scalar_lea.vmem %s2, %s153
      $region20: #{stem_fwd.13} parent=11 // pred_fallthru
        _
    $region12: #{stem_fwd.13} parent=5 // pred_fallthru
      _
    %p155 = scmp.lt.s32.totalorder %s9, 5
    // Predicated region
    $region21: #{stem_fwd.13} parent=5 // pred_check
      %p156 = pneg %p155
    $region22: #{stem_fwd.13} parent=5 // pred_check_branch
      %158 = sbr.rel (%p156) target = $region24
    $region23: #{stem_fwd.13} parent=5 // pred_region
      // Predicated region
      $region25: #{stem_fwd.13} parent=23 // pred_check
        %p159 = pneg %p41
      $region26: #{stem_fwd.13} parent=23 // pred_check_branch
        %161 = sbr.rel (%p159) target = $region28
      $region27: #{stem_fwd.13} parent=23 // pred_region
        %s162 = smul.u32 32, %s16
        %p163 = scmp.lt.s32.totalorder %s162, 159
        %s164 = scalar_select %p163, %s162, 159
        %s165 = smul.addr %s164, 3
        %s166 = smul.addr %s165, 4
        %s167 = scalar_lea.vmem %s0, %s166
        %s168 = smul.u32 32, %s16
      $region28: #{stem_fwd.13} parent=23 // pred_fallthru
        _
    $region24: #{stem_fwd.13} parent=5 // pred_fallthru
      _
    %p169 = scmp.le.s32.totalorder 1, %s9
    %p170 = scmp.lt.s32.totalorder %s9, 6
    %p171 = pnand %p169, %p170
    %p172 = pneg %p171
    // Predicated region
    $region29: #{stem_fwd.13} parent=5 // pred_check
      _
    $region30: #{stem_fwd.13} parent=5 // pred_check_branch
      %174 = sbr.rel (%p171) target = $region32
    $region31: #{stem_fwd.13} parent=5 // pred_region
      %s175 = ssub.s32 %s9, 1
      %s176 = smul.u32 32, %s18
      %p177 = scmp.lt.s32.totalorder %s176, 159
      %s178 = scalar_select %p177, %s176, 159
      %s179 = smul.addr %s178, 3
      %s180 = smul.addr %s179, 4
      %s181 = scalar_lea.vmem %s0, %s180
      %p182 = pneg %p47
      %p183 = pneg %p44
      %p184 = scmp.lt.s32.totalorder %s19, 0
      %s185 = scalar_select %p184, %s19, 0
      %s186 = smul.addr %s185, 4
      %s187 = scalar_lea.vmem %s1, %s186
      %p188 = pneg %p73
      %p189 = pneg %p70
      %p190 = scmp.lt.s32.totalorder %s19, 0
      %s191 = scalar_select %p190, %s19, 0
      %s192 = scalar_lea.vmem %s2, %s191
      %p193 = pneg %p99
      %p194 = pneg %p96
      %p195 = pneg %p127
      %p196 = pneg %p124
      %s197 = smul.u32 32, %s18
      %p198 = scmp.lt.s32.totalorder %s197, 159
      %s199 = scalar_select %p198, %s197, 159
      %p200 = scmp.lt.s32.totalorder %s19, 0
      %s201 = scalar_select %p200, %s19, 0
      %s202 = sadd.s32 %s201, %s199
      %s203 = smul.addr %s202, 4
      %s204 = scalar_lea.vmem %s3, %s203
      %s205 = smul.u32 32, %s18
      %p206 = scmp.lt.s32.totalorder %s205, 159
      %s207 = scalar_select %p206, %s205, 159
      %s208 = smul.addr %s207, 3
      %s209 = smul.addr %s208, 4
      %s210 = scalar_lea.vmem %s0, %s209
      %s211 = smul.u32 32, %s18
      %p212 = scmp.lt.s32.totalorder %s19, 0
      %s213 = scalar_select %p212, %s19, 0
      %s214 = smul.addr %s213, 4
      %s215 = scalar_lea.vmem %s1, %s214
      %p216 = scmp.lt.s32.totalorder %s19, 0
      %s217 = scalar_select %p216, %s19, 0
      %s218 = scalar_lea.vmem %s2, %s217
      %s219 = smul.u32 32, %s18
      %p220 = scmp.lt.s32.totalorder %s219, 159
      %s221 = scalar_select %p220, %s219, 159
      %p222 = scmp.lt.s32.totalorder %s19, 0
      %s223 = scalar_select %p222, %s19, 0
      %s224 = sadd.s32 %s223, %s221
      %s225 = smul.addr %s224, 4
      %s226 = scalar_lea.vmem %s3, %s225
      %s227 = smul.u32 32, %s18
      %v229 = vld [vmem:[%s210] sm:$0xff]
      %v230 = vld [vmem:[%s210 + $0x8] sm:$0xf]
      %v231 = vld [vmem:[%s210 + $0xc] sm:$0xff]
      %v232 = vld [vmem:[%s210 + $0x14] sm:$0xf]
      %v233 = vld [vmem:[%s210 + $0x18] sm:$0xff]
      %v234 = vld [vmem:[%s210 + $0x20] sm:$0xf]
      %v235 = vld [vmem:[%s210 + $0x24] sm:$0xff]
      %v236 = vld [vmem:[%s210 + $0x2c] sm:$0xf]
      %v237 = vld [vmem:[%s210 + $0x30] sm:$0xff]
      %v238 = vld [vmem:[%s210 + $0x38] sm:$0xf]
      %v239 = vld [vmem:[%s210 + $0x3c] sm:$0xff]
      %v240 = vld [vmem:[%s210 + $0x44] sm:$0xf]
      %v241 = vld [vmem:[%s210 + $0x48] sm:$0xff]
      %v242 = vld [vmem:[%s210 + $0x50] sm:$0xf]
      %v243 = vld [vmem:[%s210 + $0x54] sm:$0xff]
      %v244 = vld [vmem:[%s210 + $0x5c] sm:$0xf]
      %v245 = vld [vmem:[%s210 + $0x60] sm:$0xff]
      %v246 = vld [vmem:[%s210 + $0x68] sm:$0xf]
      %v247 = vld [vmem:[%s210 + $0x6c] sm:$0xff]
      %v248 = vld [vmem:[%s210 + $0x74] sm:$0xf]
      %v249 = vld [vmem:[%s210 + $0x78] sm:$0xff]
      %v250 = vld [vmem:[%s210 + $0x80] sm:$0xf]
      %v251 = vld [vmem:[%s210 + $0x84] sm:$0xff]
      %v252 = vld [vmem:[%s210 + $0x8c] sm:$0xf]
      %v253 = vld [vmem:[%s210 + $0x90] sm:$0xff]
      %v254 = vld [vmem:[%s210 + $0x98] sm:$0xf]
      %v255 = vld [vmem:[%s210 + $0x9c] sm:$0xff]
      %v256 = vld [vmem:[%s210 + $0xa4] sm:$0xf]
      %v257 = vld [vmem:[%s210 + $0xa8] sm:$0xff]
      %v258 = vld [vmem:[%s210 + $0xb0] sm:$0xf]
      %v259 = vld [vmem:[%s210 + $0xb4] sm:$0xff]
      %v260 = vld [vmem:[%s210 + $0xbc] sm:$0xf]
      %v261 = vld [vmem:[%s210 + $0xc0] sm:$0xff]
      %v262 = vld [vmem:[%s210 + $0xc8] sm:$0xf]
      %v263 = vld [vmem:[%s210 + $0xcc] sm:$0xff]
      %v264 = vld [vmem:[%s210 + $0xd4] sm:$0xf]
      %v265 = vld [vmem:[%s210 + $0xd8] sm:$0xff]
      %v266 = vld [vmem:[%s210 + $0xe0] sm:$0xf]
      %v267 = vld [vmem:[%s210 + $0xe4] sm:$0xff]
      %v268 = vld [vmem:[%s210 + $0xec] sm:$0xf]
      %v269 = vld [vmem:[%s210 + $0xf0] sm:$0xff]
      %v270 = vld [vmem:[%s210 + $0xf8] sm:$0xf]
      %v271 = vld [vmem:[%s210 + $0xfc] sm:$0xff]
      %v272 = vld [vmem:[%s210 + $0x104] sm:$0xf]
      %v273 = vld [vmem:[%s210 + $0x108] sm:$0xff]
      %v274 = vld [vmem:[%s210 + $0x110] sm:$0xf]
      %v275 = vld [vmem:[%s210 + $0x114] sm:$0xff]
      %v276 = vld [vmem:[%s210 + $0x11c] sm:$0xf]
      %v277 = vld [vmem:[%s210 + $0x120] sm:$0xff]
      %v278 = vld [vmem:[%s210 + $0x128] sm:$0xf]
      %v279 = vld [vmem:[%s210 + $0x12c] sm:$0xff]
      %v280 = vld [vmem:[%s210 + $0x134] sm:$0xf]
      %v281 = vld [vmem:[%s210 + $0x138] sm:$0xff]
      %v282 = vld [vmem:[%s210 + $0x140] sm:$0xf]
      %v283 = vld [vmem:[%s210 + $0x144] sm:$0xff]
      %v284 = vld [vmem:[%s210 + $0x14c] sm:$0xf]
      %v285 = vld [vmem:[%s210 + $0x150] sm:$0xff]
      %v286 = vld [vmem:[%s210 + $0x158] sm:$0xf]
      %v287 = vld [vmem:[%s210 + $0x15c] sm:$0xff]
      %v288 = vld [vmem:[%s210 + $0x164] sm:$0xf]
      %v289 = vld [vmem:[%s210 + $0x168] sm:$0xff]
      %v290 = vld [vmem:[%s210 + $0x170] sm:$0xf]
      %v291 = vld [vmem:[%s210 + $0x174] sm:$0xff]
      %v292 = vld [vmem:[%s210 + $0x17c] sm:$0xf]
      %v293 = vld [vmem:[%s215] sm:$0xf]
      %v294 = vld [vmem:[%s215 + $0x4] sm:$0xf]
      %v295 = vld [vmem:[%s215 + $0x8] sm:$0xf]
      %v296 = vld [vmem:[%s215 + $0xc] sm:$0xf]
      %v297 = vld [vmem:[%s215 + $0x10] sm:$0xf]
      %v298 = vld [vmem:[%s215 + $0x14] sm:$0xf]
      %v299 = vld [vmem:[%s215 + $0x18] sm:$0xf]
      %v300 = vld [vmem:[%s215 + $0x1c] sm:$0xf]
      %v301 = vld [vmem:[%s215 + $0x20] sm:$0xf]
      %v302 = vld [vmem:[%s215 + $0x24] sm:$0xf]
      %v303 = vld [vmem:[%s215 + $0x28] sm:$0xf]
      %v304 = vld [vmem:[%s215 + $0x2c] sm:$0xf]
      %v305 = vld [vmem:[%s215 + $0x30] sm:$0xf]
      %v306 = vld [vmem:[%s215 + $0x34] sm:$0xf]
      %v307 = vld [vmem:[%s215 + $0x38] sm:$0xf]
      %v308 = vld [vmem:[%s215 + $0x3c] sm:$0xf]
      %v309 = vld [vmem:[%s215 + $0x40] sm:$0xf]
      %v310 = vld [vmem:[%s215 + $0x44] sm:$0xf]
      %v311 = vld [vmem:[%s215 + $0x48] sm:$0xf]
      %v312 = vld [vmem:[%s215 + $0x4c] sm:$0xf]
      %v313 = vld [vmem:[%s215 + $0x50] sm:$0xf]
      %v314 = vld [vmem:[%s215 + $0x54] sm:$0xf]
      %v315 = vld [vmem:[%s215 + $0x58] sm:$0xf]
      %v316 = vld [vmem:[%s215 + $0x5c] sm:$0xf]
      %v317 = vld [vmem:[%s215 + $0x60] sm:$0xf]
      %v318 = vld [vmem:[%s215 + $0x64] sm:$0xf]
      %v319 = vld [vmem:[%s215 + $0x68] sm:$0xf]
      %v320 = vld [vmem:[%s215 + $0x6c] sm:$0xf]
      %v321 = vld [vmem:[%s215 + $0x70] sm:$0xf]
      %v322 = vld [vmem:[%s215 + $0x74] sm:$0xf]
      %v323 = vld [vmem:[%s215 + $0x78] sm:$0xf]
      %v324 = vld [vmem:[%s215 + $0x7c] sm:$0xf]
      %v325 = vld [vmem:[%s215 + $0x80] sm:$0xf]
      %v326 = vld [vmem:[%s215 + $0x84] sm:$0xf]
      %v327 = vld [vmem:[%s215 + $0x88] sm:$0xf]
      %v328 = vld [vmem:[%s215 + $0x8c] sm:$0xf]
      %v329 = vld [vmem:[%s215 + $0x90] sm:$0xf]
      %v330 = vld [vmem:[%s215 + $0x94] sm:$0xf]
      %v331 = vld [vmem:[%s215 + $0x98] sm:$0xf]
      %v332 = vld [vmem:[%s215 + $0x9c] sm:$0xf]
      %v333 = vld [vmem:[%s215 + $0xa0] sm:$0xf]
      %v334 = vld [vmem:[%s215 + $0xa4] sm:$0xf]
      %v335 = vld [vmem:[%s215 + $0xa8] sm:$0xf]
      %v336 = vld [vmem:[%s215 + $0xac] sm:$0xf]
      %v337 = vld [vmem:[%s215 + $0xb0] sm:$0xf]
      %v338 = vld [vmem:[%s215 + $0xb4] sm:$0xf]
      %v339 = vld [vmem:[%s215 + $0xb8] sm:$0xf]
      %v340 = vld [vmem:[%s215 + $0xbc] sm:$0xf]
      %v341 = vld [vmem:[%s218] sm:$0x1]
      %v343 = vlaneseq
      %v344 = vshrl.u32 %v343, 7
      %v345 = vsub.s32 0, %v344
      %v346 = vrot.slane %v341, %v345
      %v412 = vunpack.c.l.b16 %v229
      %v413 = vunpack.c.h.b16 %v229
      %v414 = vunpack.c.l.b16 %v230
      %v415 = vunpack.c.l.b16 %v231
      %v416 = vunpack.c.h.b16 %v231
      %v417 = vunpack.c.l.b16 %v232
      %v418 = vunpack.c.l.b16 %v233
      %v419 = vunpack.c.h.b16 %v233
      %v420 = vunpack.c.l.b16 %v234
      %v421 = vunpack.c.l.b16 %v235
      %v422 = vunpack.c.h.b16 %v235
      %v423 = vunpack.c.l.b16 %v236
      %v424 = vunpack.c.l.b16 %v237
      %v425 = vunpack.c.h.b16 %v237
      %v426 = vunpack.c.l.b16 %v238
      %v427 = vunpack.c.l.b16 %v239
      %v428 = vunpack.c.h.b16 %v239
      %v429 = vunpack.c.l.b16 %v240
      %v430 = vunpack.c.l.b16 %v241
      %v431 = vunpack.c.h.b16 %v241
      %v432 = vunpack.c.l.b16 %v242
      %v433 = vunpack.c.l.b16 %v243
      %v434 = vunpack.c.h.b16 %v243
      %v435 = vunpack.c.l.b16 %v244
      %v436 = vunpack.c.l.b16 %v245
      %v437 = vunpack.c.h.b16 %v245
      %v438 = vunpack.c.l.b16 %v246
      %v439 = vunpack.c.l.b16 %v247
      %v440 = vunpack.c.h.b16 %v247
      %v441 = vunpack.c.l.b16 %v248
      %v442 = vunpack.c.l.b16 %v249
      %v443 = vunpack.c.h.b16 %v249
      %v444 = vunpack.c.l.b16 %v250
      %v445 = vunpack.c.l.b16 %v251
      %v446 = vunpack.c.h.b16 %v251
      %v447 = vunpack.c.l.b16 %v252
      %v448 = vunpack.c.l.b16 %v253
      %v449 = vunpack.c.h.b16 %v253
      %v450 = vunpack.c.l.b16 %v254
      %v451 = vunpack.c.l.b16 %v255
      %v452 = vunpack.c.h.b16 %v255
      %v453 = vunpack.c.l.b16 %v256
      %v454 = vunpack.c.l.b16 %v257
      %v455 = vunpack.c.h.b16 %v257
      %v456 = vunpack.c.l.b16 %v258
      %v457 = vunpack.c.l.b16 %v259
      %v458 = vunpack.c.h.b16 %v259
      %v459 = vunpack.c.l.b16 %v260
      %v460 = vunpack.c.l.b16 %v261
      %v461 = vunpack.c.h.b16 %v261
      %v462 = vunpack.c.l.b16 %v262
      %v463 = vunpack.c.l.b16 %v263
      %v464 = vunpack.c.h.b16 %v263
      %v465 = vunpack.c.l.b16 %v264
      %v466 = vunpack.c.l.b16 %v265
      %v467 = vunpack.c.h.b16 %v265
      %v468 = vunpack.c.l.b16 %v266
      %v469 = vunpack.c.l.b16 %v267
      %v470 = vunpack.c.h.b16 %v267
      %v471 = vunpack.c.l.b16 %v268
      %v472 = vunpack.c.l.b16 %v269
      %v473 = vunpack.c.h.b16 %v269
      %v474 = vunpack.c.l.b16 %v270
      %v475 = vunpack.c.l.b16 %v271
      %v476 = vunpack.c.h.b16 %v271
      %v477 = vunpack.c.l.b16 %v272
      %v478 = vunpack.c.l.b16 %v273
      %v479 = vunpack.c.h.b16 %v273
      %v480 = vunpack.c.l.b16 %v274
      %v481 = vunpack.c.l.b16 %v275
      %v482 = vunpack.c.h.b16 %v275
      %v483 = vunpack.c.l.b16 %v276
      %v484 = vunpack.c.l.b16 %v277
      %v485 = vunpack.c.h.b16 %v277
      %v486 = vunpack.c.l.b16 %v278
      %v487 = vunpack.c.l.b16 %v279
      %v488 = vunpack.c.h.b16 %v279
      %v489 = vunpack.c.l.b16 %v280
      %v490 = vunpack.c.l.b16 %v281
      %v491 = vunpack.c.h.b16 %v281
      %v492 = vunpack.c.l.b16 %v282
      %v493 = vunpack.c.l.b16 %v283
      %v494 = vunpack.c.h.b16 %v283
      %v495 = vunpack.c.l.b16 %v284
      %v496 = vunpack.c.l.b16 %v285
      %v497 = vunpack.c.h.b16 %v285
      %v498 = vunpack.c.l.b16 %v286
      %v499 = vunpack.c.l.b16 %v287
      %v500 = vunpack.c.h.b16 %v287
      %v501 = vunpack.c.l.b16 %v288
      %v502 = vunpack.c.l.b16 %v289
      %v503 = vunpack.c.h.b16 %v289
      %v504 = vunpack.c.l.b16 %v290
      %v505 = vunpack.c.l.b16 %v291
      %v506 = vunpack.c.h.b16 %v291
      %v507 = vunpack.c.l.b16 %v292
      %v508 = vpack.c.b16 %v415, %v412
      %v509 = vpack.c.b16 %v416, %v413
      %v510 = vpack.c.b16 %v417, %v414
      %v511 = vpack.c.b16 %v421, %v418
      %v512 = vpack.c.b16 %v422, %v419
      %v513 = vpack.c.b16 %v423, %v420
      %v514 = vpack.c.b16 %v427, %v424
      %v515 = vpack.c.b16 %v428, %v425
      %v516 = vpack.c.b16 %v429, %v426
      %v517 = vpack.c.b16 %v433, %v430
      %v518 = vpack.c.b16 %v434, %v431
      %v519 = vpack.c.b16 %v435, %v432
      %v520 = vpack.c.b16 %v439, %v436
      %v521 = vpack.c.b16 %v440, %v437
      %v522 = vpack.c.b16 %v441, %v438
      %v523 = vpack.c.b16 %v445, %v442
      %v524 = vpack.c.b16 %v446, %v443
      %v525 = vpack.c.b16 %v447, %v444
      %v526 = vpack.c.b16 %v451, %v448
      %v527 = vpack.c.b16 %v452, %v449
      %v528 = vpack.c.b16 %v453, %v450
      %v529 = vpack.c.b16 %v457, %v454
      %v530 = vpack.c.b16 %v458, %v455
      %v531 = vpack.c.b16 %v459, %v456
      %v532 = vpack.c.b16 %v463, %v460
      %v533 = vpack.c.b16 %v464, %v461
      %v534 = vpack.c.b16 %v465, %v462
      %v535 = vpack.c.b16 %v469, %v466
      %v536 = vpack.c.b16 %v470, %v467
      %v537 = vpack.c.b16 %v471, %v468
      %v538 = vpack.c.b16 %v475, %v472
      %v539 = vpack.c.b16 %v476, %v473
      %v540 = vpack.c.b16 %v477, %v474
      %v541 = vpack.c.b16 %v481, %v478
      %v542 = vpack.c.b16 %v482, %v479
      %v543 = vpack.c.b16 %v483, %v480
      %v544 = vpack.c.b16 %v487, %v484
      %v545 = vpack.c.b16 %v488, %v485
      %v546 = vpack.c.b16 %v489, %v486
      %v547 = vpack.c.b16 %v493, %v490
      %v548 = vpack.c.b16 %v494, %v491
      %v549 = vpack.c.b16 %v495, %v492
      %v550 = vpack.c.b16 %v499, %v496
      %v551 = vpack.c.b16 %v500, %v497
      %v552 = vpack.c.b16 %v501, %v498
      %v553 = vpack.c.b16 %v505, %v502
      %v554 = vpack.c.b16 %v506, %v503
      %v555 = vpack.c.b16 %v507, %v504
      %v652 = vunpack.c.l.b16 %v293
      %v653 = vunpack.c.l.b16 %v294
      %v654 = vunpack.c.l.b16 %v295
      %v655 = vunpack.c.l.b16 %v296
      %v656 = vunpack.c.l.b16 %v297
      %v657 = vunpack.c.l.b16 %v298
      %v658 = vunpack.c.l.b16 %v299
      %v659 = vunpack.c.l.b16 %v300
      %v660 = vunpack.c.l.b16 %v301
      %v661 = vunpack.c.l.b16 %v302
      %v662 = vunpack.c.l.b16 %v303
      %v663 = vunpack.c.l.b16 %v304
      %v664 = vunpack.c.l.b16 %v305
      %v665 = vunpack.c.l.b16 %v306
      %v666 = vunpack.c.l.b16 %v307
      %v667 = vunpack.c.l.b16 %v308
      %v668 = vunpack.c.l.b16 %v309
      %v669 = vunpack.c.l.b16 %v310
      %v670 = vunpack.c.l.b16 %v311
      %v671 = vunpack.c.l.b16 %v312
      %v672 = vunpack.c.l.b16 %v313
      %v673 = vunpack.c.l.b16 %v314
      %v674 = vunpack.c.l.b16 %v315
      %v675 = vunpack.c.l.b16 %v316
      %v676 = vunpack.c.l.b16 %v317
      %v677 = vunpack.c.l.b16 %v318
      %v678 = vunpack.c.l.b16 %v319
      %v679 = vunpack.c.l.b16 %v320
      %v680 = vunpack.c.l.b16 %v321
      %v681 = vunpack.c.l.b16 %v322
      %v682 = vunpack.c.l.b16 %v323
      %v683 = vunpack.c.l.b16 %v324
      %v684 = vunpack.c.l.b16 %v325
      %v685 = vunpack.c.l.b16 %v326
      %v686 = vunpack.c.l.b16 %v327
      %v687 = vunpack.c.l.b16 %v328
      %v688 = vunpack.c.l.b16 %v329
      %v689 = vunpack.c.l.b16 %v330
      %v690 = vunpack.c.l.b16 %v331
      %v691 = vunpack.c.l.b16 %v332
      %v692 = vunpack.c.l.b16 %v333
      %v693 = vunpack.c.l.b16 %v334
      %v694 = vunpack.c.l.b16 %v335
      %v695 = vunpack.c.l.b16 %v336
      %v696 = vunpack.c.l.b16 %v337
      %v697 = vunpack.c.l.b16 %v338
      %v698 = vunpack.c.l.b16 %v339
      %v699 = vunpack.c.l.b16 %v340
      %v700 = vpack.c.b16 %v653, %v652
      %v701 = vpack.c.b16 %v655, %v654
      %v702 = vpack.c.b16 %v657, %v656
      %v703 = vpack.c.b16 %v659, %v658
      %v704 = vpack.c.b16 %v661, %v660
      %v705 = vpack.c.b16 %v663, %v662
      %v706 = vpack.c.b16 %v665, %v664
      %v707 = vpack.c.b16 %v667, %v666
      %v708 = vpack.c.b16 %v669, %v668
      %v709 = vpack.c.b16 %v671, %v670
      %v710 = vpack.c.b16 %v673, %v672
      %v711 = vpack.c.b16 %v675, %v674
      %v712 = vpack.c.b16 %v677, %v676
      %v713 = vpack.c.b16 %v679, %v678
      %v714 = vpack.c.b16 %v681, %v680
      %v715 = vpack.c.b16 %v683, %v682
      %v716 = vpack.c.b16 %v685, %v684
      %v717 = vpack.c.b16 %v687, %v686
      %v718 = vpack.c.b16 %v689, %v688
      %v719 = vpack.c.b16 %v691, %v690
      %v720 = vpack.c.b16 %v693, %v692
      %v721 = vpack.c.b16 %v695, %v694
      %v722 = vpack.c.b16 %v697, %v696
      %v723 = vpack.c.b16 %v699, %v698
      %748 = vmatprep.subr.bf16.mxu0 0
      %749 = vmatpush1.bf16.msra.mxu0 %v707
      %750 = vmatprep.subr.bf16.mxu0 0
      %751 = vmatpush1.bf16.msra.mxu0 %v706
      %752 = vmatprep.subr.bf16.mxu0 0
      %753 = vmatpush1.bf16.msra.mxu0 %v705
      %754 = vmatprep.subr.bf16.mxu0 0
      %755 = vmatpush1.bf16.msra.mxu0 %v704
      %756 = vmatprep.subr.bf16.mxu0 0
      %757 = vmatpush1.bf16.msra.mxu0 %v703
      %758 = vmatprep.subr.bf16.mxu0 0
      %759 = vmatpush1.bf16.msra.mxu0 %v702
      %760 = vmatprep.subr.bf16.mxu0 0
      %761 = vmatpush1.bf16.msra.mxu0 %v701
      %762 = vmatprep.subr.bf16.mxu0 0
      %763 = vmatpush1.bf16.msra.mxu0 %v700
      %764 = vmatprep.subr.bf16.mxu0 0
      %765 = vmatpush2.bf16.msra.mxu0 %v715
      %766 = vmatprep.subr.bf16.mxu0 0
      %767 = vmatpush2.bf16.msra.mxu0 %v714
      %768 = vmatprep.subr.bf16.mxu0 0
      %769 = vmatpush2.bf16.msra.mxu0 %v713
      %770 = vmatprep.subr.bf16.mxu0 0
      %771 = vmatpush2.bf16.msra.mxu0 %v712
      %772 = vmatprep.subr.bf16.mxu0 0
      %773 = vmatpush2.bf16.msra.mxu0 %v711
      %774 = vmatprep.subr.bf16.mxu0 0
      %775 = vmatpush2.bf16.msra.mxu0 %v710
      %776 = vmatprep.subr.bf16.mxu0 0
      %777 = vmatpush2.bf16.msra.mxu0 %v709
      %778 = vmatprep.subr.bf16.mxu0 0
      %779 = vmatpush2.bf16.msra.mxu0 %v708
      %780 = vmatprep.mubr.bf16.mxu0 %v509
      %781 = vmatmul.mubr.bf16.gmra.mxu0 %v508
      %v782 = vpop.f32.mrf.mxu0
      %v783 = vadd.f32 %v346, %v782
      %v784 = vpop.f32.mrf.mxu0
      %v785 = vpop.f32.mrf.mxu0
      %v786 = vadd.f32 %v346, %v785
      %v787 = vpop.f32.mrf.mxu0
      %788 = vmatprep.mubr.bf16.mxu0 %v512
      %789 = vmatmul.mubr.bf16.gmra.mxu0 %v511
      %v790 = vpop.f32.mrf.mxu0
      %v791 = vadd.f32 %v346, %v790
      %v792 = vpop.f32.mrf.mxu0
      %v793 = vpop.f32.mrf.mxu0
      %v794 = vadd.f32 %v346, %v793
      %v795 = vpop.f32.mrf.mxu0
      %796 = vmatprep.mubr.bf16.mxu0 %v515
      %797 = vmatmul.mubr.bf16.gmra.mxu0 %v514
      %v798 = vpop.f32.mrf.mxu0
      %v799 = vadd.f32 %v346, %v798
      %v800 = vpop.f32.mrf.mxu0
      %v801 = vpop.f32.mrf.mxu0
      %v802 = vadd.f32 %v346, %v801
      %v803 = vpop.f32.mrf.mxu0
      %804 = vmatprep.mubr.bf16.mxu0 %v518
      %805 = vmatmul.mubr.bf16.gmra.mxu0 %v517
      %v806 = vpop.f32.mrf.mxu0
      %v807 = vadd.f32 %v346, %v806
      %v808 = vpop.f32.mrf.mxu0
      %v809 = vpop.f32.mrf.mxu0
      %v810 = vadd.f32 %v346, %v809
      %v811 = vpop.f32.mrf.mxu0
      %812 = vmatprep.mubr.bf16.mxu0 %v521
      %813 = vmatmul.mubr.bf16.gmra.mxu0 %v520
      %v814 = vpop.f32.mrf.mxu0
      %v815 = vadd.f32 %v346, %v814
      %v816 = vpop.f32.mrf.mxu0
      %v817 = vpop.f32.mrf.mxu0
      %v818 = vadd.f32 %v346, %v817
      %v819 = vpop.f32.mrf.mxu0
      %820 = vmatprep.mubr.bf16.mxu0 %v524
      %821 = vmatmul.mubr.bf16.gmra.mxu0 %v523
      %v822 = vpop.f32.mrf.mxu0
      %v823 = vadd.f32 %v346, %v822
      %v824 = vpop.f32.mrf.mxu0
      %v825 = vpop.f32.mrf.mxu0
      %v826 = vadd.f32 %v346, %v825
      %v827 = vpop.f32.mrf.mxu0
      %828 = vmatprep.mubr.bf16.mxu0 %v527
      %829 = vmatmul.mubr.bf16.gmra.mxu0 %v526
      %v830 = vpop.f32.mrf.mxu0
      %v831 = vadd.f32 %v346, %v830
      %v832 = vpop.f32.mrf.mxu0
      %v833 = vpop.f32.mrf.mxu0
      %v834 = vadd.f32 %v346, %v833
      %v835 = vpop.f32.mrf.mxu0
      %836 = vmatprep.mubr.bf16.mxu0 %v530
      %837 = vmatmul.mubr.bf16.gmra.mxu0 %v529
      %v838 = vpop.f32.mrf.mxu0
      %v839 = vadd.f32 %v346, %v838
      %v840 = vpop.f32.mrf.mxu0
      %v841 = vpop.f32.mrf.mxu0
      %v842 = vadd.f32 %v346, %v841
      %v843 = vpop.f32.mrf.mxu0
      %844 = vmatprep.mubr.bf16.mxu0 %v533
      %845 = vmatmul.mubr.bf16.gmra.mxu0 %v532
      %v846 = vpop.f32.mrf.mxu0
      %v847 = vadd.f32 %v346, %v846
      %v848 = vpop.f32.mrf.mxu0
      %v849 = vpop.f32.mrf.mxu0
      %v850 = vadd.f32 %v346, %v849
      %v851 = vpop.f32.mrf.mxu0
      %852 = vmatprep.mubr.bf16.mxu0 %v536
      %853 = vmatmul.mubr.bf16.gmra.mxu0 %v535
      %v854 = vpop.f32.mrf.mxu0
      %v855 = vadd.f32 %v346, %v854
      %v856 = vpop.f32.mrf.mxu0
      %v857 = vpop.f32.mrf.mxu0
      %v858 = vadd.f32 %v346, %v857
      %v859 = vpop.f32.mrf.mxu0
      %860 = vmatprep.mubr.bf16.mxu0 %v539
      %861 = vmatmul.mubr.bf16.gmra.mxu0 %v538
      %v862 = vpop.f32.mrf.mxu0
      %v863 = vadd.f32 %v346, %v862
      %v864 = vpop.f32.mrf.mxu0
      %v865 = vpop.f32.mrf.mxu0
      %v866 = vadd.f32 %v346, %v865
      %v867 = vpop.f32.mrf.mxu0
      %868 = vmatprep.mubr.bf16.mxu0 %v542
      %869 = vmatmul.mubr.bf16.gmra.mxu0 %v541
      %v870 = vpop.f32.mrf.mxu0
      %v871 = vadd.f32 %v346, %v870
      %v872 = vpop.f32.mrf.mxu0
      %v873 = vpop.f32.mrf.mxu0
      %v874 = vadd.f32 %v346, %v873
      %v875 = vpop.f32.mrf.mxu0
      %876 = vmatprep.mubr.bf16.mxu0 %v545
      %877 = vmatmul.mubr.bf16.gmra.mxu0 %v544
      %v878 = vpop.f32.mrf.mxu0
      %v879 = vadd.f32 %v346, %v878
      %v880 = vpop.f32.mrf.mxu0
      %v881 = vpop.f32.mrf.mxu0
      %v882 = vadd.f32 %v346, %v881
      %v883 = vpop.f32.mrf.mxu0
      %884 = vmatprep.mubr.bf16.mxu0 %v548
      %885 = vmatmul.mubr.bf16.gmra.mxu0 %v547
      %v886 = vpop.f32.mrf.mxu0
      %v887 = vadd.f32 %v346, %v886
      %v888 = vpop.f32.mrf.mxu0
      %v889 = vpop.f32.mrf.mxu0
      %v890 = vadd.f32 %v346, %v889
      %v891 = vpop.f32.mrf.mxu0
      %892 = vmatprep.mubr.bf16.mxu0 %v551
      %893 = vmatmul.mubr.bf16.gmra.mxu0 %v550
      %v894 = vpop.f32.mrf.mxu0
      %v895 = vadd.f32 %v346, %v894
      %v896 = vpop.f32.mrf.mxu0
      %v897 = vpop.f32.mrf.mxu0
      %v898 = vadd.f32 %v346, %v897
      %v899 = vpop.f32.mrf.mxu0
      %900 = vmatprep.mubr.bf16.mxu0 %v554
      %901 = vmatmul.mubr.bf16.gmra.mxu0 %v553
      %v902 = vpop.f32.mrf.mxu0
      %v903 = vadd.f32 %v346, %v902
      %v904 = vpop.f32.mrf.mxu0
      %v905 = vpop.f32.mrf.mxu0
      %v906 = vadd.f32 %v346, %v905
      %v907 = vpop.f32.mrf.mxu0
      %908 = vdwg.mxu0
      %909 = vmatprep.subr.bf16.mxu0 0
      %910 = vmatpush1.bf16.msra.mxu0 %v723
      %911 = vmatprep.subr.bf16.mxu0 0
      %912 = vmatpush1.bf16.msra.mxu0 %v722
      %913 = vmatprep.subr.bf16.mxu0 0
      %914 = vmatpush1.bf16.msra.mxu0 %v721
      %915 = vmatprep.subr.bf16.mxu0 0
      %916 = vmatpush1.bf16.msra.mxu0 %v720
      %917 = vmatprep.subr.bf16.mxu0 0
      %918 = vmatpush1.bf16.msra.mxu0 %v719
      %919 = vmatprep.subr.bf16.mxu0 0
      %920 = vmatpush1.bf16.msra.mxu0 %v718
      %921 = vmatprep.subr.bf16.mxu0 0
      %922 = vmatpush1.bf16.msra.mxu0 %v717
      %923 = vmatprep.subr.bf16.mxu0 0
      %924 = vmatpush1.bf16.msra.mxu0 %v716
      %925 = vmatprep.subr.bf16.mxu0 0
      %926 = vmatpush2.bf16.msra.mxu0 0
      %927 = vmatprep.subr.bf16.mxu0 0
      %928 = vmatpush2.bf16.msra.mxu0 0
      %929 = vmatprep.subr.bf16.mxu0 0
      %930 = vmatpush2.bf16.msra.mxu0 0
      %931 = vmatprep.subr.bf16.mxu0 0
      %932 = vmatpush2.bf16.msra.mxu0 0
      %933 = vmatprep.subr.bf16.mxu0 0
      %934 = vmatpush2.bf16.msra.mxu0 0
      %935 = vmatprep.subr.bf16.mxu0 0
      %936 = vmatpush2.bf16.msra.mxu0 0
      %937 = vmatprep.subr.bf16.mxu0 0
      %938 = vmatpush2.bf16.msra.mxu0 0
      %939 = vmatprep.subr.bf16.mxu0 0
      %940 = vmatpush2.bf16.msra.mxu0 0
      %941 = vmatprep.mubr.bf16.mxu0 0
      %942 = vmatmul.mubr.bf16.gmra.mxu0 %v510
      %v943 = vpop.f32.mrf.mxu0
      %v944 = vadd.f32 %v783, %v943
      %v945 = vpop.f32.mrf.mxu0
      %v946 = vpop.f32.mrf.mxu0
      %v947 = vadd.f32 %v786, %v946
      %v948 = vpop.f32.mrf.mxu0
      %949 = vmatprep.mubr.bf16.mxu0 0
      %950 = vmatmul.mubr.bf16.gmra.mxu0 %v513
      %v951 = vpop.f32.mrf.mxu0
      %v952 = vadd.f32 %v791, %v951
      %v953 = vpop.f32.mrf.mxu0
      %v954 = vpop.f32.mrf.mxu0
      %v955 = vadd.f32 %v794, %v954
      %v956 = vpop.f32.mrf.mxu0
      %957 = vmatprep.mubr.bf16.mxu0 0
      %958 = vmatmul.mubr.bf16.gmra.mxu0 %v516
      %v959 = vpop.f32.mrf.mxu0
      %v960 = vadd.f32 %v799, %v959
      %v961 = vpop.f32.mrf.mxu0
      %v962 = vpop.f32.mrf.mxu0
      %v963 = vadd.f32 %v802, %v962
      %v964 = vpop.f32.mrf.mxu0
      %965 = vmatprep.mubr.bf16.mxu0 0
      %966 = vmatmul.mubr.bf16.gmra.mxu0 %v519
      %v967 = vpop.f32.mrf.mxu0
      %v968 = vadd.f32 %v807, %v967
      %v969 = vpop.f32.mrf.mxu0
      %v970 = vpop.f32.mrf.mxu0
      %v971 = vadd.f32 %v810, %v970
      %v972 = vpop.f32.mrf.mxu0
      %973 = vmatprep.mubr.bf16.mxu0 0
      %974 = vmatmul.mubr.bf16.gmra.mxu0 %v522
      %v975 = vpop.f32.mrf.mxu0
      %v976 = vadd.f32 %v815, %v975
      %v977 = vpop.f32.mrf.mxu0
      %v978 = vpop.f32.mrf.mxu0
      %v979 = vadd.f32 %v818, %v978
      %v980 = vpop.f32.mrf.mxu0
      %981 = vmatprep.mubr.bf16.mxu0 0
      %982 = vmatmul.mubr.bf16.gmra.mxu0 %v525
      %v983 = vpop.f32.mrf.mxu0
      %v984 = vadd.f32 %v823, %v983
      %v985 = vpop.f32.mrf.mxu0
      %v986 = vpop.f32.mrf.mxu0
      %v987 = vadd.f32 %v826, %v986
      %v988 = vpop.f32.mrf.mxu0
      %989 = vmatprep.mubr.bf16.mxu0 0
      %990 = vmatmul.mubr.bf16.gmra.mxu0 %v528
      %v991 = vpop.f32.mrf.mxu0
      %v992 = vadd.f32 %v831, %v991
      %v993 = vpop.f32.mrf.mxu0
      %v994 = vpop.f32.mrf.mxu0
      %v995 = vadd.f32 %v834, %v994
      %v996 = vpop.f32.mrf.mxu0
      %997 = vmatprep.mubr.bf16.mxu0 0
      %998 = vmatmul.mubr.bf16.gmra.mxu0 %v531
      %v999 = vpop.f32.mrf.mxu0
      %v1000 = vadd.f32 %v839, %v999
      %v1001 = vpop.f32.mrf.mxu0
      %v1002 = vpop.f32.mrf.mxu0
      %v1003 = vadd.f32 %v842, %v1002
      %v1004 = vpop.f32.mrf.mxu0
      %1005 = vmatprep.mubr.bf16.mxu0 0
      %1006 = vmatmul.mubr.bf16.gmra.mxu0 %v534
      %v1007 = vpop.f32.mrf.mxu0
      %v1008 = vadd.f32 %v847, %v1007
      %v1009 = vpop.f32.mrf.mxu0
      %v1010 = vpop.f32.mrf.mxu0
      %v1011 = vadd.f32 %v850, %v1010
      %v1012 = vpop.f32.mrf.mxu0
      %1013 = vmatprep.mubr.bf16.mxu0 0
      %1014 = vmatmul.mubr.bf16.gmra.mxu0 %v537
      %v1015 = vpop.f32.mrf.mxu0
      %v1016 = vadd.f32 %v855, %v1015
      %v1017 = vpop.f32.mrf.mxu0
      %v1018 = vpop.f32.mrf.mxu0
      %v1019 = vadd.f32 %v858, %v1018
      %v1020 = vpop.f32.mrf.mxu0
      %1021 = vmatprep.mubr.bf16.mxu0 0
      %1022 = vmatmul.mubr.bf16.gmra.mxu0 %v540
      %v1023 = vpop.f32.mrf.mxu0
      %v1024 = vadd.f32 %v863, %v1023
      %v1025 = vpop.f32.mrf.mxu0
      %v1026 = vpop.f32.mrf.mxu0
      %v1027 = vadd.f32 %v866, %v1026
      %v1028 = vpop.f32.mrf.mxu0
      %1029 = vmatprep.mubr.bf16.mxu0 0
      %1030 = vmatmul.mubr.bf16.gmra.mxu0 %v543
      %v1031 = vpop.f32.mrf.mxu0
      %v1032 = vadd.f32 %v871, %v1031
      %v1033 = vpop.f32.mrf.mxu0
      %v1034 = vpop.f32.mrf.mxu0
      %v1035 = vadd.f32 %v874, %v1034
      %v1036 = vpop.f32.mrf.mxu0
      %1037 = vmatprep.mubr.bf16.mxu0 0
      %1038 = vmatmul.mubr.bf16.gmra.mxu0 %v546
      %v1039 = vpop.f32.mrf.mxu0
      %v1040 = vadd.f32 %v879, %v1039
      %v1041 = vpop.f32.mrf.mxu0
      %v1042 = vpop.f32.mrf.mxu0
      %v1043 = vadd.f32 %v882, %v1042
      %v1044 = vpop.f32.mrf.mxu0
      %1045 = vmatprep.mubr.bf16.mxu0 0
      %1046 = vmatmul.mubr.bf16.gmra.mxu0 %v549
      %v1047 = vpop.f32.mrf.mxu0
      %v1048 = vadd.f32 %v887, %v1047
      %v1049 = vpop.f32.mrf.mxu0
      %v1050 = vpop.f32.mrf.mxu0
      %v1051 = vadd.f32 %v890, %v1050
      %v1052 = vpop.f32.mrf.mxu0
      %1053 = vmatprep.mubr.bf16.mxu0 0
      %1054 = vmatmul.mubr.bf16.gmra.mxu0 %v552
      %v1055 = vpop.f32.mrf.mxu0
      %v1056 = vadd.f32 %v895, %v1055
      %v1057 = vpop.f32.mrf.mxu0
      %v1058 = vpop.f32.mrf.mxu0
      %v1059 = vadd.f32 %v898, %v1058
      %v1060 = vpop.f32.mrf.mxu0
      %1061 = vmatprep.mubr.bf16.mxu0 0
      %1062 = vmatmul.mubr.bf16.gmra.mxu0 %v555
      %v1063 = vpop.f32.mrf.mxu0
      %v1064 = vadd.f32 %v903, %v1063
      %v1065 = vpop.f32.mrf.mxu0
      %v1066 = vpop.f32.mrf.mxu0
      %v1067 = vadd.f32 %v906, %v1066
      %v1068 = vpop.f32.mrf.mxu0
      %1069 = vdwg.mxu0
      %v1070 = vmax.f32 %v944, 0.0
      %v1071 = vmax.f32 %v947, 0.0
      %v1072 = vmax.f32 %v952, 0.0
      %v1073 = vmax.f32 %v955, 0.0
      %v1074 = vmax.f32 %v960, 0.0
      %v1075 = vmax.f32 %v963, 0.0
      %v1076 = vmax.f32 %v968, 0.0
      %v1077 = vmax.f32 %v971, 0.0
      %v1078 = vmax.f32 %v976, 0.0
      %v1079 = vmax.f32 %v979, 0.0
      %v1080 = vmax.f32 %v984, 0.0
      %v1081 = vmax.f32 %v987, 0.0
      %v1082 = vmax.f32 %v992, 0.0
      %v1083 = vmax.f32 %v995, 0.0
      %v1084 = vmax.f32 %v1000, 0.0
      %v1085 = vmax.f32 %v1003, 0.0
      %v1086 = vmax.f32 %v1008, 0.0
      %v1087 = vmax.f32 %v1011, 0.0
      %v1088 = vmax.f32 %v1016, 0.0
      %v1089 = vmax.f32 %v1019, 0.0
      %v1090 = vmax.f32 %v1024, 0.0
      %v1091 = vmax.f32 %v1027, 0.0
      %v1092 = vmax.f32 %v1032, 0.0
      %v1093 = vmax.f32 %v1035, 0.0
      %v1094 = vmax.f32 %v1040, 0.0
      %v1095 = vmax.f32 %v1043, 0.0
      %v1096 = vmax.f32 %v1048, 0.0
      %v1097 = vmax.f32 %v1051, 0.0
      %v1098 = vmax.f32 %v1056, 0.0
      %v1099 = vmax.f32 %v1059, 0.0
      %v1100 = vmax.f32 %v1064, 0.0
      %v1101 = vmax.f32 %v1067, 0.0
      %v1102 = vpack.c.bf16 %v1071, %v1070
      %v1103 = vpack.c.bf16 %v1073, %v1072
      %v1104 = vpack.c.bf16 %v1075, %v1074
      %v1105 = vpack.c.bf16 %v1077, %v1076
      %v1106 = vpack.c.bf16 %v1079, %v1078
      %v1107 = vpack.c.bf16 %v1081, %v1080
      %v1108 = vpack.c.bf16 %v1083, %v1082
      %v1109 = vpack.c.bf16 %v1085, %v1084
      %v1110 = vpack.c.bf16 %v1087, %v1086
      %v1111 = vpack.c.bf16 %v1089, %v1088
      %v1112 = vpack.c.bf16 %v1091, %v1090
      %v1113 = vpack.c.bf16 %v1093, %v1092
      %v1114 = vpack.c.bf16 %v1095, %v1094
      %v1115 = vpack.c.bf16 %v1097, %v1096
      %v1116 = vpack.c.bf16 %v1099, %v1098
      %v1117 = vpack.c.bf16 %v1101, %v1100
      %v1134 = vunpack.c.l.b16 %v1102
      %v1135 = vunpack.c.h.b16 %v1102
      %v1136 = vunpack.c.l.b16 %v1103
      %v1137 = vunpack.c.h.b16 %v1103
      %v1138 = vunpack.c.l.b16 %v1104
      %v1139 = vunpack.c.h.b16 %v1104
      %v1140 = vunpack.c.l.b16 %v1105
      %v1141 = vunpack.c.h.b16 %v1105
      %v1142 = vunpack.c.l.b16 %v1106
      %v1143 = vunpack.c.h.b16 %v1106
      %v1144 = vunpack.c.l.b16 %v1107
      %v1145 = vunpack.c.h.b16 %v1107
      %v1146 = vunpack.c.l.b16 %v1108
      %v1147 = vunpack.c.h.b16 %v1108
      %v1148 = vunpack.c.l.b16 %v1109
      %v1149 = vunpack.c.h.b16 %v1109
      %v1150 = vunpack.c.l.b16 %v1110
      %v1151 = vunpack.c.h.b16 %v1110
      %v1152 = vunpack.c.l.b16 %v1111
      %v1153 = vunpack.c.h.b16 %v1111
      %v1154 = vunpack.c.l.b16 %v1112
      %v1155 = vunpack.c.h.b16 %v1112
      %v1156 = vunpack.c.l.b16 %v1113
      %v1157 = vunpack.c.h.b16 %v1113
      %v1158 = vunpack.c.l.b16 %v1114
      %v1159 = vunpack.c.h.b16 %v1114
      %v1160 = vunpack.c.l.b16 %v1115
      %v1161 = vunpack.c.h.b16 %v1115
      %v1162 = vunpack.c.l.b16 %v1116
      %v1163 = vunpack.c.h.b16 %v1116
      %v1164 = vunpack.c.l.b16 %v1117
      %v1165 = vunpack.c.h.b16 %v1117
      %v1166 = vpack.c.b16 %v1134, %v1134
      %v1167 = vpack.c.b16 %v1135, %v1135
      %v1168 = vpack.c.b16 %v1136, %v1136
      %v1169 = vpack.c.b16 %v1137, %v1137
      %v1170 = vpack.c.b16 %v1138, %v1138
      %v1171 = vpack.c.b16 %v1139, %v1139
      %v1172 = vpack.c.b16 %v1140, %v1140
      %v1173 = vpack.c.b16 %v1141, %v1141
      %v1174 = vpack.c.b16 %v1142, %v1142
      %v1175 = vpack.c.b16 %v1143, %v1143
      %v1176 = vpack.c.b16 %v1144, %v1144
      %v1177 = vpack.c.b16 %v1145, %v1145
      %v1178 = vpack.c.b16 %v1146, %v1146
      %v1179 = vpack.c.b16 %v1147, %v1147
      %v1180 = vpack.c.b16 %v1148, %v1148
      %v1181 = vpack.c.b16 %v1149, %v1149
      %v1182 = vpack.c.b16 %v1150, %v1150
      %v1183 = vpack.c.b16 %v1151, %v1151
      %v1184 = vpack.c.b16 %v1152, %v1152
      %v1185 = vpack.c.b16 %v1153, %v1153
      %v1186 = vpack.c.b16 %v1154, %v1154
      %v1187 = vpack.c.b16 %v1155, %v1155
      %v1188 = vpack.c.b16 %v1156, %v1156
      %v1189 = vpack.c.b16 %v1157, %v1157
      %v1190 = vpack.c.b16 %v1158, %v1158
      %v1191 = vpack.c.b16 %v1159, %v1159
      %v1192 = vpack.c.b16 %v1160, %v1160
      %v1193 = vpack.c.b16 %v1161, %v1161
      %v1194 = vpack.c.b16 %v1162, %v1162
      %v1195 = vpack.c.b16 %v1163, %v1163
      %v1196 = vpack.c.b16 %v1164, %v1164
      %v1197 = vpack.c.b16 %v1165, %v1165
      %1230 = vst [vmem:[%s226] sm:$0xf] %v1166
      %1231 = vst [vmem:[%s226 + $0x4] sm:$0xf] %v1167
      %1232 = vst [vmem:[%s226 + $0x8] sm:$0xf] %v1168
      %1233 = vst [vmem:[%s226 + $0xc] sm:$0xf] %v1169
      %1234 = vst [vmem:[%s226 + $0x10] sm:$0xf] %v1170
      %1235 = vst [vmem:[%s226 + $0x14] sm:$0xf] %v1171
      %1236 = vst [vmem:[%s226 + $0x18] sm:$0xf] %v1172
      %1237 = vst [vmem:[%s226 + $0x1c] sm:$0xf] %v1173
      %1238 = vst [vmem:[%s226 + $0x20] sm:$0xf] %v1174
      %1239 = vst [vmem:[%s226 + $0x24] sm:$0xf] %v1175
      %1240 = vst [vmem:[%s226 + $0x28] sm:$0xf] %v1176
      %1241 = vst [vmem:[%s226 + $0x2c] sm:$0xf] %v1177
      %1242 = vst [vmem:[%s226 + $0x30] sm:$0xf] %v1178
      %1243 = vst [vmem:[%s226 + $0x34] sm:$0xf] %v1179
      %1244 = vst [vmem:[%s226 + $0x38] sm:$0xf] %v1180
      %1245 = vst [vmem:[%s226 + $0x3c] sm:$0xf] %v1181
      %1246 = vst [vmem:[%s226 + $0x40] sm:$0xf] %v1182
      %1247 = vst [vmem:[%s226 + $0x44] sm:$0xf] %v1183
      %1248 = vst [vmem:[%s226 + $0x48] sm:$0xf] %v1184
      %1249 = vst [vmem:[%s226 + $0x4c] sm:$0xf] %v1185
      %1250 = vst [vmem:[%s226 + $0x50] sm:$0xf] %v1186
      %1251 = vst [vmem:[%s226 + $0x54] sm:$0xf] %v1187
      %1252 = vst [vmem:[%s226 + $0x58] sm:$0xf] %v1188
      %1253 = vst [vmem:[%s226 + $0x5c] sm:$0xf] %v1189
      %1254 = vst [vmem:[%s226 + $0x60] sm:$0xf] %v1190
      %1255 = vst [vmem:[%s226 + $0x64] sm:$0xf] %v1191
      %1256 = vst [vmem:[%s226 + $0x68] sm:$0xf] %v1192
      %1257 = vst [vmem:[%s226 + $0x6c] sm:$0xf] %v1193
      %1258 = vst [vmem:[%s226 + $0x70] sm:$0xf] %v1194
      %1259 = vst [vmem:[%s226 + $0x74] sm:$0xf] %v1195
      %1260 = vst [vmem:[%s226 + $0x78] sm:$0xf] %v1196
      %1261 = vst [vmem:[%s226 + $0x7c] sm:$0xf] %v1197
      %s1262 = smul.u32 32, %s18
      %p1263 = scmp.lt.s32.totalorder %s1262, 159
      %s1264 = scalar_select %p1263, %s1262, 159
      %p1265 = scmp.lt.s32.totalorder %s19, 0
      %s1266 = scalar_select %p1265, %s19, 0
      %s1267 = sadd.s32 %s1266, %s1264
      %s1268 = smul.addr %s1267, 4
      %s1269 = scalar_lea.vmem %s3, %s1268
      // Predicated region
      $region33: #{stem_fwd.13} parent=31 // pred_check
        %p1270 = pneg %p124
      $region34: #{stem_fwd.13} parent=31 // pred_check_branch
        %1272 = sbr.rel (%p1270) target = $region36
      $region35: #{stem_fwd.13} parent=31 // pred_region
        %s1273 = smul.u32 32, %s18
      $region36: #{stem_fwd.13} parent=31 // pred_fallthru
        _
    $region32: #{stem_fwd.13} parent=5 // pred_fallthru
      _
    %p1274 = scmp.le.s32.totalorder 2, %s9
    // Predicated region
    $region37: #{stem_fwd.13} parent=5 // pred_check
      %p1275 = pneg %p1274
    $region38: #{stem_fwd.13} parent=5 // pred_check_branch
      %1277 = sbr.rel (%p1275) target = $region40
    $region39: #{stem_fwd.13} parent=5 // pred_region
      %s1278 = ssub.s32 %s9, 2
      // Predicated region
      $region41: #{stem_fwd.13} parent=39 // pred_check
        %p1279 = pneg %p130
      $region42: #{stem_fwd.13} parent=39 // pred_check_branch
        %1281 = sbr.rel (%p1279) target = $region44
      $region43: #{stem_fwd.13} parent=39 // pred_region
        %s1282 = smul.u32 32, %s20
        %p1283 = scmp.lt.s32.totalorder %s1282, 159
        %s1284 = scalar_select %p1283, %s1282, 159
        %p1285 = scmp.lt.s32.totalorder %s21, 0
        %s1286 = scalar_select %p1285, %s21, 0
        %s1287 = sadd.s32 %s1286, %s1284
        %s1288 = smul.addr %s1287, 4
        %s1289 = scalar_lea.vmem %s3, %s1288
      $region44: #{stem_fwd.13} parent=39 // pred_fallthru
        _
    $region40: #{stem_fwd.13} parent=5 // pred_fallthru
      _
  $region6: #{stem_fwd.13} parent=0 // loop_footer
    %s13 = sadd.s32 1, %s9
  $region7: #{stem_fwd.13} parent=0 // loop_footer_branch
    %8 = sbr.rel target = $region3
  $region8: #{stem_fwd.13} parent=0 // loop_exit
    _

// kernel: stem_fwd.15
$region0: #{stem_fwd.15}
  #allocation0 [shape = 'u32[]', space=smem, size = 0x4, offset = 0x4, fixed_abs, tag = 'smem constant byte address 0x4 - core index']
  #allocation1 [shape = 'u32[144,128]{1,0:T(1,128)}', space=vmem, size = 0x12000, scoped, tag = 'internal scratch']
  %s0 = inlined_call_operand.vmem [shape: bf16[384,128], index: 0, kind: input, shape index: {}]
  %s1 = inlined_call_operand.vmem [shape: bf16[128,128], index: 1, kind: input, shape index: {}]
  %s2 = inlined_call_operand.vmem [shape: f32[1,128], index: 2, kind: input, shape index: {}]
  %s3 = inlined_call_operand.vmem [shape: bf16[384,128], index: 3, kind: output, shape index: {}]
  %s4 = sld [smem:[#allocation0]]
  $region45: #{stem_fwd.15} parent=0
    _
  %s6 = ssub.s32 1, %s4
  %s7 = scalar_select 0, %s6, %s4
  loop: start=0, step=1, limit=5
  $region2: #{stem_fwd.15} parent=0 // loop_pre_header
    _
  $region3: #{stem_fwd.15} parent=0 // loop_header
    %s9 = sphi 0, %s13
    %p10 = scmp.ge.s32.totalorder %s9, 5
    %s16 = sphi 0, %s28
    %s17 = sphi 0, %s24
    %s18 = sphi 0, %s16
    %s19 = sphi 0, %s17
    %s20 = sphi 0, %s18
    %s21 = sphi 0, %s19
    %s31 = sphi 0, %s33
    %s34 = sphi 0, %s31
    %s35 = sphi 0, %s34
    %s51 = sphi 0, %s35
    %s57 = sphi 0, %s59
    %s60 = sphi 0, %s57
    %s61 = sphi 0, %s60
    %s77 = sphi 0, %s61
    %s83 = sphi 0, %s85
    %s86 = sphi 0, %s83
    %s87 = sphi 0, %s86
    %s103 = sphi 0, %s87
    %s111 = sphi 0, %s113
    %s114 = sphi 0, %s111
    %s115 = sphi 0, %s114
    %s131 = sphi 0, %s115
  $region4: #{stem_fwd.15} parent=0 // loop_header_branch
    %12 = sbr.rel (%p10) target = $region8
  $region5: #{stem_fwd.15} parent=0 // loop_body
    %s14 = ssub.s32 %s9, 1
    %s15 = ssub.s32 %s9, 2
    %s22 = sadd.s32 1, %s17
    %p23 = scmp.ge.s32.totalorder %s22, 1
    %s24 = scalar_select %p23, 0, %s22
    %s25 = sadd.s32 1, %s16
    %s26 = scalar_select %p23, %s25, %s16
    %p27 = scmp.ge.s32.totalorder %s26, 3
    %s28 = scalar_select %p27, 0, %s26
    %s29 = ssub.s32 %s16, %s28
    %p30 = scmp.eq.s32.totalorder %s29, 0
    %s32 = sadd.s32 %s31, 1
    %s33 = scalar_select %p30, %s31, %s32
    %p36 = pneg %p30
    %p37 = scmp.eq.s32.totalorder %s9, 2
    %p38 = por %p36, %p37
    %p39 = scmp.ne.s32.totalorder %s31, %s34
    %p40 = scmp.eq.s32.totalorder %s9, 0
    %p41 = por %p39, %p40
    %p42 = scmp.ne.s32.totalorder %s31, %s34
    %p43 = scmp.eq.s32.totalorder %s14, 2
    %p44 = por %p42, %p43
    %p45 = scmp.ne.s32.totalorder %s34, %s35
    %p46 = scmp.eq.s32.totalorder %s14, 0
    %p47 = por %p45, %p46
    %p48 = scmp.ne.s32.totalorder %s34, %s35
    %p49 = scmp.eq.s32.totalorder %s15, 2
    %p50 = por %p48, %p49
    %p52 = scmp.ne.s32.totalorder %s35, %s51
    %p53 = scmp.eq.s32.totalorder %s15, 0
    %p54 = por %p52, %p53
    %s55 = ssub.s32 %s17, %s24
    %p56 = scmp.eq.s32.totalorder %s55, 0
    %s58 = sadd.s32 %s57, 1
    %s59 = scalar_select %p56, %s57, %s58
    %p62 = pneg %p56
    %p63 = scmp.eq.s32.totalorder %s9, 2
    %p64 = por %p62, %p63
    %p65 = scmp.ne.s32.totalorder %s57, %s60
    %p66 = scmp.eq.s32.totalorder %s9, 0
    %p67 = por %p65, %p66
    %p68 = scmp.ne.s32.totalorder %s57, %s60
    %p69 = scmp.eq.s32.totalorder %s14, 2
    %p70 = por %p68, %p69
    %p71 = scmp.ne.s32.totalorder %s60, %s61
    %p72 = scmp.eq.s32.totalorder %s14, 0
    %p73 = por %p71, %p72
    %p74 = scmp.ne.s32.totalorder %s60, %s61
    %p75 = scmp.eq.s32.totalorder %s15, 2
    %p76 = por %p74, %p75
    %p78 = scmp.ne.s32.totalorder %s61, %s77
    %p79 = scmp.eq.s32.totalorder %s15, 0
    %p80 = por %p78, %p79
    %s81 = ssub.s32 %s17, %s24
    %p82 = scmp.eq.s32.totalorder %s81, 0
    %s84 = sadd.s32 %s83, 1
    %s85 = scalar_select %p82, %s83, %s84
    %p88 = pneg %p82
    %p89 = scmp.eq.s32.totalorder %s9, 2
    %p90 = por %p88, %p89
    %p91 = scmp.ne.s32.totalorder %s83, %s86
    %p92 = scmp.eq.s32.totalorder %s9, 0
    %p93 = por %p91, %p92
    %p94 = scmp.ne.s32.totalorder %s83, %s86
    %p95 = scmp.eq.s32.totalorder %s14, 2
    %p96 = por %p94, %p95
    %p97 = scmp.ne.s32.totalorder %s86, %s87
    %p98 = scmp.eq.s32.totalorder %s14, 0
    %p99 = por %p97, %p98
    %p100 = scmp.ne.s32.totalorder %s86, %s87
    %p101 = scmp.eq.s32.totalorder %s15, 2
    %p102 = por %p100, %p101
    %p104 = scmp.ne.s32.totalorder %s87, %s103
    %p105 = scmp.eq.s32.totalorder %s15, 0
    %p106 = por %p104, %p105
    %s107 = ssub.s32 %s16, %s28
    %s108 = ssub.s32 %s17, %s24
    %s109 = sor.u32 %s107, %s108
    %p110 = scmp.eq.s32.totalorder %s109, 0
    %s112 = sadd.s32 %s111, 1
    %s113 = scalar_select %p110, %s111, %s112
    %p116 = pneg %p110
    %p117 = scmp.eq.s32.totalorder %s9, 2
    %p118 = por %p116, %p117
    %p119 = scmp.ne.s32.totalorder %s111, %s114
    %p120 = scmp.eq.s32.totalorder %s9, 0
    %p121 = por %p119, %p120
    %p122 = scmp.ne.s32.totalorder %s111, %s114
    %p123 = scmp.eq.s32.totalorder %s14, 2
    %p124 = por %p122, %p123
    %p125 = scmp.ne.s32.totalorder %s114, %s115
    %p126 = scmp.eq.s32.totalorder %s14, 0
    %p127 = por %p125, %p126
    %p128 = scmp.ne.s32.totalorder %s114, %s115
    %p129 = scmp.eq.s32.totalorder %s15, 2
    %p130 = por %p128, %p129
    %p132 = scmp.ne.s32.totalorder %s115, %s131
    %p133 = scmp.eq.s32.totalorder %s15, 0
    %p134 = por %p132, %p133
    %p135 = scmp.le.s32.totalorder 1, %s9
    %p136 = scmp.lt.s32.totalorder %s9, 4
    %p137 = pnand %p135, %p136
    %p138 = pneg %p137
    // Predicated region
    $region9: #{stem_fwd.15} parent=5 // pred_check
      _
    $region10: #{stem_fwd.15} parent=5 // pred_check_branch
      %140 = sbr.rel (%p137) target = $region12
    $region11: #{stem_fwd.15} parent=5 // pred_region
      %s141 = ssub.s32 %s9, 1
      // Predicated region
      $region13: #{stem_fwd.15} parent=11 // pred_check
        %p142 = pneg %p73
      $region14: #{stem_fwd.15} parent=11 // pred_check_branch
        %144 = sbr.rel (%p142) target = $region16
      $region15: #{stem_fwd.15} parent=11 // pred_region
        %p145 = scmp.lt.s32.totalorder %s19, 0
        %s146 = scalar_select %p145, %s19, 0
        %s147 = smul.addr %s146, 4
        %s148 = scalar_lea.vmem %s1, %s147
      $region16: #{stem_fwd.15} parent=11 // pred_fallthru
        _
      // Predicated region
      $region17: #{stem_fwd.15} parent=11 // pred_check
        %p149 = pneg %p99
      $region18: #{stem_fwd.15} parent=11 // pred_check_branch
        %151 = sbr.rel (%p149) target = $region20
      $region19: #{stem_fwd.15} parent=11 // pred_region
        %p152 = scmp.lt.s32.totalorder %s19, 0
        %s153 = scalar_select %p152, %s19, 0
        %s154 = scalar_lea.vmem %s2, %s153
      $region20: #{stem_fwd.15} parent=11 // pred_fallthru
        _
    $region12: #{stem_fwd.15} parent=5 // pred_fallthru
      _
    %p155 = scmp.lt.s32.totalorder %s9, 3
    // Predicated region
    $region21: #{stem_fwd.15} parent=5 // pred_check
      %p156 = pneg %p155
    $region22: #{stem_fwd.15} parent=5 // pred_check_branch
      %158 = sbr.rel (%p156) target = $region24
    $region23: #{stem_fwd.15} parent=5 // pred_region
      // Predicated region
      $region25: #{stem_fwd.15} parent=23 // pred_check
        %p159 = pneg %p41
      $region26: #{stem_fwd.15} parent=23 // pred_check_branch
        %161 = sbr.rel (%p159) target = $region28
      $region27: #{stem_fwd.15} parent=23 // pred_region
        %s162 = smul.u32 16, %s16
        %p163 = scmp.lt.s32.totalorder %s162, 47
        %s164 = scalar_select %p163, %s162, 47
        %s165 = smul.addr %s164, 4
        %s166 = scalar_lea.vmem %s0, %s165
        %s167 = smul.u32 16, %s16
      $region28: #{stem_fwd.15} parent=23 // pred_fallthru
        _
    $region24: #{stem_fwd.15} parent=5 // pred_fallthru
      _
    %p168 = scmp.le.s32.totalorder 1, %s9
    %p169 = scmp.lt.s32.totalorder %s9, 4
    %p170 = pnand %p168, %p169
    %p171 = pneg %p170
    // Predicated region
    $region29: #{stem_fwd.15} parent=5 // pred_check
      _
    $region30: #{stem_fwd.15} parent=5 // pred_check_branch
      %173 = sbr.rel (%p170) target = $region32
    $region31: #{stem_fwd.15} parent=5 // pred_region
      %s174 = ssub.s32 %s9, 1
      %s175 = smul.u32 16, %s18
      %p176 = scmp.lt.s32.totalorder %s175, 47
      %s177 = scalar_select %p176, %s175, 47
      %s178 = smul.addr %s177, 4
      %s179 = scalar_lea.vmem %s0, %s178
      %p180 = pneg %p47
      %p181 = pneg %p44
      %p182 = scmp.lt.s32.totalorder %s19, 0
      %s183 = scalar_select %p182, %s19, 0
      %s184 = smul.addr %s183, 4
      %s185 = scalar_lea.vmem %s1, %s184
      %p186 = pneg %p73
      %p187 = pneg %p70
      %p188 = scmp.lt.s32.totalorder %s19, 0
      %s189 = scalar_select %p188, %s19, 0
      %s190 = scalar_lea.vmem %s2, %s189
      %p191 = pneg %p99
      %p192 = pneg %p96
      %p193 = pneg %p127
      %p194 = pneg %p124
      %s195 = smul.u32 16, %s18
      %p196 = scmp.lt.s32.totalorder %s195, 47
      %s197 = scalar_select %p196, %s195, 47
      %p198 = scmp.lt.s32.totalorder %s19, 0
      %s199 = scalar_select %p198, %s19, 0
      %s200 = sadd.s32 %s199, %s197
      %s201 = smul.addr %s200, 4
      %s202 = scalar_lea.vmem %s3, %s201
      %s203 = smul.u32 16, %s18
      %p204 = scmp.lt.s32.totalorder %s203, 47
      %s205 = scalar_select %p204, %s203, 47
      %s206 = smul.addr %s205, 4
      %s207 = scalar_lea.vmem %s0, %s206
      %s208 = smul.u32 16, %s18
      %p209 = scmp.lt.s32.totalorder %s19, 0
      %s210 = scalar_select %p209, %s19, 0
      %s211 = smul.addr %s210, 4
      %s212 = scalar_lea.vmem %s1, %s211
      %p213 = scmp.lt.s32.totalorder %s19, 0
      %s214 = scalar_select %p213, %s19, 0
      %s215 = scalar_lea.vmem %s2, %s214
      %s216 = smul.u32 16, %s18
      %p217 = scmp.lt.s32.totalorder %s216, 47
      %s218 = scalar_select %p217, %s216, 47
      %p219 = scmp.lt.s32.totalorder %s19, 0
      %s220 = scalar_select %p219, %s19, 0
      %s221 = sadd.s32 %s220, %s218
      %s222 = smul.addr %s221, 4
      %s223 = scalar_lea.vmem %s3, %s222
      %s224 = smul.u32 16, %s18
      %v226 = vld [vmem:[%s207] sm:$0xf]
      %v227 = vld [vmem:[%s207 + $0x4] sm:$0xf]
      %v228 = vld [vmem:[%s207 + $0x8] sm:$0xf]
      %v229 = vld [vmem:[%s207 + $0xc] sm:$0xf]
      %v230 = vld [vmem:[%s207 + $0x10] sm:$0xf]
      %v231 = vld [vmem:[%s207 + $0x14] sm:$0xf]
      %v232 = vld [vmem:[%s207 + $0x18] sm:$0xf]
      %v233 = vld [vmem:[%s207 + $0x1c] sm:$0xf]
      %v234 = vld [vmem:[%s207 + $0x20] sm:$0xf]
      %v235 = vld [vmem:[%s207 + $0x24] sm:$0xf]
      %v236 = vld [vmem:[%s207 + $0x28] sm:$0xf]
      %v237 = vld [vmem:[%s207 + $0x2c] sm:$0xf]
      %v238 = vld [vmem:[%s207 + $0x30] sm:$0xf]
      %v239 = vld [vmem:[%s207 + $0x34] sm:$0xf]
      %v240 = vld [vmem:[%s207 + $0x38] sm:$0xf]
      %v241 = vld [vmem:[%s207 + $0x3c] sm:$0xf]
      %v242 = vld [vmem:[%s212] sm:$0xf]
      %v243 = vld [vmem:[%s212 + $0x4] sm:$0xf]
      %v244 = vld [vmem:[%s212 + $0x8] sm:$0xf]
      %v245 = vld [vmem:[%s212 + $0xc] sm:$0xf]
      %v246 = vld [vmem:[%s212 + $0x10] sm:$0xf]
      %v247 = vld [vmem:[%s212 + $0x14] sm:$0xf]
      %v248 = vld [vmem:[%s212 + $0x18] sm:$0xf]
      %v249 = vld [vmem:[%s212 + $0x1c] sm:$0xf]
      %v250 = vld [vmem:[%s212 + $0x20] sm:$0xf]
      %v251 = vld [vmem:[%s212 + $0x24] sm:$0xf]
      %v252 = vld [vmem:[%s212 + $0x28] sm:$0xf]
      %v253 = vld [vmem:[%s212 + $0x2c] sm:$0xf]
      %v254 = vld [vmem:[%s212 + $0x30] sm:$0xf]
      %v255 = vld [vmem:[%s212 + $0x34] sm:$0xf]
      %v256 = vld [vmem:[%s212 + $0x38] sm:$0xf]
      %v257 = vld [vmem:[%s212 + $0x3c] sm:$0xf]
      %v258 = vld [vmem:[%s215] sm:$0x1]
      %v260 = vlaneseq
      %v261 = vshrl.u32 %v260, 7
      %v262 = vsub.s32 0, %v261
      %v263 = vrot.slane %v258, %v262
      %v281 = vunpack.c.l.b16 %v226
      %v282 = vunpack.c.l.b16 %v227
      %v283 = vunpack.c.l.b16 %v228
      %v284 = vunpack.c.l.b16 %v229
      %v285 = vunpack.c.l.b16 %v230
      %v286 = vunpack.c.l.b16 %v231
      %v287 = vunpack.c.l.b16 %v232
      %v288 = vunpack.c.l.b16 %v233
      %v289 = vunpack.c.l.b16 %v234
      %v290 = vunpack.c.l.b16 %v235
      %v291 = vunpack.c.l.b16 %v236
      %v292 = vunpack.c.l.b16 %v237
      %v293 = vunpack.c.l.b16 %v238
      %v294 = vunpack.c.l.b16 %v239
      %v295 = vunpack.c.l.b16 %v240
      %v296 = vunpack.c.l.b16 %v241
      %v297 = vpack.c.b16 %v282, %v281
      %v298 = vpack.c.b16 %v284, %v283
      %v299 = vpack.c.b16 %v286, %v285
      %v300 = vpack.c.b16 %v288, %v287
      %v301 = vpack.c.b16 %v290, %v289
      %v302 = vpack.c.b16 %v292, %v291
      %v303 = vpack.c.b16 %v294, %v293
      %v304 = vpack.c.b16 %v296, %v295
      %v329 = vunpack.c.l.b16 %v242
      %v330 = vunpack.c.l.b16 %v243
      %v331 = vunpack.c.l.b16 %v244
      %v332 = vunpack.c.l.b16 %v245
      %v333 = vunpack.c.l.b16 %v246
      %v334 = vunpack.c.l.b16 %v247
      %v335 = vunpack.c.l.b16 %v248
      %v336 = vunpack.c.l.b16 %v249
      %v337 = vunpack.c.l.b16 %v250
      %v338 = vunpack.c.l.b16 %v251
      %v339 = vunpack.c.l.b16 %v252
      %v340 = vunpack.c.l.b16 %v253
      %v341 = vunpack.c.l.b16 %v254
      %v342 = vunpack.c.l.b16 %v255
      %v343 = vunpack.c.l.b16 %v256
      %v344 = vunpack.c.l.b16 %v257
      %v345 = vpack.c.b16 %v330, %v329
      %v346 = vpack.c.b16 %v332, %v331
      %v347 = vpack.c.b16 %v334, %v333
      %v348 = vpack.c.b16 %v336, %v335
      %v349 = vpack.c.b16 %v338, %v337
      %v350 = vpack.c.b16 %v340, %v339
      %v351 = vpack.c.b16 %v342, %v341
      %v352 = vpack.c.b16 %v344, %v343
      %361 = vmatprep.subr.bf16.mxu0 0
      %362 = vmatpush1.bf16.msra.mxu0 %v352
      %363 = vmatprep.subr.bf16.mxu0 0
      %364 = vmatpush1.bf16.msra.mxu0 %v351
      %365 = vmatprep.subr.bf16.mxu0 0
      %366 = vmatpush1.bf16.msra.mxu0 %v350
      %367 = vmatprep.subr.bf16.mxu0 0
      %368 = vmatpush1.bf16.msra.mxu0 %v349
      %369 = vmatprep.subr.bf16.mxu0 0
      %370 = vmatpush1.bf16.msra.mxu0 %v348
      %371 = vmatprep.subr.bf16.mxu0 0
      %372 = vmatpush1.bf16.msra.mxu0 %v347
      %373 = vmatprep.subr.bf16.mxu0 0
      %374 = vmatpush1.bf16.msra.mxu0 %v346
      %375 = vmatprep.subr.bf16.mxu0 0
      %376 = vmatpush1.bf16.msra.mxu0 %v345
      %377 = vmatprep.subr.bf16.mxu0 0
      %378 = vmatpush2.bf16.msra.mxu0 0
      %379 = vmatprep.subr.bf16.mxu0 0
      %380 = vmatpush2.bf16.msra.mxu0 0
      %381 = vmatprep.subr.bf16.mxu0 0
      %382 = vmatpush2.bf16.msra.mxu0 0
      %383 = vmatprep.subr.bf16.mxu0 0
      %384 = vmatpush2.bf16.msra.mxu0 0
      %385 = vmatprep.subr.bf16.mxu0 0
      %386 = vmatpush2.bf16.msra.mxu0 0
      %387 = vmatprep.subr.bf16.mxu0 0
      %388 = vmatpush2.bf16.msra.mxu0 0
      %389 = vmatprep.subr.bf16.mxu0 0
      %390 = vmatpush2.bf16.msra.mxu0 0
      %391 = vmatprep.subr.bf16.mxu0 0
      %392 = vmatpush2.bf16.msra.mxu0 0
      %393 = vmatprep.mubr.bf16.mxu0 0
      %394 = vmatmul.mubr.bf16.gmra.mxu0 %v297
      %v395 = vpop.f32.mrf.mxu0
      %v396 = vadd.f32 %v263, %v395
      %v397 = vpop.f32.mrf.mxu0
      %v398 = vpop.f32.mrf.mxu0
      %v399 = vadd.f32 %v263, %v398
      %v400 = vpop.f32.mrf.mxu0
      %401 = vmatprep.mubr.bf16.mxu0 0
      %402 = vmatmul.mubr.bf16.gmra.mxu0 %v298
      %v403 = vpop.f32.mrf.mxu0
      %v404 = vadd.f32 %v263, %v403
      %v405 = vpop.f32.mrf.mxu0
      %v406 = vpop.f32.mrf.mxu0
      %v407 = vadd.f32 %v263, %v406
      %v408 = vpop.f32.mrf.mxu0
      %409 = vmatprep.mubr.bf16.mxu0 0
      %410 = vmatmul.mubr.bf16.gmra.mxu0 %v299
      %v411 = vpop.f32.mrf.mxu0
      %v412 = vadd.f32 %v263, %v411
      %v413 = vpop.f32.mrf.mxu0
      %v414 = vpop.f32.mrf.mxu0
      %v415 = vadd.f32 %v263, %v414
      %v416 = vpop.f32.mrf.mxu0
      %417 = vmatprep.mubr.bf16.mxu0 0
      %418 = vmatmul.mubr.bf16.gmra.mxu0 %v300
      %v419 = vpop.f32.mrf.mxu0
      %v420 = vadd.f32 %v263, %v419
      %v421 = vpop.f32.mrf.mxu0
      %v422 = vpop.f32.mrf.mxu0
      %v423 = vadd.f32 %v263, %v422
      %v424 = vpop.f32.mrf.mxu0
      %425 = vmatprep.mubr.bf16.mxu0 0
      %426 = vmatmul.mubr.bf16.gmra.mxu0 %v301
      %v427 = vpop.f32.mrf.mxu0
      %v428 = vadd.f32 %v263, %v427
      %v429 = vpop.f32.mrf.mxu0
      %v430 = vpop.f32.mrf.mxu0
      %v431 = vadd.f32 %v263, %v430
      %v432 = vpop.f32.mrf.mxu0
      %433 = vmatprep.mubr.bf16.mxu0 0
      %434 = vmatmul.mubr.bf16.gmra.mxu0 %v302
      %v435 = vpop.f32.mrf.mxu0
      %v436 = vadd.f32 %v263, %v435
      %v437 = vpop.f32.mrf.mxu0
      %v438 = vpop.f32.mrf.mxu0
      %v439 = vadd.f32 %v263, %v438
      %v440 = vpop.f32.mrf.mxu0
      %441 = vmatprep.mubr.bf16.mxu0 0
      %442 = vmatmul.mubr.bf16.gmra.mxu0 %v303
      %v443 = vpop.f32.mrf.mxu0
      %v444 = vadd.f32 %v263, %v443
      %v445 = vpop.f32.mrf.mxu0
      %v446 = vpop.f32.mrf.mxu0
      %v447 = vadd.f32 %v263, %v446
      %v448 = vpop.f32.mrf.mxu0
      %449 = vmatprep.mubr.bf16.mxu0 0
      %450 = vmatmul.mubr.bf16.gmra.mxu0 %v304
      %v451 = vpop.f32.mrf.mxu0
      %v452 = vadd.f32 %v263, %v451
      %v453 = vpop.f32.mrf.mxu0
      %v454 = vpop.f32.mrf.mxu0
      %v455 = vadd.f32 %v263, %v454
      %v456 = vpop.f32.mrf.mxu0
      %457 = vdwg.mxu0
      %v458 = vmax.f32 %v396, 0.0
      %v459 = vmax.f32 %v399, 0.0
      %v460 = vmax.f32 %v404, 0.0
      %v461 = vmax.f32 %v407, 0.0
      %v462 = vmax.f32 %v412, 0.0
      %v463 = vmax.f32 %v415, 0.0
      %v464 = vmax.f32 %v420, 0.0
      %v465 = vmax.f32 %v423, 0.0
      %v466 = vmax.f32 %v428, 0.0
      %v467 = vmax.f32 %v431, 0.0
      %v468 = vmax.f32 %v436, 0.0
      %v469 = vmax.f32 %v439, 0.0
      %v470 = vmax.f32 %v444, 0.0
      %v471 = vmax.f32 %v447, 0.0
      %v472 = vmax.f32 %v452, 0.0
      %v473 = vmax.f32 %v455, 0.0
      %v474 = vpack.c.bf16 %v459, %v458
      %v475 = vpack.c.bf16 %v461, %v460
      %v476 = vpack.c.bf16 %v463, %v462
      %v477 = vpack.c.bf16 %v465, %v464
      %v478 = vpack.c.bf16 %v467, %v466
      %v479 = vpack.c.bf16 %v469, %v468
      %v480 = vpack.c.bf16 %v471, %v470
      %v481 = vpack.c.bf16 %v473, %v472
      %v490 = vunpack.c.l.b16 %v474
      %v491 = vunpack.c.h.b16 %v474
      %v492 = vunpack.c.l.b16 %v475
      %v493 = vunpack.c.h.b16 %v475
      %v494 = vunpack.c.l.b16 %v476
      %v495 = vunpack.c.h.b16 %v476
      %v496 = vunpack.c.l.b16 %v477
      %v497 = vunpack.c.h.b16 %v477
      %v498 = vunpack.c.l.b16 %v478
      %v499 = vunpack.c.h.b16 %v478
      %v500 = vunpack.c.l.b16 %v479
      %v501 = vunpack.c.h.b16 %v479
      %v502 = vunpack.c.l.b16 %v480
      %v503 = vunpack.c.h.b16 %v480
      %v504 = vunpack.c.l.b16 %v481
      %v505 = vunpack.c.h.b16 %v481
      %v506 = vpack.c.b16 %v490, %v490
      %v507 = vpack.c.b16 %v491, %v491
      %v508 = vpack.c.b16 %v492, %v492
      %v509 = vpack.c.b16 %v493, %v493
      %v510 = vpack.c.b16 %v494, %v494
      %v511 = vpack.c.b16 %v495, %v495
      %v512 = vpack.c.b16 %v496, %v496
      %v513 = vpack.c.b16 %v497, %v497
      %v514 = vpack.c.b16 %v498, %v498
      %v515 = vpack.c.b16 %v499, %v499
      %v516 = vpack.c.b16 %v500, %v500
      %v517 = vpack.c.b16 %v501, %v501
      %v518 = vpack.c.b16 %v502, %v502
      %v519 = vpack.c.b16 %v503, %v503
      %v520 = vpack.c.b16 %v504, %v504
      %v521 = vpack.c.b16 %v505, %v505
      %538 = vst [vmem:[%s223] sm:$0xf] %v506
      %539 = vst [vmem:[%s223 + $0x4] sm:$0xf] %v507
      %540 = vst [vmem:[%s223 + $0x8] sm:$0xf] %v508
      %541 = vst [vmem:[%s223 + $0xc] sm:$0xf] %v509
      %542 = vst [vmem:[%s223 + $0x10] sm:$0xf] %v510
      %543 = vst [vmem:[%s223 + $0x14] sm:$0xf] %v511
      %544 = vst [vmem:[%s223 + $0x18] sm:$0xf] %v512
      %545 = vst [vmem:[%s223 + $0x1c] sm:$0xf] %v513
      %546 = vst [vmem:[%s223 + $0x20] sm:$0xf] %v514
      %547 = vst [vmem:[%s223 + $0x24] sm:$0xf] %v515
      %548 = vst [vmem:[%s223 + $0x28] sm:$0xf] %v516
      %549 = vst [vmem:[%s223 + $0x2c] sm:$0xf] %v517
      %550 = vst [vmem:[%s223 + $0x30] sm:$0xf] %v518
      %551 = vst [vmem:[%s223 + $0x34] sm:$0xf] %v519
      %552 = vst [vmem:[%s223 + $0x38] sm:$0xf] %v520
      %553 = vst [vmem:[%s223 + $0x3c] sm:$0xf] %v521
      %s554 = smul.u32 16, %s18
      %p555 = scmp.lt.s32.totalorder %s554, 47
      %s556 = scalar_select %p555, %s554, 47
      %p557 = scmp.lt.s32.totalorder %s19, 0
      %s558 = scalar_select %p557, %s19, 0
      %s559 = sadd.s32 %s558, %s556
      %s560 = smul.addr %s559, 4
      %s561 = scalar_lea.vmem %s3, %s560
      // Predicated region
      $region33: #{stem_fwd.15} parent=31 // pred_check
        %p562 = pneg %p124
      $region34: #{stem_fwd.15} parent=31 // pred_check_branch
        %564 = sbr.rel (%p562) target = $region36
      $region35: #{stem_fwd.15} parent=31 // pred_region
        %s565 = smul.u32 16, %s18
      $region36: #{stem_fwd.15} parent=31 // pred_fallthru
        _
    $region32: #{stem_fwd.15} parent=5 // pred_fallthru
      _
    %p566 = scmp.le.s32.totalorder 2, %s9
    // Predicated region
    $region37: #{stem_fwd.15} parent=5 // pred_check
      %p567 = pneg %p566
    $region38: #{stem_fwd.15} parent=5 // pred_check_branch
      %569 = sbr.rel (%p567) target = $region40
    $region39: #{stem_fwd.15} parent=5 // pred_region
      %s570 = ssub.s32 %s9, 2
      // Predicated region
      $region41: #{stem_fwd.15} parent=39 // pred_check
        %p571 = pneg %p130
      $region42: #{stem_fwd.15} parent=39 // pred_check_branch
        %573 = sbr.rel (%p571) target = $region44
      $region43: #{stem_fwd.15} parent=39 // pred_region
        %s574 = smul.u32 16, %s20
        %p575 = scmp.lt.s32.totalorder %s574, 47
        %s576 = scalar_select %p575, %s574, 47
        %p577 = scmp.lt.s32.totalorder %s21, 0
        %s578 = scalar_select %p577, %s21, 0
        %s579 = sadd.s32 %s578, %s576
        %s580 = smul.addr %s579, 4
        %s581 = scalar_lea.vmem %s3, %s580
      $region44: #{stem_fwd.15} parent=39 // pred_fallthru
        _
    $region40: #{stem_fwd.15} parent=5 // pred_fallthru
      _
  $region6: #{stem_fwd.15} parent=0 // loop_footer
    %s13 = sadd.s32 1, %s9
  $region7: #{stem_fwd.15} parent=0 // loop_footer_branch
    %8 = sbr.rel target = $region3
  $region8: #{stem_fwd.15} parent=0 // loop_exit
    _

// kernel: stem_fwd.20
$region0: #{stem_fwd.20}
  #allocation0 [shape = 'u32[]', space=smem, size = 0x4, offset = 0x4, fixed_abs, tag = 'smem constant byte address 0x4 - core index']
  #allocation1 [shape = 'u32[144,128]{1,0:T(1,128)}', space=vmem, size = 0x12000, scoped, tag = 'internal scratch']
  %s0 = inlined_call_operand.vmem [shape: bf16[56,256], index: 0, kind: input, shape index: {}]
  %s1 = inlined_call_operand.vmem [shape: bf16[256,128], index: 1, kind: input, shape index: {}]
  %s2 = inlined_call_operand.vmem [shape: f32[1,128], index: 2, kind: input, shape index: {}]
  %s3 = inlined_call_operand.vmem [shape: bf16[56,128], index: 3, kind: output, shape index: {}]
  %s4 = sld [smem:[#allocation0]]
  $region22: #{stem_fwd.20} parent=0
    _
  %s6 = ssub.s32 1, %s4
  %s7 = scalar_select 0, %s6, %s4
  // Predicated region
  $region2: #{stem_fwd.20} parent=0 // pred_check
    _
  $region3: #{stem_fwd.20} parent=0 // pred_check_branch
    %9 = sbr.rel (0) target = $region5
  $region4: #{stem_fwd.20} parent=0 // pred_region
    _
  $region5: #{stem_fwd.20} parent=0 // pred_fallthru
    _
  // Predicated region
  $region6: #{stem_fwd.20} parent=0 // pred_check
    _
  $region7: #{stem_fwd.20} parent=0 // pred_check_branch
    %11 = sbr.rel (0) target = $region9
  $region8: #{stem_fwd.20} parent=0 // pred_region
    _
  $region9: #{stem_fwd.20} parent=0 // pred_fallthru
    _
  // Predicated region
  $region10: #{stem_fwd.20} parent=0 // pred_check
    _
  $region11: #{stem_fwd.20} parent=0 // pred_check_branch
    %13 = sbr.rel (0) target = $region13
  $region12: #{stem_fwd.20} parent=0 // pred_region
    _
  $region13: #{stem_fwd.20} parent=0 // pred_fallthru
    _
  %v15 = vld [vmem:[%s0] sm:$0xff]
  %v16 = vld [vmem:[%s0 + $0x8] sm:$0xff]
  %v17 = vld [vmem:[%s0 + $0x10] sm:$0xff]
  %v18 = vld [vmem:[%s0 + $0x18] sm:$0xff]
  %v19 = vld [vmem:[%s0 + $0x20] sm:$0xff]
  %v20 = vld [vmem:[%s0 + $0x28] sm:$0xff]
  %v21 = vld [vmem:[%s0 + $0x30] sm:$0xff]
  %v22 = vld [vmem:[%s1] sm:$0xf]
  %v23 = vld [vmem:[%s1 + $0x4] sm:$0xf]
  %v24 = vld [vmem:[%s1 + $0x8] sm:$0xf]
  %v25 = vld [vmem:[%s1 + $0xc] sm:$0xf]
  %v26 = vld [vmem:[%s1 + $0x10] sm:$0xf]
  %v27 = vld [vmem:[%s1 + $0x14] sm:$0xf]
  %v28 = vld [vmem:[%s1 + $0x18] sm:$0xf]
  %v29 = vld [vmem:[%s1 + $0x1c] sm:$0xf]
  %v30 = vld [vmem:[%s1 + $0x20] sm:$0xf]
  %v31 = vld [vmem:[%s1 + $0x24] sm:$0xf]
  %v32 = vld [vmem:[%s1 + $0x28] sm:$0xf]
  %v33 = vld [vmem:[%s1 + $0x2c] sm:$0xf]
  %v34 = vld [vmem:[%s1 + $0x30] sm:$0xf]
  %v35 = vld [vmem:[%s1 + $0x34] sm:$0xf]
  %v36 = vld [vmem:[%s1 + $0x38] sm:$0xf]
  %v37 = vld [vmem:[%s1 + $0x3c] sm:$0xf]
  %v38 = vld [vmem:[%s1 + $0x40] sm:$0xf]
  %v39 = vld [vmem:[%s1 + $0x44] sm:$0xf]
  %v40 = vld [vmem:[%s1 + $0x48] sm:$0xf]
  %v41 = vld [vmem:[%s1 + $0x4c] sm:$0xf]
  %v42 = vld [vmem:[%s1 + $0x50] sm:$0xf]
  %v43 = vld [vmem:[%s1 + $0x54] sm:$0xf]
  %v44 = vld [vmem:[%s1 + $0x58] sm:$0xf]
  %v45 = vld [vmem:[%s1 + $0x5c] sm:$0xf]
  %v46 = vld [vmem:[%s1 + $0x60] sm:$0xf]
  %v47 = vld [vmem:[%s1 + $0x64] sm:$0xf]
  %v48 = vld [vmem:[%s1 + $0x68] sm:$0xf]
  %v49 = vld [vmem:[%s1 + $0x6c] sm:$0xf]
  %v50 = vld [vmem:[%s1 + $0x70] sm:$0xf]
  %v51 = vld [vmem:[%s1 + $0x74] sm:$0xf]
  %v52 = vld [vmem:[%s1 + $0x78] sm:$0xf]
  %v53 = vld [vmem:[%s1 + $0x7c] sm:$0xf]
  %v54 = vld [vmem:[%s2] sm:$0x1]
  %v56 = vlaneseq
  %v57 = vshrl.u32 %v56, 7
  %v58 = vsub.s32 0, %v57
  %v59 = vrot.slane %v54, %v58
  %v68 = vunpack.c.l.b16 %v15
  %v69 = vunpack.c.h.b16 %v15
  %v70 = vunpack.c.l.b16 %v16
  %v71 = vunpack.c.h.b16 %v16
  %v72 = vunpack.c.l.b16 %v17
  %v73 = vunpack.c.h.b16 %v17
  %v74 = vunpack.c.l.b16 %v18
  %v75 = vunpack.c.h.b16 %v18
  %v76 = vunpack.c.l.b16 %v19
  %v77 = vunpack.c.h.b16 %v19
  %v78 = vunpack.c.l.b16 %v20
  %v79 = vunpack.c.h.b16 %v20
  %v80 = vunpack.c.l.b16 %v21
  %v81 = vunpack.c.h.b16 %v21
  %v82 = vpack.c.b16 %v70, %v68
  %v83 = vpack.c.b16 %v71, %v69
  %v84 = vpack.c.b16 %v74, %v72
  %v85 = vpack.c.b16 %v75, %v73
  %v86 = vpack.c.b16 %v78, %v76
  %v87 = vpack.c.b16 %v79, %v77
  %v88 = vpack.c.b16 %v80, %v80
  %v89 = vpack.c.b16 %v81, %v81
  %v130 = vunpack.c.l.b16 %v22
  %v131 = vunpack.c.l.b16 %v23
  %v132 = vunpack.c.l.b16 %v24
  %v133 = vunpack.c.l.b16 %v25
  %v134 = vunpack.c.l.b16 %v26
  %v135 = vunpack.c.l.b16 %v27
  %v136 = vunpack.c.l.b16 %v28
  %v137 = vunpack.c.l.b16 %v29
  %v138 = vunpack.c.l.b16 %v30
  %v139 = vunpack.c.l.b16 %v31
  %v140 = vunpack.c.l.b16 %v32
  %v141 = vunpack.c.l.b16 %v33
  %v142 = vunpack.c.l.b16 %v34
  %v143 = vunpack.c.l.b16 %v35
  %v144 = vunpack.c.l.b16 %v36
  %v145 = vunpack.c.l.b16 %v37
  %v146 = vunpack.c.l.b16 %v38
  %v147 = vunpack.c.l.b16 %v39
  %v148 = vunpack.c.l.b16 %v40
  %v149 = vunpack.c.l.b16 %v41
  %v150 = vunpack.c.l.b16 %v42
  %v151 = vunpack.c.l.b16 %v43
  %v152 = vunpack.c.l.b16 %v44
  %v153 = vunpack.c.l.b16 %v45
  %v154 = vunpack.c.l.b16 %v46
  %v155 = vunpack.c.l.b16 %v47
  %v156 = vunpack.c.l.b16 %v48
  %v157 = vunpack.c.l.b16 %v49
  %v158 = vunpack.c.l.b16 %v50
  %v159 = vunpack.c.l.b16 %v51
  %v160 = vunpack.c.l.b16 %v52
  %v161 = vunpack.c.l.b16 %v53
  %v162 = vpack.c.b16 %v131, %v130
  %v163 = vpack.c.b16 %v133, %v132
  %v164 = vpack.c.b16 %v135, %v134
  %v165 = vpack.c.b16 %v137, %v136
  %v166 = vpack.c.b16 %v139, %v138
  %v167 = vpack.c.b16 %v141, %v140
  %v168 = vpack.c.b16 %v143, %v142
  %v169 = vpack.c.b16 %v145, %v144
  %v170 = vpack.c.b16 %v147, %v146
  %v171 = vpack.c.b16 %v149, %v148
  %v172 = vpack.c.b16 %v151, %v150
  %v173 = vpack.c.b16 %v153, %v152
  %v174 = vpack.c.b16 %v155, %v154
  %v175 = vpack.c.b16 %v157, %v156
  %v176 = vpack.c.b16 %v159, %v158
  %v177 = vpack.c.b16 %v161, %v160
  %194 = vmatprep.subr.bf16.mxu0 0
  %195 = vmatpush1.bf16.msra.mxu0 %v169
  %196 = vmatprep.subr.bf16.mxu0 0
  %197 = vmatpush1.bf16.msra.mxu0 %v168
  %198 = vmatprep.subr.bf16.mxu0 0
  %199 = vmatpush1.bf16.msra.mxu0 %v167
  %200 = vmatprep.subr.bf16.mxu0 0
  %201 = vmatpush1.bf16.msra.mxu0 %v166
  %202 = vmatprep.subr.bf16.mxu0 0
  %203 = vmatpush1.bf16.msra.mxu0 %v165
  %204 = vmatprep.subr.bf16.mxu0 0
  %205 = vmatpush1.bf16.msra.mxu0 %v164
  %206 = vmatprep.subr.bf16.mxu0 0
  %207 = vmatpush1.bf16.msra.mxu0 %v163
  %208 = vmatprep.subr.bf16.mxu0 0
  %209 = vmatpush1.bf16.msra.mxu0 %v162
  %210 = vmatprep.subr.bf16.mxu0 0
  %211 = vmatpush2.bf16.msra.mxu0 %v177
  %212 = vmatprep.subr.bf16.mxu0 0
  %213 = vmatpush2.bf16.msra.mxu0 %v176
  %214 = vmatprep.subr.bf16.mxu0 0
  %215 = vmatpush2.bf16.msra.mxu0 %v175
  %216 = vmatprep.subr.bf16.mxu0 0
  %217 = vmatpush2.bf16.msra.mxu0 %v174
  %218 = vmatprep.subr.bf16.mxu0 0
  %219 = vmatpush2.bf16.msra.mxu0 %v173
  %220 = vmatprep.subr.bf16.mxu0 0
  %221 = vmatpush2.bf16.msra.mxu0 %v172
  %222 = vmatprep.subr.bf16.mxu0 0
  %223 = vmatpush2.bf16.msra.mxu0 %v171
  %224 = vmatprep.subr.bf16.mxu0 0
  %225 = vmatpush2.bf16.msra.mxu0 %v170
  %226 = vmatprep.mubr.bf16.mxu0 %v83
  %227 = vmatmul.mubr.bf16.gmra.mxu0 %v82
  %v228 = vpop.f32.mrf.mxu0
  %v229 = vadd.f32 %v59, %v228
  %v230 = vpop.f32.mrf.mxu0
  %v231 = vpop.f32.mrf.mxu0
  %v232 = vadd.f32 %v59, %v231
  %v233 = vpop.f32.mrf.mxu0
  %234 = vmatprep.mubr.bf16.mxu0 %v85
  %235 = vmatmul.mubr.bf16.gmra.mxu0 %v84
  %v236 = vpop.f32.mrf.mxu0
  %v237 = vadd.f32 %v59, %v236
  %v238 = vpop.f32.mrf.mxu0
  %v239 = vpop.f32.mrf.mxu0
  %v240 = vadd.f32 %v59, %v239
  %v241 = vpop.f32.mrf.mxu0
  %242 = vmatprep.mubr.bf16.mxu0 %v87
  %243 = vmatmul.mubr.bf16.gmra.mxu0 %v86
  %v244 = vpop.f32.mrf.mxu0
  %v245 = vadd.f32 %v59, %v244
  %v246 = vpop.f32.mrf.mxu0
  %v247 = vpop.f32.mrf.mxu0
  %v248 = vadd.f32 %v59, %v247
  %v249 = vpop.f32.mrf.mxu0
  %250 = vmatprep.mubr.bf16.mxu0 %v89
  %251 = vmatmul.mubr.bf16.gmra.mxu0 %v88
  %v252 = vpop.f32.mrf.mxu0
  %v253 = vadd.f32 %v59, %v252
  %v254 = vpop.f32.mrf.mxu0
  %v255 = vpop.f32.mrf.mxu0
  %v256 = vpop.f32.mrf.mxu0
  %257 = vdwg.mxu0
  %v258 = vmax.f32 %v229, 0.0
  %v259 = vmax.f32 %v232, 0.0
  %v260 = vmax.f32 %v237, 0.0
  %v261 = vmax.f32 %v240, 0.0
  %v262 = vmax.f32 %v245, 0.0
  %v263 = vmax.f32 %v248, 0.0
  %v264 = vmax.f32 %v253, 0.0
  %v265 = vpack.c.bf16 %v259, %v258
  %v266 = vpack.c.bf16 %v261, %v260
  %v267 = vpack.c.bf16 %v263, %v262
  %v268 = vpack.c.bf16 %v264, %v264
  %v273 = vunpack.c.l.b16 %v265
  %v274 = vunpack.c.h.b16 %v265
  %v275 = vunpack.c.l.b16 %v266
  %v276 = vunpack.c.h.b16 %v266
  %v277 = vunpack.c.l.b16 %v267
  %v278 = vunpack.c.h.b16 %v267
  %v279 = vunpack.c.l.b16 %v268
  %v280 = vpack.c.b16 %v273, %v273
  %v281 = vpack.c.b16 %v274, %v274
  %v282 = vpack.c.b16 %v275, %v275
  %v283 = vpack.c.b16 %v276, %v276
  %v284 = vpack.c.b16 %v277, %v277
  %v285 = vpack.c.b16 %v278, %v278
  %v286 = vpack.c.b16 %v279, %v279
  %294 = vst [vmem:[%s3] sm:$0xf] %v280
  %295 = vst [vmem:[%s3 + $0x4] sm:$0xf] %v281
  %296 = vst [vmem:[%s3 + $0x8] sm:$0xf] %v282
  %297 = vst [vmem:[%s3 + $0xc] sm:$0xf] %v283
  %298 = vst [vmem:[%s3 + $0x10] sm:$0xf] %v284
  %299 = vst [vmem:[%s3 + $0x14] sm:$0xf] %v285
  %300 = vst [vmem:[%s3 + $0x18] sm:$0xf] %v286
  // Predicated region
  $region14: #{stem_fwd.20} parent=0 // pred_check
    _
  $region15: #{stem_fwd.20} parent=0 // pred_check_branch
    %302 = sbr.rel (0) target = $region17
  $region16: #{stem_fwd.20} parent=0 // pred_region
    _
  $region17: #{stem_fwd.20} parent=0 // pred_fallthru
    _
  // Predicated region
  $region18: #{stem_fwd.20} parent=0 // pred_check
    _
  $region19: #{stem_fwd.20} parent=0 // pred_check_branch
    %304 = sbr.rel (0) target = $region21
  $region20: #{stem_fwd.20} parent=0 // pred_region
    _
  $region21: #{stem_fwd.20} parent=0 // pred_fallthru
    _

// kernel: stem_fwd.16
$region0: #{stem_fwd.16}
  #allocation0 [shape = 'u32[]', space=smem, size = 0x4, offset = 0x4, fixed_abs, tag = 'smem constant byte address 0x4 - core index']
  #allocation1 [shape = 'u32[144,128]{1,0:T(1,128)}', space=vmem, size = 0x12000, scoped, tag = 'internal scratch']
  %s0 = inlined_call_operand.vmem [shape: bf16[232,768], index: 0, kind: input, shape index: {}]
  %s1 = inlined_call_operand.vmem [shape: bf16[768,256], index: 1, kind: input, shape index: {}]
  %s2 = inlined_call_operand.vmem [shape: f32[1,256], index: 2, kind: input, shape index: {}]
  %s3 = inlined_call_operand.vmem [shape: bf16[232,256], index: 3, kind: output, shape index: {}]
  %s4 = sld [smem:[#allocation0]]
  $region22: #{stem_fwd.16} parent=0
    _
  %s6 = ssub.s32 1, %s4
  %s7 = scalar_select 0, %s6, %s4
  // Predicated region
  $region2: #{stem_fwd.16} parent=0 // pred_check
    _
  $region3: #{stem_fwd.16} parent=0 // pred_check_branch
    %9 = sbr.rel (0) target = $region5
  $region4: #{stem_fwd.16} parent=0 // pred_region
    _
  $region5: #{stem_fwd.16} parent=0 // pred_fallthru
    _
  // Predicated region
  $region6: #{stem_fwd.16} parent=0 // pred_check
    _
  $region7: #{stem_fwd.16} parent=0 // pred_check_branch
    %11 = sbr.rel (0) target = $region9
  $region8: #{stem_fwd.16} parent=0 // pred_region
    _
  $region9: #{stem_fwd.16} parent=0 // pred_fallthru
    _
  // Predicated region
  $region10: #{stem_fwd.16} parent=0 // pred_check
    _
  $region11: #{stem_fwd.16} parent=0 // pred_check_branch
    %13 = sbr.rel (0) target = $region13
  $region12: #{stem_fwd.16} parent=0 // pred_region
    _
  $region13: #{stem_fwd.16} parent=0 // pred_fallthru
    _
  %v14 = vld [vmem:[%s0] sm:$0xff]
  %v15 = vld [vmem:[%s0 + $0x8] sm:$0xff]
  %v16 = vld [vmem:[%s0 + $0x10] sm:$0xff]
  %v17 = vld [vmem:[%s0 + $0x18] sm:$0xff]
  %v18 = vld [vmem:[%s0 + $0x20] sm:$0xff]
  %v19 = vld [vmem:[%s0 + $0x28] sm:$0xff]
  %v20 = vld [vmem:[%s0 + $0x30] sm:$0xff]
  %v21 = vld [vmem:[%s0 + $0x38] sm:$0xff]
  %v22 = vld [vmem:[%s0 + $0x40] sm:$0xff]
  %v23 = vld [vmem:[%s0 + $0x48] sm:$0xff]
  %v24 = vld [vmem:[%s0 + $0x50] sm:$0xff]
  %v25 = vld [vmem:[%s0 + $0x58] sm:$0xff]
  %v26 = vld [vmem:[%s0 + $0x60] sm:$0xff]
  %v27 = vld [vmem:[%s0 + $0x68] sm:$0xff]
  %v28 = vld [vmem:[%s0 + $0x70] sm:$0xff]
  %v29 = vld [vmem:[%s0 + $0x78] sm:$0xff]
  %v30 = vld [vmem:[%s0 + $0x80] sm:$0xff]
  %v31 = vld [vmem:[%s0 + $0x88] sm:$0xff]
  %v32 = vld [vmem:[%s0 + $0x90] sm:$0xff]
  %v33 = vld [vmem:[%s0 + $0x98] sm:$0xff]
  %v34 = vld [vmem:[%s0 + $0xa0] sm:$0xff]
  %v35 = vld [vmem:[%s0 + $0xa8] sm:$0xff]
  %v36 = vld [vmem:[%s0 + $0xb0] sm:$0xff]
  %v37 = vld [vmem:[%s0 + $0xb8] sm:$0xff]
  %v38 = vld [vmem:[%s0 + $0xc0] sm:$0xff]
  %v39 = vld [vmem:[%s0 + $0xc8] sm:$0xff]
  %v40 = vld [vmem:[%s0 + $0xd0] sm:$0xff]
  %v41 = vld [vmem:[%s0 + $0xd8] sm:$0xff]
  %v42 = vld [vmem:[%s0 + $0xe0] sm:$0xff]
  %v43 = vld [vmem:[%s0 + $0xe8] sm:$0xff]
  %v44 = vld [vmem:[%s0 + $0xf0] sm:$0xff]
  %v45 = vld [vmem:[%s0 + $0xf8] sm:$0xff]
  %v46 = vld [vmem:[%s0 + $0x100] sm:$0xff]
  %v47 = vld [vmem:[%s0 + $0x108] sm:$0xff]
  %v48 = vld [vmem:[%s0 + $0x110] sm:$0xff]
  %v49 = vld [vmem:[%s0 + $0x118] sm:$0xff]
  %v50 = vld [vmem:[%s0 + $0x120] sm:$0xff]
  %v51 = vld [vmem:[%s0 + $0x128] sm:$0xff]
  %v52 = vld [vmem:[%s0 + $0x130] sm:$0xff]
  %v53 = vld [vmem:[%s0 + $0x138] sm:$0xff]
  %v54 = vld [vmem:[%s0 + $0x140] sm:$0xff]
  %v55 = vld [vmem:[%s0 + $0x148] sm:$0xff]
  %v56 = vld [vmem:[%s0 + $0x150] sm:$0xff]
  %v57 = vld [vmem:[%s0 + $0x158] sm:$0xff]
  %v58 = vld [vmem:[%s0 + $0x160] sm:$0xff]
  %v59 = vld [vmem:[%s0 + $0x168] sm:$0xff]
  %v60 = vld [vmem:[%s0 + $0x170] sm:$0xff]
  %v61 = vld [vmem:[%s0 + $0x178] sm:$0xff]
  %v62 = vld [vmem:[%s0 + $0x180] sm:$0xff]
  %v63 = vld [vmem:[%s0 + $0x188] sm:$0xff]
  %v64 = vld [vmem:[%s0 + $0x190] sm:$0xff]
  %v65 = vld [vmem:[%s0 + $0x198] sm:$0xff]
  %v66 = vld [vmem:[%s0 + $0x1a0] sm:$0xff]
  %v67 = vld [vmem:[%s0 + $0x1a8] sm:$0xff]
  %v68 = vld [vmem:[%s0 + $0x1b0] sm:$0xff]
  %v69 = vld [vmem:[%s0 + $0x1b8] sm:$0xff]
  %v70 = vld [vmem:[%s0 + $0x1c0] sm:$0xff]
  %v71 = vld [vmem:[%s0 + $0x1c8] sm:$0xff]
  %v72 = vld [vmem:[%s0 + $0x1d0] sm:$0xff]
  %v73 = vld [vmem:[%s0 + $0x1d8] sm:$0xff]
  %v74 = vld [vmem:[%s0 + $0x1e0] sm:$0xff]
  %v75 = vld [vmem:[%s0 + $0x1e8] sm:$0xff]
  %v76 = vld [vmem:[%s0 + $0x1f0] sm:$0xff]
  %v77 = vld [vmem:[%s0 + $0x1f8] sm:$0xff]
  %v78 = vld [vmem:[%s0 + $0x200] sm:$0xff]
  %v79 = vld [vmem:[%s0 + $0x208] sm:$0xff]
  %v80 = vld [vmem:[%s0 + $0x210] sm:$0xff]
  %v81 = vld [vmem:[%s0 + $0x218] sm:$0xff]
  %v82 = vld [vmem:[%s0 + $0x220] sm:$0xff]
  %v83 = vld [vmem:[%s0 + $0x228] sm:$0xff]
  %v84 = vld [vmem:[%s0 + $0x230] sm:$0xff]
  %v85 = vld [vmem:[%s0 + $0x238] sm:$0xff]
  %v86 = vld [vmem:[%s0 + $0x240] sm:$0xff]
  %v87 = vld [vmem:[%s0 + $0x248] sm:$0xff]
  %v88 = vld [vmem:[%s0 + $0x250] sm:$0xff]
  %v89 = vld [vmem:[%s0 + $0x258] sm:$0xff]
  %v90 = vld [vmem:[%s0 + $0x260] sm:$0xff]
  %v91 = vld [vmem:[%s0 + $0x268] sm:$0xff]
  %v92 = vld [vmem:[%s0 + $0x270] sm:$0xff]
  %v93 = vld [vmem:[%s0 + $0x278] sm:$0xff]
  %v94 = vld [vmem:[%s0 + $0x280] sm:$0xff]
  %v95 = vld [vmem:[%s0 + $0x288] sm:$0xff]
  %v96 = vld [vmem:[%s0 + $0x290] sm:$0xff]
  %v97 = vld [vmem:[%s0 + $0x298] sm:$0xff]
  %v98 = vld [vmem:[%s0 + $0x2a0] sm:$0xff]
  %v99 = vld [vmem:[%s0 + $0x2a8] sm:$0xff]
  %v100 = vld [vmem:[%s0 + $0x2b0] sm:$0xff]
  %v101 = vld [vmem:[%s1] sm:$0xff]
  %v102 = vld [vmem:[%s1 + $0x8] sm:$0xff]
  %v103 = vld [vmem:[%s1 + $0x10] sm:$0xff]
  %v104 = vld [vmem:[%s1 + $0x18] sm:$0xff]
  %v105 = vld [vmem:[%s1 + $0x20] sm:$0xff]
  %v106 = vld [vmem:[%s1 + $0x28] sm:$0xff]
  %v107 = vld [vmem:[%s1 + $0x30] sm:$0xff]
  %v108 = vld [vmem:[%s1 + $0x38] sm:$0xff]
  %v109 = vld [vmem:[%s1 + $0x40] sm:$0xff]
  %v110 = vld [vmem:[%s1 + $0x48] sm:$0xff]
  %v111 = vld [vmem:[%s1 + $0x50] sm:$0xff]
  %v112 = vld [vmem:[%s1 + $0x58] sm:$0xff]
  %v113 = vld [vmem:[%s1 + $0x60] sm:$0xff]
  %v114 = vld [vmem:[%s1 + $0x68] sm:$0xff]
  %v115 = vld [vmem:[%s1 + $0x70] sm:$0xff]
  %v116 = vld [vmem:[%s1 + $0x78] sm:$0xff]
  %v117 = vld [vmem:[%s1 + $0x80] sm:$0xff]
  %v118 = vld [vmem:[%s1 + $0x88] sm:$0xff]
  %v119 = vld [vmem:[%s1 + $0x90] sm:$0xff]
  %v120 = vld [vmem:[%s1 + $0x98] sm:$0xff]
  %v121 = vld [vmem:[%s1 + $0xa0] sm:$0xff]
  %v122 = vld [vmem:[%s1 + $0xa8] sm:$0xff]
  %v123 = vld [vmem:[%s1 + $0xb0] sm:$0xff]
  %v124 = vld [vmem:[%s1 + $0xb8] sm:$0xff]
  %v125 = vld [vmem:[%s1 + $0xc0] sm:$0xff]
  %v126 = vld [vmem:[%s1 + $0xc8] sm:$0xff]
  %v127 = vld [vmem:[%s1 + $0xd0] sm:$0xff]
  %v128 = vld [vmem:[%s1 + $0xd8] sm:$0xff]
  %v129 = vld [vmem:[%s1 + $0xe0] sm:$0xff]
  %v130 = vld [vmem:[%s1 + $0xe8] sm:$0xff]
  %v131 = vld [vmem:[%s1 + $0xf0] sm:$0xff]
  %v132 = vld [vmem:[%s1 + $0xf8] sm:$0xff]
  %v133 = vld [vmem:[%s1 + $0x100] sm:$0xff]
  %v134 = vld [vmem:[%s1 + $0x108] sm:$0xff]
  %v135 = vld [vmem:[%s1 + $0x110] sm:$0xff]
  %v136 = vld [vmem:[%s1 + $0x118] sm:$0xff]
  %v137 = vld [vmem:[%s1 + $0x120] sm:$0xff]
  %v138 = vld [vmem:[%s1 + $0x128] sm:$0xff]
  %v139 = vld [vmem:[%s1 + $0x130] sm:$0xff]
  %v140 = vld [vmem:[%s1 + $0x138] sm:$0xff]
  %v141 = vld [vmem:[%s1 + $0x140] sm:$0xff]
  %v142 = vld [vmem:[%s1 + $0x148] sm:$0xff]
  %v143 = vld [vmem:[%s1 + $0x150] sm:$0xff]
  %v144 = vld [vmem:[%s1 + $0x158] sm:$0xff]
  %v145 = vld [vmem:[%s1 + $0x160] sm:$0xff]
  %v146 = vld [vmem:[%s1 + $0x168] sm:$0xff]
  %v147 = vld [vmem:[%s1 + $0x170] sm:$0xff]
  %v148 = vld [vmem:[%s1 + $0x178] sm:$0xff]
  %v149 = vld [vmem:[%s1 + $0x180] sm:$0xff]
  %v150 = vld [vmem:[%s1 + $0x188] sm:$0xff]
  %v151 = vld [vmem:[%s1 + $0x190] sm:$0xff]
  %v152 = vld [vmem:[%s1 + $0x198] sm:$0xff]
  %v153 = vld [vmem:[%s1 + $0x1a0] sm:$0xff]
  %v154 = vld [vmem:[%s1 + $0x1a8] sm:$0xff]
  %v155 = vld [vmem:[%s1 + $0x1b0] sm:$0xff]
  %v156 = vld [vmem:[%s1 + $0x1b8] sm:$0xff]
  %v157 = vld [vmem:[%s1 + $0x1c0] sm:$0xff]
  %v158 = vld [vmem:[%s1 + $0x1c8] sm:$0xff]
  %v159 = vld [vmem:[%s1 + $0x1d0] sm:$0xff]
  %v160 = vld [vmem:[%s1 + $0x1d8] sm:$0xff]
  %v161 = vld [vmem:[%s1 + $0x1e0] sm:$0xff]
  %v162 = vld [vmem:[%s1 + $0x1e8] sm:$0xff]
  %v163 = vld [vmem:[%s1 + $0x1f0] sm:$0xff]
  %v164 = vld [vmem:[%s1 + $0x1f8] sm:$0xff]
  %v165 = vld [vmem:[%s1 + $0x200] sm:$0xff]
  %v166 = vld [vmem:[%s1 + $0x208] sm:$0xff]
  %v167 = vld [vmem:[%s1 + $0x210] sm:$0xff]
  %v168 = vld [vmem:[%s1 + $0x218] sm:$0xff]
  %v169 = vld [vmem:[%s1 + $0x220] sm:$0xff]
  %v170 = vld [vmem:[%s1 + $0x228] sm:$0xff]
  %v171 = vld [vmem:[%s1 + $0x230] sm:$0xff]
  %v172 = vld [vmem:[%s1 + $0x238] sm:$0xff]
  %v173 = vld [vmem:[%s1 + $0x240] sm:$0xff]
  %v174 = vld [vmem:[%s1 + $0x248] sm:$0xff]
  %v175 = vld [vmem:[%s1 + $0x250] sm:$0xff]
  %v176 = vld [vmem:[%s1 + $0x258] sm:$0xff]
  %v177 = vld [vmem:[%s1 + $0x260] sm:$0xff]
  %v178 = vld [vmem:[%s1 + $0x268] sm:$0xff]
  %v179 = vld [vmem:[%s1 + $0x270] sm:$0xff]
  %v180 = vld [vmem:[%s1 + $0x278] sm:$0xff]
  %v181 = vld [vmem:[%s1 + $0x280] sm:$0xff]
  %v182 = vld [vmem:[%s1 + $0x288] sm:$0xff]
  %v183 = vld [vmem:[%s1 + $0x290] sm:$0xff]
  %v184 = vld [vmem:[%s1 + $0x298] sm:$0xff]
  %v185 = vld [vmem:[%s1 + $0x2a0] sm:$0xff]
  %v186 = vld [vmem:[%s1 + $0x2a8] sm:$0xff]
  %v187 = vld [vmem:[%s1 + $0x2b0] sm:$0xff]
  %v188 = vld [vmem:[%s1 + $0x2b8] sm:$0xff]
  %v189 = vld [vmem:[%s1 + $0x2c0] sm:$0xff]
  %v190 = vld [vmem:[%s1 + $0x2c8] sm:$0xff]
  %v191 = vld [vmem:[%s1 + $0x2d0] sm:$0xff]
  %v192 = vld [vmem:[%s1 + $0x2d8] sm:$0xff]
  %v193 = vld [vmem:[%s1 + $0x2e0] sm:$0xff]
  %v194 = vld [vmem:[%s1 + $0x2e8] sm:$0xff]
  %v195 = vld [vmem:[%s1 + $0x2f0] sm:$0xff]
  %v196 = vld [vmem:[%s1 + $0x2f8] sm:$0xff]
  %v197 = vld [vmem:[%s2] sm:$0x3]
  %v199 = vlaneseq
  %v200 = vshrl.u32 %v199, 7
  %v201 = vsub.s32 0, %v200
  %v202 = vrot.slane %v197, %v201
  %v203 = vlaneseq
  %v204 = vshrl.u32 %v203, 7
  %v205 = vsub.s32 1, %v204
  %v206 = vrot.slane %v197, %v205
  %v296 = vunpack.c.l.b16 %v14
  %v297 = vunpack.c.h.b16 %v14
  %v298 = vunpack.c.l.b16 %v15
  %v299 = vunpack.c.h.b16 %v15
  %v300 = vunpack.c.l.b16 %v16
  %v301 = vunpack.c.h.b16 %v16
  %v302 = vunpack.c.l.b16 %v17
  %v303 = vunpack.c.h.b16 %v17
  %v304 = vunpack.c.l.b16 %v18
  %v305 = vunpack.c.h.b16 %v18
  %v306 = vunpack.c.l.b16 %v19
  %v307 = vunpack.c.h.b16 %v19
  %v308 = vunpack.c.l.b16 %v20
  %v309 = vunpack.c.h.b16 %v20
  %v310 = vunpack.c.l.b16 %v21
  %v311 = vunpack.c.h.b16 %v21
  %v312 = vunpack.c.l.b16 %v22
  %v313 = vunpack.c.h.b16 %v22
  %v314 = vunpack.c.l.b16 %v23
  %v315 = vunpack.c.h.b16 %v23
  %v316 = vunpack.c.l.b16 %v24
  %v317 = vunpack.c.h.b16 %v24
  %v318 = vunpack.c.l.b16 %v25
  %v319 = vunpack.c.h.b16 %v25
  %v320 = vunpack.c.l.b16 %v26
  %v321 = vunpack.c.h.b16 %v26
  %v322 = vunpack.c.l.b16 %v27
  %v323 = vunpack.c.h.b16 %v27
  %v324 = vunpack.c.l.b16 %v28
  %v325 = vunpack.c.h.b16 %v28
  %v326 = vunpack.c.l.b16 %v29
  %v327 = vunpack.c.h.b16 %v29
  %v328 = vunpack.c.l.b16 %v30
  %v329 = vunpack.c.h.b16 %v30
  %v330 = vunpack.c.l.b16 %v31
  %v331 = vunpack.c.h.b16 %v31
  %v332 = vunpack.c.l.b16 %v32
  %v333 = vunpack.c.h.b16 %v32
  %v334 = vunpack.c.l.b16 %v33
  %v335 = vunpack.c.h.b16 %v33
  %v336 = vunpack.c.l.b16 %v34
  %v337 = vunpack.c.h.b16 %v34
  %v338 = vunpack.c.l.b16 %v35
  %v339 = vunpack.c.h.b16 %v35
  %v340 = vunpack.c.l.b16 %v36
  %v341 = vunpack.c.h.b16 %v36
  %v342 = vunpack.c.l.b16 %v37
  %v343 = vunpack.c.h.b16 %v37
  %v344 = vunpack.c.l.b16 %v38
  %v345 = vunpack.c.h.b16 %v38
  %v346 = vunpack.c.l.b16 %v39
  %v347 = vunpack.c.h.b16 %v39
  %v348 = vunpack.c.l.b16 %v40
  %v349 = vunpack.c.h.b16 %v40
  %v350 = vunpack.c.l.b16 %v41
  %v351 = vunpack.c.h.b16 %v41
  %v352 = vunpack.c.l.b16 %v42
  %v353 = vunpack.c.h.b16 %v42
  %v354 = vunpack.c.l.b16 %v43
  %v355 = vunpack.c.h.b16 %v43
  %v356 = vunpack.c.l.b16 %v44
  %v357 = vunpack.c.h.b16 %v44
  %v358 = vunpack.c.l.b16 %v45
  %v359 = vunpack.c.h.b16 %v45
  %v360 = vunpack.c.l.b16 %v46
  %v361 = vunpack.c.h.b16 %v46
  %v362 = vunpack.c.l.b16 %v47
  %v363 = vunpack.c.h.b16 %v47
  %v364 = vunpack.c.l.b16 %v48
  %v365 = vunpack.c.h.b16 %v48
  %v366 = vunpack.c.l.b16 %v49
  %v367 = vunpack.c.h.b16 %v49
  %v368 = vunpack.c.l.b16 %v50
  %v369 = vunpack.c.h.b16 %v50
  %v370 = vunpack.c.l.b16 %v51
  %v371 = vunpack.c.h.b16 %v51
  %v372 = vunpack.c.l.b16 %v52
  %v373 = vunpack.c.h.b16 %v52
  %v374 = vunpack.c.l.b16 %v53
  %v375 = vunpack.c.h.b16 %v53
  %v376 = vunpack.c.l.b16 %v54
  %v377 = vunpack.c.h.b16 %v54
  %v378 = vunpack.c.l.b16 %v55
  %v379 = vunpack.c.h.b16 %v55
  %v380 = vunpack.c.l.b16 %v56
  %v381 = vunpack.c.h.b16 %v56
  %v382 = vunpack.c.l.b16 %v57
  %v383 = vunpack.c.h.b16 %v57
  %v384 = vunpack.c.l.b16 %v58
  %v385 = vunpack.c.h.b16 %v58
  %v386 = vunpack.c.l.b16 %v59
  %v387 = vunpack.c.h.b16 %v59
  %v388 = vunpack.c.l.b16 %v60
  %v389 = vunpack.c.h.b16 %v60
  %v390 = vunpack.c.l.b16 %v61
  %v391 = vunpack.c.h.b16 %v61
  %v392 = vunpack.c.l.b16 %v62
  %v393 = vunpack.c.h.b16 %v62
  %v394 = vunpack.c.l.b16 %v63
  %v395 = vunpack.c.h.b16 %v63
  %v396 = vunpack.c.l.b16 %v64
  %v397 = vunpack.c.h.b16 %v64
  %v398 = vunpack.c.l.b16 %v65
  %v399 = vunpack.c.h.b16 %v65
  %v400 = vunpack.c.l.b16 %v66
  %v401 = vunpack.c.h.b16 %v66
  %v402 = vunpack.c.l.b16 %v67
  %v403 = vunpack.c.h.b16 %v67
  %v404 = vunpack.c.l.b16 %v68
  %v405 = vunpack.c.h.b16 %v68
  %v406 = vunpack.c.l.b16 %v69
  %v407 = vunpack.c.h.b16 %v69
  %v408 = vunpack.c.l.b16 %v70
  %v409 = vunpack.c.h.b16 %v70
  %v410 = vunpack.c.l.b16 %v71
  %v411 = vunpack.c.h.b16 %v71
  %v412 = vunpack.c.l.b16 %v72
  %v413 = vunpack.c.h.b16 %v72
  %v414 = vunpack.c.l.b16 %v73
  %v415 = vunpack.c.h.b16 %v73
  %v416 = vunpack.c.l.b16 %v74
  %v417 = vunpack.c.h.b16 %v74
  %v418 = vunpack.c.l.b16 %v75
  %v419 = vunpack.c.h.b16 %v75
  %v420 = vunpack.c.l.b16 %v76
  %v421 = vunpack.c.h.b16 %v76
  %v422 = vunpack.c.l.b16 %v77
  %v423 = vunpack.c.h.b16 %v77
  %v424 = vunpack.c.l.b16 %v78
  %v425 = vunpack.c.h.b16 %v78
  %v426 = vunpack.c.l.b16 %v79
  %v427 = vunpack.c.h.b16 %v79
  %v428 = vunpack.c.l.b16 %v80
  %v429 = vunpack.c.h.b16 %v80
  %v430 = vunpack.c.l.b16 %v81
  %v431 = vunpack.c.h.b16 %v81
  %v432 = vunpack.c.l.b16 %v82
  %v433 = vunpack.c.h.b16 %v82
  %v434 = vunpack.c.l.b16 %v83
  %v435 = vunpack.c.h.b16 %v83
  %v436 = vunpack.c.l.b16 %v84
  %v437 = vunpack.c.h.b16 %v84
  %v438 = vunpack.c.l.b16 %v85
  %v439 = vunpack.c.h.b16 %v85
  %v440 = vunpack.c.l.b16 %v86
  %v441 = vunpack.c.h.b16 %v86
  %v442 = vunpack.c.l.b16 %v87
  %v443 = vunpack.c.h.b16 %v87
  %v444 = vunpack.c.l.b16 %v88
  %v445 = vunpack.c.h.b16 %v88
  %v446 = vunpack.c.l.b16 %v89
  %v447 = vunpack.c.h.b16 %v89
  %v448 = vunpack.c.l.b16 %v90
  %v449 = vunpack.c.h.b16 %v90
  %v450 = vunpack.c.l.b16 %v91
  %v451 = vunpack.c.h.b16 %v91
  %v452 = vunpack.c.l.b16 %v92
  %v453 = vunpack.c.h.b16 %v92
  %v454 = vunpack.c.l.b16 %v93
  %v455 = vunpack.c.h.b16 %v93
  %v456 = vunpack.c.l.b16 %v94
  %v457 = vunpack.c.h.b16 %v94
  %v458 = vunpack.c.l.b16 %v95
  %v459 = vunpack.c.h.b16 %v95
  %v460 = vunpack.c.l.b16 %v96
  %v461 = vunpack.c.h.b16 %v96
  %v462 = vunpack.c.l.b16 %v97
  %v463 = vunpack.c.h.b16 %v97
  %v464 = vunpack.c.l.b16 %v98
  %v465 = vunpack.c.h.b16 %v98
  %v466 = vunpack.c.l.b16 %v99
  %v467 = vunpack.c.h.b16 %v99
  %v468 = vunpack.c.l.b16 %v100
  %v469 = vunpack.c.h.b16 %v100
  %v470 = vpack.c.b16 %v302, %v296
  %v471 = vpack.c.b16 %v303, %v297
  %v472 = vpack.c.b16 %v304, %v298
  %v473 = vpack.c.b16 %v305, %v299
  %v474 = vpack.c.b16 %v306, %v300
  %v475 = vpack.c.b16 %v307, %v301
  %v476 = vpack.c.b16 %v314, %v308
  %v477 = vpack.c.b16 %v315, %v309
  %v478 = vpack.c.b16 %v316, %v310
  %v479 = vpack.c.b16 %v317, %v311
  %v480 = vpack.c.b16 %v318, %v312
  %v481 = vpack.c.b16 %v319, %v313
  %v482 = vpack.c.b16 %v326, %v320
  %v483 = vpack.c.b16 %v327, %v321
  %v484 = vpack.c.b16 %v328, %v322
  %v485 = vpack.c.b16 %v329, %v323
  %v486 = vpack.c.b16 %v330, %v324
  %v487 = vpack.c.b16 %v331, %v325
  %v488 = vpack.c.b16 %v338, %v332
  %v489 = vpack.c.b16 %v339, %v333
  %v490 = vpack.c.b16 %v340, %v334
  %v491 = vpack.c.b16 %v341, %v335
  %v492 = vpack.c.b16 %v342, %v336
  %v493 = vpack.c.b16 %v343, %v337
  %v494 = vpack.c.b16 %v350, %v344
  %v495 = vpack.c.b16 %v351, %v345
  %v496 = vpack.c.b16 %v352, %v346
  %v497 = vpack.c.b16 %v353, %v347
  %v498 = vpack.c.b16 %v354, %v348
  %v499 = vpack.c.b16 %v355, %v349
  %v500 = vpack.c.b16 %v362, %v356
  %v501 = vpack.c.b16 %v363, %v357
  %v502 = vpack.c.b16 %v364, %v358
  %v503 = vpack.c.b16 %v365, %v359
  %v504 = vpack.c.b16 %v366, %v360
  %v505 = vpack.c.b16 %v367, %v361
  %v506 = vpack.c.b16 %v374, %v368
  %v507 = vpack.c.b16 %v375, %v369
  %v508 = vpack.c.b16 %v376, %v370
  %v509 = vpack.c.b16 %v377, %v371
  %v510 = vpack.c.b16 %v378, %v372
  %v511 = vpack.c.b16 %v379, %v373
  %v512 = vpack.c.b16 %v386, %v380
  %v513 = vpack.c.b16 %v387, %v381
  %v514 = vpack.c.b16 %v388, %v382
  %v515 = vpack.c.b16 %v389, %v383
  %v516 = vpack.c.b16 %v390, %v384
  %v517 = vpack.c.b16 %v391, %v385
  %v518 = vpack.c.b16 %v398, %v392
  %v519 = vpack.c.b16 %v399, %v393
  %v520 = vpack.c.b16 %v400, %v394
  %v521 = vpack.c.b16 %v401, %v395
  %v522 = vpack.c.b16 %v402, %v396
  %v523 = vpack.c.b16 %v403, %v397
  %v524 = vpack.c.b16 %v410, %v404
  %v525 = vpack.c.b16 %v411, %v405
  %v526 = vpack.c.b16 %v412, %v406
  %v527 = vpack.c.b16 %v413, %v407
  %v528 = vpack.c.b16 %v414, %v408
  %v529 = vpack.c.b16 %v415, %v409
  %v530 = vpack.c.b16 %v422, %v416
  %v531 = vpack.c.b16 %v423, %v417
  %v532 = vpack.c.b16 %v424, %v418
  %v533 = vpack.c.b16 %v425, %v419
  %v534 = vpack.c.b16 %v426, %v420
  %v535 = vpack.c.b16 %v427, %v421
  %v536 = vpack.c.b16 %v434, %v428
  %v537 = vpack.c.b16 %v435, %v429
  %v538 = vpack.c.b16 %v436, %v430
  %v539 = vpack.c.b16 %v437, %v431
  %v540 = vpack.c.b16 %v438, %v432
  %v541 = vpack.c.b16 %v439, %v433
  %v542 = vpack.c.b16 %v446, %v440
  %v543 = vpack.c.b16 %v447, %v441
  %v544 = vpack.c.b16 %v448, %v442
  %v545 = vpack.c.b16 %v449, %v443
  %v546 = vpack.c.b16 %v450, %v444
  %v547 = vpack.c.b16 %v451, %v445
  %v548 = vpack.c.b16 %v458, %v452
  %v549 = vpack.c.b16 %v459, %v453
  %v550 = vpack.c.b16 %v460, %v454
  %v551 = vpack.c.b16 %v461, %v455
  %v552 = vpack.c.b16 %v462, %v456
  %v553 = vpack.c.b16 %v463, %v457
  %v554 = vpack.c.b16 %v464, %v464
  %v555 = vpack.c.b16 %v465, %v465
  %v556 = vpack.c.b16 %v466, %v466
  %v557 = vpack.c.b16 %v467, %v467
  %v558 = vpack.c.b16 %v468, %v468
  %v559 = vpack.c.b16 %v469, %v469
  %v746 = vunpack.c.l.b16 %v101
  %v747 = vunpack.c.h.b16 %v101
  %v748 = vunpack.c.l.b16 %v102
  %v749 = vunpack.c.h.b16 %v102
  %v750 = vunpack.c.l.b16 %v103
  %v751 = vunpack.c.h.b16 %v103
  %v752 = vunpack.c.l.b16 %v104
  %v753 = vunpack.c.h.b16 %v104
  %v754 = vunpack.c.l.b16 %v105
  %v755 = vunpack.c.h.b16 %v105
  %v756 = vunpack.c.l.b16 %v106
  %v757 = vunpack.c.h.b16 %v106
  %v758 = vunpack.c.l.b16 %v107
  %v759 = vunpack.c.h.b16 %v107
  %v760 = vunpack.c.l.b16 %v108
  %v761 = vunpack.c.h.b16 %v108
  %v762 = vunpack.c.l.b16 %v109
  %v763 = vunpack.c.h.b16 %v109
  %v764 = vunpack.c.l.b16 %v110
  %v765 = vunpack.c.h.b16 %v110
  %v766 = vunpack.c.l.b16 %v111
  %v767 = vunpack.c.h.b16 %v111
  %v768 = vunpack.c.l.b16 %v112
  %v769 = vunpack.c.h.b16 %v112
  %v770 = vunpack.c.l.b16 %v113
  %v771 = vunpack.c.h.b16 %v113
  %v772 = vunpack.c.l.b16 %v114
  %v773 = vunpack.c.h.b16 %v114
  %v774 = vunpack.c.l.b16 %v115
  %v775 = vunpack.c.h.b16 %v115
  %v776 = vunpack.c.l.b16 %v116
  %v777 = vunpack.c.h.b16 %v116
  %v778 = vunpack.c.l.b16 %v117
  %v779 = vunpack.c.h.b16 %v117
  %v780 = vunpack.c.l.b16 %v118
  %v781 = vunpack.c.h.b16 %v118
  %v782 = vunpack.c.l.b16 %v119
  %v783 = vunpack.c.h.b16 %v119
  %v784 = vunpack.c.l.b16 %v120
  %v785 = vunpack.c.h.b16 %v120
  %v786 = vunpack.c.l.b16 %v121
  %v787 = vunpack.c.h.b16 %v121
  %v788 = vunpack.c.l.b16 %v122
  %v789 = vunpack.c.h.b16 %v122
  %v790 = vunpack.c.l.b16 %v123
  %v791 = vunpack.c.h.b16 %v123
  %v792 = vunpack.c.l.b16 %v124
  %v793 = vunpack.c.h.b16 %v124
  %v794 = vunpack.c.l.b16 %v125
  %v795 = vunpack.c.h.b16 %v125
  %v796 = vunpack.c.l.b16 %v126
  %v797 = vunpack.c.h.b16 %v126
  %v798 = vunpack.c.l.b16 %v127
  %v799 = vunpack.c.h.b16 %v127
  %v800 = vunpack.c.l.b16 %v128
  %v801 = vunpack.c.h.b16 %v128
  %v802 = vunpack.c.l.b16 %v129
  %v803 = vunpack.c.h.b16 %v129
  %v804 = vunpack.c.l.b16 %v130
  %v805 = vunpack.c.h.b16 %v130
  %v806 = vunpack.c.l.b16 %v131
  %v807 = vunpack.c.h.b16 %v131
  %v808 = vunpack.c.l.b16 %v132
  %v809 = vunpack.c.h.b16 %v132
  %v810 = vunpack.c.l.b16 %v133
  %v811 = vunpack.c.h.b16 %v133
  %v812 = vunpack.c.l.b16 %v134
  %v813 = vunpack.c.h.b16 %v134
  %v814 = vunpack.c.l.b16 %v135
  %v815 = vunpack.c.h.b16 %v135
  %v816 = vunpack.c.l.b16 %v136
  %v817 = vunpack.c.h.b16 %v136
  %v818 = vunpack.c.l.b16 %v137
  %v819 = vunpack.c.h.b16 %v137
  %v820 = vunpack.c.l.b16 %v138
  %v821 = vunpack.c.h.b16 %v138
  %v822 = vunpack.c.l.b16 %v139
  %v823 = vunpack.c.h.b16 %v139
  %v824 = vunpack.c.l.b16 %v140
  %v825 = vunpack.c.h.b16 %v140
  %v826 = vunpack.c.l.b16 %v141
  %v827 = vunpack.c.h.b16 %v141
  %v828 = vunpack.c.l.b16 %v142
  %v829 = vunpack.c.h.b16 %v142
  %v830 = vunpack.c.l.b16 %v143
  %v831 = vunpack.c.h.b16 %v143
  %v832 = vunpack.c.l.b16 %v144
  %v833 = vunpack.c.h.b16 %v144
  %v834 = vunpack.c.l.b16 %v145
  %v835 = vunpack.c.h.b16 %v145
  %v836 = vunpack.c.l.b16 %v146
  %v837 = vunpack.c.h.b16 %v146
  %v838 = vunpack.c.l.b16 %v147
  %v839 = vunpack.c.h.b16 %v147
  %v840 = vunpack.c.l.b16 %v148
  %v841 = vunpack.c.h.b16 %v148
  %v842 = vunpack.c.l.b16 %v149
  %v843 = vunpack.c.h.b16 %v149
  %v844 = vunpack.c.l.b16 %v150
  %v845 = vunpack.c.h.b16 %v150
  %v846 = vunpack.c.l.b16 %v151
  %v847 = vunpack.c.h.b16 %v151
  %v848 = vunpack.c.l.b16 %v152
  %v849 = vunpack.c.h.b16 %v152
  %v850 = vunpack.c.l.b16 %v153
  %v851 = vunpack.c.h.b16 %v153
  %v852 = vunpack.c.l.b16 %v154
  %v853 = vunpack.c.h.b16 %v154
  %v854 = vunpack.c.l.b16 %v155
  %v855 = vunpack.c.h.b16 %v155
  %v856 = vunpack.c.l.b16 %v156
  %v857 = vunpack.c.h.b16 %v156
  %v858 = vunpack.c.l.b16 %v157
  %v859 = vunpack.c.h.b16 %v157
  %v860 = vunpack.c.l.b16 %v158
  %v861 = vunpack.c.h.b16 %v158
  %v862 = vunpack.c.l.b16 %v159
  %v863 = vunpack.c.h.b16 %v159
  %v864 = vunpack.c.l.b16 %v160
  %v865 = vunpack.c.h.b16 %v160
  %v866 = vunpack.c.l.b16 %v161
  %v867 = vunpack.c.h.b16 %v161
  %v868 = vunpack.c.l.b16 %v162
  %v869 = vunpack.c.h.b16 %v162
  %v870 = vunpack.c.l.b16 %v163
  %v871 = vunpack.c.h.b16 %v163
  %v872 = vunpack.c.l.b16 %v164
  %v873 = vunpack.c.h.b16 %v164
  %v874 = vunpack.c.l.b16 %v165
  %v875 = vunpack.c.h.b16 %v165
  %v876 = vunpack.c.l.b16 %v166
  %v877 = vunpack.c.h.b16 %v166
  %v878 = vunpack.c.l.b16 %v167
  %v879 = vunpack.c.h.b16 %v167
  %v880 = vunpack.c.l.b16 %v168
  %v881 = vunpack.c.h.b16 %v168
  %v882 = vunpack.c.l.b16 %v169
  %v883 = vunpack.c.h.b16 %v169
  %v884 = vunpack.c.l.b16 %v170
  %v885 = vunpack.c.h.b16 %v170
  %v886 = vunpack.c.l.b16 %v171
  %v887 = vunpack.c.h.b16 %v171
  %v888 = vunpack.c.l.b16 %v172
  %v889 = vunpack.c.h.b16 %v172
  %v890 = vunpack.c.l.b16 %v173
  %v891 = vunpack.c.h.b16 %v173
  %v892 = vunpack.c.l.b16 %v174
  %v893 = vunpack.c.h.b16 %v174
  %v894 = vunpack.c.l.b16 %v175
  %v895 = vunpack.c.h.b16 %v175
  %v896 = vunpack.c.l.b16 %v176
  %v897 = vunpack.c.h.b16 %v176
  %v898 = vunpack.c.l.b16 %v177
  %v899 = vunpack.c.h.b16 %v177
  %v900 = vunpack.c.l.b16 %v178
  %v901 = vunpack.c.h.b16 %v178
  %v902 = vunpack.c.l.b16 %v179
  %v903 = vunpack.c.h.b16 %v179
  %v904 = vunpack.c.l.b16 %v180
  %v905 = vunpack.c.h.b16 %v180
  %v906 = vunpack.c.l.b16 %v181
  %v907 = vunpack.c.h.b16 %v181
  %v908 = vunpack.c.l.b16 %v182
  %v909 = vunpack.c.h.b16 %v182
  %v910 = vunpack.c.l.b16 %v183
  %v911 = vunpack.c.h.b16 %v183
  %v912 = vunpack.c.l.b16 %v184
  %v913 = vunpack.c.h.b16 %v184
  %v914 = vunpack.c.l.b16 %v185
  %v915 = vunpack.c.h.b16 %v185
  %v916 = vunpack.c.l.b16 %v186
  %v917 = vunpack.c.h.b16 %v186
  %v918 = vunpack.c.l.b16 %v187
  %v919 = vunpack.c.h.b16 %v187
  %v920 = vunpack.c.l.b16 %v188
  %v921 = vunpack.c.h.b16 %v188
  %v922 = vunpack.c.l.b16 %v189
  %v923 = vunpack.c.h.b16 %v189
  %v924 = vunpack.c.l.b16 %v190
  %v925 = vunpack.c.h.b16 %v190
  %v926 = vunpack.c.l.b16 %v191
  %v927 = vunpack.c.h.b16 %v191
  %v928 = vunpack.c.l.b16 %v192
  %v929 = vunpack.c.h.b16 %v192
  %v930 = vunpack.c.l.b16 %v193
  %v931 = vunpack.c.h.b16 %v193
  %v932 = vunpack.c.l.b16 %v194
  %v933 = vunpack.c.h.b16 %v194
  %v934 = vunpack.c.l.b16 %v195
  %v935 = vunpack.c.h.b16 %v195
  %v936 = vunpack.c.l.b16 %v196
  %v937 = vunpack.c.h.b16 %v196
  %v938 = vpack.c.b16 %v748, %v746
  %v939 = vpack.c.b16 %v749, %v747
  %v940 = vpack.c.b16 %v752, %v750
  %v941 = vpack.c.b16 %v753, %v751
  %v942 = vpack.c.b16 %v756, %v754
  %v943 = vpack.c.b16 %v757, %v755
  %v944 = vpack.c.b16 %v760, %v758
  %v945 = vpack.c.b16 %v761, %v759
  %v946 = vpack.c.b16 %v764, %v762
  %v947 = vpack.c.b16 %v765, %v763
  %v948 = vpack.c.b16 %v768, %v766
  %v949 = vpack.c.b16 %v769, %v767
  %v950 = vpack.c.b16 %v772, %v770
  %v951 = vpack.c.b16 %v773, %v771
  %v952 = vpack.c.b16 %v776, %v774
  %v953 = vpack.c.b16 %v777, %v775
  %v954 = vpack.c.b16 %v780, %v778
  %v955 = vpack.c.b16 %v781, %v779
  %v956 = vpack.c.b16 %v784, %v782
  %v957 = vpack.c.b16 %v785, %v783
  %v958 = vpack.c.b16 %v788, %v786
  %v959 = vpack.c.b16 %v789, %v787
  %v960 = vpack.c.b16 %v792, %v790
  %v961 = vpack.c.b16 %v793, %v791
  %v962 = vpack.c.b16 %v796, %v794
  %v963 = vpack.c.b16 %v797, %v795
  %v964 = vpack.c.b16 %v800, %v798
  %v965 = vpack.c.b16 %v801, %v799
  %v966 = vpack.c.b16 %v804, %v802
  %v967 = vpack.c.b16 %v805, %v803
  %v968 = vpack.c.b16 %v808, %v806
  %v969 = vpack.c.b16 %v809, %v807
  %v970 = vpack.c.b16 %v812, %v810
  %v971 = vpack.c.b16 %v813, %v811
  %v972 = vpack.c.b16 %v816, %v814
  %v973 = vpack.c.b16 %v817, %v815
  %v974 = vpack.c.b16 %v820, %v818
  %v975 = vpack.c.b16 %v821, %v819
  %v976 = vpack.c.b16 %v824, %v822
  %v977 = vpack.c.b16 %v825, %v823
  %v978 = vpack.c.b16 %v828, %v826
  %v979 = vpack.c.b16 %v829, %v827
  %v980 = vpack.c.b16 %v832, %v830
  %v981 = vpack.c.b16 %v833, %v831
  %v982 = vpack.c.b16 %v836, %v834
  %v983 = vpack.c.b16 %v837, %v835
  %v984 = vpack.c.b16 %v840, %v838
  %v985 = vpack.c.b16 %v841, %v839
  %v986 = vpack.c.b16 %v844, %v842
  %v987 = vpack.c.b16 %v845, %v843
  %v988 = vpack.c.b16 %v848, %v846
  %v989 = vpack.c.b16 %v849, %v847
  %v990 = vpack.c.b16 %v852, %v850
  %v991 = vpack.c.b16 %v853, %v851
  %v992 = vpack.c.b16 %v856, %v854
  %v993 = vpack.c.b16 %v857, %v855
  %v994 = vpack.c.b16 %v860, %v858
  %v995 = vpack.c.b16 %v861, %v859
  %v996 = vpack.c.b16 %v864, %v862
  %v997 = vpack.c.b16 %v865, %v863
  %v998 = vpack.c.b16 %v868, %v866
  %v999 = vpack.c.b16 %v869, %v867
  %v1000 = vpack.c.b16 %v872, %v870
  %v1001 = vpack.c.b16 %v873, %v871
  %v1002 = vpack.c.b16 %v876, %v874
  %v1003 = vpack.c.b16 %v877, %v875
  %v1004 = vpack.c.b16 %v880, %v878
  %v1005 = vpack.c.b16 %v881, %v879
  %v1006 = vpack.c.b16 %v884, %v882
  %v1007 = vpack.c.b16 %v885, %v883
  %v1008 = vpack.c.b16 %v888, %v886
  %v1009 = vpack.c.b16 %v889, %v887
  %v1010 = vpack.c.b16 %v892, %v890
  %v1011 = vpack.c.b16 %v893, %v891
  %v1012 = vpack.c.b16 %v896, %v894
  %v1013 = vpack.c.b16 %v897, %v895
  %v1014 = vpack.c.b16 %v900, %v898
  %v1015 = vpack.c.b16 %v901, %v899
  %v1016 = vpack.c.b16 %v904, %v902
  %v1017 = vpack.c.b16 %v905, %v903
  %v1018 = vpack.c.b16 %v908, %v906
  %v1019 = vpack.c.b16 %v909, %v907
  %v1020 = vpack.c.b16 %v912, %v910
  %v1021 = vpack.c.b16 %v913, %v911
  %v1022 = vpack.c.b16 %v916, %v914
  %v1023 = vpack.c.b16 %v917, %v915
  %v1024 = vpack.c.b16 %v920, %v918
  %v1025 = vpack.c.b16 %v921, %v919
  %v1026 = vpack.c.b16 %v924, %v922
  %v1027 = vpack.c.b16 %v925, %v923
  %v1028 = vpack.c.b16 %v928, %v926
  %v1029 = vpack.c.b16 %v929, %v927
  %v1030 = vpack.c.b16 %v932, %v930
  %v1031 = vpack.c.b16 %v933, %v931
  %v1032 = vpack.c.b16 %v936, %v934
  %v1033 = vpack.c.b16 %v937, %v935
  %1130 = vmatprep.subr.bf16.mxu0 %v953
  %1131 = vmatpush1.bf16.msra.mxu0 %v952
  %1132 = vmatprep.subr.bf16.mxu0 %v951
  %1133 = vmatpush1.bf16.msra.mxu0 %v950
  %1134 = vmatprep.subr.bf16.mxu0 %v949
  %1135 = vmatpush1.bf16.msra.mxu0 %v948
  %1136 = vmatprep.subr.bf16.mxu0 %v947
  %1137 = vmatpush1.bf16.msra.mxu0 %v946
  %1138 = vmatprep.subr.bf16.mxu0 %v945
  %1139 = vmatpush1.bf16.msra.mxu0 %v944
  %1140 = vmatprep.subr.bf16.mxu0 %v943
  %1141 = vmatpush1.bf16.msra.mxu0 %v942
  %1142 = vmatprep.subr.bf16.mxu0 %v941
  %1143 = vmatpush1.bf16.msra.mxu0 %v940
  %1144 = vmatprep.subr.bf16.mxu0 %v939
  %1145 = vmatpush1.bf16.msra.mxu0 %v938
  %1146 = vmatprep.subr.bf16.mxu0 %v969
  %1147 = vmatpush2.bf16.msra.mxu0 %v968
  %1148 = vmatprep.subr.bf16.mxu0 %v967
  %1149 = vmatpush2.bf16.msra.mxu0 %v966
  %1150 = vmatprep.subr.bf16.mxu0 %v965
  %1151 = vmatpush2.bf16.msra.mxu0 %v964
  %1152 = vmatprep.subr.bf16.mxu0 %v963
  %1153 = vmatpush2.bf16.msra.mxu0 %v962
  %1154 = vmatprep.subr.bf16.mxu0 %v961
  %1155 = vmatpush2.bf16.msra.mxu0 %v960
  %1156 = vmatprep.subr.bf16.mxu0 %v959
  %1157 = vmatpush2.bf16.msra.mxu0 %v958
  %1158 = vmatprep.subr.bf16.mxu0 %v957
  %1159 = vmatpush2.bf16.msra.mxu0 %v956
  %1160 = vmatprep.subr.bf16.mxu0 %v955
  %1161 = vmatpush2.bf16.msra.mxu0 %v954
  %1162 = vmatprep.mubr.bf16.mxu0 %v471
  %1163 = vmatmul.mubr.bf16.gmra.mxu0 %v470
  %v1164 = vpop.f32.mrf.mxu0
  %v1165 = vadd.f32 %v202, %v1164
  %v1166 = vpop.f32.mrf.mxu0
  %v1167 = vadd.f32 %v206, %v1166
  %v1168 = vpop.f32.mrf.mxu0
  %v1169 = vadd.f32 %v202, %v1168
  %v1170 = vpop.f32.mrf.mxu0
  %v1171 = vadd.f32 %v206, %v1170
  %1172 = vmatprep.mubr.bf16.mxu0 %v477
  %1173 = vmatmul.mubr.bf16.gmra.mxu0 %v476
  %v1174 = vpop.f32.mrf.mxu0
  %v1175 = vadd.f32 %v202, %v1174
  %v1176 = vpop.f32.mrf.mxu0
  %v1177 = vadd.f32 %v206, %v1176
  %v1178 = vpop.f32.mrf.mxu0
  %v1179 = vadd.f32 %v202, %v1178
  %v1180 = vpop.f32.mrf.mxu0
  %v1181 = vadd.f32 %v206, %v1180
  %1182 = vmatprep.mubr.bf16.mxu0 %v483
  %1183 = vmatmul.mubr.bf16.gmra.mxu0 %v482
  %v1184 = vpop.f32.mrf.mxu0
  %v1185 = vadd.f32 %v202, %v1184
  %v1186 = vpop.f32.mrf.mxu0
  %v1187 = vadd.f32 %v206, %v1186
  %v1188 = vpop.f32.mrf.mxu0
  %v1189 = vadd.f32 %v202, %v1188
  %v1190 = vpop.f32.mrf.mxu0
  %v1191 = vadd.f32 %v206, %v1190
  %1192 = vmatprep.mubr.bf16.mxu0 %v489
  %1193 = vmatmul.mubr.bf16.gmra.mxu0 %v488
  %v1194 = vpop.f32.mrf.mxu0
  %v1195 = vadd.f32 %v202, %v1194
  %v1196 = vpop.f32.mrf.mxu0
  %v1197 = vadd.f32 %v206, %v1196
  %v1198 = vpop.f32.mrf.mxu0
  %v1199 = vadd.f32 %v202, %v1198
  %v1200 = vpop.f32.mrf.mxu0
  %v1201 = vadd.f32 %v206, %v1200
  %1202 = vmatprep.mubr.bf16.mxu0 %v495
  %1203 = vmatmul.mubr.bf16.gmra.mxu0 %v494
  %v1204 = vpop.f32.mrf.mxu0
  %v1205 = vadd.f32 %v202, %v1204
  %v1206 = vpop.f32.mrf.mxu0
  %v1207 = vadd.f32 %v206, %v1206
  %v1208 = vpop.f32.mrf.mxu0
  %v1209 = vadd.f32 %v202, %v1208
  %v1210 = vpop.f32.mrf.mxu0
  %v1211 = vadd.f32 %v206, %v1210
  %1212 = vmatprep.mubr.bf16.mxu0 %v501
  %1213 = vmatmul.mubr.bf16.gmra.mxu0 %v500
  %v1214 = vpop.f32.mrf.mxu0
  %v1215 = vadd.f32 %v202, %v1214
  %v1216 = vpop.f32.mrf.mxu0
  %v1217 = vadd.f32 %v206, %v1216
  %v1218 = vpop.f32.mrf.mxu0
  %v1219 = vadd.f32 %v202, %v1218
  %v1220 = vpop.f32.mrf.mxu0
  %v1221 = vadd.f32 %v206, %v1220
  %1222 = vmatprep.mubr.bf16.mxu0 %v507
  %1223 = vmatmul.mubr.bf16.gmra.mxu0 %v506
  %v1224 = vpop.f32.mrf.mxu0
  %v1225 = vadd.f32 %v202, %v1224
  %v1226 = vpop.f32.mrf.mxu0
  %v1227 = vadd.f32 %v206, %v1226
  %v1228 = vpop.f32.mrf.mxu0
  %v1229 = vadd.f32 %v202, %v1228
  %v1230 = vpop.f32.mrf.mxu0
  %v1231 = vadd.f32 %v206, %v1230
  %1232 = vmatprep.mubr.bf16.mxu0 %v513
  %1233 = vmatmul.mubr.bf16.gmra.mxu0 %v512
  %v1234 = vpop.f32.mrf.mxu0
  %v1235 = vadd.f32 %v202, %v1234
  %v1236 = vpop.f32.mrf.mxu0
  %v1237 = vadd.f32 %v206, %v1236
  %v1238 = vpop.f32.mrf.mxu0
  %v1239 = vadd.f32 %v202, %v1238
  %v1240 = vpop.f32.mrf.mxu0
  %v1241 = vadd.f32 %v206, %v1240
  %1242 = vmatprep.mubr.bf16.mxu0 %v519
  %1243 = vmatmul.mubr.bf16.gmra.mxu0 %v518
  %v1244 = vpop.f32.mrf.mxu0
  %v1245 = vadd.f32 %v202, %v1244
  %v1246 = vpop.f32.mrf.mxu0
  %v1247 = vadd.f32 %v206, %v1246
  %v1248 = vpop.f32.mrf.mxu0
  %v1249 = vadd.f32 %v202, %v1248
  %v1250 = vpop.f32.mrf.mxu0
  %v1251 = vadd.f32 %v206, %v1250
  %1252 = vmatprep.mubr.bf16.mxu0 %v525
  %1253 = vmatmul.mubr.bf16.gmra.mxu0 %v524
  %v1254 = vpop.f32.mrf.mxu0
  %v1255 = vadd.f32 %v202, %v1254
  %v1256 = vpop.f32.mrf.mxu0
  %v1257 = vadd.f32 %v206, %v1256
  %v1258 = vpop.f32.mrf.mxu0
  %v1259 = vadd.f32 %v202, %v1258
  %v1260 = vpop.f32.mrf.mxu0
  %v1261 = vadd.f32 %v206, %v1260
  %1262 = vmatprep.mubr.bf16.mxu0 %v531
  %1263 = vmatmul.mubr.bf16.gmra.mxu0 %v530
  %v1264 = vpop.f32.mrf.mxu0
  %v1265 = vadd.f32 %v202, %v1264
  %v1266 = vpop.f32.mrf.mxu0
  %v1267 = vadd.f32 %v206, %v1266
  %v1268 = vpop.f32.mrf.mxu0
  %v1269 = vadd.f32 %v202, %v1268
  %v1270 = vpop.f32.mrf.mxu0
  %v1271 = vadd.f32 %v206, %v1270
  %1272 = vmatprep.mubr.bf16.mxu0 %v537
  %1273 = vmatmul.mubr.bf16.gmra.mxu0 %v536
  %v1274 = vpop.f32.mrf.mxu0
  %v1275 = vadd.f32 %v202, %v1274
  %v1276 = vpop.f32.mrf.mxu0
  %v1277 = vadd.f32 %v206, %v1276
  %v1278 = vpop.f32.mrf.mxu0
  %v1279 = vadd.f32 %v202, %v1278
  %v1280 = vpop.f32.mrf.mxu0
  %v1281 = vadd.f32 %v206, %v1280
  %1282 = vmatprep.mubr.bf16.mxu0 %v543
  %1283 = vmatmul.mubr.bf16.gmra.mxu0 %v542
  %v1284 = vpop.f32.mrf.mxu0
  %v1285 = vadd.f32 %v202, %v1284
  %v1286 = vpop.f32.mrf.mxu0
  %v1287 = vadd.f32 %v206, %v1286
  %v1288 = vpop.f32.mrf.mxu0
  %v1289 = vadd.f32 %v202, %v1288
  %v1290 = vpop.f32.mrf.mxu0
  %v1291 = vadd.f32 %v206, %v1290
  %1292 = vmatprep.mubr.bf16.mxu0 %v549
  %1293 = vmatmul.mubr.bf16.gmra.mxu0 %v548
  %v1294 = vpop.f32.mrf.mxu0
  %v1295 = vadd.f32 %v202, %v1294
  %v1296 = vpop.f32.mrf.mxu0
  %v1297 = vadd.f32 %v206, %v1296
  %v1298 = vpop.f32.mrf.mxu0
  %v1299 = vadd.f32 %v202, %v1298
  %v1300 = vpop.f32.mrf.mxu0
  %v1301 = vadd.f32 %v206, %v1300
  %1302 = vmatprep.mubr.bf16.mxu0 %v555
  %1303 = vmatmul.mubr.bf16.gmra.mxu0 %v554
  %v1304 = vpop.f32.mrf.mxu0
  %v1305 = vadd.f32 %v202, %v1304
  %v1306 = vpop.f32.mrf.mxu0
  %v1307 = vadd.f32 %v206, %v1306
  %v1308 = vpop.f32.mrf.mxu0
  %v1309 = vpop.f32.mrf.mxu0
  %1310 = vdwg.mxu0
  %1311 = vmatprep.subr.bf16.mxu0 %v985
  %1312 = vmatpush1.bf16.msra.mxu0 %v984
  %1313 = vmatprep.subr.bf16.mxu0 %v983
  %1314 = vmatpush1.bf16.msra.mxu0 %v982
  %1315 = vmatprep.subr.bf16.mxu0 %v981
  %1316 = vmatpush1.bf16.msra.mxu0 %v980
  %1317 = vmatprep.subr.bf16.mxu0 %v979
  %1318 = vmatpush1.bf16.msra.mxu0 %v978
  %1319 = vmatprep.subr.bf16.mxu0 %v977
  %1320 = vmatpush1.bf16.msra.mxu0 %v976
  %1321 = vmatprep.subr.bf16.mxu0 %v975
  %1322 = vmatpush1.bf16.msra.mxu0 %v974
  %1323 = vmatprep.subr.bf16.mxu0 %v973
  %1324 = vmatpush1.bf16.msra.mxu0 %v972
  %1325 = vmatprep.subr.bf16.mxu0 %v971
  %1326 = vmatpush1.bf16.msra.mxu0 %v970
  %1327 = vmatprep.subr.bf16.mxu0 %v1001
  %1328 = vmatpush2.bf16.msra.mxu0 %v1000
  %1329 = vmatprep.subr.bf16.mxu0 %v999
  %1330 = vmatpush2.bf16.msra.mxu0 %v998
  %1331 = vmatprep.subr.bf16.mxu0 %v997
  %1332 = vmatpush2.bf16.msra.mxu0 %v996
  %1333 = vmatprep.subr.bf16.mxu0 %v995
  %1334 = vmatpush2.bf16.msra.mxu0 %v994
  %1335 = vmatprep.subr.bf16.mxu0 %v993
  %1336 = vmatpush2.bf16.msra.mxu0 %v992
  %1337 = vmatprep.subr.bf16.mxu0 %v991
  %1338 = vmatpush2.bf16.msra.mxu0 %v990
  %1339 = vmatprep.subr.bf16.mxu0 %v989
  %1340 = vmatpush2.bf16.msra.mxu0 %v988
  %1341 = vmatprep.subr.bf16.mxu0 %v987
  %1342 = vmatpush2.bf16.msra.mxu0 %v986
  %1343 = vmatprep.mubr.bf16.mxu0 %v473
  %1344 = vmatmul.mubr.bf16.gmra.mxu0 %v472
  %v1345 = vpop.f32.mrf.mxu0
  %v1346 = vadd.f32 %v1165, %v1345
  %v1347 = vpop.f32.mrf.mxu0
  %v1348 = vadd.f32 %v1167, %v1347
  %v1349 = vpop.f32.mrf.mxu0
  %v1350 = vadd.f32 %v1169, %v1349
  %v1351 = vpop.f32.mrf.mxu0
  %v1352 = vadd.f32 %v1171, %v1351
  %1353 = vmatprep.mubr.bf16.mxu0 %v479
  %1354 = vmatmul.mubr.bf16.gmra.mxu0 %v478
  %v1355 = vpop.f32.mrf.mxu0
  %v1356 = vadd.f32 %v1175, %v1355
  %v1357 = vpop.f32.mrf.mxu0
  %v1358 = vadd.f32 %v1177, %v1357
  %v1359 = vpop.f32.mrf.mxu0
  %v1360 = vadd.f32 %v1179, %v1359
  %v1361 = vpop.f32.mrf.mxu0
  %v1362 = vadd.f32 %v1181, %v1361
  %1363 = vmatprep.mubr.bf16.mxu0 %v485
  %1364 = vmatmul.mubr.bf16.gmra.mxu0 %v484
  %v1365 = vpop.f32.mrf.mxu0
  %v1366 = vadd.f32 %v1185, %v1365
  %v1367 = vpop.f32.mrf.mxu0
  %v1368 = vadd.f32 %v1187, %v1367
  %v1369 = vpop.f32.mrf.mxu0
  %v1370 = vadd.f32 %v1189, %v1369
  %v1371 = vpop.f32.mrf.mxu0
  %v1372 = vadd.f32 %v1191, %v1371
  %1373 = vmatprep.mubr.bf16.mxu0 %v491
  %1374 = vmatmul.mubr.bf16.gmra.mxu0 %v490
  %v1375 = vpop.f32.mrf.mxu0
  %v1376 = vadd.f32 %v1195, %v1375
  %v1377 = vpop.f32.mrf.mxu0
  %v1378 = vadd.f32 %v1197, %v1377
  %v1379 = vpop.f32.mrf.mxu0
  %v1380 = vadd.f32 %v1199, %v1379
  %v1381 = vpop.f32.mrf.mxu0
  %v1382 = vadd.f32 %v1201, %v1381
  %1383 = vmatprep.mubr.bf16.mxu0 %v497
  %1384 = vmatmul.mubr.bf16.gmra.mxu0 %v496
  %v1385 = vpop.f32.mrf.mxu0
  %v1386 = vadd.f32 %v1205, %v1385
  %v1387 = vpop.f32.mrf.mxu0
  %v1388 = vadd.f32 %v1207, %v1387
  %v1389 = vpop.f32.mrf.mxu0
  %v1390 = vadd.f32 %v1209, %v1389
  %v1391 = vpop.f32.mrf.mxu0
  %v1392 = vadd.f32 %v1211, %v1391
  %1393 = vmatprep.mubr.bf16.mxu0 %v503
  %1394 = vmatmul.mubr.bf16.gmra.mxu0 %v502
  %v1395 = vpop.f32.mrf.mxu0
  %v1396 = vadd.f32 %v1215, %v1395
  %v1397 = vpop.f32.mrf.mxu0
  %v1398 = vadd.f32 %v1217, %v1397
  %v1399 = vpop.f32.mrf.mxu0
  %v1400 = vadd.f32 %v1219, %v1399
  %v1401 = vpop.f32.mrf.mxu0
  %v1402 = vadd.f32 %v1221, %v1401
  %1403 = vmatprep.mubr.bf16.mxu0 %v509
  %1404 = vmatmul.mubr.bf16.gmra.mxu0 %v508
  %v1405 = vpop.f32.mrf.mxu0
  %v1406 = vadd.f32 %v1225, %v1405
  %v1407 = vpop.f32.mrf.mxu0
  %v1408 = vadd.f32 %v1227, %v1407
  %v1409 = vpop.f32.mrf.mxu0
  %v1410 = vadd.f32 %v1229, %v1409
  %v1411 = vpop.f32.mrf.mxu0
  %v1412 = vadd.f32 %v1231, %v1411
  %1413 = vmatprep.mubr.bf16.mxu0 %v515
  %1414 = vmatmul.mubr.bf16.gmra.mxu0 %v514
  %v1415 = vpop.f32.mrf.mxu0
  %v1416 = vadd.f32 %v1235, %v1415
  %v1417 = vpop.f32.mrf.mxu0
  %v1418 = vadd.f32 %v1237, %v1417
  %v1419 = vpop.f32.mrf.mxu0
  %v1420 = vadd.f32 %v1239, %v1419
  %v1421 = vpop.f32.mrf.mxu0
  %v1422 = vadd.f32 %v1241, %v1421
  %1423 = vmatprep.mubr.bf16.mxu0 %v521
  %1424 = vmatmul.mubr.bf16.gmra.mxu0 %v520
  %v1425 = vpop.f32.mrf.mxu0
  %v1426 = vadd.f32 %v1245, %v1425
  %v1427 = vpop.f32.mrf.mxu0
  %v1428 = vadd.f32 %v1247, %v1427
  %v1429 = vpop.f32.mrf.mxu0
  %v1430 = vadd.f32 %v1249, %v1429
  %v1431 = vpop.f32.mrf.mxu0
  %v1432 = vadd.f32 %v1251, %v1431
  %1433 = vmatprep.mubr.bf16.mxu0 %v527
  %1434 = vmatmul.mubr.bf16.gmra.mxu0 %v526
  %v1435 = vpop.f32.mrf.mxu0
  %v1436 = vadd.f32 %v1255, %v1435
  %v1437 = vpop.f32.mrf.mxu0
  %v1438 = vadd.f32 %v1257, %v1437
  %v1439 = vpop.f32.mrf.mxu0
  %v1440 = vadd.f32 %v1259, %v1439
  %v1441 = vpop.f32.mrf.mxu0
  %v1442 = vadd.f32 %v1261, %v1441
  %1443 = vmatprep.mubr.bf16.mxu0 %v533
  %1444 = vmatmul.mubr.bf16.gmra.mxu0 %v532
  %v1445 = vpop.f32.mrf.mxu0
  %v1446 = vadd.f32 %v1265, %v1445
  %v1447 = vpop.f32.mrf.mxu0
  %v1448 = vadd.f32 %v1267, %v1447
  %v1449 = vpop.f32.mrf.mxu0
  %v1450 = vadd.f32 %v1269, %v1449
  %v1451 = vpop.f32.mrf.mxu0
  %v1452 = vadd.f32 %v1271, %v1451
  %1453 = vmatprep.mubr.bf16.mxu0 %v539
  %1454 = vmatmul.mubr.bf16.gmra.mxu0 %v538
  %v1455 = vpop.f32.mrf.mxu0
  %v1456 = vadd.f32 %v1275, %v1455
  %v1457 = vpop.f32.mrf.mxu0
  %v1458 = vadd.f32 %v1277, %v1457
  %v1459 = vpop.f32.mrf.mxu0
  %v1460 = vadd.f32 %v1279, %v1459
  %v1461 = vpop.f32.mrf.mxu0
  %v1462 = vadd.f32 %v1281, %v1461
  %1463 = vmatprep.mubr.bf16.mxu0 %v545
  %1464 = vmatmul.mubr.bf16.gmra.mxu0 %v544
  %v1465 = vpop.f32.mrf.mxu0
  %v1466 = vadd.f32 %v1285, %v1465
  %v1467 = vpop.f32.mrf.mxu0
  %v1468 = vadd.f32 %v1287, %v1467
  %v1469 = vpop.f32.mrf.mxu0
  %v1470 = vadd.f32 %v1289, %v1469
  %v1471 = vpop.f32.mrf.mxu0
  %v1472 = vadd.f32 %v1291, %v1471
  %1473 = vmatprep.mubr.bf16.mxu0 %v551
  %1474 = vmatmul.mubr.bf16.gmra.mxu0 %v550
  %v1475 = vpop.f32.mrf.mxu0
  %v1476 = vadd.f32 %v1295, %v1475
  %v1477 = vpop.f32.mrf.mxu0
  %v1478 = vadd.f32 %v1297, %v1477
  %v1479 = vpop.f32.mrf.mxu0
  %v1480 = vadd.f32 %v1299, %v1479
  %v1481 = vpop.f32.mrf.mxu0
  %v1482 = vadd.f32 %v1301, %v1481
  %1483 = vmatprep.mubr.bf16.mxu0 %v557
  %1484 = vmatmul.mubr.bf16.gmra.mxu0 %v556
  %v1485 = vpop.f32.mrf.mxu0
  %v1486 = vadd.f32 %v1305, %v1485
  %v1487 = vpop.f32.mrf.mxu0
  %v1488 = vadd.f32 %v1307, %v1487
  %v1489 = vpop.f32.mrf.mxu0
  %v1490 = vpop.f32.mrf.mxu0
  %1491 = vdwg.mxu0
  %1492 = vmatprep.subr.bf16.mxu0 %v1017
  %1493 = vmatpush1.bf16.msra.mxu0 %v1016
  %1494 = vmatprep.subr.bf16.mxu0 %v1015
  %1495 = vmatpush1.bf16.msra.mxu0 %v1014
  %1496 = vmatprep.subr.bf16.mxu0 %v1013
  %1497 = vmatpush1.bf16.msra.mxu0 %v1012
  %1498 = vmatprep.subr.bf16.mxu0 %v1011
  %1499 = vmatpush1.bf16.msra.mxu0 %v1010
  %1500 = vmatprep.subr.bf16.mxu0 %v1009
  %1501 = vmatpush1.bf16.msra.mxu0 %v1008
  %1502 = vmatprep.subr.bf16.mxu0 %v1007
  %1503 = vmatpush1.bf16.msra.mxu0 %v1006
  %1504 = vmatprep.subr.bf16.mxu0 %v1005
  %1505 = vmatpush1.bf16.msra.mxu0 %v1004
  %1506 = vmatprep.subr.bf16.mxu0 %v1003
  %1507 = vmatpush1.bf16.msra.mxu0 %v1002
  %1508 = vmatprep.subr.bf16.mxu0 %v1033
  %1509 = vmatpush2.bf16.msra.mxu0 %v1032
  %1510 = vmatprep.subr.bf16.mxu0 %v1031
  %1511 = vmatpush2.bf16.msra.mxu0 %v1030
  %1512 = vmatprep.subr.bf16.mxu0 %v1029
  %1513 = vmatpush2.bf16.msra.mxu0 %v1028
  %1514 = vmatprep.subr.bf16.mxu0 %v1027
  %1515 = vmatpush2.bf16.msra.mxu0 %v1026
  %1516 = vmatprep.subr.bf16.mxu0 %v1025
  %1517 = vmatpush2.bf16.msra.mxu0 %v1024
  %1518 = vmatprep.subr.bf16.mxu0 %v1023
  %1519 = vmatpush2.bf16.msra.mxu0 %v1022
  %1520 = vmatprep.subr.bf16.mxu0 %v1021
  %1521 = vmatpush2.bf16.msra.mxu0 %v1020
  %1522 = vmatprep.subr.bf16.mxu0 %v1019
  %1523 = vmatpush2.bf16.msra.mxu0 %v1018
  %1524 = vmatprep.mubr.bf16.mxu0 %v475
  %1525 = vmatmul.mubr.bf16.gmra.mxu0 %v474
  %v1526 = vpop.f32.mrf.mxu0
  %v1527 = vadd.f32 %v1346, %v1526
  %v1528 = vpop.f32.mrf.mxu0
  %v1529 = vadd.f32 %v1348, %v1528
  %v1530 = vpop.f32.mrf.mxu0
  %v1531 = vadd.f32 %v1350, %v1530
  %v1532 = vpop.f32.mrf.mxu0
  %v1533 = vadd.f32 %v1352, %v1532
  %1534 = vmatprep.mubr.bf16.mxu0 %v481
  %1535 = vmatmul.mubr.bf16.gmra.mxu0 %v480
  %v1536 = vpop.f32.mrf.mxu0
  %v1537 = vadd.f32 %v1356, %v1536
  %v1538 = vpop.f32.mrf.mxu0
  %v1539 = vadd.f32 %v1358, %v1538
  %v1540 = vpop.f32.mrf.mxu0
  %v1541 = vadd.f32 %v1360, %v1540
  %v1542 = vpop.f32.mrf.mxu0
  %v1543 = vadd.f32 %v1362, %v1542
  %1544 = vmatprep.mubr.bf16.mxu0 %v487
  %1545 = vmatmul.mubr.bf16.gmra.mxu0 %v486
  %v1546 = vpop.f32.mrf.mxu0
  %v1547 = vadd.f32 %v1366, %v1546
  %v1548 = vpop.f32.mrf.mxu0
  %v1549 = vadd.f32 %v1368, %v1548
  %v1550 = vpop.f32.mrf.mxu0
  %v1551 = vadd.f32 %v1370, %v1550
  %v1552 = vpop.f32.mrf.mxu0
  %v1553 = vadd.f32 %v1372, %v1552
  %1554 = vmatprep.mubr.bf16.mxu0 %v493
  %1555 = vmatmul.mubr.bf16.gmra.mxu0 %v492
  %v1556 = vpop.f32.mrf.mxu0
  %v1557 = vadd.f32 %v1376, %v1556
  %v1558 = vpop.f32.mrf.mxu0
  %v1559 = vadd.f32 %v1378, %v1558
  %v1560 = vpop.f32.mrf.mxu0
  %v1561 = vadd.f32 %v1380, %v1560
  %v1562 = vpop.f32.mrf.mxu0
  %v1563 = vadd.f32 %v1382, %v1562
  %1564 = vmatprep.mubr.bf16.mxu0 %v499
  %1565 = vmatmul.mubr.bf16.gmra.mxu0 %v498
  %v1566 = vpop.f32.mrf.mxu0
  %v1567 = vadd.f32 %v1386, %v1566
  %v1568 = vpop.f32.mrf.mxu0
  %v1569 = vadd.f32 %v1388, %v1568
  %v1570 = vpop.f32.mrf.mxu0
  %v1571 = vadd.f32 %v1390, %v1570
  %v1572 = vpop.f32.mrf.mxu0
  %v1573 = vadd.f32 %v1392, %v1572
  %1574 = vmatprep.mubr.bf16.mxu0 %v505
  %1575 = vmatmul.mubr.bf16.gmra.mxu0 %v504
  %v1576 = vpop.f32.mrf.mxu0
  %v1577 = vadd.f32 %v1396, %v1576
  %v1578 = vpop.f32.mrf.mxu0
  %v1579 = vadd.f32 %v1398, %v1578
  %v1580 = vpop.f32.mrf.mxu0
  %v1581 = vadd.f32 %v1400, %v1580
  %v1582 = vpop.f32.mrf.mxu0
  %v1583 = vadd.f32 %v1402, %v1582
  %1584 = vmatprep.mubr.bf16.mxu0 %v511
  %1585 = vmatmul.mubr.bf16.gmra.mxu0 %v510
  %v1586 = vpop.f32.mrf.mxu0
  %v1587 = vadd.f32 %v1406, %v1586
  %v1588 = vpop.f32.mrf.mxu0
  %v1589 = vadd.f32 %v1408, %v1588
  %v1590 = vpop.f32.mrf.mxu0
  %v1591 = vadd.f32 %v1410, %v1590
  %v1592 = vpop.f32.mrf.mxu0
  %v1593 = vadd.f32 %v1412, %v1592
  %1594 = vmatprep.mubr.bf16.mxu0 %v517
  %1595 = vmatmul.mubr.bf16.gmra.mxu0 %v516
  %v1596 = vpop.f32.mrf.mxu0
  %v1597 = vadd.f32 %v1416, %v1596
  %v1598 = vpop.f32.mrf.mxu0
  %v1599 = vadd.f32 %v1418, %v1598
  %v1600 = vpop.f32.mrf.mxu0
  %v1601 = vadd.f32 %v1420, %v1600
  %v1602 = vpop.f32.mrf.mxu0
  %v1603 = vadd.f32 %v1422, %v1602
  %1604 = vmatprep.mubr.bf16.mxu0 %v523
  %1605 = vmatmul.mubr.bf16.gmra.mxu0 %v522
  %v1606 = vpop.f32.mrf.mxu0
  %v1607 = vadd.f32 %v1426, %v1606
  %v1608 = vpop.f32.mrf.mxu0
  %v1609 = vadd.f32 %v1428, %v1608
  %v1610 = vpop.f32.mrf.mxu0
  %v1611 = vadd.f32 %v1430, %v1610
  %v1612 = vpop.f32.mrf.mxu0
  %v1613 = vadd.f32 %v1432, %v1612
  %1614 = vmatprep.mubr.bf16.mxu0 %v529
  %1615 = vmatmul.mubr.bf16.gmra.mxu0 %v528
  %v1616 = vpop.f32.mrf.mxu0
  %v1617 = vadd.f32 %v1436, %v1616
  %v1618 = vpop.f32.mrf.mxu0
  %v1619 = vadd.f32 %v1438, %v1618
  %v1620 = vpop.f32.mrf.mxu0
  %v1621 = vadd.f32 %v1440, %v1620
  %v1622 = vpop.f32.mrf.mxu0
  %v1623 = vadd.f32 %v1442, %v1622
  %1624 = vmatprep.mubr.bf16.mxu0 %v535
  %1625 = vmatmul.mubr.bf16.gmra.mxu0 %v534
  %v1626 = vpop.f32.mrf.mxu0
  %v1627 = vadd.f32 %v1446, %v1626
  %v1628 = vpop.f32.mrf.mxu0
  %v1629 = vadd.f32 %v1448, %v1628
  %v1630 = vpop.f32.mrf.mxu0
  %v1631 = vadd.f32 %v1450, %v1630
  %v1632 = vpop.f32.mrf.mxu0
  %v1633 = vadd.f32 %v1452, %v1632
  %1634 = vmatprep.mubr.bf16.mxu0 %v541
  %1635 = vmatmul.mubr.bf16.gmra.mxu0 %v540
  %v1636 = vpop.f32.mrf.mxu0
  %v1637 = vadd.f32 %v1456, %v1636
  %v1638 = vpop.f32.mrf.mxu0
  %v1639 = vadd.f32 %v1458, %v1638
  %v1640 = vpop.f32.mrf.mxu0
  %v1641 = vadd.f32 %v1460, %v1640
  %v1642 = vpop.f32.mrf.mxu0
  %v1643 = vadd.f32 %v1462, %v1642
  %1644 = vmatprep.mubr.bf16.mxu0 %v547
  %1645 = vmatmul.mubr.bf16.gmra.mxu0 %v546
  %v1646 = vpop.f32.mrf.mxu0
  %v1647 = vadd.f32 %v1466, %v1646
  %v1648 = vpop.f32.mrf.mxu0
  %v1649 = vadd.f32 %v1468, %v1648
  %v1650 = vpop.f32.mrf.mxu0
  %v1651 = vadd.f32 %v1470, %v1650
  %v1652 = vpop.f32.mrf.mxu0
  %v1653 = vadd.f32 %v1472, %v1652
  %1654 = vmatprep.mubr.bf16.mxu0 %v553
  %1655 = vmatmul.mubr.bf16.gmra.mxu0 %v552
  %v1656 = vpop.f32.mrf.mxu0
  %v1657 = vadd.f32 %v1476, %v1656
  %v1658 = vpop.f32.mrf.mxu0
  %v1659 = vadd.f32 %v1478, %v1658
  %v1660 = vpop.f32.mrf.mxu0
  %v1661 = vadd.f32 %v1480, %v1660
  %v1662 = vpop.f32.mrf.mxu0
  %v1663 = vadd.f32 %v1482, %v1662
  %1664 = vmatprep.mubr.bf16.mxu0 %v559
  %1665 = vmatmul.mubr.bf16.gmra.mxu0 %v558
  %v1666 = vpop.f32.mrf.mxu0
  %v1667 = vadd.f32 %v1486, %v1666
  %v1668 = vpop.f32.mrf.mxu0
  %v1669 = vadd.f32 %v1488, %v1668
  %v1670 = vpop.f32.mrf.mxu0
  %v1671 = vpop.f32.mrf.mxu0
  %1672 = vdwg.mxu0
  %v1673 = vmax.f32 %v1527, 0.0
  %v1674 = vmax.f32 %v1529, 0.0
  %v1675 = vmax.f32 %v1531, 0.0
  %v1676 = vmax.f32 %v1533, 0.0
  %v1677 = vmax.f32 %v1537, 0.0
  %v1678 = vmax.f32 %v1539, 0.0
  %v1679 = vmax.f32 %v1541, 0.0
  %v1680 = vmax.f32 %v1543, 0.0
  %v1681 = vmax.f32 %v1547, 0.0
  %v1682 = vmax.f32 %v1549, 0.0
  %v1683 = vmax.f32 %v1551, 0.0
  %v1684 = vmax.f32 %v1553, 0.0
  %v1685 = vmax.f32 %v1557, 0.0
  %v1686 = vmax.f32 %v1559, 0.0
  %v1687 = vmax.f32 %v1561, 0.0
  %v1688 = vmax.f32 %v1563, 0.0
  %v1689 = vmax.f32 %v1567, 0.0
  %v1690 = vmax.f32 %v1569, 0.0
  %v1691 = vmax.f32 %v1571, 0.0
  %v1692 = vmax.f32 %v1573, 0.0
  %v1693 = vmax.f32 %v1577, 0.0
  %v1694 = vmax.f32 %v1579, 0.0
  %v1695 = vmax.f32 %v1581, 0.0
  %v1696 = vmax.f32 %v1583, 0.0
  %v1697 = vmax.f32 %v1587, 0.0
  %v1698 = vmax.f32 %v1589, 0.0
  %v1699 = vmax.f32 %v1591, 0.0
  %v1700 = vmax.f32 %v1593, 0.0
  %v1701 = vmax.f32 %v1597, 0.0
  %v1702 = vmax.f32 %v1599, 0.0
  %v1703 = vmax.f32 %v1601, 0.0
  %v1704 = vmax.f32 %v1603, 0.0
  %v1705 = vmax.f32 %v1607, 0.0
  %v1706 = vmax.f32 %v1609, 0.0
  %v1707 = vmax.f32 %v1611, 0.0
  %v1708 = vmax.f32 %v1613, 0.0
  %v1709 = vmax.f32 %v1617, 0.0
  %v1710 = vmax.f32 %v1619, 0.0
  %v1711 = vmax.f32 %v1621, 0.0
  %v1712 = vmax.f32 %v1623, 0.0
  %v1713 = vmax.f32 %v1627, 0.0
  %v1714 = vmax.f32 %v1629, 0.0
  %v1715 = vmax.f32 %v1631, 0.0
  %v1716 = vmax.f32 %v1633, 0.0
  %v1717 = vmax.f32 %v1637, 0.0
  %v1718 = vmax.f32 %v1639, 0.0
  %v1719 = vmax.f32 %v1641, 0.0
  %v1720 = vmax.f32 %v1643, 0.0
  %v1721 = vmax.f32 %v1647, 0.0
  %v1722 = vmax.f32 %v1649, 0.0
  %v1723 = vmax.f32 %v1651, 0.0
  %v1724 = vmax.f32 %v1653, 0.0
  %v1725 = vmax.f32 %v1657, 0.0
  %v1726 = vmax.f32 %v1659, 0.0
  %v1727 = vmax.f32 %v1661, 0.0
  %v1728 = vmax.f32 %v1663, 0.0
  %v1729 = vmax.f32 %v1667, 0.0
  %v1730 = vmax.f32 %v1669, 0.0
  %v1731 = vpack.c.bf16 %v1675, %v1673
  %v1732 = vpack.c.bf16 %v1676, %v1674
  %v1733 = vpack.c.bf16 %v1679, %v1677
  %v1734 = vpack.c.bf16 %v1680, %v1678
  %v1735 = vpack.c.bf16 %v1683, %v1681
  %v1736 = vpack.c.bf16 %v1684, %v1682
  %v1737 = vpack.c.bf16 %v1687, %v1685
  %v1738 = vpack.c.bf16 %v1688, %v1686
  %v1739 = vpack.c.bf16 %v1691, %v1689
  %v1740 = vpack.c.bf16 %v1692, %v1690
  %v1741 = vpack.c.bf16 %v1695, %v1693
  %v1742 = vpack.c.bf16 %v1696, %v1694
  %v1743 = vpack.c.bf16 %v1699, %v1697
  %v1744 = vpack.c.bf16 %v1700, %v1698
  %v1745 = vpack.c.bf16 %v1703, %v1701
  %v1746 = vpack.c.bf16 %v1704, %v1702
  %v1747 = vpack.c.bf16 %v1707, %v1705
  %v1748 = vpack.c.bf16 %v1708, %v1706
  %v1749 = vpack.c.bf16 %v1711, %v1709
  %v1750 = vpack.c.bf16 %v1712, %v1710
  %v1751 = vpack.c.bf16 %v1715, %v1713
  %v1752 = vpack.c.bf16 %v1716, %v1714
  %v1753 = vpack.c.bf16 %v1719, %v1717
  %v1754 = vpack.c.bf16 %v1720, %v1718
  %v1755 = vpack.c.bf16 %v1723, %v1721
  %v1756 = vpack.c.bf16 %v1724, %v1722
  %v1757 = vpack.c.bf16 %v1727, %v1725
  %v1758 = vpack.c.bf16 %v1728, %v1726
  %v1759 = vpack.c.bf16 %v1729, %v1729
  %v1760 = vpack.c.bf16 %v1730, %v1730
  %v1791 = vunpack.c.l.b16 %v1731
  %v1792 = vunpack.c.l.b16 %v1732
  %v1793 = vunpack.c.h.b16 %v1731
  %v1794 = vunpack.c.h.b16 %v1732
  %v1795 = vunpack.c.l.b16 %v1733
  %v1796 = vunpack.c.l.b16 %v1734
  %v1797 = vunpack.c.h.b16 %v1733
  %v1798 = vunpack.c.h.b16 %v1734
  %v1799 = vunpack.c.l.b16 %v1735
  %v1800 = vunpack.c.l.b16 %v1736
  %v1801 = vunpack.c.h.b16 %v1735
  %v1802 = vunpack.c.h.b16 %v1736
  %v1803 = vunpack.c.l.b16 %v1737
  %v1804 = vunpack.c.l.b16 %v1738
  %v1805 = vunpack.c.h.b16 %v1737
  %v1806 = vunpack.c.h.b16 %v1738
  %v1807 = vunpack.c.l.b16 %v1739
  %v1808 = vunpack.c.l.b16 %v1740
  %v1809 = vunpack.c.h.b16 %v1739
  %v1810 = vunpack.c.h.b16 %v1740
  %v1811 = vunpack.c.l.b16 %v1741
  %v1812 = vunpack.c.l.b16 %v1742
  %v1813 = vunpack.c.h.b16 %v1741
  %v1814 = vunpack.c.h.b16 %v1742
  %v1815 = vunpack.c.l.b16 %v1743
  %v1816 = vunpack.c.l.b16 %v1744
  %v1817 = vunpack.c.h.b16 %v1743
  %v1818 = vunpack.c.h.b16 %v1744
  %v1819 = vunpack.c.l.b16 %v1745
  %v1820 = vunpack.c.l.b16 %v1746
  %v1821 = vunpack.c.h.b16 %v1745
  %v1822 = vunpack.c.h.b16 %v1746
  %v1823 = vunpack.c.l.b16 %v1747
  %v1824 = vunpack.c.l.b16 %v1748
  %v1825 = vunpack.c.h.b16 %v1747
  %v1826 = vunpack.c.h.b16 %v1748
  %v1827 = vunpack.c.l.b16 %v1749
  %v1828 = vunpack.c.l.b16 %v1750
  %v1829 = vunpack.c.h.b16 %v1749
  %v1830 = vunpack.c.h.b16 %v1750
  %v1831 = vunpack.c.l.b16 %v1751
  %v1832 = vunpack.c.l.b16 %v1752
  %v1833 = vunpack.c.h.b16 %v1751
  %v1834 = vunpack.c.h.b16 %v1752
  %v1835 = vunpack.c.l.b16 %v1753
  %v1836 = vunpack.c.l.b16 %v1754
  %v1837 = vunpack.c.h.b16 %v1753
  %v1838 = vunpack.c.h.b16 %v1754
  %v1839 = vunpack.c.l.b16 %v1755
  %v1840 = vunpack.c.l.b16 %v1756
  %v1841 = vunpack.c.h.b16 %v1755
  %v1842 = vunpack.c.h.b16 %v1756
  %v1843 = vunpack.c.l.b16 %v1757
  %v1844 = vunpack.c.l.b16 %v1758
  %v1845 = vunpack.c.h.b16 %v1757
  %v1846 = vunpack.c.h.b16 %v1758
  %v1847 = vunpack.c.l.b16 %v1759
  %v1848 = vunpack.c.l.b16 %v1760
  %v1849 = vpack.c.b16 %v1792, %v1791
  %v1850 = vpack.c.b16 %v1794, %v1793
  %v1851 = vpack.c.b16 %v1796, %v1795
  %v1852 = vpack.c.b16 %v1798, %v1797
  %v1853 = vpack.c.b16 %v1800, %v1799
  %v1854 = vpack.c.b16 %v1802, %v1801
  %v1855 = vpack.c.b16 %v1804, %v1803
  %v1856 = vpack.c.b16 %v1806, %v1805
  %v1857 = vpack.c.b16 %v1808, %v1807
  %v1858 = vpack.c.b16 %v1810, %v1809
  %v1859 = vpack.c.b16 %v1812, %v1811
  %v1860 = vpack.c.b16 %v1814, %v1813
  %v1861 = vpack.c.b16 %v1816, %v1815
  %v1862 = vpack.c.b16 %v1818, %v1817
  %v1863 = vpack.c.b16 %v1820, %v1819
  %v1864 = vpack.c.b16 %v1822, %v1821
  %v1865 = vpack.c.b16 %v1824, %v1823
  %v1866 = vpack.c.b16 %v1826, %v1825
  %v1867 = vpack.c.b16 %v1828, %v1827
  %v1868 = vpack.c.b16 %v1830, %v1829
  %v1869 = vpack.c.b16 %v1832, %v1831
  %v1870 = vpack.c.b16 %v1834, %v1833
  %v1871 = vpack.c.b16 %v1836, %v1835
  %v1872 = vpack.c.b16 %v1838, %v1837
  %v1873 = vpack.c.b16 %v1840, %v1839
  %v1874 = vpack.c.b16 %v1842, %v1841
  %v1875 = vpack.c.b16 %v1844, %v1843
  %v1876 = vpack.c.b16 %v1846, %v1845
  %v1877 = vpack.c.b16 %v1848, %v1847
  %1907 = vst [vmem:[%s3] sm:$0xff] %v1849
  %1908 = vst [vmem:[%s3 + $0x8] sm:$0xff] %v1850
  %1909 = vst [vmem:[%s3 + $0x10] sm:$0xff] %v1851
  %1910 = vst [vmem:[%s3 + $0x18] sm:$0xff] %v1852
  %1911 = vst [vmem:[%s3 + $0x20] sm:$0xff] %v1853
  %1912 = vst [vmem:[%s3 + $0x28] sm:$0xff] %v1854
  %1913 = vst [vmem:[%s3 + $0x30] sm:$0xff] %v1855
  %1914 = vst [vmem:[%s3 + $0x38] sm:$0xff] %v1856
  %1915 = vst [vmem:[%s3 + $0x40] sm:$0xff] %v1857
  %1916 = vst [vmem:[%s3 + $0x48] sm:$0xff] %v1858
  %1917 = vst [vmem:[%s3 + $0x50] sm:$0xff] %v1859
  %1918 = vst [vmem:[%s3 + $0x58] sm:$0xff] %v1860
  %1919 = vst [vmem:[%s3 + $0x60] sm:$0xff] %v1861
  %1920 = vst [vmem:[%s3 + $0x68] sm:$0xff] %v1862
  %1921 = vst [vmem:[%s3 + $0x70] sm:$0xff] %v1863
  %1922 = vst [vmem:[%s3 + $0x78] sm:$0xff] %v1864
  %1923 = vst [vmem:[%s3 + $0x80] sm:$0xff] %v1865
  %1924 = vst [vmem:[%s3 + $0x88] sm:$0xff] %v1866
  %1925 = vst [vmem:[%s3 + $0x90] sm:$0xff] %v1867
  %1926 = vst [vmem:[%s3 + $0x98] sm:$0xff] %v1868
  %1927 = vst [vmem:[%s3 + $0xa0] sm:$0xff] %v1869
  %1928 = vst [vmem:[%s3 + $0xa8] sm:$0xff] %v1870
  %1929 = vst [vmem:[%s3 + $0xb0] sm:$0xff] %v1871
  %1930 = vst [vmem:[%s3 + $0xb8] sm:$0xff] %v1872
  %1931 = vst [vmem:[%s3 + $0xc0] sm:$0xff] %v1873
  %1932 = vst [vmem:[%s3 + $0xc8] sm:$0xff] %v1874
  %1933 = vst [vmem:[%s3 + $0xd0] sm:$0xff] %v1875
  %1934 = vst [vmem:[%s3 + $0xd8] sm:$0xff] %v1876
  %1935 = vst [vmem:[%s3 + $0xe0] sm:$0xff] %v1877
  // Predicated region
  $region14: #{stem_fwd.16} parent=0 // pred_check
    _
  $region15: #{stem_fwd.16} parent=0 // pred_check_branch
    %1937 = sbr.rel (0) target = $region17
  $region16: #{stem_fwd.16} parent=0 // pred_region
    _
  $region17: #{stem_fwd.16} parent=0 // pred_fallthru
    _
  // Predicated region
  $region18: #{stem_fwd.16} parent=0 // pred_check
    _
  $region19: #{stem_fwd.16} parent=0 // pred_check_branch
    %1939 = sbr.rel (0) target = $region21
  $region20: #{stem_fwd.16} parent=0 // pred_region
    _
  $region21: #{stem_fwd.16} parent=0 // pred_fallthru
    _

// kernel: stem_fwd.21
$region0: #{stem_fwd.21}
  #allocation0 [shape = 'u32[]', space=smem, size = 0x4, offset = 0x4, fixed_abs, tag = 'smem constant byte address 0x4 - core index']
  #allocation1 [shape = 'u32[144,128]{1,0:T(1,128)}', space=vmem, size = 0x12000, scoped, tag = 'internal scratch']
  %s0 = inlined_call_operand.vmem [shape: bf16[56,640], index: 0, kind: input, shape index: {}]
  %s1 = inlined_call_operand.vmem [shape: bf16[640,128], index: 1, kind: input, shape index: {}]
  %s2 = inlined_call_operand.vmem [shape: f32[1,128], index: 2, kind: input, shape index: {}]
  %s3 = inlined_call_operand.vmem [shape: bf16[56,128], index: 3, kind: output, shape index: {}]
  %s4 = sld [smem:[#allocation0]]
  $region22: #{stem_fwd.21} parent=0
    _
  %s6 = ssub.s32 1, %s4
  %s7 = scalar_select 0, %s6, %s4
  // Predicated region
  $region2: #{stem_fwd.21} parent=0 // pred_check
    _
  $region3: #{stem_fwd.21} parent=0 // pred_check_branch
    %9 = sbr.rel (0) target = $region5
  $region4: #{stem_fwd.21} parent=0 // pred_region
    _
  $region5: #{stem_fwd.21} parent=0 // pred_fallthru
    _
  // Predicated region
  $region6: #{stem_fwd.21} parent=0 // pred_check
    _
  $region7: #{stem_fwd.21} parent=0 // pred_check_branch
    %11 = sbr.rel (0) target = $region9
  $region8: #{stem_fwd.21} parent=0 // pred_region
    _
  $region9: #{stem_fwd.21} parent=0 // pred_fallthru
    _
  // Predicated region
  $region10: #{stem_fwd.21} parent=0 // pred_check
    _
  $region11: #{stem_fwd.21} parent=0 // pred_check_branch
    %13 = sbr.rel (0) target = $region13
  $region12: #{stem_fwd.21} parent=0 // pred_region
    _
  $region13: #{stem_fwd.21} parent=0 // pred_fallthru
    _
  %v15 = vld [vmem:[%s0] sm:$0xff]
  %v16 = vld [vmem:[%s0 + $0x8] sm:$0xff]
  %v17 = vld [vmem:[%s0 + $0x10] sm:$0xf]
  %v18 = vld [vmem:[%s0 + $0x14] sm:$0xff]
  %v19 = vld [vmem:[%s0 + $0x1c] sm:$0xff]
  %v20 = vld [vmem:[%s0 + $0x24] sm:$0xf]
  %v21 = vld [vmem:[%s0 + $0x28] sm:$0xff]
  %v22 = vld [vmem:[%s0 + $0x30] sm:$0xff]
  %v23 = vld [vmem:[%s0 + $0x38] sm:$0xf]
  %v24 = vld [vmem:[%s0 + $0x3c] sm:$0xff]
  %v25 = vld [vmem:[%s0 + $0x44] sm:$0xff]
  %v26 = vld [vmem:[%s0 + $0x4c] sm:$0xf]
  %v27 = vld [vmem:[%s0 + $0x50] sm:$0xff]
  %v28 = vld [vmem:[%s0 + $0x58] sm:$0xff]
  %v29 = vld [vmem:[%s0 + $0x60] sm:$0xf]
  %v30 = vld [vmem:[%s0 + $0x64] sm:$0xff]
  %v31 = vld [vmem:[%s0 + $0x6c] sm:$0xff]
  %v32 = vld [vmem:[%s0 + $0x74] sm:$0xf]
  %v33 = vld [vmem:[%s0 + $0x78] sm:$0xff]
  %v34 = vld [vmem:[%s0 + $0x80] sm:$0xff]
  %v35 = vld [vmem:[%s0 + $0x88] sm:$0xf]
  %v36 = vld [vmem:[%s1] sm:$0xf]
  %v37 = vld [vmem:[%s1 + $0x4] sm:$0xf]
  %v38 = vld [vmem:[%s1 + $0x8] sm:$0xf]
  %v39 = vld [vmem:[%s1 + $0xc] sm:$0xf]
  %v40 = vld [vmem:[%s1 + $0x10] sm:$0xf]
  %v41 = vld [vmem:[%s1 + $0x14] sm:$0xf]
  %v42 = vld [vmem:[%s1 + $0x18] sm:$0xf]
  %v43 = vld [vmem:[%s1 + $0x1c] sm:$0xf]
  %v44 = vld [vmem:[%s1 + $0x20] sm:$0xf]
  %v45 = vld [vmem:[%s1 + $0x24] sm:$0xf]
  %v46 = vld [vmem:[%s1 + $0x28] sm:$0xf]
  %v47 = vld [vmem:[%s1 + $0x2c] sm:$0xf]
  %v48 = vld [vmem:[%s1 + $0x30] sm:$0xf]
  %v49 = vld [vmem:[%s1 + $0x34] sm:$0xf]
  %v50 = vld [vmem:[%s1 + $0x38] sm:$0xf]
  %v51 = vld [vmem:[%s1 + $0x3c] sm:$0xf]
  %v52 = vld [vmem:[%s1 + $0x40] sm:$0xf]
  %v53 = vld [vmem:[%s1 + $0x44] sm:$0xf]
  %v54 = vld [vmem:[%s1 + $0x48] sm:$0xf]
  %v55 = vld [vmem:[%s1 + $0x4c] sm:$0xf]
  %v56 = vld [vmem:[%s1 + $0x50] sm:$0xf]
  %v57 = vld [vmem:[%s1 + $0x54] sm:$0xf]
  %v58 = vld [vmem:[%s1 + $0x58] sm:$0xf]
  %v59 = vld [vmem:[%s1 + $0x5c] sm:$0xf]
  %v60 = vld [vmem:[%s1 + $0x60] sm:$0xf]
  %v61 = vld [vmem:[%s1 + $0x64] sm:$0xf]
  %v62 = vld [vmem:[%s1 + $0x68] sm:$0xf]
  %v63 = vld [vmem:[%s1 + $0x6c] sm:$0xf]
  %v64 = vld [vmem:[%s1 + $0x70] sm:$0xf]
  %v65 = vld [vmem:[%s1 + $0x74] sm:$0xf]
  %v66 = vld [vmem:[%s1 + $0x78] sm:$0xf]
  %v67 = vld [vmem:[%s1 + $0x7c] sm:$0xf]
  %v68 = vld [vmem:[%s1 + $0x80] sm:$0xf]
  %v69 = vld [vmem:[%s1 + $0x84] sm:$0xf]
  %v70 = vld [vmem:[%s1 + $0x88] sm:$0xf]
  %v71 = vld [vmem:[%s1 + $0x8c] sm:$0xf]
  %v72 = vld [vmem:[%s1 + $0x90] sm:$0xf]
  %v73 = vld [vmem:[%s1 + $0x94] sm:$0xf]
  %v74 = vld [vmem:[%s1 + $0x98] sm:$0xf]
  %v75 = vld [vmem:[%s1 + $0x9c] sm:$0xf]
  %v76 = vld [vmem:[%s1 + $0xa0] sm:$0xf]
  %v77 = vld [vmem:[%s1 + $0xa4] sm:$0xf]
  %v78 = vld [vmem:[%s1 + $0xa8] sm:$0xf]
  %v79 = vld [vmem:[%s1 + $0xac] sm:$0xf]
  %v80 = vld [vmem:[%s1 + $0xb0] sm:$0xf]
  %v81 = vld [vmem:[%s1 + $0xb4] sm:$0xf]
  %v82 = vld [vmem:[%s1 + $0xb8] sm:$0xf]
  %v83 = vld [vmem:[%s1 + $0xbc] sm:$0xf]
  %v84 = vld [vmem:[%s1 + $0xc0] sm:$0xf]
  %v85 = vld [vmem:[%s1 + $0xc4] sm:$0xf]
  %v86 = vld [vmem:[%s1 + $0xc8] sm:$0xf]
  %v87 = vld [vmem:[%s1 + $0xcc] sm:$0xf]
  %v88 = vld [vmem:[%s1 + $0xd0] sm:$0xf]
  %v89 = vld [vmem:[%s1 + $0xd4] sm:$0xf]
  %v90 = vld [vmem:[%s1 + $0xd8] sm:$0xf]
  %v91 = vld [vmem:[%s1 + $0xdc] sm:$0xf]
  %v92 = vld [vmem:[%s1 + $0xe0] sm:$0xf]
  %v93 = vld [vmem:[%s1 + $0xe4] sm:$0xf]
  %v94 = vld [vmem:[%s1 + $0xe8] sm:$0xf]
  %v95 = vld [vmem:[%s1 + $0xec] sm:$0xf]
  %v96 = vld [vmem:[%s1 + $0xf0] sm:$0xf]
  %v97 = vld [vmem:[%s1 + $0xf4] sm:$0xf]
  %v98 = vld [vmem:[%s1 + $0xf8] sm:$0xf]
  %v99 = vld [vmem:[%s1 + $0xfc] sm:$0xf]
  %v100 = vld [vmem:[%s1 + $0x100] sm:$0xf]
  %v101 = vld [vmem:[%s1 + $0x104] sm:$0xf]
  %v102 = vld [vmem:[%s1 + $0x108] sm:$0xf]
  %v103 = vld [vmem:[%s1 + $0x10c] sm:$0xf]
  %v104 = vld [vmem:[%s1 + $0x110] sm:$0xf]
  %v105 = vld [vmem:[%s1 + $0x114] sm:$0xf]
  %v106 = vld [vmem:[%s1 + $0x118] sm:$0xf]
  %v107 = vld [vmem:[%s1 + $0x11c] sm:$0xf]
  %v108 = vld [vmem:[%s1 + $0x120] sm:$0xf]
  %v109 = vld [vmem:[%s1 + $0x124] sm:$0xf]
  %v110 = vld [vmem:[%s1 + $0x128] sm:$0xf]
  %v111 = vld [vmem:[%s1 + $0x12c] sm:$0xf]
  %v112 = vld [vmem:[%s1 + $0x130] sm:$0xf]
  %v113 = vld [vmem:[%s1 + $0x134] sm:$0xf]
  %v114 = vld [vmem:[%s1 + $0x138] sm:$0xf]
  %v115 = vld [vmem:[%s1 + $0x13c] sm:$0xf]
  %v116 = vld [vmem:[%s2] sm:$0x1]
  %v118 = vlaneseq
  %v119 = vshrl.u32 %v118, 7
  %v120 = vsub.s32 0, %v119
  %v121 = vrot.slane %v116, %v120
  %v144 = vunpack.c.l.b16 %v15
  %v145 = vunpack.c.h.b16 %v15
  %v146 = vunpack.c.l.b16 %v16
  %v147 = vunpack.c.h.b16 %v16
  %v148 = vunpack.c.l.b16 %v17
  %v149 = vunpack.c.l.b16 %v18
  %v150 = vunpack.c.h.b16 %v18
  %v151 = vunpack.c.l.b16 %v19
  %v152 = vunpack.c.h.b16 %v19
  %v153 = vunpack.c.l.b16 %v20
  %v154 = vunpack.c.l.b16 %v21
  %v155 = vunpack.c.h.b16 %v21
  %v156 = vunpack.c.l.b16 %v22
  %v157 = vunpack.c.h.b16 %v22
  %v158 = vunpack.c.l.b16 %v23
  %v159 = vunpack.c.l.b16 %v24
  %v160 = vunpack.c.h.b16 %v24
  %v161 = vunpack.c.l.b16 %v25
  %v162 = vunpack.c.h.b16 %v25
  %v163 = vunpack.c.l.b16 %v26
  %v164 = vunpack.c.l.b16 %v27
  %v165 = vunpack.c.h.b16 %v27
  %v166 = vunpack.c.l.b16 %v28
  %v167 = vunpack.c.h.b16 %v28
  %v168 = vunpack.c.l.b16 %v29
  %v169 = vunpack.c.l.b16 %v30
  %v170 = vunpack.c.h.b16 %v30
  %v171 = vunpack.c.l.b16 %v31
  %v172 = vunpack.c.h.b16 %v31
  %v173 = vunpack.c.l.b16 %v32
  %v174 = vunpack.c.l.b16 %v33
  %v175 = vunpack.c.h.b16 %v33
  %v176 = vunpack.c.l.b16 %v34
  %v177 = vunpack.c.h.b16 %v34
  %v178 = vunpack.c.l.b16 %v35
  %v179 = vpack.c.b16 %v149, %v144
  %v180 = vpack.c.b16 %v150, %v145
  %v181 = vpack.c.b16 %v151, %v146
  %v182 = vpack.c.b16 %v152, %v147
  %v183 = vpack.c.b16 %v153, %v148
  %v184 = vpack.c.b16 %v159, %v154
  %v185 = vpack.c.b16 %v160, %v155
  %v186 = vpack.c.b16 %v161, %v156
  %v187 = vpack.c.b16 %v162, %v157
  %v188 = vpack.c.b16 %v163, %v158
  %v189 = vpack.c.b16 %v169, %v164
  %v190 = vpack.c.b16 %v170, %v165
  %v191 = vpack.c.b16 %v171, %v166
  %v192 = vpack.c.b16 %v172, %v167
  %v193 = vpack.c.b16 %v173, %v168
  %v194 = vpack.c.b16 %v174, %v174
  %v195 = vpack.c.b16 %v175, %v175
  %v196 = vpack.c.b16 %v176, %v176
  %v197 = vpack.c.b16 %v177, %v177
  %v198 = vpack.c.b16 %v178, %v178
  %v299 = vunpack.c.l.b16 %v36
  %v300 = vunpack.c.l.b16 %v37
  %v301 = vunpack.c.l.b16 %v38
  %v302 = vunpack.c.l.b16 %v39
  %v303 = vunpack.c.l.b16 %v40
  %v304 = vunpack.c.l.b16 %v41
  %v305 = vunpack.c.l.b16 %v42
  %v306 = vunpack.c.l.b16 %v43
  %v307 = vunpack.c.l.b16 %v44
  %v308 = vunpack.c.l.b16 %v45
  %v309 = vunpack.c.l.b16 %v46
  %v310 = vunpack.c.l.b16 %v47
  %v311 = vunpack.c.l.b16 %v48
  %v312 = vunpack.c.l.b16 %v49
  %v313 = vunpack.c.l.b16 %v50
  %v314 = vunpack.c.l.b16 %v51
  %v315 = vunpack.c.l.b16 %v52
  %v316 = vunpack.c.l.b16 %v53
  %v317 = vunpack.c.l.b16 %v54
  %v318 = vunpack.c.l.b16 %v55
  %v319 = vunpack.c.l.b16 %v56
  %v320 = vunpack.c.l.b16 %v57
  %v321 = vunpack.c.l.b16 %v58
  %v322 = vunpack.c.l.b16 %v59
  %v323 = vunpack.c.l.b16 %v60
  %v324 = vunpack.c.l.b16 %v61
  %v325 = vunpack.c.l.b16 %v62
  %v326 = vunpack.c.l.b16 %v63
  %v327 = vunpack.c.l.b16 %v64
  %v328 = vunpack.c.l.b16 %v65
  %v329 = vunpack.c.l.b16 %v66
  %v330 = vunpack.c.l.b16 %v67
  %v331 = vunpack.c.l.b16 %v68
  %v332 = vunpack.c.l.b16 %v69
  %v333 = vunpack.c.l.b16 %v70
  %v334 = vunpack.c.l.b16 %v71
  %v335 = vunpack.c.l.b16 %v72
  %v336 = vunpack.c.l.b16 %v73
  %v337 = vunpack.c.l.b16 %v74
  %v338 = vunpack.c.l.b16 %v75
  %v339 = vunpack.c.l.b16 %v76
  %v340 = vunpack.c.l.b16 %v77
  %v341 = vunpack.c.l.b16 %v78
  %v342 = vunpack.c.l.b16 %v79
  %v343 = vunpack.c.l.b16 %v80
  %v344 = vunpack.c.l.b16 %v81
  %v345 = vunpack.c.l.b16 %v82
  %v346 = vunpack.c.l.b16 %v83
  %v347 = vunpack.c.l.b16 %v84
  %v348 = vunpack.c.l.b16 %v85
  %v349 = vunpack.c.l.b16 %v86
  %v350 = vunpack.c.l.b16 %v87
  %v351 = vunpack.c.l.b16 %v88
  %v352 = vunpack.c.l.b16 %v89
  %v353 = vunpack.c.l.b16 %v90
  %v354 = vunpack.c.l.b16 %v91
  %v355 = vunpack.c.l.b16 %v92
  %v356 = vunpack.c.l.b16 %v93
  %v357 = vunpack.c.l.b16 %v94
  %v358 = vunpack.c.l.b16 %v95
  %v359 = vunpack.c.l.b16 %v96
  %v360 = vunpack.c.l.b16 %v97
  %v361 = vunpack.c.l.b16 %v98
  %v362 = vunpack.c.l.b16 %v99
  %v363 = vunpack.c.l.b16 %v100
  %v364 = vunpack.c.l.b16 %v101
  %v365 = vunpack.c.l.b16 %v102
  %v366 = vunpack.c.l.b16 %v103
  %v367 = vunpack.c.l.b16 %v104
  %v368 = vunpack.c.l.b16 %v105
  %v369 = vunpack.c.l.b16 %v106
  %v370 = vunpack.c.l.b16 %v107
  %v371 = vunpack.c.l.b16 %v108
  %v372 = vunpack.c.l.b16 %v109
  %v373 = vunpack.c.l.b16 %v110
  %v374 = vunpack.c.l.b16 %v111
  %v375 = vunpack.c.l.b16 %v112
  %v376 = vunpack.c.l.b16 %v113
  %v377 = vunpack.c.l.b16 %v114
  %v378 = vunpack.c.l.b16 %v115
  %v379 = vpack.c.b16 %v300, %v299
  %v380 = vpack.c.b16 %v302, %v301
  %v381 = vpack.c.b16 %v304, %v303
  %v382 = vpack.c.b16 %v306, %v305
  %v383 = vpack.c.b16 %v308, %v307
  %v384 = vpack.c.b16 %v310, %v309
  %v385 = vpack.c.b16 %v312, %v311
  %v386 = vpack.c.b16 %v314, %v313
  %v387 = vpack.c.b16 %v316, %v315
  %v388 = vpack.c.b16 %v318, %v317
  %v389 = vpack.c.b16 %v320, %v319
  %v390 = vpack.c.b16 %v322, %v321
  %v391 = vpack.c.b16 %v324, %v323
  %v392 = vpack.c.b16 %v326, %v325
  %v393 = vpack.c.b16 %v328, %v327
  %v394 = vpack.c.b16 %v330, %v329
  %v395 = vpack.c.b16 %v332, %v331
  %v396 = vpack.c.b16 %v334, %v333
  %v397 = vpack.c.b16 %v336, %v335
  %v398 = vpack.c.b16 %v338, %v337
  %v399 = vpack.c.b16 %v340, %v339
  %v400 = vpack.c.b16 %v342, %v341
  %v401 = vpack.c.b16 %v344, %v343
  %v402 = vpack.c.b16 %v346, %v345
  %v403 = vpack.c.b16 %v348, %v347
  %v404 = vpack.c.b16 %v350, %v349
  %v405 = vpack.c.b16 %v352, %v351
  %v406 = vpack.c.b16 %v354, %v353
  %v407 = vpack.c.b16 %v356, %v355
  %v408 = vpack.c.b16 %v358, %v357
  %v409 = vpack.c.b16 %v360, %v359
  %v410 = vpack.c.b16 %v362, %v361
  %v411 = vpack.c.b16 %v364, %v363
  %v412 = vpack.c.b16 %v366, %v365
  %v413 = vpack.c.b16 %v368, %v367
  %v414 = vpack.c.b16 %v370, %v369
  %v415 = vpack.c.b16 %v372, %v371
  %v416 = vpack.c.b16 %v374, %v373
  %v417 = vpack.c.b16 %v376, %v375
  %v418 = vpack.c.b16 %v378, %v377
  %459 = vmatprep.subr.bf16.mxu0 0
  %460 = vmatpush1.bf16.msra.mxu0 %v386
  %461 = vmatprep.subr.bf16.mxu0 0
  %462 = vmatpush1.bf16.msra.mxu0 %v385
  %463 = vmatprep.subr.bf16.mxu0 0
  %464 = vmatpush1.bf16.msra.mxu0 %v384
  %465 = vmatprep.subr.bf16.mxu0 0
  %466 = vmatpush1.bf16.msra.mxu0 %v383
  %467 = vmatprep.subr.bf16.mxu0 0
  %468 = vmatpush1.bf16.msra.mxu0 %v382
  %469 = vmatprep.subr.bf16.mxu0 0
  %470 = vmatpush1.bf16.msra.mxu0 %v381
  %471 = vmatprep.subr.bf16.mxu0 0
  %472 = vmatpush1.bf16.msra.mxu0 %v380
  %473 = vmatprep.subr.bf16.mxu0 0
  %474 = vmatpush1.bf16.msra.mxu0 %v379
  %475 = vmatprep.subr.bf16.mxu0 0
  %476 = vmatpush2.bf16.msra.mxu0 %v394
  %477 = vmatprep.subr.bf16.mxu0 0
  %478 = vmatpush2.bf16.msra.mxu0 %v393
  %479 = vmatprep.subr.bf16.mxu0 0
  %480 = vmatpush2.bf16.msra.mxu0 %v392
  %481 = vmatprep.subr.bf16.mxu0 0
  %482 = vmatpush2.bf16.msra.mxu0 %v391
  %483 = vmatprep.subr.bf16.mxu0 0
  %484 = vmatpush2.bf16.msra.mxu0 %v390
  %485 = vmatprep.subr.bf16.mxu0 0
  %486 = vmatpush2.bf16.msra.mxu0 %v389
  %487 = vmatprep.subr.bf16.mxu0 0
  %488 = vmatpush2.bf16.msra.mxu0 %v388
  %489 = vmatprep.subr.bf16.mxu0 0
  %490 = vmatpush2.bf16.msra.mxu0 %v387
  %491 = vmatprep.mubr.bf16.mxu0 %v180
  %492 = vmatmul.mubr.bf16.gmra.mxu0 %v179
  %v493 = vpop.f32.mrf.mxu0
  %v494 = vadd.f32 %v121, %v493
  %v495 = vpop.f32.mrf.mxu0
  %v496 = vpop.f32.mrf.mxu0
  %v497 = vadd.f32 %v121, %v496
  %v498 = vpop.f32.mrf.mxu0
  %499 = vmatprep.mubr.bf16.mxu0 %v185
  %500 = vmatmul.mubr.bf16.gmra.mxu0 %v184
  %v501 = vpop.f32.mrf.mxu0
  %v502 = vadd.f32 %v121, %v501
  %v503 = vpop.f32.mrf.mxu0
  %v504 = vpop.f32.mrf.mxu0
  %v505 = vadd.f32 %v121, %v504
  %v506 = vpop.f32.mrf.mxu0
  %507 = vmatprep.mubr.bf16.mxu0 %v190
  %508 = vmatmul.mubr.bf16.gmra.mxu0 %v189
  %v509 = vpop.f32.mrf.mxu0
  %v510 = vadd.f32 %v121, %v509
  %v511 = vpop.f32.mrf.mxu0
  %v512 = vpop.f32.mrf.mxu0
  %v513 = vadd.f32 %v121, %v512
  %v514 = vpop.f32.mrf.mxu0
  %515 = vmatprep.mubr.bf16.mxu0 %v195
  %516 = vmatmul.mubr.bf16.gmra.mxu0 %v194
  %v517 = vpop.f32.mrf.mxu0
  %v518 = vadd.f32 %v121, %v517
  %v519 = vpop.f32.mrf.mxu0
  %v520 = vpop.f32.mrf.mxu0
  %v521 = vpop.f32.mrf.mxu0
  %522 = vdwg.mxu0
  %523 = vmatprep.subr.bf16.mxu0 0
  %524 = vmatpush1.bf16.msra.mxu0 %v402
  %525 = vmatprep.subr.bf16.mxu0 0
  %526 = vmatpush1.bf16.msra.mxu0 %v401
  %527 = vmatprep.subr.bf16.mxu0 0
  %528 = vmatpush1.bf16.msra.mxu0 %v400
  %529 = vmatprep.subr.bf16.mxu0 0
  %530 = vmatpush1.bf16.msra.mxu0 %v399
  %531 = vmatprep.subr.bf16.mxu0 0
  %532 = vmatpush1.bf16.msra.mxu0 %v398
  %533 = vmatprep.subr.bf16.mxu0 0
  %534 = vmatpush1.bf16.msra.mxu0 %v397
  %535 = vmatprep.subr.bf16.mxu0 0
  %536 = vmatpush1.bf16.msra.mxu0 %v396
  %537 = vmatprep.subr.bf16.mxu0 0
  %538 = vmatpush1.bf16.msra.mxu0 %v395
  %539 = vmatprep.subr.bf16.mxu0 0
  %540 = vmatpush2.bf16.msra.mxu0 %v410
  %541 = vmatprep.subr.bf16.mxu0 0
  %542 = vmatpush2.bf16.msra.mxu0 %v409
  %543 = vmatprep.subr.bf16.mxu0 0
  %544 = vmatpush2.bf16.msra.mxu0 %v408
  %545 = vmatprep.subr.bf16.mxu0 0
  %546 = vmatpush2.bf16.msra.mxu0 %v407
  %547 = vmatprep.subr.bf16.mxu0 0
  %548 = vmatpush2.bf16.msra.mxu0 %v406
  %549 = vmatprep.subr.bf16.mxu0 0
  %550 = vmatpush2.bf16.msra.mxu0 %v405
  %551 = vmatprep.subr.bf16.mxu0 0
  %552 = vmatpush2.bf16.msra.mxu0 %v404
  %553 = vmatprep.subr.bf16.mxu0 0
  %554 = vmatpush2.bf16.msra.mxu0 %v403
  %555 = vmatprep.mubr.bf16.mxu0 %v182
  %556 = vmatmul.mubr.bf16.gmra.mxu0 %v181
  %v557 = vpop.f32.mrf.mxu0
  %v558 = vadd.f32 %v494, %v557
  %v559 = vpop.f32.mrf.mxu0
  %v560 = vpop.f32.mrf.mxu0
  %v561 = vadd.f32 %v497, %v560
  %v562 = vpop.f32.mrf.mxu0
  %563 = vmatprep.mubr.bf16.mxu0 %v187
  %564 = vmatmul.mubr.bf16.gmra.mxu0 %v186
  %v565 = vpop.f32.mrf.mxu0
  %v566 = vadd.f32 %v502, %v565
  %v567 = vpop.f32.mrf.mxu0
  %v568 = vpop.f32.mrf.mxu0
  %v569 = vadd.f32 %v505, %v568
  %v570 = vpop.f32.mrf.mxu0
  %571 = vmatprep.mubr.bf16.mxu0 %v192
  %572 = vmatmul.mubr.bf16.gmra.mxu0 %v191
  %v573 = vpop.f32.mrf.mxu0
  %v574 = vadd.f32 %v510, %v573
  %v575 = vpop.f32.mrf.mxu0
  %v576 = vpop.f32.mrf.mxu0
  %v577 = vadd.f32 %v513, %v576
  %v578 = vpop.f32.mrf.mxu0
  %579 = vmatprep.mubr.bf16.mxu0 %v197
  %580 = vmatmul.mubr.bf16.gmra.mxu0 %v196
  %v581 = vpop.f32.mrf.mxu0
  %v582 = vadd.f32 %v518, %v581
  %v583 = vpop.f32.mrf.mxu0
  %v584 = vpop.f32.mrf.mxu0
  %v585 = vpop.f32.mrf.mxu0
  %586 = vdwg.mxu0
  %587 = vmatprep.subr.bf16.mxu0 0
  %588 = vmatpush1.bf16.msra.mxu0 %v418
  %589 = vmatprep.subr.bf16.mxu0 0
  %590 = vmatpush1.bf16.msra.mxu0 %v417
  %591 = vmatprep.subr.bf16.mxu0 0
  %592 = vmatpush1.bf16.msra.mxu0 %v416
  %593 = vmatprep.subr.bf16.mxu0 0
  %594 = vmatpush1.bf16.msra.mxu0 %v415
  %595 = vmatprep.subr.bf16.mxu0 0
  %596 = vmatpush1.bf16.msra.mxu0 %v414
  %597 = vmatprep.subr.bf16.mxu0 0
  %598 = vmatpush1.bf16.msra.mxu0 %v413
  %599 = vmatprep.subr.bf16.mxu0 0
  %600 = vmatpush1.bf16.msra.mxu0 %v412
  %601 = vmatprep.subr.bf16.mxu0 0
  %602 = vmatpush1.bf16.msra.mxu0 %v411
  %603 = vmatprep.subr.bf16.mxu0 0
  %604 = vmatpush2.bf16.msra.mxu0 0
  %605 = vmatprep.subr.bf16.mxu0 0
  %606 = vmatpush2.bf16.msra.mxu0 0
  %607 = vmatprep.subr.bf16.mxu0 0
  %608 = vmatpush2.bf16.msra.mxu0 0
  %609 = vmatprep.subr.bf16.mxu0 0
  %610 = vmatpush2.bf16.msra.mxu0 0
  %611 = vmatprep.subr.bf16.mxu0 0
  %612 = vmatpush2.bf16.msra.mxu0 0
  %613 = vmatprep.subr.bf16.mxu0 0
  %614 = vmatpush2.bf16.msra.mxu0 0
  %615 = vmatprep.subr.bf16.mxu0 0
  %616 = vmatpush2.bf16.msra.mxu0 0
  %617 = vmatprep.subr.bf16.mxu0 0
  %618 = vmatpush2.bf16.msra.mxu0 0
  %619 = vmatprep.mubr.bf16.mxu0 0
  %620 = vmatmul.mubr.bf16.gmra.mxu0 %v183
  %v621 = vpop.f32.mrf.mxu0
  %v622 = vadd.f32 %v558, %v621
  %v623 = vpop.f32.mrf.mxu0
  %v624 = vpop.f32.mrf.mxu0
  %v625 = vadd.f32 %v561, %v624
  %v626 = vpop.f32.mrf.mxu0
  %627 = vmatprep.mubr.bf16.mxu0 0
  %628 = vmatmul.mubr.bf16.gmra.mxu0 %v188
  %v629 = vpop.f32.mrf.mxu0
  %v630 = vadd.f32 %v566, %v629
  %v631 = vpop.f32.mrf.mxu0
  %v632 = vpop.f32.mrf.mxu0
  %v633 = vadd.f32 %v569, %v632
  %v634 = vpop.f32.mrf.mxu0
  %635 = vmatprep.mubr.bf16.mxu0 0
  %636 = vmatmul.mubr.bf16.gmra.mxu0 %v193
  %v637 = vpop.f32.mrf.mxu0
  %v638 = vadd.f32 %v574, %v637
  %v639 = vpop.f32.mrf.mxu0
  %v640 = vpop.f32.mrf.mxu0
  %v641 = vadd.f32 %v577, %v640
  %v642 = vpop.f32.mrf.mxu0
  %643 = vmatprep.mubr.bf16.mxu0 0
  %644 = vmatmul.mubr.bf16.gmra.mxu0 %v198
  %v645 = vpop.f32.mrf.mxu0
  %v646 = vadd.f32 %v582, %v645
  %v647 = vpop.f32.mrf.mxu0
  %v648 = vpop.f32.mrf.mxu0
  %v649 = vpop.f32.mrf.mxu0
  %650 = vdwg.mxu0
  %v651 = vmax.f32 %v622, 0.0
  %v652 = vmax.f32 %v625, 0.0
  %v653 = vmax.f32 %v630, 0.0
  %v654 = vmax.f32 %v633, 0.0
  %v655 = vmax.f32 %v638, 0.0
  %v656 = vmax.f32 %v641, 0.0
  %v657 = vmax.f32 %v646, 0.0
  %v658 = vpack.c.bf16 %v652, %v651
  %v659 = vpack.c.bf16 %v654, %v653
  %v660 = vpack.c.bf16 %v656, %v655
  %v661 = vpack.c.bf16 %v657, %v657
  %v666 = vunpack.c.l.b16 %v658
  %v667 = vunpack.c.h.b16 %v658
  %v668 = vunpack.c.l.b16 %v659
  %v669 = vunpack.c.h.b16 %v659
  %v670 = vunpack.c.l.b16 %v660
  %v671 = vunpack.c.h.b16 %v660
  %v672 = vunpack.c.l.b16 %v661
  %v673 = vpack.c.b16 %v666, %v666
  %v674 = vpack.c.b16 %v667, %v667
  %v675 = vpack.c.b16 %v668, %v668
  %v676 = vpack.c.b16 %v669, %v669
  %v677 = vpack.c.b16 %v670, %v670
  %v678 = vpack.c.b16 %v671, %v671
  %v679 = vpack.c.b16 %v672, %v672
  %687 = vst [vmem:[%s3] sm:$0xf] %v673
  %688 = vst [vmem:[%s3 + $0x4] sm:$0xf] %v674
  %689 = vst [vmem:[%s3 + $0x8] sm:$0xf] %v675
  %690 = vst [vmem:[%s3 + $0xc] sm:$0xf] %v676
  %691 = vst [vmem:[%s3 + $0x10] sm:$0xf] %v677
  %692 = vst [vmem:[%s3 + $0x14] sm:$0xf] %v678
  %693 = vst [vmem:[%s3 + $0x18] sm:$0xf] %v679
  // Predicated region
  $region14: #{stem_fwd.21} parent=0 // pred_check
    _
  $region15: #{stem_fwd.21} parent=0 // pred_check_branch
    %695 = sbr.rel (0) target = $region17
  $region16: #{stem_fwd.21} parent=0 // pred_region
    _
  $region17: #{stem_fwd.21} parent=0 // pred_fallthru
    _
  // Predicated region
  $region18: #{stem_fwd.21} parent=0 // pred_check
    _
  $region19: #{stem_fwd.21} parent=0 // pred_check_branch
    %697 = sbr.rel (0) target = $region21
  $region20: #{stem_fwd.21} parent=0 // pred_region
    _
  $region21: #{stem_fwd.21} parent=0 // pred_fallthru
    _

// kernel: stem_fwd.22
$region0: #{stem_fwd.22}
  #allocation0 [shape = 'u32[]', space=smem, size = 0x4, offset = 0x4, fixed_abs, tag = 'smem constant byte address 0x4 - core index']
  #allocation1 [shape = 'u32[144,128]{1,0:T(1,128)}', space=vmem, size = 0x12000, scoped, tag = 'internal scratch']
  %s0 = inlined_call_operand.vmem [shape: bf16[56,896], index: 0, kind: input, shape index: {}]
  %s1 = inlined_call_operand.vmem [shape: bf16[896,128], index: 1, kind: input, shape index: {}]
  %s2 = inlined_call_operand.vmem [shape: f32[1,128], index: 2, kind: input, shape index: {}]
  %s3 = inlined_call_operand.vmem [shape: bf16[56,128], index: 3, kind: output, shape index: {}]
  %s4 = sld [smem:[#allocation0]]
  $region22: #{stem_fwd.22} parent=0
    _
  %s6 = ssub.s32 1, %s4
  %s7 = scalar_select 0, %s6, %s4
  // Predicated region
  $region2: #{stem_fwd.22} parent=0 // pred_check
    _
  $region3: #{stem_fwd.22} parent=0 // pred_check_branch
    %9 = sbr.rel (0) target = $region5
  $region4: #{stem_fwd.22} parent=0 // pred_region
    _
  $region5: #{stem_fwd.22} parent=0 // pred_fallthru
    _
  // Predicated region
  $region6: #{stem_fwd.22} parent=0 // pred_check
    _
  $region7: #{stem_fwd.22} parent=0 // pred_check_branch
    %11 = sbr.rel (0) target = $region9
  $region8: #{stem_fwd.22} parent=0 // pred_region
    _
  $region9: #{stem_fwd.22} parent=0 // pred_fallthru
    _
  // Predicated region
  $region10: #{stem_fwd.22} parent=0 // pred_check
    _
  $region11: #{stem_fwd.22} parent=0 // pred_check_branch
    %13 = sbr.rel (0) target = $region13
  $region12: #{stem_fwd.22} parent=0 // pred_region
    _
  $region13: #{stem_fwd.22} parent=0 // pred_fallthru
    _
  %v15 = vld [vmem:[%s0] sm:$0xff]
  %v16 = vld [vmem:[%s0 + $0x8] sm:$0xff]
  %v17 = vld [vmem:[%s0 + $0x10] sm:$0xff]
  %v18 = vld [vmem:[%s0 + $0x18] sm:$0xf]
  %v19 = vld [vmem:[%s0 + $0x1c] sm:$0xff]
  %v20 = vld [vmem:[%s0 + $0x24] sm:$0xff]
  %v21 = vld [vmem:[%s0 + $0x2c] sm:$0xff]
  %v22 = vld [vmem:[%s0 + $0x34] sm:$0xf]
  %v23 = vld [vmem:[%s0 + $0x38] sm:$0xff]
  %v24 = vld [vmem:[%s0 + $0x40] sm:$0xff]
  %v25 = vld [vmem:[%s0 + $0x48] sm:$0xff]
  %v26 = vld [vmem:[%s0 + $0x50] sm:$0xf]
  %v27 = vld [vmem:[%s0 + $0x54] sm:$0xff]
  %v28 = vld [vmem:[%s0 + $0x5c] sm:$0xff]
  %v29 = vld [vmem:[%s0 + $0x64] sm:$0xff]
  %v30 = vld [vmem:[%s0 + $0x6c] sm:$0xf]
  %v31 = vld [vmem:[%s0 + $0x70] sm:$0xff]
  %v32 = vld [vmem:[%s0 + $0x78] sm:$0xff]
  %v33 = vld [vmem:[%s0 + $0x80] sm:$0xff]
  %v34 = vld [vmem:[%s0 + $0x88] sm:$0xf]
  %v35 = vld [vmem:[%s0 + $0x8c] sm:$0xff]
  %v36 = vld [vmem:[%s0 + $0x94] sm:$0xff]
  %v37 = vld [vmem:[%s0 + $0x9c] sm:$0xff]
  %v38 = vld [vmem:[%s0 + $0xa4] sm:$0xf]
  %v39 = vld [vmem:[%s0 + $0xa8] sm:$0xff]
  %v40 = vld [vmem:[%s0 + $0xb0] sm:$0xff]
  %v41 = vld [vmem:[%s0 + $0xb8] sm:$0xff]
  %v42 = vld [vmem:[%s0 + $0xc0] sm:$0xf]
  %v43 = vld [vmem:[%s1] sm:$0xf]
  %v44 = vld [vmem:[%s1 + $0x4] sm:$0xf]
  %v45 = vld [vmem:[%s1 + $0x8] sm:$0xf]
  %v46 = vld [vmem:[%s1 + $0xc] sm:$0xf]
  %v47 = vld [vmem:[%s1 + $0x10] sm:$0xf]
  %v48 = vld [vmem:[%s1 + $0x14] sm:$0xf]
  %v49 = vld [vmem:[%s1 + $0x18] sm:$0xf]
  %v50 = vld [vmem:[%s1 + $0x1c] sm:$0xf]
  %v51 = vld [vmem:[%s1 + $0x20] sm:$0xf]
  %v52 = vld [vmem:[%s1 + $0x24] sm:$0xf]
  %v53 = vld [vmem:[%s1 + $0x28] sm:$0xf]
  %v54 = vld [vmem:[%s1 + $0x2c] sm:$0xf]
  %v55 = vld [vmem:[%s1 + $0x30] sm:$0xf]
  %v56 = vld [vmem:[%s1 + $0x34] sm:$0xf]
  %v57 = vld [vmem:[%s1 + $0x38] sm:$0xf]
  %v58 = vld [vmem:[%s1 + $0x3c] sm:$0xf]
  %v59 = vld [vmem:[%s1 + $0x40] sm:$0xf]
  %v60 = vld [vmem:[%s1 + $0x44] sm:$0xf]
  %v61 = vld [vmem:[%s1 + $0x48] sm:$0xf]
  %v62 = vld [vmem:[%s1 + $0x4c] sm:$0xf]
  %v63 = vld [vmem:[%s1 + $0x50] sm:$0xf]
  %v64 = vld [vmem:[%s1 + $0x54] sm:$0xf]
  %v65 = vld [vmem:[%s1 + $0x58] sm:$0xf]
  %v66 = vld [vmem:[%s1 + $0x5c] sm:$0xf]
  %v67 = vld [vmem:[%s1 + $0x60] sm:$0xf]
  %v68 = vld [vmem:[%s1 + $0x64] sm:$0xf]
  %v69 = vld [vmem:[%s1 + $0x68] sm:$0xf]
  %v70 = vld [vmem:[%s1 + $0x6c] sm:$0xf]
  %v71 = vld [vmem:[%s1 + $0x70] sm:$0xf]
  %v72 = vld [vmem:[%s1 + $0x74] sm:$0xf]
  %v73 = vld [vmem:[%s1 + $0x78] sm:$0xf]
  %v74 = vld [vmem:[%s1 + $0x7c] sm:$0xf]
  %v75 = vld [vmem:[%s1 + $0x80] sm:$0xf]
  %v76 = vld [vmem:[%s1 + $0x84] sm:$0xf]
  %v77 = vld [vmem:[%s1 + $0x88] sm:$0xf]
  %v78 = vld [vmem:[%s1 + $0x8c] sm:$0xf]
  %v79 = vld [vmem:[%s1 + $0x90] sm:$0xf]
  %v80 = vld [vmem:[%s1 + $0x94] sm:$0xf]
  %v81 = vld [vmem:[%s1 + $0x98] sm:$0xf]
  %v82 = vld [vmem:[%s1 + $0x9c] sm:$0xf]
  %v83 = vld [vmem:[%s1 + $0xa0] sm:$0xf]
  %v84 = vld [vmem:[%s1 + $0xa4] sm:$0xf]
  %v85 = vld [vmem:[%s1 + $0xa8] sm:$0xf]
  %v86 = vld [vmem:[%s1 + $0xac] sm:$0xf]
  %v87 = vld [vmem:[%s1 + $0xb0] sm:$0xf]
  %v88 = vld [vmem:[%s1 + $0xb4] sm:$0xf]
  %v89 = vld [vmem:[%s1 + $0xb8] sm:$0xf]
  %v90 = vld [vmem:[%s1 + $0xbc] sm:$0xf]
  %v91 = vld [vmem:[%s1 + $0xc0] sm:$0xf]
  %v92 = vld [vmem:[%s1 + $0xc4] sm:$0xf]
  %v93 = vld [vmem:[%s1 + $0xc8] sm:$0xf]
  %v94 = vld [vmem:[%s1 + $0xcc] sm:$0xf]
  %v95 = vld [vmem:[%s1 + $0xd0] sm:$0xf]
  %v96 = vld [vmem:[%s1 + $0xd4] sm:$0xf]
  %v97 = vld [vmem:[%s1 + $0xd8] sm:$0xf]
  %v98 = vld [vmem:[%s1 + $0xdc] sm:$0xf]
  %v99 = vld [vmem:[%s1 + $0xe0] sm:$0xf]
  %v100 = vld [vmem:[%s1 + $0xe4] sm:$0xf]
  %v101 = vld [vmem:[%s1 + $0xe8] sm:$0xf]
  %v102 = vld [vmem:[%s1 + $0xec] sm:$0xf]
  %v103 = vld [vmem:[%s1 + $0xf0] sm:$0xf]
  %v104 = vld [vmem:[%s1 + $0xf4] sm:$0xf]
  %v105 = vld [vmem:[%s1 + $0xf8] sm:$0xf]
  %v106 = vld [vmem:[%s1 + $0xfc] sm:$0xf]
  %v107 = vld [vmem:[%s1 + $0x100] sm:$0xf]
  %v108 = vld [vmem:[%s1 + $0x104] sm:$0xf]
  %v109 = vld [vmem:[%s1 + $0x108] sm:$0xf]
  %v110 = vld [vmem:[%s1 + $0x10c] sm:$0xf]
  %v111 = vld [vmem:[%s1 + $0x110] sm:$0xf]
  %v112 = vld [vmem:[%s1 + $0x114] sm:$0xf]
  %v113 = vld [vmem:[%s1 + $0x118] sm:$0xf]
  %v114 = vld [vmem:[%s1 + $0x11c] sm:$0xf]
  %v115 = vld [vmem:[%s1 + $0x120] sm:$0xf]
  %v116 = vld [vmem:[%s1 + $0x124] sm:$0xf]
  %v117 = vld [vmem:[%s1 + $0x128] sm:$0xf]
  %v118 = vld [vmem:[%s1 + $0x12c] sm:$0xf]
  %v119 = vld [vmem:[%s1 + $0x130] sm:$0xf]
  %v120 = vld [vmem:[%s1 + $0x134] sm:$0xf]
  %v121 = vld [vmem:[%s1 + $0x138] sm:$0xf]
  %v122 = vld [vmem:[%s1 + $0x13c] sm:$0xf]
  %v123 = vld [vmem:[%s1 + $0x140] sm:$0xf]
  %v124 = vld [vmem:[%s1 + $0x144] sm:$0xf]
  %v125 = vld [vmem:[%s1 + $0x148] sm:$0xf]
  %v126 = vld [vmem:[%s1 + $0x14c] sm:$0xf]
  %v127 = vld [vmem:[%s1 + $0x150] sm:$0xf]
  %v128 = vld [vmem:[%s1 + $0x154] sm:$0xf]
  %v129 = vld [vmem:[%s1 + $0x158] sm:$0xf]
  %v130 = vld [vmem:[%s1 + $0x15c] sm:$0xf]
  %v131 = vld [vmem:[%s1 + $0x160] sm:$0xf]
  %v132 = vld [vmem:[%s1 + $0x164] sm:$0xf]
  %v133 = vld [vmem:[%s1 + $0x168] sm:$0xf]
  %v134 = vld [vmem:[%s1 + $0x16c] sm:$0xf]
  %v135 = vld [vmem:[%s1 + $0x170] sm:$0xf]
  %v136 = vld [vmem:[%s1 + $0x174] sm:$0xf]
  %v137 = vld [vmem:[%s1 + $0x178] sm:$0xf]
  %v138 = vld [vmem:[%s1 + $0x17c] sm:$0xf]
  %v139 = vld [vmem:[%s1 + $0x180] sm:$0xf]
  %v140 = vld [vmem:[%s1 + $0x184] sm:$0xf]
  %v141 = vld [vmem:[%s1 + $0x188] sm:$0xf]
  %v142 = vld [vmem:[%s1 + $0x18c] sm:$0xf]
  %v143 = vld [vmem:[%s1 + $0x190] sm:$0xf]
  %v144 = vld [vmem:[%s1 + $0x194] sm:$0xf]
  %v145 = vld [vmem:[%s1 + $0x198] sm:$0xf]
  %v146 = vld [vmem:[%s1 + $0x19c] sm:$0xf]
  %v147 = vld [vmem:[%s1 + $0x1a0] sm:$0xf]
  %v148 = vld [vmem:[%s1 + $0x1a4] sm:$0xf]
  %v149 = vld [vmem:[%s1 + $0x1a8] sm:$0xf]
  %v150 = vld [vmem:[%s1 + $0x1ac] sm:$0xf]
  %v151 = vld [vmem:[%s1 + $0x1b0] sm:$0xf]
  %v152 = vld [vmem:[%s1 + $0x1b4] sm:$0xf]
  %v153 = vld [vmem:[%s1 + $0x1b8] sm:$0xf]
  %v154 = vld [vmem:[%s1 + $0x1bc] sm:$0xf]
  %v155 = vld [vmem:[%s2] sm:$0x1]
  %v157 = vlaneseq
  %v158 = vshrl.u32 %v157, 7
  %v159 = vsub.s32 0, %v158
  %v160 = vrot.slane %v155, %v159
  %v190 = vunpack.c.l.b16 %v15
  %v191 = vunpack.c.h.b16 %v15
  %v192 = vunpack.c.l.b16 %v16
  %v193 = vunpack.c.h.b16 %v16
  %v194 = vunpack.c.l.b16 %v17
  %v195 = vunpack.c.h.b16 %v17
  %v196 = vunpack.c.l.b16 %v18
  %v197 = vunpack.c.l.b16 %v19
  %v198 = vunpack.c.h.b16 %v19
  %v199 = vunpack.c.l.b16 %v20
  %v200 = vunpack.c.h.b16 %v20
  %v201 = vunpack.c.l.b16 %v21
  %v202 = vunpack.c.h.b16 %v21
  %v203 = vunpack.c.l.b16 %v22
  %v204 = vunpack.c.l.b16 %v23
  %v205 = vunpack.c.h.b16 %v23
  %v206 = vunpack.c.l.b16 %v24
  %v207 = vunpack.c.h.b16 %v24
  %v208 = vunpack.c.l.b16 %v25
  %v209 = vunpack.c.h.b16 %v25
  %v210 = vunpack.c.l.b16 %v26
  %v211 = vunpack.c.l.b16 %v27
  %v212 = vunpack.c.h.b16 %v27
  %v213 = vunpack.c.l.b16 %v28
  %v214 = vunpack.c.h.b16 %v28
  %v215 = vunpack.c.l.b16 %v29
  %v216 = vunpack.c.h.b16 %v29
  %v217 = vunpack.c.l.b16 %v30
  %v218 = vunpack.c.l.b16 %v31
  %v219 = vunpack.c.h.b16 %v31
  %v220 = vunpack.c.l.b16 %v32
  %v221 = vunpack.c.h.b16 %v32
  %v222 = vunpack.c.l.b16 %v33
  %v223 = vunpack.c.h.b16 %v33
  %v224 = vunpack.c.l.b16 %v34
  %v225 = vunpack.c.l.b16 %v35
  %v226 = vunpack.c.h.b16 %v35
  %v227 = vunpack.c.l.b16 %v36
  %v228 = vunpack.c.h.b16 %v36
  %v229 = vunpack.c.l.b16 %v37
  %v230 = vunpack.c.h.b16 %v37
  %v231 = vunpack.c.l.b16 %v38
  %v232 = vunpack.c.l.b16 %v39
  %v233 = vunpack.c.h.b16 %v39
  %v234 = vunpack.c.l.b16 %v40
  %v235 = vunpack.c.h.b16 %v40
  %v236 = vunpack.c.l.b16 %v41
  %v237 = vunpack.c.h.b16 %v41
  %v238 = vunpack.c.l.b16 %v42
  %v239 = vpack.c.b16 %v197, %v190
  %v240 = vpack.c.b16 %v198, %v191
  %v241 = vpack.c.b16 %v199, %v192
  %v242 = vpack.c.b16 %v200, %v193
  %v243 = vpack.c.b16 %v201, %v194
  %v244 = vpack.c.b16 %v202, %v195
  %v245 = vpack.c.b16 %v203, %v196
  %v246 = vpack.c.b16 %v211, %v204
  %v247 = vpack.c.b16 %v212, %v205
  %v248 = vpack.c.b16 %v213, %v206
  %v249 = vpack.c.b16 %v214, %v207
  %v250 = vpack.c.b16 %v215, %v208
  %v251 = vpack.c.b16 %v216, %v209
  %v252 = vpack.c.b16 %v217, %v210
  %v253 = vpack.c.b16 %v225, %v218
  %v254 = vpack.c.b16 %v226, %v219
  %v255 = vpack.c.b16 %v227, %v220
  %v256 = vpack.c.b16 %v228, %v221
  %v257 = vpack.c.b16 %v229, %v222
  %v258 = vpack.c.b16 %v230, %v223
  %v259 = vpack.c.b16 %v231, %v224
  %v260 = vpack.c.b16 %v232, %v232
  %v261 = vpack.c.b16 %v233, %v233
  %v262 = vpack.c.b16 %v234, %v234
  %v263 = vpack.c.b16 %v235, %v235
  %v264 = vpack.c.b16 %v236, %v236
  %v265 = vpack.c.b16 %v237, %v237
  %v266 = vpack.c.b16 %v238, %v238
  %v407 = vunpack.c.l.b16 %v43
  %v408 = vunpack.c.l.b16 %v44
  %v409 = vunpack.c.l.b16 %v45
  %v410 = vunpack.c.l.b16 %v46
  %v411 = vunpack.c.l.b16 %v47
  %v412 = vunpack.c.l.b16 %v48
  %v413 = vunpack.c.l.b16 %v49
  %v414 = vunpack.c.l.b16 %v50
  %v415 = vunpack.c.l.b16 %v51
  %v416 = vunpack.c.l.b16 %v52
  %v417 = vunpack.c.l.b16 %v53
  %v418 = vunpack.c.l.b16 %v54
  %v419 = vunpack.c.l.b16 %v55
  %v420 = vunpack.c.l.b16 %v56
  %v421 = vunpack.c.l.b16 %v57
  %v422 = vunpack.c.l.b16 %v58
  %v423 = vunpack.c.l.b16 %v59
  %v424 = vunpack.c.l.b16 %v60
  %v425 = vunpack.c.l.b16 %v61
  %v426 = vunpack.c.l.b16 %v62
  %v427 = vunpack.c.l.b16 %v63
  %v428 = vunpack.c.l.b16 %v64
  %v429 = vunpack.c.l.b16 %v65
  %v430 = vunpack.c.l.b16 %v66
  %v431 = vunpack.c.l.b16 %v67
  %v432 = vunpack.c.l.b16 %v68
  %v433 = vunpack.c.l.b16 %v69
  %v434 = vunpack.c.l.b16 %v70
  %v435 = vunpack.c.l.b16 %v71
  %v436 = vunpack.c.l.b16 %v72
  %v437 = vunpack.c.l.b16 %v73
  %v438 = vunpack.c.l.b16 %v74
  %v439 = vunpack.c.l.b16 %v75
  %v440 = vunpack.c.l.b16 %v76
  %v441 = vunpack.c.l.b16 %v77
  %v442 = vunpack.c.l.b16 %v78
  %v443 = vunpack.c.l.b16 %v79
  %v444 = vunpack.c.l.b16 %v80
  %v445 = vunpack.c.l.b16 %v81
  %v446 = vunpack.c.l.b16 %v82
  %v447 = vunpack.c.l.b16 %v83
  %v448 = vunpack.c.l.b16 %v84
  %v449 = vunpack.c.l.b16 %v85
  %v450 = vunpack.c.l.b16 %v86
  %v451 = vunpack.c.l.b16 %v87
  %v452 = vunpack.c.l.b16 %v88
  %v453 = vunpack.c.l.b16 %v89
  %v454 = vunpack.c.l.b16 %v90
  %v455 = vunpack.c.l.b16 %v91
  %v456 = vunpack.c.l.b16 %v92
  %v457 = vunpack.c.l.b16 %v93
  %v458 = vunpack.c.l.b16 %v94
  %v459 = vunpack.c.l.b16 %v95
  %v460 = vunpack.c.l.b16 %v96
  %v461 = vunpack.c.l.b16 %v97
  %v462 = vunpack.c.l.b16 %v98
  %v463 = vunpack.c.l.b16 %v99
  %v464 = vunpack.c.l.b16 %v100
  %v465 = vunpack.c.l.b16 %v101
  %v466 = vunpack.c.l.b16 %v102
  %v467 = vunpack.c.l.b16 %v103
  %v468 = vunpack.c.l.b16 %v104
  %v469 = vunpack.c.l.b16 %v105
  %v470 = vunpack.c.l.b16 %v106
  %v471 = vunpack.c.l.b16 %v107
  %v472 = vunpack.c.l.b16 %v108
  %v473 = vunpack.c.l.b16 %v109
  %v474 = vunpack.c.l.b16 %v110
  %v475 = vunpack.c.l.b16 %v111
  %v476 = vunpack.c.l.b16 %v112
  %v477 = vunpack.c.l.b16 %v113
  %v478 = vunpack.c.l.b16 %v114
  %v479 = vunpack.c.l.b16 %v115
  %v480 = vunpack.c.l.b16 %v116
  %v481 = vunpack.c.l.b16 %v117
  %v482 = vunpack.c.l.b16 %v118
  %v483 = vunpack.c.l.b16 %v119
  %v484 = vunpack.c.l.b16 %v120
  %v485 = vunpack.c.l.b16 %v121
  %v486 = vunpack.c.l.b16 %v122
  %v487 = vunpack.c.l.b16 %v123
  %v488 = vunpack.c.l.b16 %v124
  %v489 = vunpack.c.l.b16 %v125
  %v490 = vunpack.c.l.b16 %v126
  %v491 = vunpack.c.l.b16 %v127
  %v492 = vunpack.c.l.b16 %v128
  %v493 = vunpack.c.l.b16 %v129
  %v494 = vunpack.c.l.b16 %v130
  %v495 = vunpack.c.l.b16 %v131
  %v496 = vunpack.c.l.b16 %v132
  %v497 = vunpack.c.l.b16 %v133
  %v498 = vunpack.c.l.b16 %v134
  %v499 = vunpack.c.l.b16 %v135
  %v500 = vunpack.c.l.b16 %v136
  %v501 = vunpack.c.l.b16 %v137
  %v502 = vunpack.c.l.b16 %v138
  %v503 = vunpack.c.l.b16 %v139
  %v504 = vunpack.c.l.b16 %v140
  %v505 = vunpack.c.l.b16 %v141
  %v506 = vunpack.c.l.b16 %v142
  %v507 = vunpack.c.l.b16 %v143
  %v508 = vunpack.c.l.b16 %v144
  %v509 = vunpack.c.l.b16 %v145
  %v510 = vunpack.c.l.b16 %v146
  %v511 = vunpack.c.l.b16 %v147
  %v512 = vunpack.c.l.b16 %v148
  %v513 = vunpack.c.l.b16 %v149
  %v514 = vunpack.c.l.b16 %v150
  %v515 = vunpack.c.l.b16 %v151
  %v516 = vunpack.c.l.b16 %v152
  %v517 = vunpack.c.l.b16 %v153
  %v518 = vunpack.c.l.b16 %v154
  %v519 = vpack.c.b16 %v408, %v407
  %v520 = vpack.c.b16 %v410, %v409
  %v521 = vpack.c.b16 %v412, %v411
  %v522 = vpack.c.b16 %v414, %v413
  %v523 = vpack.c.b16 %v416, %v415
  %v524 = vpack.c.b16 %v418, %v417
  %v525 = vpack.c.b16 %v420, %v419
  %v526 = vpack.c.b16 %v422, %v421
  %v527 = vpack.c.b16 %v424, %v423
  %v528 = vpack.c.b16 %v426, %v425
  %v529 = vpack.c.b16 %v428, %v427
  %v530 = vpack.c.b16 %v430, %v429
  %v531 = vpack.c.b16 %v432, %v431
  %v532 = vpack.c.b16 %v434, %v433
  %v533 = vpack.c.b16 %v436, %v435
  %v534 = vpack.c.b16 %v438, %v437
  %v535 = vpack.c.b16 %v440, %v439
  %v536 = vpack.c.b16 %v442, %v441
  %v537 = vpack.c.b16 %v444, %v443
  %v538 = vpack.c.b16 %v446, %v445
  %v539 = vpack.c.b16 %v448, %v447
  %v540 = vpack.c.b16 %v450, %v449
  %v541 = vpack.c.b16 %v452, %v451
  %v542 = vpack.c.b16 %v454, %v453
  %v543 = vpack.c.b16 %v456, %v455
  %v544 = vpack.c.b16 %v458, %v457
  %v545 = vpack.c.b16 %v460, %v459
  %v546 = vpack.c.b16 %v462, %v461
  %v547 = vpack.c.b16 %v464, %v463
  %v548 = vpack.c.b16 %v466, %v465
  %v549 = vpack.c.b16 %v468, %v467
  %v550 = vpack.c.b16 %v470, %v469
  %v551 = vpack.c.b16 %v472, %v471
  %v552 = vpack.c.b16 %v474, %v473
  %v553 = vpack.c.b16 %v476, %v475
  %v554 = vpack.c.b16 %v478, %v477
  %v555 = vpack.c.b16 %v480, %v479
  %v556 = vpack.c.b16 %v482, %v481
  %v557 = vpack.c.b16 %v484, %v483
  %v558 = vpack.c.b16 %v486, %v485
  %v559 = vpack.c.b16 %v488, %v487
  %v560 = vpack.c.b16 %v490, %v489
  %v561 = vpack.c.b16 %v492, %v491
  %v562 = vpack.c.b16 %v494, %v493
  %v563 = vpack.c.b16 %v496, %v495
  %v564 = vpack.c.b16 %v498, %v497
  %v565 = vpack.c.b16 %v500, %v499
  %v566 = vpack.c.b16 %v502, %v501
  %v567 = vpack.c.b16 %v504, %v503
  %v568 = vpack.c.b16 %v506, %v505
  %v569 = vpack.c.b16 %v508, %v507
  %v570 = vpack.c.b16 %v510, %v509
  %v571 = vpack.c.b16 %v512, %v511
  %v572 = vpack.c.b16 %v514, %v513
  %v573 = vpack.c.b16 %v516, %v515
  %v574 = vpack.c.b16 %v518, %v517
  %631 = vmatprep.subr.bf16.mxu0 0
  %632 = vmatpush1.bf16.msra.mxu0 %v526
  %633 = vmatprep.subr.bf16.mxu0 0
  %634 = vmatpush1.bf16.msra.mxu0 %v525
  %635 = vmatprep.subr.bf16.mxu0 0
  %636 = vmatpush1.bf16.msra.mxu0 %v524
  %637 = vmatprep.subr.bf16.mxu0 0
  %638 = vmatpush1.bf16.msra.mxu0 %v523
  %639 = vmatprep.subr.bf16.mxu0 0
  %640 = vmatpush1.bf16.msra.mxu0 %v522
  %641 = vmatprep.subr.bf16.mxu0 0
  %642 = vmatpush1.bf16.msra.mxu0 %v521
  %643 = vmatprep.subr.bf16.mxu0 0
  %644 = vmatpush1.bf16.msra.mxu0 %v520
  %645 = vmatprep.subr.bf16.mxu0 0
  %646 = vmatpush1.bf16.msra.mxu0 %v519
  %647 = vmatprep.subr.bf16.mxu0 0
  %648 = vmatpush2.bf16.msra.mxu0 %v534
  %649 = vmatprep.subr.bf16.mxu0 0
  %650 = vmatpush2.bf16.msra.mxu0 %v533
  %651 = vmatprep.subr.bf16.mxu0 0
  %652 = vmatpush2.bf16.msra.mxu0 %v532
  %653 = vmatprep.subr.bf16.mxu0 0
  %654 = vmatpush2.bf16.msra.mxu0 %v531
  %655 = vmatprep.subr.bf16.mxu0 0
  %656 = vmatpush2.bf16.msra.mxu0 %v530
  %657 = vmatprep.subr.bf16.mxu0 0
  %658 = vmatpush2.bf16.msra.mxu0 %v529
  %659 = vmatprep.subr.bf16.mxu0 0
  %660 = vmatpush2.bf16.msra.mxu0 %v528
  %661 = vmatprep.subr.bf16.mxu0 0
  %662 = vmatpush2.bf16.msra.mxu0 %v527
  %663 = vmatprep.mubr.bf16.mxu0 %v240
  %664 = vmatmul.mubr.bf16.gmra.mxu0 %v239
  %v665 = vpop.f32.mrf.mxu0
  %v666 = vadd.f32 %v160, %v665
  %v667 = vpop.f32.mrf.mxu0
  %v668 = vpop.f32.mrf.mxu0
  %v669 = vadd.f32 %v160, %v668
  %v670 = vpop.f32.mrf.mxu0
  %671 = vmatprep.mubr.bf16.mxu0 %v247
  %672 = vmatmul.mubr.bf16.gmra.mxu0 %v246
  %v673 = vpop.f32.mrf.mxu0
  %v674 = vadd.f32 %v160, %v673
  %v675 = vpop.f32.mrf.mxu0
  %v676 = vpop.f32.mrf.mxu0
  %v677 = vadd.f32 %v160, %v676
  %v678 = vpop.f32.mrf.mxu0
  %679 = vmatprep.mubr.bf16.mxu0 %v254
  %680 = vmatmul.mubr.bf16.gmra.mxu0 %v253
  %v681 = vpop.f32.mrf.mxu0
  %v682 = vadd.f32 %v160, %v681
  %v683 = vpop.f32.mrf.mxu0
  %v684 = vpop.f32.mrf.mxu0
  %v685 = vadd.f32 %v160, %v684
  %v686 = vpop.f32.mrf.mxu0
  %687 = vmatprep.mubr.bf16.mxu0 %v261
  %688 = vmatmul.mubr.bf16.gmra.mxu0 %v260
  %v689 = vpop.f32.mrf.mxu0
  %v690 = vadd.f32 %v160, %v689
  %v691 = vpop.f32.mrf.mxu0
  %v692 = vpop.f32.mrf.mxu0
  %v693 = vpop.f32.mrf.mxu0
  %694 = vdwg.mxu0
  %695 = vmatprep.subr.bf16.mxu0 0
  %696 = vmatpush1.bf16.msra.mxu0 %v542
  %697 = vmatprep.subr.bf16.mxu0 0
  %698 = vmatpush1.bf16.msra.mxu0 %v541
  %699 = vmatprep.subr.bf16.mxu0 0
  %700 = vmatpush1.bf16.msra.mxu0 %v540
  %701 = vmatprep.subr.bf16.mxu0 0
  %702 = vmatpush1.bf16.msra.mxu0 %v539
  %703 = vmatprep.subr.bf16.mxu0 0
  %704 = vmatpush1.bf16.msra.mxu0 %v538
  %705 = vmatprep.subr.bf16.mxu0 0
  %706 = vmatpush1.bf16.msra.mxu0 %v537
  %707 = vmatprep.subr.bf16.mxu0 0
  %708 = vmatpush1.bf16.msra.mxu0 %v536
  %709 = vmatprep.subr.bf16.mxu0 0
  %710 = vmatpush1.bf16.msra.mxu0 %v535
  %711 = vmatprep.subr.bf16.mxu0 0
  %712 = vmatpush2.bf16.msra.mxu0 %v550
  %713 = vmatprep.subr.bf16.mxu0 0
  %714 = vmatpush2.bf16.msra.mxu0 %v549
  %715 = vmatprep.subr.bf16.mxu0 0
  %716 = vmatpush2.bf16.msra.mxu0 %v548
  %717 = vmatprep.subr.bf16.mxu0 0
  %718 = vmatpush2.bf16.msra.mxu0 %v547
  %719 = vmatprep.subr.bf16.mxu0 0
  %720 = vmatpush2.bf16.msra.mxu0 %v546
  %721 = vmatprep.subr.bf16.mxu0 0
  %722 = vmatpush2.bf16.msra.mxu0 %v545
  %723 = vmatprep.subr.bf16.mxu0 0
  %724 = vmatpush2.bf16.msra.mxu0 %v544
  %725 = vmatprep.subr.bf16.mxu0 0
  %726 = vmatpush2.bf16.msra.mxu0 %v543
  %727 = vmatprep.mubr.bf16.mxu0 %v242
  %728 = vmatmul.mubr.bf16.gmra.mxu0 %v241
  %v729 = vpop.f32.mrf.mxu0
  %v730 = vadd.f32 %v666, %v729
  %v731 = vpop.f32.mrf.mxu0
  %v732 = vpop.f32.mrf.mxu0
  %v733 = vadd.f32 %v669, %v732
  %v734 = vpop.f32.mrf.mxu0
  %735 = vmatprep.mubr.bf16.mxu0 %v249
  %736 = vmatmul.mubr.bf16.gmra.mxu0 %v248
  %v737 = vpop.f32.mrf.mxu0
  %v738 = vadd.f32 %v674, %v737
  %v739 = vpop.f32.mrf.mxu0
  %v740 = vpop.f32.mrf.mxu0
  %v741 = vadd.f32 %v677, %v740
  %v742 = vpop.f32.mrf.mxu0
  %743 = vmatprep.mubr.bf16.mxu0 %v256
  %744 = vmatmul.mubr.bf16.gmra.mxu0 %v255
  %v745 = vpop.f32.mrf.mxu0
  %v746 = vadd.f32 %v682, %v745
  %v747 = vpop.f32.mrf.mxu0
  %v748 = vpop.f32.mrf.mxu0
  %v749 = vadd.f32 %v685, %v748
  %v750 = vpop.f32.mrf.mxu0
  %751 = vmatprep.mubr.bf16.mxu0 %v263
  %752 = vmatmul.mubr.bf16.gmra.mxu0 %v262
  %v753 = vpop.f32.mrf.mxu0
  %v754 = vadd.f32 %v690, %v753
  %v755 = vpop.f32.mrf.mxu0
  %v756 = vpop.f32.mrf.mxu0
  %v757 = vpop.f32.mrf.mxu0
  %758 = vdwg.mxu0
  %759 = vmatprep.subr.bf16.mxu0 0
  %760 = vmatpush1.bf16.msra.mxu0 %v558
  %761 = vmatprep.subr.bf16.mxu0 0
  %762 = vmatpush1.bf16.msra.mxu0 %v557
  %763 = vmatprep.subr.bf16.mxu0 0
  %764 = vmatpush1.bf16.msra.mxu0 %v556
  %765 = vmatprep.subr.bf16.mxu0 0
  %766 = vmatpush1.bf16.msra.mxu0 %v555
  %767 = vmatprep.subr.bf16.mxu0 0
  %768 = vmatpush1.bf16.msra.mxu0 %v554
  %769 = vmatprep.subr.bf16.mxu0 0
  %770 = vmatpush1.bf16.msra.mxu0 %v553
  %771 = vmatprep.subr.bf16.mxu0 0
  %772 = vmatpush1.bf16.msra.mxu0 %v552
  %773 = vmatprep.subr.bf16.mxu0 0
  %774 = vmatpush1.bf16.msra.mxu0 %v551
  %775 = vmatprep.subr.bf16.mxu0 0
  %776 = vmatpush2.bf16.msra.mxu0 %v566
  %777 = vmatprep.subr.bf16.mxu0 0
  %778 = vmatpush2.bf16.msra.mxu0 %v565
  %779 = vmatprep.subr.bf16.mxu0 0
  %780 = vmatpush2.bf16.msra.mxu0 %v564
  %781 = vmatprep.subr.bf16.mxu0 0
  %782 = vmatpush2.bf16.msra.mxu0 %v563
  %783 = vmatprep.subr.bf16.mxu0 0
  %784 = vmatpush2.bf16.msra.mxu0 %v562
  %785 = vmatprep.subr.bf16.mxu0 0
  %786 = vmatpush2.bf16.msra.mxu0 %v561
  %787 = vmatprep.subr.bf16.mxu0 0
  %788 = vmatpush2.bf16.msra.mxu0 %v560
  %789 = vmatprep.subr.bf16.mxu0 0
  %790 = vmatpush2.bf16.msra.mxu0 %v559
  %791 = vmatprep.mubr.bf16.mxu0 %v244
  %792 = vmatmul.mubr.bf16.gmra.mxu0 %v243
  %v793 = vpop.f32.mrf.mxu0
  %v794 = vadd.f32 %v730, %v793
  %v795 = vpop.f32.mrf.mxu0
  %v796 = vpop.f32.mrf.mxu0
  %v797 = vadd.f32 %v733, %v796
  %v798 = vpop.f32.mrf.mxu0
  %799 = vmatprep.mubr.bf16.mxu0 %v251
  %800 = vmatmul.mubr.bf16.gmra.mxu0 %v250
  %v801 = vpop.f32.mrf.mxu0
  %v802 = vadd.f32 %v738, %v801
  %v803 = vpop.f32.mrf.mxu0
  %v804 = vpop.f32.mrf.mxu0
  %v805 = vadd.f32 %v741, %v804
  %v806 = vpop.f32.mrf.mxu0
  %807 = vmatprep.mubr.bf16.mxu0 %v258
  %808 = vmatmul.mubr.bf16.gmra.mxu0 %v257
  %v809 = vpop.f32.mrf.mxu0
  %v810 = vadd.f32 %v746, %v809
  %v811 = vpop.f32.mrf.mxu0
  %v812 = vpop.f32.mrf.mxu0
  %v813 = vadd.f32 %v749, %v812
  %v814 = vpop.f32.mrf.mxu0
  %815 = vmatprep.mubr.bf16.mxu0 %v265
  %816 = vmatmul.mubr.bf16.gmra.mxu0 %v264
  %v817 = vpop.f32.mrf.mxu0
  %v818 = vadd.f32 %v754, %v817
  %v819 = vpop.f32.mrf.mxu0
  %v820 = vpop.f32.mrf.mxu0
  %v821 = vpop.f32.mrf.mxu0
  %822 = vdwg.mxu0
  %823 = vmatprep.subr.bf16.mxu0 0
  %824 = vmatpush1.bf16.msra.mxu0 %v574
  %825 = vmatprep.subr.bf16.mxu0 0
  %826 = vmatpush1.bf16.msra.mxu0 %v573
  %827 = vmatprep.subr.bf16.mxu0 0
  %828 = vmatpush1.bf16.msra.mxu0 %v572
  %829 = vmatprep.subr.bf16.mxu0 0
  %830 = vmatpush1.bf16.msra.mxu0 %v571
  %831 = vmatprep.subr.bf16.mxu0 0
  %832 = vmatpush1.bf16.msra.mxu0 %v570
  %833 = vmatprep.subr.bf16.mxu0 0
  %834 = vmatpush1.bf16.msra.mxu0 %v569
  %835 = vmatprep.subr.bf16.mxu0 0
  %836 = vmatpush1.bf16.msra.mxu0 %v568
  %837 = vmatprep.subr.bf16.mxu0 0
  %838 = vmatpush1.bf16.msra.mxu0 %v567
  %839 = vmatprep.subr.bf16.mxu0 0
  %840 = vmatpush2.bf16.msra.mxu0 0
  %841 = vmatprep.subr.bf16.mxu0 0
  %842 = vmatpush2.bf16.msra.mxu0 0
  %843 = vmatprep.subr.bf16.mxu0 0
  %844 = vmatpush2.bf16.msra.mxu0 0
  %845 = vmatprep.subr.bf16.mxu0 0
  %846 = vmatpush2.bf16.msra.mxu0 0
  %847 = vmatprep.subr.bf16.mxu0 0
  %848 = vmatpush2.bf16.msra.mxu0 0
  %849 = vmatprep.subr.bf16.mxu0 0
  %850 = vmatpush2.bf16.msra.mxu0 0
  %851 = vmatprep.subr.bf16.mxu0 0
  %852 = vmatpush2.bf16.msra.mxu0 0
  %853 = vmatprep.subr.bf16.mxu0 0
  %854 = vmatpush2.bf16.msra.mxu0 0
  %855 = vmatprep.mubr.bf16.mxu0 0
  %856 = vmatmul.mubr.bf16.gmra.mxu0 %v245
  %v857 = vpop.f32.mrf.mxu0
  %v858 = vadd.f32 %v794, %v857
  %v859 = vpop.f32.mrf.mxu0
  %v860 = vpop.f32.mrf.mxu0
  %v861 = vadd.f32 %v797, %v860
  %v862 = vpop.f32.mrf.mxu0
  %863 = vmatprep.mubr.bf16.mxu0 0
  %864 = vmatmul.mubr.bf16.gmra.mxu0 %v252
  %v865 = vpop.f32.mrf.mxu0
  %v866 = vadd.f32 %v802, %v865
  %v867 = vpop.f32.mrf.mxu0
  %v868 = vpop.f32.mrf.mxu0
  %v869 = vadd.f32 %v805, %v868
  %v870 = vpop.f32.mrf.mxu0
  %871 = vmatprep.mubr.bf16.mxu0 0
  %872 = vmatmul.mubr.bf16.gmra.mxu0 %v259
  %v873 = vpop.f32.mrf.mxu0
  %v874 = vadd.f32 %v810, %v873
  %v875 = vpop.f32.mrf.mxu0
  %v876 = vpop.f32.mrf.mxu0
  %v877 = vadd.f32 %v813, %v876
  %v878 = vpop.f32.mrf.mxu0
  %879 = vmatprep.mubr.bf16.mxu0 0
  %880 = vmatmul.mubr.bf16.gmra.mxu0 %v266
  %v881 = vpop.f32.mrf.mxu0
  %v882 = vadd.f32 %v818, %v881
  %v883 = vpop.f32.mrf.mxu0
  %v884 = vpop.f32.mrf.mxu0
  %v885 = vpop.f32.mrf.mxu0
  %886 = vdwg.mxu0
  %v887 = vmax.f32 %v858, 0.0
  %v888 = vmax.f32 %v861, 0.0
  %v889 = vmax.f32 %v866, 0.0
  %v890 = vmax.f32 %v869, 0.0
  %v891 = vmax.f32 %v874, 0.0
  %v892 = vmax.f32 %v877, 0.0
  %v893 = vmax.f32 %v882, 0.0
  %v894 = vpack.c.bf16 %v888, %v887
  %v895 = vpack.c.bf16 %v890, %v889
  %v896 = vpack.c.bf16 %v892, %v891
  %v897 = vpack.c.bf16 %v893, %v893
  %v902 = vunpack.c.l.b16 %v894
  %v903 = vunpack.c.h.b16 %v894
  %v904 = vunpack.c.l.b16 %v895
  %v905 = vunpack.c.h.b16 %v895
  %v906 = vunpack.c.l.b16 %v896
  %v907 = vunpack.c.h.b16 %v896
  %v908 = vunpack.c.l.b16 %v897
  %v909 = vpack.c.b16 %v902, %v902
  %v910 = vpack.c.b16 %v903, %v903
  %v911 = vpack.c.b16 %v904, %v904
  %v912 = vpack.c.b16 %v905, %v905
  %v913 = vpack.c.b16 %v906, %v906
  %v914 = vpack.c.b16 %v907, %v907
  %v915 = vpack.c.b16 %v908, %v908
  %923 = vst [vmem:[%s3] sm:$0xf] %v909
  %924 = vst [vmem:[%s3 + $0x4] sm:$0xf] %v910
  %925 = vst [vmem:[%s3 + $0x8] sm:$0xf] %v911
  %926 = vst [vmem:[%s3 + $0xc] sm:$0xf] %v912
  %927 = vst [vmem:[%s3 + $0x10] sm:$0xf] %v913
  %928 = vst [vmem:[%s3 + $0x14] sm:$0xf] %v914
  %929 = vst [vmem:[%s3 + $0x18] sm:$0xf] %v915
  // Predicated region
  $region14: #{stem_fwd.22} parent=0 // pred_check
    _
  $region15: #{stem_fwd.22} parent=0 // pred_check_branch
    %931 = sbr.rel (0) target = $region17
  $region16: #{stem_fwd.22} parent=0 // pred_region
    _
  $region17: #{stem_fwd.22} parent=0 // pred_fallthru
    _
  // Predicated region
  $region18: #{stem_fwd.22} parent=0 // pred_check
    _
  $region19: #{stem_fwd.22} parent=0 // pred_check_branch
    %933 = sbr.rel (0) target = $region21
  $region20: #{stem_fwd.22} parent=0 // pred_region
    _
  $region21: #{stem_fwd.22} parent=0 // pred_fallthru
    _

// kernel: stem_fwd.19
$region0: #{stem_fwd.19}
  #allocation0 [shape = 'u32[]', space=smem, size = 0x4, offset = 0x4, fixed_abs, tag = 'smem constant byte address 0x4 - core index']
  #allocation1 [shape = 'u32[144,128]{1,0:T(1,128)}', space=vmem, size = 0x12000, scoped, tag = 'internal scratch']
  %s0 = inlined_call_operand.vmem [shape: bf16[56,1280], index: 0, kind: input, shape index: {}]
  %s1 = inlined_call_operand.vmem [shape: bf16[1280,128], index: 1, kind: input, shape index: {}]
  %s2 = inlined_call_operand.vmem [shape: f32[1,128], index: 2, kind: input, shape index: {}]
  %s3 = inlined_call_operand.vmem [shape: bf16[56,128], index: 3, kind: output, shape index: {}]
  %s4 = sld [smem:[#allocation0]]
  $region22: #{stem_fwd.19} parent=0
    _
  %s6 = ssub.s32 1, %s4
  %s7 = scalar_select 0, %s6, %s4
  // Predicated region
  $region2: #{stem_fwd.19} parent=0 // pred_check
    _
  $region3: #{stem_fwd.19} parent=0 // pred_check_branch
    %9 = sbr.rel (0) target = $region5
  $region4: #{stem_fwd.19} parent=0 // pred_region
    _
  $region5: #{stem_fwd.19} parent=0 // pred_fallthru
    _
  // Predicated region
  $region6: #{stem_fwd.19} parent=0 // pred_check
    _
  $region7: #{stem_fwd.19} parent=0 // pred_check_branch
    %11 = sbr.rel (0) target = $region9
  $region8: #{stem_fwd.19} parent=0 // pred_region
    _
  $region9: #{stem_fwd.19} parent=0 // pred_fallthru
    _
  // Predicated region
  $region10: #{stem_fwd.19} parent=0 // pred_check
    _
  $region11: #{stem_fwd.19} parent=0 // pred_check_branch
    %13 = sbr.rel (0) target = $region13
  $region12: #{stem_fwd.19} parent=0 // pred_region
    _
  $region13: #{stem_fwd.19} parent=0 // pred_fallthru
    _
  %v15 = vld [vmem:[%s0] sm:$0xff]
  %v16 = vld [vmem:[%s0 + $0x8] sm:$0xff]
  %v17 = vld [vmem:[%s0 + $0x10] sm:$0xff]
  %v18 = vld [vmem:[%s0 + $0x18] sm:$0xff]
  %v19 = vld [vmem:[%s0 + $0x20] sm:$0xff]
  %v20 = vld [vmem:[%s0 + $0x28] sm:$0xff]
  %v21 = vld [vmem:[%s0 + $0x30] sm:$0xff]
  %v22 = vld [vmem:[%s0 + $0x38] sm:$0xff]
  %v23 = vld [vmem:[%s0 + $0x40] sm:$0xff]
  %v24 = vld [vmem:[%s0 + $0x48] sm:$0xff]
  %v25 = vld [vmem:[%s0 + $0x50] sm:$0xff]
  %v26 = vld [vmem:[%s0 + $0x58] sm:$0xff]
  %v27 = vld [vmem:[%s0 + $0x60] sm:$0xff]
  %v28 = vld [vmem:[%s0 + $0x68] sm:$0xff]
  %v29 = vld [vmem:[%s0 + $0x70] sm:$0xff]
  %v30 = vld [vmem:[%s0 + $0x78] sm:$0xff]
  %v31 = vld [vmem:[%s0 + $0x80] sm:$0xff]
  %v32 = vld [vmem:[%s0 + $0x88] sm:$0xff]
  %v33 = vld [vmem:[%s0 + $0x90] sm:$0xff]
  %v34 = vld [vmem:[%s0 + $0x98] sm:$0xff]
  %v35 = vld [vmem:[%s0 + $0xa0] sm:$0xff]
  %v36 = vld [vmem:[%s0 + $0xa8] sm:$0xff]
  %v37 = vld [vmem:[%s0 + $0xb0] sm:$0xff]
  %v38 = vld [vmem:[%s0 + $0xb8] sm:$0xff]
  %v39 = vld [vmem:[%s0 + $0xc0] sm:$0xff]
  %v40 = vld [vmem:[%s0 + $0xc8] sm:$0xff]
  %v41 = vld [vmem:[%s0 + $0xd0] sm:$0xff]
  %v42 = vld [vmem:[%s0 + $0xd8] sm:$0xff]
  %v43 = vld [vmem:[%s0 + $0xe0] sm:$0xff]
  %v44 = vld [vmem:[%s0 + $0xe8] sm:$0xff]
  %v45 = vld [vmem:[%s0 + $0xf0] sm:$0xff]
  %v46 = vld [vmem:[%s0 + $0xf8] sm:$0xff]
  %v47 = vld [vmem:[%s0 + $0x100] sm:$0xff]
  %v48 = vld [vmem:[%s0 + $0x108] sm:$0xff]
  %v49 = vld [vmem:[%s0 + $0x110] sm:$0xff]
  %v50 = vld [vmem:[%s1] sm:$0xf]
  %v51 = vld [vmem:[%s1 + $0x4] sm:$0xf]
  %v52 = vld [vmem:[%s1 + $0x8] sm:$0xf]
  %v53 = vld [vmem:[%s1 + $0xc] sm:$0xf]
  %v54 = vld [vmem:[%s1 + $0x10] sm:$0xf]
  %v55 = vld [vmem:[%s1 + $0x14] sm:$0xf]
  %v56 = vld [vmem:[%s1 + $0x18] sm:$0xf]
  %v57 = vld [vmem:[%s1 + $0x1c] sm:$0xf]
  %v58 = vld [vmem:[%s1 + $0x20] sm:$0xf]
  %v59 = vld [vmem:[%s1 + $0x24] sm:$0xf]
  %v60 = vld [vmem:[%s1 + $0x28] sm:$0xf]
  %v61 = vld [vmem:[%s1 + $0x2c] sm:$0xf]
  %v62 = vld [vmem:[%s1 + $0x30] sm:$0xf]
  %v63 = vld [vmem:[%s1 + $0x34] sm:$0xf]
  %v64 = vld [vmem:[%s1 + $0x38] sm:$0xf]
  %v65 = vld [vmem:[%s1 + $0x3c] sm:$0xf]
  %v66 = vld [vmem:[%s1 + $0x40] sm:$0xf]
  %v67 = vld [vmem:[%s1 + $0x44] sm:$0xf]
  %v68 = vld [vmem:[%s1 + $0x48] sm:$0xf]
  %v69 = vld [vmem:[%s1 + $0x4c] sm:$0xf]
  %v70 = vld [vmem:[%s1 + $0x50] sm:$0xf]
  %v71 = vld [vmem:[%s1 + $0x54] sm:$0xf]
  %v72 = vld [vmem:[%s1 + $0x58] sm:$0xf]
  %v73 = vld [vmem:[%s1 + $0x5c] sm:$0xf]
  %v74 = vld [vmem:[%s1 + $0x60] sm:$0xf]
  %v75 = vld [vmem:[%s1 + $0x64] sm:$0xf]
  %v76 = vld [vmem:[%s1 + $0x68] sm:$0xf]
  %v77 = vld [vmem:[%s1 + $0x6c] sm:$0xf]
  %v78 = vld [vmem:[%s1 + $0x70] sm:$0xf]
  %v79 = vld [vmem:[%s1 + $0x74] sm:$0xf]
  %v80 = vld [vmem:[%s1 + $0x78] sm:$0xf]
  %v81 = vld [vmem:[%s1 + $0x7c] sm:$0xf]
  %v82 = vld [vmem:[%s1 + $0x80] sm:$0xf]
  %v83 = vld [vmem:[%s1 + $0x84] sm:$0xf]
  %v84 = vld [vmem:[%s1 + $0x88] sm:$0xf]
  %v85 = vld [vmem:[%s1 + $0x8c] sm:$0xf]
  %v86 = vld [vmem:[%s1 + $0x90] sm:$0xf]
  %v87 = vld [vmem:[%s1 + $0x94] sm:$0xf]
  %v88 = vld [vmem:[%s1 + $0x98] sm:$0xf]
  %v89 = vld [vmem:[%s1 + $0x9c] sm:$0xf]
  %v90 = vld [vmem:[%s1 + $0xa0] sm:$0xf]
  %v91 = vld [vmem:[%s1 + $0xa4] sm:$0xf]
  %v92 = vld [vmem:[%s1 + $0xa8] sm:$0xf]
  %v93 = vld [vmem:[%s1 + $0xac] sm:$0xf]
  %v94 = vld [vmem:[%s1 + $0xb0] sm:$0xf]
  %v95 = vld [vmem:[%s1 + $0xb4] sm:$0xf]
  %v96 = vld [vmem:[%s1 + $0xb8] sm:$0xf]
  %v97 = vld [vmem:[%s1 + $0xbc] sm:$0xf]
  %v98 = vld [vmem:[%s1 + $0xc0] sm:$0xf]
  %v99 = vld [vmem:[%s1 + $0xc4] sm:$0xf]
  %v100 = vld [vmem:[%s1 + $0xc8] sm:$0xf]
  %v101 = vld [vmem:[%s1 + $0xcc] sm:$0xf]
  %v102 = vld [vmem:[%s1 + $0xd0] sm:$0xf]
  %v103 = vld [vmem:[%s1 + $0xd4] sm:$0xf]
  %v104 = vld [vmem:[%s1 + $0xd8] sm:$0xf]
  %v105 = vld [vmem:[%s1 + $0xdc] sm:$0xf]
  %v106 = vld [vmem:[%s1 + $0xe0] sm:$0xf]
  %v107 = vld [vmem:[%s1 + $0xe4] sm:$0xf]
  %v108 = vld [vmem:[%s1 + $0xe8] sm:$0xf]
  %v109 = vld [vmem:[%s1 + $0xec] sm:$0xf]
  %v110 = vld [vmem:[%s1 + $0xf0] sm:$0xf]
  %v111 = vld [vmem:[%s1 + $0xf4] sm:$0xf]
  %v112 = vld [vmem:[%s1 + $0xf8] sm:$0xf]
  %v113 = vld [vmem:[%s1 + $0xfc] sm:$0xf]
  %v114 = vld [vmem:[%s1 + $0x100] sm:$0xf]
  %v115 = vld [vmem:[%s1 + $0x104] sm:$0xf]
  %v116 = vld [vmem:[%s1 + $0x108] sm:$0xf]
  %v117 = vld [vmem:[%s1 + $0x10c] sm:$0xf]
  %v118 = vld [vmem:[%s1 + $0x110] sm:$0xf]
  %v119 = vld [vmem:[%s1 + $0x114] sm:$0xf]
  %v120 = vld [vmem:[%s1 + $0x118] sm:$0xf]
  %v121 = vld [vmem:[%s1 + $0x11c] sm:$0xf]
  %v122 = vld [vmem:[%s1 + $0x120] sm:$0xf]
  %v123 = vld [vmem:[%s1 + $0x124] sm:$0xf]
  %v124 = vld [vmem:[%s1 + $0x128] sm:$0xf]
  %v125 = vld [vmem:[%s1 + $0x12c] sm:$0xf]
  %v126 = vld [vmem:[%s1 + $0x130] sm:$0xf]
  %v127 = vld [vmem:[%s1 + $0x134] sm:$0xf]
  %v128 = vld [vmem:[%s1 + $0x138] sm:$0xf]
  %v129 = vld [vmem:[%s1 + $0x13c] sm:$0xf]
  %v130 = vld [vmem:[%s1 + $0x140] sm:$0xf]
  %v131 = vld [vmem:[%s1 + $0x144] sm:$0xf]
  %v132 = vld [vmem:[%s1 + $0x148] sm:$0xf]
  %v133 = vld [vmem:[%s1 + $0x14c] sm:$0xf]
  %v134 = vld [vmem:[%s1 + $0x150] sm:$0xf]
  %v135 = vld [vmem:[%s1 + $0x154] sm:$0xf]
  %v136 = vld [vmem:[%s1 + $0x158] sm:$0xf]
  %v137 = vld [vmem:[%s1 + $0x15c] sm:$0xf]
  %v138 = vld [vmem:[%s1 + $0x160] sm:$0xf]
  %v139 = vld [vmem:[%s1 + $0x164] sm:$0xf]
  %v140 = vld [vmem:[%s1 + $0x168] sm:$0xf]
  %v141 = vld [vmem:[%s1 + $0x16c] sm:$0xf]
  %v142 = vld [vmem:[%s1 + $0x170] sm:$0xf]
  %v143 = vld [vmem:[%s1 + $0x174] sm:$0xf]
  %v144 = vld [vmem:[%s1 + $0x178] sm:$0xf]
  %v145 = vld [vmem:[%s1 + $0x17c] sm:$0xf]
  %v146 = vld [vmem:[%s1 + $0x180] sm:$0xf]
  %v147 = vld [vmem:[%s1 + $0x184] sm:$0xf]
  %v148 = vld [vmem:[%s1 + $0x188] sm:$0xf]
  %v149 = vld [vmem:[%s1 + $0x18c] sm:$0xf]
  %v150 = vld [vmem:[%s1 + $0x190] sm:$0xf]
  %v151 = vld [vmem:[%s1 + $0x194] sm:$0xf]
  %v152 = vld [vmem:[%s1 + $0x198] sm:$0xf]
  %v153 = vld [vmem:[%s1 + $0x19c] sm:$0xf]
  %v154 = vld [vmem:[%s1 + $0x1a0] sm:$0xf]
  %v155 = vld [vmem:[%s1 + $0x1a4] sm:$0xf]
  %v156 = vld [vmem:[%s1 + $0x1a8] sm:$0xf]
  %v157 = vld [vmem:[%s1 + $0x1ac] sm:$0xf]
  %v158 = vld [vmem:[%s1 + $0x1b0] sm:$0xf]
  %v159 = vld [vmem:[%s1 + $0x1b4] sm:$0xf]
  %v160 = vld [vmem:[%s1 + $0x1b8] sm:$0xf]
  %v161 = vld [vmem:[%s1 + $0x1bc] sm:$0xf]
  %v162 = vld [vmem:[%s1 + $0x1c0] sm:$0xf]
  %v163 = vld [vmem:[%s1 + $0x1c4] sm:$0xf]
  %v164 = vld [vmem:[%s1 + $0x1c8] sm:$0xf]
  %v165 = vld [vmem:[%s1 + $0x1cc] sm:$0xf]
  %v166 = vld [vmem:[%s1 + $0x1d0] sm:$0xf]
  %v167 = vld [vmem:[%s1 + $0x1d4] sm:$0xf]
  %v168 = vld [vmem:[%s1 + $0x1d8] sm:$0xf]
  %v169 = vld [vmem:[%s1 + $0x1dc] sm:$0xf]
  %v170 = vld [vmem:[%s1 + $0x1e0] sm:$0xf]
  %v171 = vld [vmem:[%s1 + $0x1e4] sm:$0xf]
  %v172 = vld [vmem:[%s1 + $0x1e8] sm:$0xf]
  %v173 = vld [vmem:[%s1 + $0x1ec] sm:$0xf]
  %v174 = vld [vmem:[%s1 + $0x1f0] sm:$0xf]
  %v175 = vld [vmem:[%s1 + $0x1f4] sm:$0xf]
  %v176 = vld [vmem:[%s1 + $0x1f8] sm:$0xf]
  %v177 = vld [vmem:[%s1 + $0x1fc] sm:$0xf]
  %v178 = vld [vmem:[%s1 + $0x200] sm:$0xf]
  %v179 = vld [vmem:[%s1 + $0x204] sm:$0xf]
  %v180 = vld [vmem:[%s1 + $0x208] sm:$0xf]
  %v181 = vld [vmem:[%s1 + $0x20c] sm:$0xf]
  %v182 = vld [vmem:[%s1 + $0x210] sm:$0xf]
  %v183 = vld [vmem:[%s1 + $0x214] sm:$0xf]
  %v184 = vld [vmem:[%s1 + $0x218] sm:$0xf]
  %v185 = vld [vmem:[%s1 + $0x21c] sm:$0xf]
  %v186 = vld [vmem:[%s1 + $0x220] sm:$0xf]
  %v187 = vld [vmem:[%s1 + $0x224] sm:$0xf]
  %v188 = vld [vmem:[%s1 + $0x228] sm:$0xf]
  %v189 = vld [vmem:[%s1 + $0x22c] sm:$0xf]
  %v190 = vld [vmem:[%s1 + $0x230] sm:$0xf]
  %v191 = vld [vmem:[%s1 + $0x234] sm:$0xf]
  %v192 = vld [vmem:[%s1 + $0x238] sm:$0xf]
  %v193 = vld [vmem:[%s1 + $0x23c] sm:$0xf]
  %v194 = vld [vmem:[%s1 + $0x240] sm:$0xf]
  %v195 = vld [vmem:[%s1 + $0x244] sm:$0xf]
  %v196 = vld [vmem:[%s1 + $0x248] sm:$0xf]
  %v197 = vld [vmem:[%s1 + $0x24c] sm:$0xf]
  %v198 = vld [vmem:[%s1 + $0x250] sm:$0xf]
  %v199 = vld [vmem:[%s1 + $0x254] sm:$0xf]
  %v200 = vld [vmem:[%s1 + $0x258] sm:$0xf]
  %v201 = vld [vmem:[%s1 + $0x25c] sm:$0xf]
  %v202 = vld [vmem:[%s1 + $0x260] sm:$0xf]
  %v203 = vld [vmem:[%s1 + $0x264] sm:$0xf]
  %v204 = vld [vmem:[%s1 + $0x268] sm:$0xf]
  %v205 = vld [vmem:[%s1 + $0x26c] sm:$0xf]
  %v206 = vld [vmem:[%s1 + $0x270] sm:$0xf]
  %v207 = vld [vmem:[%s1 + $0x274] sm:$0xf]
  %v208 = vld [vmem:[%s1 + $0x278] sm:$0xf]
  %v209 = vld [vmem:[%s1 + $0x27c] sm:$0xf]
  %v210 = vld [vmem:[%s2] sm:$0x1]
  %v212 = vlaneseq
  %v213 = vshrl.u32 %v212, 7
  %v214 = vsub.s32 0, %v213
  %v215 = vrot.slane %v210, %v214
  %v252 = vunpack.c.l.b16 %v15
  %v253 = vunpack.c.h.b16 %v15
  %v254 = vunpack.c.l.b16 %v16
  %v255 = vunpack.c.h.b16 %v16
  %v256 = vunpack.c.l.b16 %v17
  %v257 = vunpack.c.h.b16 %v17
  %v258 = vunpack.c.l.b16 %v18
  %v259 = vunpack.c.h.b16 %v18
  %v260 = vunpack.c.l.b16 %v19
  %v261 = vunpack.c.h.b16 %v19
  %v262 = vunpack.c.l.b16 %v20
  %v263 = vunpack.c.h.b16 %v20
  %v264 = vunpack.c.l.b16 %v21
  %v265 = vunpack.c.h.b16 %v21
  %v266 = vunpack.c.l.b16 %v22
  %v267 = vunpack.c.h.b16 %v22
  %v268 = vunpack.c.l.b16 %v23
  %v269 = vunpack.c.h.b16 %v23
  %v270 = vunpack.c.l.b16 %v24
  %v271 = vunpack.c.h.b16 %v24
  %v272 = vunpack.c.l.b16 %v25
  %v273 = vunpack.c.h.b16 %v25
  %v274 = vunpack.c.l.b16 %v26
  %v275 = vunpack.c.h.b16 %v26
  %v276 = vunpack.c.l.b16 %v27
  %v277 = vunpack.c.h.b16 %v27
  %v278 = vunpack.c.l.b16 %v28
  %v279 = vunpack.c.h.b16 %v28
  %v280 = vunpack.c.l.b16 %v29
  %v281 = vunpack.c.h.b16 %v29
  %v282 = vunpack.c.l.b16 %v30
  %v283 = vunpack.c.h.b16 %v30
  %v284 = vunpack.c.l.b16 %v31
  %v285 = vunpack.c.h.b16 %v31
  %v286 = vunpack.c.l.b16 %v32
  %v287 = vunpack.c.h.b16 %v32
  %v288 = vunpack.c.l.b16 %v33
  %v289 = vunpack.c.h.b16 %v33
  %v290 = vunpack.c.l.b16 %v34
  %v291 = vunpack.c.h.b16 %v34
  %v292 = vunpack.c.l.b16 %v35
  %v293 = vunpack.c.h.b16 %v35
  %v294 = vunpack.c.l.b16 %v36
  %v295 = vunpack.c.h.b16 %v36
  %v296 = vunpack.c.l.b16 %v37
  %v297 = vunpack.c.h.b16 %v37
  %v298 = vunpack.c.l.b16 %v38
  %v299 = vunpack.c.h.b16 %v38
  %v300 = vunpack.c.l.b16 %v39
  %v301 = vunpack.c.h.b16 %v39
  %v302 = vunpack.c.l.b16 %v40
  %v303 = vunpack.c.h.b16 %v40
  %v304 = vunpack.c.l.b16 %v41
  %v305 = vunpack.c.h.b16 %v41
  %v306 = vunpack.c.l.b16 %v42
  %v307 = vunpack.c.h.b16 %v42
  %v308 = vunpack.c.l.b16 %v43
  %v309 = vunpack.c.h.b16 %v43
  %v310 = vunpack.c.l.b16 %v44
  %v311 = vunpack.c.h.b16 %v44
  %v312 = vunpack.c.l.b16 %v45
  %v313 = vunpack.c.h.b16 %v45
  %v314 = vunpack.c.l.b16 %v46
  %v315 = vunpack.c.h.b16 %v46
  %v316 = vunpack.c.l.b16 %v47
  %v317 = vunpack.c.h.b16 %v47
  %v318 = vunpack.c.l.b16 %v48
  %v319 = vunpack.c.h.b16 %v48
  %v320 = vunpack.c.l.b16 %v49
  %v321 = vunpack.c.h.b16 %v49
  %v322 = vpack.c.b16 %v262, %v252
  %v323 = vpack.c.b16 %v263, %v253
  %v324 = vpack.c.b16 %v264, %v254
  %v325 = vpack.c.b16 %v265, %v255
  %v326 = vpack.c.b16 %v266, %v256
  %v327 = vpack.c.b16 %v267, %v257
  %v328 = vpack.c.b16 %v268, %v258
  %v329 = vpack.c.b16 %v269, %v259
  %v330 = vpack.c.b16 %v270, %v260
  %v331 = vpack.c.b16 %v271, %v261
  %v332 = vpack.c.b16 %v282, %v272
  %v333 = vpack.c.b16 %v283, %v273
  %v334 = vpack.c.b16 %v284, %v274
  %v335 = vpack.c.b16 %v285, %v275
  %v336 = vpack.c.b16 %v286, %v276
  %v337 = vpack.c.b16 %v287, %v277
  %v338 = vpack.c.b16 %v288, %v278
  %v339 = vpack.c.b16 %v289, %v279
  %v340 = vpack.c.b16 %v290, %v280
  %v341 = vpack.c.b16 %v291, %v281
  %v342 = vpack.c.b16 %v302, %v292
  %v343 = vpack.c.b16 %v303, %v293
  %v344 = vpack.c.b16 %v304, %v294
  %v345 = vpack.c.b16 %v305, %v295
  %v346 = vpack.c.b16 %v306, %v296
  %v347 = vpack.c.b16 %v307, %v297
  %v348 = vpack.c.b16 %v308, %v298
  %v349 = vpack.c.b16 %v309, %v299
  %v350 = vpack.c.b16 %v310, %v300
  %v351 = vpack.c.b16 %v311, %v301
  %v352 = vpack.c.b16 %v312, %v312
  %v353 = vpack.c.b16 %v313, %v313
  %v354 = vpack.c.b16 %v314, %v314
  %v355 = vpack.c.b16 %v315, %v315
  %v356 = vpack.c.b16 %v316, %v316
  %v357 = vpack.c.b16 %v317, %v317
  %v358 = vpack.c.b16 %v318, %v318
  %v359 = vpack.c.b16 %v319, %v319
  %v360 = vpack.c.b16 %v320, %v320
  %v361 = vpack.c.b16 %v321, %v321
  %v562 = vunpack.c.l.b16 %v50
  %v563 = vunpack.c.l.b16 %v51
  %v564 = vunpack.c.l.b16 %v52
  %v565 = vunpack.c.l.b16 %v53
  %v566 = vunpack.c.l.b16 %v54
  %v567 = vunpack.c.l.b16 %v55
  %v568 = vunpack.c.l.b16 %v56
  %v569 = vunpack.c.l.b16 %v57
  %v570 = vunpack.c.l.b16 %v58
  %v571 = vunpack.c.l.b16 %v59
  %v572 = vunpack.c.l.b16 %v60
  %v573 = vunpack.c.l.b16 %v61
  %v574 = vunpack.c.l.b16 %v62
  %v575 = vunpack.c.l.b16 %v63
  %v576 = vunpack.c.l.b16 %v64
  %v577 = vunpack.c.l.b16 %v65
  %v578 = vunpack.c.l.b16 %v66
  %v579 = vunpack.c.l.b16 %v67
  %v580 = vunpack.c.l.b16 %v68
  %v581 = vunpack.c.l.b16 %v69
  %v582 = vunpack.c.l.b16 %v70
  %v583 = vunpack.c.l.b16 %v71
  %v584 = vunpack.c.l.b16 %v72
  %v585 = vunpack.c.l.b16 %v73
  %v586 = vunpack.c.l.b16 %v74
  %v587 = vunpack.c.l.b16 %v75
  %v588 = vunpack.c.l.b16 %v76
  %v589 = vunpack.c.l.b16 %v77
  %v590 = vunpack.c.l.b16 %v78
  %v591 = vunpack.c.l.b16 %v79
  %v592 = vunpack.c.l.b16 %v80
  %v593 = vunpack.c.l.b16 %v81
  %v594 = vunpack.c.l.b16 %v82
  %v595 = vunpack.c.l.b16 %v83
  %v596 = vunpack.c.l.b16 %v84
  %v597 = vunpack.c.l.b16 %v85
  %v598 = vunpack.c.l.b16 %v86
  %v599 = vunpack.c.l.b16 %v87
  %v600 = vunpack.c.l.b16 %v88
  %v601 = vunpack.c.l.b16 %v89
  %v602 = vunpack.c.l.b16 %v90
  %v603 = vunpack.c.l.b16 %v91
  %v604 = vunpack.c.l.b16 %v92
  %v605 = vunpack.c.l.b16 %v93
  %v606 = vunpack.c.l.b16 %v94
  %v607 = vunpack.c.l.b16 %v95
  %v608 = vunpack.c.l.b16 %v96
  %v609 = vunpack.c.l.b16 %v97
  %v610 = vunpack.c.l.b16 %v98
  %v611 = vunpack.c.l.b16 %v99
  %v612 = vunpack.c.l.b16 %v100
  %v613 = vunpack.c.l.b16 %v101
  %v614 = vunpack.c.l.b16 %v102
  %v615 = vunpack.c.l.b16 %v103
  %v616 = vunpack.c.l.b16 %v104
  %v617 = vunpack.c.l.b16 %v105
  %v618 = vunpack.c.l.b16 %v106
  %v619 = vunpack.c.l.b16 %v107
  %v620 = vunpack.c.l.b16 %v108
  %v621 = vunpack.c.l.b16 %v109
  %v622 = vunpack.c.l.b16 %v110
  %v623 = vunpack.c.l.b16 %v111
  %v624 = vunpack.c.l.b16 %v112
  %v625 = vunpack.c.l.b16 %v113
  %v626 = vunpack.c.l.b16 %v114
  %v627 = vunpack.c.l.b16 %v115
  %v628 = vunpack.c.l.b16 %v116
  %v629 = vunpack.c.l.b16 %v117
  %v630 = vunpack.c.l.b16 %v118
  %v631 = vunpack.c.l.b16 %v119
  %v632 = vunpack.c.l.b16 %v120
  %v633 = vunpack.c.l.b16 %v121
  %v634 = vunpack.c.l.b16 %v122
  %v635 = vunpack.c.l.b16 %v123
  %v636 = vunpack.c.l.b16 %v124
  %v637 = vunpack.c.l.b16 %v125
  %v638 = vunpack.c.l.b16 %v126
  %v639 = vunpack.c.l.b16 %v127
  %v640 = vunpack.c.l.b16 %v128
  %v641 = vunpack.c.l.b16 %v129
  %v642 = vunpack.c.l.b16 %v130
  %v643 = vunpack.c.l.b16 %v131
  %v644 = vunpack.c.l.b16 %v132
  %v645 = vunpack.c.l.b16 %v133
  %v646 = vunpack.c.l.b16 %v134
  %v647 = vunpack.c.l.b16 %v135
  %v648 = vunpack.c.l.b16 %v136
  %v649 = vunpack.c.l.b16 %v137
  %v650 = vunpack.c.l.b16 %v138
  %v651 = vunpack.c.l.b16 %v139
  %v652 = vunpack.c.l.b16 %v140
  %v653 = vunpack.c.l.b16 %v141
  %v654 = vunpack.c.l.b16 %v142
  %v655 = vunpack.c.l.b16 %v143
  %v656 = vunpack.c.l.b16 %v144
  %v657 = vunpack.c.l.b16 %v145
  %v658 = vunpack.c.l.b16 %v146
  %v659 = vunpack.c.l.b16 %v147
  %v660 = vunpack.c.l.b16 %v148
  %v661 = vunpack.c.l.b16 %v149
  %v662 = vunpack.c.l.b16 %v150
  %v663 = vunpack.c.l.b16 %v151
  %v664 = vunpack.c.l.b16 %v152
  %v665 = vunpack.c.l.b16 %v153
  %v666 = vunpack.c.l.b16 %v154
  %v667 = vunpack.c.l.b16 %v155
  %v668 = vunpack.c.l.b16 %v156
  %v669 = vunpack.c.l.b16 %v157
  %v670 = vunpack.c.l.b16 %v158
  %v671 = vunpack.c.l.b16 %v159
  %v672 = vunpack.c.l.b16 %v160
  %v673 = vunpack.c.l.b16 %v161
  %v674 = vunpack.c.l.b16 %v162
  %v675 = vunpack.c.l.b16 %v163
  %v676 = vunpack.c.l.b16 %v164
  %v677 = vunpack.c.l.b16 %v165
  %v678 = vunpack.c.l.b16 %v166
  %v679 = vunpack.c.l.b16 %v167
  %v680 = vunpack.c.l.b16 %v168
  %v681 = vunpack.c.l.b16 %v169
  %v682 = vunpack.c.l.b16 %v170
  %v683 = vunpack.c.l.b16 %v171
  %v684 = vunpack.c.l.b16 %v172
  %v685 = vunpack.c.l.b16 %v173
  %v686 = vunpack.c.l.b16 %v174
  %v687 = vunpack.c.l.b16 %v175
  %v688 = vunpack.c.l.b16 %v176
  %v689 = vunpack.c.l.b16 %v177
  %v690 = vunpack.c.l.b16 %v178
  %v691 = vunpack.c.l.b16 %v179
  %v692 = vunpack.c.l.b16 %v180
  %v693 = vunpack.c.l.b16 %v181
  %v694 = vunpack.c.l.b16 %v182
  %v695 = vunpack.c.l.b16 %v183
  %v696 = vunpack.c.l.b16 %v184
  %v697 = vunpack.c.l.b16 %v185
  %v698 = vunpack.c.l.b16 %v186
  %v699 = vunpack.c.l.b16 %v187
  %v700 = vunpack.c.l.b16 %v188
  %v701 = vunpack.c.l.b16 %v189
  %v702 = vunpack.c.l.b16 %v190
  %v703 = vunpack.c.l.b16 %v191
  %v704 = vunpack.c.l.b16 %v192
  %v705 = vunpack.c.l.b16 %v193
  %v706 = vunpack.c.l.b16 %v194
  %v707 = vunpack.c.l.b16 %v195
  %v708 = vunpack.c.l.b16 %v196
  %v709 = vunpack.c.l.b16 %v197
  %v710 = vunpack.c.l.b16 %v198
  %v711 = vunpack.c.l.b16 %v199
  %v712 = vunpack.c.l.b16 %v200
  %v713 = vunpack.c.l.b16 %v201
  %v714 = vunpack.c.l.b16 %v202
  %v715 = vunpack.c.l.b16 %v203
  %v716 = vunpack.c.l.b16 %v204
  %v717 = vunpack.c.l.b16 %v205
  %v718 = vunpack.c.l.b16 %v206
  %v719 = vunpack.c.l.b16 %v207
  %v720 = vunpack.c.l.b16 %v208
  %v721 = vunpack.c.l.b16 %v209
  %v722 = vpack.c.b16 %v563, %v562
  %v723 = vpack.c.b16 %v565, %v564
  %v724 = vpack.c.b16 %v567, %v566
  %v725 = vpack.c.b16 %v569, %v568
  %v726 = vpack.c.b16 %v571, %v570
  %v727 = vpack.c.b16 %v573, %v572
  %v728 = vpack.c.b16 %v575, %v574
  %v729 = vpack.c.b16 %v577, %v576
  %v730 = vpack.c.b16 %v579, %v578
  %v731 = vpack.c.b16 %v581, %v580
  %v732 = vpack.c.b16 %v583, %v582
  %v733 = vpack.c.b16 %v585, %v584
  %v734 = vpack.c.b16 %v587, %v586
  %v735 = vpack.c.b16 %v589, %v588
  %v736 = vpack.c.b16 %v591, %v590
  %v737 = vpack.c.b16 %v593, %v592
  %v738 = vpack.c.b16 %v595, %v594
  %v739 = vpack.c.b16 %v597, %v596
  %v740 = vpack.c.b16 %v599, %v598
  %v741 = vpack.c.b16 %v601, %v600
  %v742 = vpack.c.b16 %v603, %v602
  %v743 = vpack.c.b16 %v605, %v604
  %v744 = vpack.c.b16 %v607, %v606
  %v745 = vpack.c.b16 %v609, %v608
  %v746 = vpack.c.b16 %v611, %v610
  %v747 = vpack.c.b16 %v613, %v612
  %v748 = vpack.c.b16 %v615, %v614
  %v749 = vpack.c.b16 %v617, %v616
  %v750 = vpack.c.b16 %v619, %v618
  %v751 = vpack.c.b16 %v621, %v620
  %v752 = vpack.c.b16 %v623, %v622
  %v753 = vpack.c.b16 %v625, %v624
  %v754 = vpack.c.b16 %v627, %v626
  %v755 = vpack.c.b16 %v629, %v628
  %v756 = vpack.c.b16 %v631, %v630
  %v757 = vpack.c.b16 %v633, %v632
  %v758 = vpack.c.b16 %v635, %v634
  %v759 = vpack.c.b16 %v637, %v636
  %v760 = vpack.c.b16 %v639, %v638
  %v761 = vpack.c.b16 %v641, %v640
  %v762 = vpack.c.b16 %v643, %v642
  %v763 = vpack.c.b16 %v645, %v644
  %v764 = vpack.c.b16 %v647, %v646
  %v765 = vpack.c.b16 %v649, %v648
  %v766 = vpack.c.b16 %v651, %v650
  %v767 = vpack.c.b16 %v653, %v652
  %v768 = vpack.c.b16 %v655, %v654
  %v769 = vpack.c.b16 %v657, %v656
  %v770 = vpack.c.b16 %v659, %v658
  %v771 = vpack.c.b16 %v661, %v660
  %v772 = vpack.c.b16 %v663, %v662
  %v773 = vpack.c.b16 %v665, %v664
  %v774 = vpack.c.b16 %v667, %v666
  %v775 = vpack.c.b16 %v669, %v668
  %v776 = vpack.c.b16 %v671, %v670
  %v777 = vpack.c.b16 %v673, %v672
  %v778 = vpack.c.b16 %v675, %v674
  %v779 = vpack.c.b16 %v677, %v676
  %v780 = vpack.c.b16 %v679, %v678
  %v781 = vpack.c.b16 %v681, %v680
  %v782 = vpack.c.b16 %v683, %v682
  %v783 = vpack.c.b16 %v685, %v684
  %v784 = vpack.c.b16 %v687, %v686
  %v785 = vpack.c.b16 %v689, %v688
  %v786 = vpack.c.b16 %v691, %v690
  %v787 = vpack.c.b16 %v693, %v692
  %v788 = vpack.c.b16 %v695, %v694
  %v789 = vpack.c.b16 %v697, %v696
  %v790 = vpack.c.b16 %v699, %v698
  %v791 = vpack.c.b16 %v701, %v700
  %v792 = vpack.c.b16 %v703, %v702
  %v793 = vpack.c.b16 %v705, %v704
  %v794 = vpack.c.b16 %v707, %v706
  %v795 = vpack.c.b16 %v709, %v708
  %v796 = vpack.c.b16 %v711, %v710
  %v797 = vpack.c.b16 %v713, %v712
  %v798 = vpack.c.b16 %v715, %v714
  %v799 = vpack.c.b16 %v717, %v716
  %v800 = vpack.c.b16 %v719, %v718
  %v801 = vpack.c.b16 %v721, %v720
  %882 = vmatprep.subr.bf16.mxu0 0
  %883 = vmatpush1.bf16.msra.mxu0 %v729
  %884 = vmatprep.subr.bf16.mxu0 0
  %885 = vmatpush1.bf16.msra.mxu0 %v728
  %886 = vmatprep.subr.bf16.mxu0 0
  %887 = vmatpush1.bf16.msra.mxu0 %v727
  %888 = vmatprep.subr.bf16.mxu0 0
  %889 = vmatpush1.bf16.msra.mxu0 %v726
  %890 = vmatprep.subr.bf16.mxu0 0
  %891 = vmatpush1.bf16.msra.mxu0 %v725
  %892 = vmatprep.subr.bf16.mxu0 0
  %893 = vmatpush1.bf16.msra.mxu0 %v724
  %894 = vmatprep.subr.bf16.mxu0 0
  %895 = vmatpush1.bf16.msra.mxu0 %v723
  %896 = vmatprep.subr.bf16.mxu0 0
  %897 = vmatpush1.bf16.msra.mxu0 %v722
  %898 = vmatprep.subr.bf16.mxu0 0
  %899 = vmatpush2.bf16.msra.mxu0 %v737
  %900 = vmatprep.subr.bf16.mxu0 0
  %901 = vmatpush2.bf16.msra.mxu0 %v736
  %902 = vmatprep.subr.bf16.mxu0 0
  %903 = vmatpush2.bf16.msra.mxu0 %v735
  %904 = vmatprep.subr.bf16.mxu0 0
  %905 = vmatpush2.bf16.msra.mxu0 %v734
  %906 = vmatprep.subr.bf16.mxu0 0
  %907 = vmatpush2.bf16.msra.mxu0 %v733
  %908 = vmatprep.subr.bf16.mxu0 0
  %909 = vmatpush2.bf16.msra.mxu0 %v732
  %910 = vmatprep.subr.bf16.mxu0 0
  %911 = vmatpush2.bf16.msra.mxu0 %v731
  %912 = vmatprep.subr.bf16.mxu0 0
  %913 = vmatpush2.bf16.msra.mxu0 %v730
  %914 = vmatprep.mubr.bf16.mxu0 %v323
  %915 = vmatmul.mubr.bf16.gmra.mxu0 %v322
  %v916 = vpop.f32.mrf.mxu0
  %v917 = vadd.f32 %v215, %v916
  %v918 = vpop.f32.mrf.mxu0
  %v919 = vpop.f32.mrf.mxu0
  %v920 = vadd.f32 %v215, %v919
  %v921 = vpop.f32.mrf.mxu0
  %922 = vmatprep.mubr.bf16.mxu0 %v333
  %923 = vmatmul.mubr.bf16.gmra.mxu0 %v332
  %v924 = vpop.f32.mrf.mxu0
  %v925 = vadd.f32 %v215, %v924
  %v926 = vpop.f32.mrf.mxu0
  %v927 = vpop.f32.mrf.mxu0
  %v928 = vadd.f32 %v215, %v927
  %v929 = vpop.f32.mrf.mxu0
  %930 = vmatprep.mubr.bf16.mxu0 %v343
  %931 = vmatmul.mubr.bf16.gmra.mxu0 %v342
  %v932 = vpop.f32.mrf.mxu0
  %v933 = vadd.f32 %v215, %v932
  %v934 = vpop.f32.mrf.mxu0
  %v935 = vpop.f32.mrf.mxu0
  %v936 = vadd.f32 %v215, %v935
  %v937 = vpop.f32.mrf.mxu0
  %938 = vmatprep.mubr.bf16.mxu0 %v353
  %939 = vmatmul.mubr.bf16.gmra.mxu0 %v352
  %v940 = vpop.f32.mrf.mxu0
  %v941 = vadd.f32 %v215, %v940
  %v942 = vpop.f32.mrf.mxu0
  %v943 = vpop.f32.mrf.mxu0
  %v944 = vpop.f32.mrf.mxu0
  %945 = vdwg.mxu0
  %946 = vmatprep.subr.bf16.mxu0 0
  %947 = vmatpush1.bf16.msra.mxu0 %v745
  %948 = vmatprep.subr.bf16.mxu0 0
  %949 = vmatpush1.bf16.msra.mxu0 %v744
  %950 = vmatprep.subr.bf16.mxu0 0
  %951 = vmatpush1.bf16.msra.mxu0 %v743
  %952 = vmatprep.subr.bf16.mxu0 0
  %953 = vmatpush1.bf16.msra.mxu0 %v742
  %954 = vmatprep.subr.bf16.mxu0 0
  %955 = vmatpush1.bf16.msra.mxu0 %v741
  %956 = vmatprep.subr.bf16.mxu0 0
  %957 = vmatpush1.bf16.msra.mxu0 %v740
  %958 = vmatprep.subr.bf16.mxu0 0
  %959 = vmatpush1.bf16.msra.mxu0 %v739
  %960 = vmatprep.subr.bf16.mxu0 0
  %961 = vmatpush1.bf16.msra.mxu0 %v738
  %962 = vmatprep.subr.bf16.mxu0 0
  %963 = vmatpush2.bf16.msra.mxu0 %v753
  %964 = vmatprep.subr.bf16.mxu0 0
  %965 = vmatpush2.bf16.msra.mxu0 %v752
  %966 = vmatprep.subr.bf16.mxu0 0
  %967 = vmatpush2.bf16.msra.mxu0 %v751
  %968 = vmatprep.subr.bf16.mxu0 0
  %969 = vmatpush2.bf16.msra.mxu0 %v750
  %970 = vmatprep.subr.bf16.mxu0 0
  %971 = vmatpush2.bf16.msra.mxu0 %v749
  %972 = vmatprep.subr.bf16.mxu0 0
  %973 = vmatpush2.bf16.msra.mxu0 %v748
  %974 = vmatprep.subr.bf16.mxu0 0
  %975 = vmatpush2.bf16.msra.mxu0 %v747
  %976 = vmatprep.subr.bf16.mxu0 0
  %977 = vmatpush2.bf16.msra.mxu0 %v746
  %978 = vmatprep.mubr.bf16.mxu0 %v325
  %979 = vmatmul.mubr.bf16.gmra.mxu0 %v324
  %v980 = vpop.f32.mrf.mxu0
  %v981 = vadd.f32 %v917, %v980
  %v982 = vpop.f32.mrf.mxu0
  %v983 = vpop.f32.mrf.mxu0
  %v984 = vadd.f32 %v920, %v983
  %v985 = vpop.f32.mrf.mxu0
  %986 = vmatprep.mubr.bf16.mxu0 %v335
  %987 = vmatmul.mubr.bf16.gmra.mxu0 %v334
  %v988 = vpop.f32.mrf.mxu0
  %v989 = vadd.f32 %v925, %v988
  %v990 = vpop.f32.mrf.mxu0
  %v991 = vpop.f32.mrf.mxu0
  %v992 = vadd.f32 %v928, %v991
  %v993 = vpop.f32.mrf.mxu0
  %994 = vmatprep.mubr.bf16.mxu0 %v345
  %995 = vmatmul.mubr.bf16.gmra.mxu0 %v344
  %v996 = vpop.f32.mrf.mxu0
  %v997 = vadd.f32 %v933, %v996
  %v998 = vpop.f32.mrf.mxu0
  %v999 = vpop.f32.mrf.mxu0
  %v1000 = vadd.f32 %v936, %v999
  %v1001 = vpop.f32.mrf.mxu0
  %1002 = vmatprep.mubr.bf16.mxu0 %v355
  %1003 = vmatmul.mubr.bf16.gmra.mxu0 %v354
  %v1004 = vpop.f32.mrf.mxu0
  %v1005 = vadd.f32 %v941, %v1004
  %v1006 = vpop.f32.mrf.mxu0
  %v1007 = vpop.f32.mrf.mxu0
  %v1008 = vpop.f32.mrf.mxu0
  %1009 = vdwg.mxu0
  %1010 = vmatprep.subr.bf16.mxu0 0
  %1011 = vmatpush1.bf16.msra.mxu0 %v761
  %1012 = vmatprep.subr.bf16.mxu0 0
  %1013 = vmatpush1.bf16.msra.mxu0 %v760
  %1014 = vmatprep.subr.bf16.mxu0 0
  %1015 = vmatpush1.bf16.msra.mxu0 %v759
  %1016 = vmatprep.subr.bf16.mxu0 0
  %1017 = vmatpush1.bf16.msra.mxu0 %v758
  %1018 = vmatprep.subr.bf16.mxu0 0
  %1019 = vmatpush1.bf16.msra.mxu0 %v757
  %1020 = vmatprep.subr.bf16.mxu0 0
  %1021 = vmatpush1.bf16.msra.mxu0 %v756
  %1022 = vmatprep.subr.bf16.mxu0 0
  %1023 = vmatpush1.bf16.msra.mxu0 %v755
  %1024 = vmatprep.subr.bf16.mxu0 0
  %1025 = vmatpush1.bf16.msra.mxu0 %v754
  %1026 = vmatprep.subr.bf16.mxu0 0
  %1027 = vmatpush2.bf16.msra.mxu0 %v769
  %1028 = vmatprep.subr.bf16.mxu0 0
  %1029 = vmatpush2.bf16.msra.mxu0 %v768
  %1030 = vmatprep.subr.bf16.mxu0 0
  %1031 = vmatpush2.bf16.msra.mxu0 %v767
  %1032 = vmatprep.subr.bf16.mxu0 0
  %1033 = vmatpush2.bf16.msra.mxu0 %v766
  %1034 = vmatprep.subr.bf16.mxu0 0
  %1035 = vmatpush2.bf16.msra.mxu0 %v765
  %1036 = vmatprep.subr.bf16.mxu0 0
  %1037 = vmatpush2.bf16.msra.mxu0 %v764
  %1038 = vmatprep.subr.bf16.mxu0 0
  %1039 = vmatpush2.bf16.msra.mxu0 %v763
  %1040 = vmatprep.subr.bf16.mxu0 0
  %1041 = vmatpush2.bf16.msra.mxu0 %v762
  %1042 = vmatprep.mubr.bf16.mxu0 %v327
  %1043 = vmatmul.mubr.bf16.gmra.mxu0 %v326
  %v1044 = vpop.f32.mrf.mxu0
  %v1045 = vadd.f32 %v981, %v1044
  %v1046 = vpop.f32.mrf.mxu0
  %v1047 = vpop.f32.mrf.mxu0
  %v1048 = vadd.f32 %v984, %v1047
  %v1049 = vpop.f32.mrf.mxu0
  %1050 = vmatprep.mubr.bf16.mxu0 %v337
  %1051 = vmatmul.mubr.bf16.gmra.mxu0 %v336
  %v1052 = vpop.f32.mrf.mxu0
  %v1053 = vadd.f32 %v989, %v1052
  %v1054 = vpop.f32.mrf.mxu0
  %v1055 = vpop.f32.mrf.mxu0
  %v1056 = vadd.f32 %v992, %v1055
  %v1057 = vpop.f32.mrf.mxu0
  %1058 = vmatprep.mubr.bf16.mxu0 %v347
  %1059 = vmatmul.mubr.bf16.gmra.mxu0 %v346
  %v1060 = vpop.f32.mrf.mxu0
  %v1061 = vadd.f32 %v997, %v1060
  %v1062 = vpop.f32.mrf.mxu0
  %v1063 = vpop.f32.mrf.mxu0
  %v1064 = vadd.f32 %v1000, %v1063
  %v1065 = vpop.f32.mrf.mxu0
  %1066 = vmatprep.mubr.bf16.mxu0 %v357
  %1067 = vmatmul.mubr.bf16.gmra.mxu0 %v356
  %v1068 = vpop.f32.mrf.mxu0
  %v1069 = vadd.f32 %v1005, %v1068
  %v1070 = vpop.f32.mrf.mxu0
  %v1071 = vpop.f32.mrf.mxu0
  %v1072 = vpop.f32.mrf.mxu0
  %1073 = vdwg.mxu0
  %1074 = vmatprep.subr.bf16.mxu0 0
  %1075 = vmatpush1.bf16.msra.mxu0 %v777
  %1076 = vmatprep.subr.bf16.mxu0 0
  %1077 = vmatpush1.bf16.msra.mxu0 %v776
  %1078 = vmatprep.subr.bf16.mxu0 0
  %1079 = vmatpush1.bf16.msra.mxu0 %v775
  %1080 = vmatprep.subr.bf16.mxu0 0
  %1081 = vmatpush1.bf16.msra.mxu0 %v774
  %1082 = vmatprep.subr.bf16.mxu0 0
  %1083 = vmatpush1.bf16.msra.mxu0 %v773
  %1084 = vmatprep.subr.bf16.mxu0 0
  %1085 = vmatpush1.bf16.msra.mxu0 %v772
  %1086 = vmatprep.subr.bf16.mxu0 0
  %1087 = vmatpush1.bf16.msra.mxu0 %v771
  %1088 = vmatprep.subr.bf16.mxu0 0
  %1089 = vmatpush1.bf16.msra.mxu0 %v770
  %1090 = vmatprep.subr.bf16.mxu0 0
  %1091 = vmatpush2.bf16.msra.mxu0 %v785
  %1092 = vmatprep.subr.bf16.mxu0 0
  %1093 = vmatpush2.bf16.msra.mxu0 %v784
  %1094 = vmatprep.subr.bf16.mxu0 0
  %1095 = vmatpush2.bf16.msra.mxu0 %v783
  %1096 = vmatprep.subr.bf16.mxu0 0
  %1097 = vmatpush2.bf16.msra.mxu0 %v782
  %1098 = vmatprep.subr.bf16.mxu0 0
  %1099 = vmatpush2.bf16.msra.mxu0 %v781
  %1100 = vmatprep.subr.bf16.mxu0 0
  %1101 = vmatpush2.bf16.msra.mxu0 %v780
  %1102 = vmatprep.subr.bf16.mxu0 0
  %1103 = vmatpush2.bf16.msra.mxu0 %v779
  %1104 = vmatprep.subr.bf16.mxu0 0
  %1105 = vmatpush2.bf16.msra.mxu0 %v778
  %1106 = vmatprep.mubr.bf16.mxu0 %v329
  %1107 = vmatmul.mubr.bf16.gmra.mxu0 %v328
  %v1108 = vpop.f32.mrf.mxu0
  %v1109 = vadd.f32 %v1045, %v1108
  %v1110 = vpop.f32.mrf.mxu0
  %v1111 = vpop.f32.mrf.mxu0
  %v1112 = vadd.f32 %v1048, %v1111
  %v1113 = vpop.f32.mrf.mxu0
  %1114 = vmatprep.mubr.bf16.mxu0 %v339
  %1115 = vmatmul.mubr.bf16.gmra.mxu0 %v338
  %v1116 = vpop.f32.mrf.mxu0
  %v1117 = vadd.f32 %v1053, %v1116
  %v1118 = vpop.f32.mrf.mxu0
  %v1119 = vpop.f32.mrf.mxu0
  %v1120 = vadd.f32 %v1056, %v1119
  %v1121 = vpop.f32.mrf.mxu0
  %1122 = vmatprep.mubr.bf16.mxu0 %v349
  %1123 = vmatmul.mubr.bf16.gmra.mxu0 %v348
  %v1124 = vpop.f32.mrf.mxu0
  %v1125 = vadd.f32 %v1061, %v1124
  %v1126 = vpop.f32.mrf.mxu0
  %v1127 = vpop.f32.mrf.mxu0
  %v1128 = vadd.f32 %v1064, %v1127
  %v1129 = vpop.f32.mrf.mxu0
  %1130 = vmatprep.mubr.bf16.mxu0 %v359
  %1131 = vmatmul.mubr.bf16.gmra.mxu0 %v358
  %v1132 = vpop.f32.mrf.mxu0
  %v1133 = vadd.f32 %v1069, %v1132
  %v1134 = vpop.f32.mrf.mxu0
  %v1135 = vpop.f32.mrf.mxu0
  %v1136 = vpop.f32.mrf.mxu0
  %1137 = vdwg.mxu0
  %1138 = vmatprep.subr.bf16.mxu0 0
  %1139 = vmatpush1.bf16.msra.mxu0 %v793
  %1140 = vmatprep.subr.bf16.mxu0 0
  %1141 = vmatpush1.bf16.msra.mxu0 %v792
  %1142 = vmatprep.subr.bf16.mxu0 0
  %1143 = vmatpush1.bf16.msra.mxu0 %v791
  %1144 = vmatprep.subr.bf16.mxu0 0
  %1145 = vmatpush1.bf16.msra.mxu0 %v790
  %1146 = vmatprep.subr.bf16.mxu0 0
  %1147 = vmatpush1.bf16.msra.mxu0 %v789
  %1148 = vmatprep.subr.bf16.mxu0 0
  %1149 = vmatpush1.bf16.msra.mxu0 %v788
  %1150 = vmatprep.subr.bf16.mxu0 0
  %1151 = vmatpush1.bf16.msra.mxu0 %v787
  %1152 = vmatprep.subr.bf16.mxu0 0
  %1153 = vmatpush1.bf16.msra.mxu0 %v786
  %1154 = vmatprep.subr.bf16.mxu0 0
  %1155 = vmatpush2.bf16.msra.mxu0 %v801
  %1156 = vmatprep.subr.bf16.mxu0 0
  %1157 = vmatpush2.bf16.msra.mxu0 %v800
  %1158 = vmatprep.subr.bf16.mxu0 0
  %1159 = vmatpush2.bf16.msra.mxu0 %v799
  %1160 = vmatprep.subr.bf16.mxu0 0
  %1161 = vmatpush2.bf16.msra.mxu0 %v798
  %1162 = vmatprep.subr.bf16.mxu0 0
  %1163 = vmatpush2.bf16.msra.mxu0 %v797
  %1164 = vmatprep.subr.bf16.mxu0 0
  %1165 = vmatpush2.bf16.msra.mxu0 %v796
  %1166 = vmatprep.subr.bf16.mxu0 0
  %1167 = vmatpush2.bf16.msra.mxu0 %v795
  %1168 = vmatprep.subr.bf16.mxu0 0
  %1169 = vmatpush2.bf16.msra.mxu0 %v794
  %1170 = vmatprep.mubr.bf16.mxu0 %v331
  %1171 = vmatmul.mubr.bf16.gmra.mxu0 %v330
  %v1172 = vpop.f32.mrf.mxu0
  %v1173 = vadd.f32 %v1109, %v1172
  %v1174 = vpop.f32.mrf.mxu0
  %v1175 = vpop.f32.mrf.mxu0
  %v1176 = vadd.f32 %v1112, %v1175
  %v1177 = vpop.f32.mrf.mxu0
  %1178 = vmatprep.mubr.bf16.mxu0 %v341
  %1179 = vmatmul.mubr.bf16.gmra.mxu0 %v340
  %v1180 = vpop.f32.mrf.mxu0
  %v1181 = vadd.f32 %v1117, %v1180
  %v1182 = vpop.f32.mrf.mxu0
  %v1183 = vpop.f32.mrf.mxu0
  %v1184 = vadd.f32 %v1120, %v1183
  %v1185 = vpop.f32.mrf.mxu0
  %1186 = vmatprep.mubr.bf16.mxu0 %v351
  %1187 = vmatmul.mubr.bf16.gmra.mxu0 %v350
  %v1188 = vpop.f32.mrf.mxu0
  %v1189 = vadd.f32 %v1125, %v1188
  %v1190 = vpop.f32.mrf.mxu0
  %v1191 = vpop.f32.mrf.mxu0
  %v1192 = vadd.f32 %v1128, %v1191
  %v1193 = vpop.f32.mrf.mxu0
  %1194 = vmatprep.mubr.bf16.mxu0 %v361
  %1195 = vmatmul.mubr.bf16.gmra.mxu0 %v360
  %v1196 = vpop.f32.mrf.mxu0
  %v1197 = vadd.f32 %v1133, %v1196
  %v1198 = vpop.f32.mrf.mxu0
  %v1199 = vpop.f32.mrf.mxu0
  %v1200 = vpop.f32.mrf.mxu0
  %1201 = vdwg.mxu0
  %v1202 = vmax.f32 %v1173, 0.0
  %v1203 = vmax.f32 %v1176, 0.0
  %v1204 = vmax.f32 %v1181, 0.0
  %v1205 = vmax.f32 %v1184, 0.0
  %v1206 = vmax.f32 %v1189, 0.0
  %v1207 = vmax.f32 %v1192, 0.0
  %v1208 = vmax.f32 %v1197, 0.0
  %v1209 = vpack.c.bf16 %v1203, %v1202
  %v1210 = vpack.c.bf16 %v1205, %v1204
  %v1211 = vpack.c.bf16 %v1207, %v1206
  %v1212 = vpack.c.bf16 %v1208, %v1208
  %v1217 = vunpack.c.l.b16 %v1209
  %v1218 = vunpack.c.h.b16 %v1209
  %v1219 = vunpack.c.l.b16 %v1210
  %v1220 = vunpack.c.h.b16 %v1210
  %v1221 = vunpack.c.l.b16 %v1211
  %v1222 = vunpack.c.h.b16 %v1211
  %v1223 = vunpack.c.l.b16 %v1212
  %v1224 = vpack.c.b16 %v1217, %v1217
  %v1225 = vpack.c.b16 %v1218, %v1218
  %v1226 = vpack.c.b16 %v1219, %v1219
  %v1227 = vpack.c.b16 %v1220, %v1220
  %v1228 = vpack.c.b16 %v1221, %v1221
  %v1229 = vpack.c.b16 %v1222, %v1222
  %v1230 = vpack.c.b16 %v1223, %v1223
  %1238 = vst [vmem:[%s3] sm:$0xf] %v1224
  %1239 = vst [vmem:[%s3 + $0x4] sm:$0xf] %v1225
  %1240 = vst [vmem:[%s3 + $0x8] sm:$0xf] %v1226
  %1241 = vst [vmem:[%s3 + $0xc] sm:$0xf] %v1227
  %1242 = vst [vmem:[%s3 + $0x10] sm:$0xf] %v1228
  %1243 = vst [vmem:[%s3 + $0x14] sm:$0xf] %v1229
  %1244 = vst [vmem:[%s3 + $0x18] sm:$0xf] %v1230
  // Predicated region
  $region14: #{stem_fwd.19} parent=0 // pred_check
    _
  $region15: #{stem_fwd.19} parent=0 // pred_check_branch
    %1246 = sbr.rel (0) target = $region17
  $region16: #{stem_fwd.19} parent=0 // pred_region
    _
  $region17: #{stem_fwd.19} parent=0 // pred_fallthru
    _
  // Predicated region
  $region18: #{stem_fwd.19} parent=0 // pred_check
    _
  $region19: #{stem_fwd.19} parent=0 // pred_check_branch
    %1248 = sbr.rel (0) target = $region21
  $region20: #{stem_fwd.19} parent=0 // pred_region
    _
  $region21: #{stem_fwd.19} parent=0 // pred_fallthru
    _

</llo_original>
